<compile_context>
chip_gen: v7x
topology: tpu7x:2x2x1
jax: 0.10.0
libtpu: 0.0.40
codegen_flags: <defaults>
</compile_context>

<pallas_src>
import jax
import jax.numpy as jnp
import numpy as np
from jax.experimental import pallas as pl
from jax.experimental.pallas import tpu as pltpu

NUM_CLASSES = 4
C_BB, H_BB, W_BB = 2048, 7, 7
F = C_BB * H_BB * W_BB          # 100352 flattened backbone features
C1 = NUM_CLASSES + 1            # fc1 out_features = 5 (classification, returned)
TK = 25088                      # reduction tile along F; F // TK = 4 blocks
K_SPLITS = 2                    # leading "parallel" axis (2 TCs on v7x)


def _rcnn_fc1_kernel(x_ref, w_ref, out_ref):
    """Grid = (K_SPLITS, kt_half): partial K-reduction per leading-axis slot.

    The output block index depends only on the leading (parallel) axis, so
    each partial-sum block stays resident in VMEM across the inner reduction
    axis: zero it on the first inner step, then accumulate the partial
    matmuls directly into it (f32).  Bias is added in the wrapper.
    """
    @pl.when(pl.program_id(1) == 0)
    def _():
        out_ref[...] = jnp.zeros_like(out_ref)

    # x_ref: (N, TK), w_ref: (C1, TK) lane-dense — contract over dim 1 of both.
    out_ref[0] += jax.lax.dot_general(
        x_ref[...], w_ref[...],
        dimension_numbers=(((1,), (1,)), ((), ())),
        preferred_element_type=jnp.float32)


def rcnn_head_forward(feats_nchw, w1, b1):
    """feats_nchw: (N, 2048, 7, 7) frozen-backbone output, float32.
    w1: (C1, F) fc1 weight in native PyTorch Linear layout, b1: (C1,) bias.
    Returns classification logits (N, C1) == RCNN.forward's return value.

    Dropout(p=0.2) is identity in eval mode.
    TODO(synk): training-mode stochastic dropout (torch RNG stream) is not
    reproduced here.
    """
    n = feats_nchw.shape[0]
    x = feats_nchw.reshape(n, F)        # == torch .view(-1, 2048*7*7), row-major
    kt = F // TK                        # 4 reduction blocks
    kt_half = kt // K_SPLITS            # 2 blocks per parallel slot

    partials = pl.pallas_call(
        _rcnn_fc1_kernel,
        out_shape=jax.ShapeDtypeStruct((K_SPLITS, n, C1), jnp.float32),
        grid_spec=pltpu.PrefetchScalarGridSpec(
            num_scalar_prefetch=0,
            grid=(K_SPLITS, kt_half),
            in_specs=[
                # activation tile (N, TK)
                pl.BlockSpec((n, TK), lambda p, k: (0, p * kt_half + k)),
                # fc1 weight tile (C1, TK) — lane-dense, native layout
                pl.BlockSpec((C1, TK), lambda p, k: (0, p * kt_half + k)),
            ],
            # per-parallel-slot resident partial accumulator
            out_specs=pl.BlockSpec((1, n, C1), lambda p, k: (p, 0, 0)),
        ),
        compiler_params=pltpu.CompilerParams(
            dimension_semantics=("parallel", "arbitrary")),
        cost_estimate=pl.CostEstimate(
            flops=2 * n * F * C1,
            bytes_accessed=(n * F + C1 * F + K_SPLITS * n * C1) * 4,
            transcendentals=0),
    )(x, w1)

    # Combine the two K-halves and add the bias (40 f32 adds — free).
    return partials.sum(axis=0) + b1[None, :]


if __name__ == "__main__":
    key = jax.random.PRNGKey(0)
    kf, k1, k2 = jax.random.split(key, 3)

    N = 8  # fills all 8 sublanes per vreg / MXU push (kernel works for any N)
    feats = jax.random.normal(kf, (N, C_BB, H_BB, W_BB), dtype=jnp.float32)

    # Deterministic PyTorch-style Linear init: U(-1/sqrt(fan_in), 1/sqrt(fan_in)).
    bound = float(1.0 / np.sqrt(F))
    w1 = jax.random.uniform(k1, (C1, F), minval=-bound, maxval=bound,
                            dtype=jnp.float32)
    b1 = jax.random.uniform(k2, (C1,), minval=-bound, maxval=bound,
                            dtype=jnp.float32)
    # fc2 weights exist in the module but its output is discarded by forward,
    # so they are never touched by the optimized kernel.

    out = jax.block_until_ready(rcnn_head_forward(feats, w1, b1))

    # Pure-JAX reference of the same forward (dropout identity in eval mode).
    ref = feats.reshape(N, F) @ w1.T + b1
    np.testing.assert_allclose(np.asarray(out), np.asarray(ref),
                               rtol=1e-4, atol=1e-4)
    print("KERNEL_OK")
</pallas_src>

<mosaic_0001>
module attributes {stable_mosaic.version = 11 : i64} {
  func.func @_rcnn_fc1_kernel(%arg0: i32, %arg1: i32, %arg2: memref<8x25088xf32, #tpu.memory_space<vmem>>, %arg3: memref<5x25088xf32, #tpu.memory_space<vmem>>, %arg4: memref<1x8x5xf32, #tpu.memory_space<vmem>>) attributes {dimension_semantics = [#tpu.dimension_semantics<parallel>, #tpu.dimension_semantics<arbitrary>], iteration_bounds = array<i64: 2, 2>, scalar_prefetch = 0 : i64, scratch_operands = 0 : i64, tpu.core_type = #tpu.core_type<tc>, window_params = [{transform_indices = @transform_0, window_bounds = array<i64: 8, 25088>}, {transform_indices = @transform_1, window_bounds = array<i64: 5, 25088>}, {transform_indices = @transform_2, window_bounds = array<i64: 1, 8, 5>}]} {
    %c0_i32 = arith.constant 0 : i32
    %0 = arith.cmpi eq, %arg1, %c0_i32 : i32
    %1 = arith.extui %0 : i1 to i32
    %c0_i32_0 = arith.constant 0 : i32
    %2 = arith.cmpi ne, %1, %c0_i32_0 : i32
    scf.if %2 {
      %cst_10 = arith.constant 0.000000e+00 : f32
      %12 = vector.broadcast %cst_10 : f32 to vector<1x8x5xf32>
      %c0_11 = arith.constant 0 : index
      %c0_12 = arith.constant 0 : index
      %c0_13 = arith.constant 0 : index
      %13 = vector.load %arg4[%c0_11, %c0_12, %c0_13] : memref<1x8x5xf32, #tpu.memory_space<vmem>>, vector<1x8x5xf32>
      tpu.vector_store %arg4[%c0_11, %c0_12, %c0_13], %12 {strides = array<i32>} : memref<1x8x5xf32, #tpu.memory_space<vmem>>, vector<1x8x5xf32>,
    } else {
    }
    %c0 = arith.constant 0 : index
    %c0_1 = arith.constant 0 : index
    %c0_2 = arith.constant 0 : index
    %3 = vector.load %arg4[%c0, %c0_1, %c0_2] : memref<1x8x5xf32, #tpu.memory_space<vmem>>, vector<1x8x5xf32>
    %4 = vector.shape_cast %3 : vector<1x8x5xf32> to vector<8x5xf32>
    %c0_3 = arith.constant 0 : index
    %c0_4 = arith.constant 0 : index
    %5 = vector.load %arg2[%c0_3, %c0_4] : memref<8x25088xf32, #tpu.memory_space<vmem>>, vector<8x25088xf32>
    %c0_5 = arith.constant 0 : index
    %c0_6 = arith.constant 0 : index
    %6 = vector.load %arg3[%c0_5, %c0_6] : memref<5x25088xf32, #tpu.memory_space<vmem>>, vector<5x25088xf32>
    %cst = arith.constant dense<0.000000e+00> : vector<8x5xf32>
    %7 = tpu.matmul %5, %6, %cst {dimension_numbers = #tpu.dot_dimension_numbers<[1], [1], [0], [0], [0, 0, 1, 0], [], []>} : vector<8x25088xf32>, vector<5x25088xf32>, vector<8x5xf32> -> vector<8x5xf32>
    %8 = arith.addf %4, %7 : vector<8x5xf32>
    %c0_7 = arith.constant 0 : index
    %c0_8 = arith.constant 0 : index
    %c0_9 = arith.constant 0 : index
    %9 = vector.load %arg4[%c0_7, %c0_8, %c0_9] : memref<1x8x5xf32, #tpu.memory_space<vmem>>, vector<1x8x5xf32>
    %10 = vector.shape_cast %9 : vector<1x8x5xf32> to vector<8x5xf32>
    %11 = vector.shape_cast %8 : vector<8x5xf32> to vector<1x8x5xf32>
    tpu.vector_store %arg4[%c0_7, %c0_8, %c0_9], %11 {strides = array<i32>} : memref<1x8x5xf32, #tpu.memory_space<vmem>>, vector<1x8x5xf32>,
    return
  }
  func.func @transform_0(%arg0: i32, %arg1: i32) -> (i32, i32) {
    %c2_i32 = arith.constant 2 : i32
    %0 = arith.muli %arg0, %c2_i32 : i32
    %1 = arith.addi %0, %arg1 : i32
    %c0_i32 = arith.constant 0 : i32
    %c0_i32_0 = arith.constant 0 : i32
    return %c0_i32, %1 : i32, i32
  }
  func.func @transform_1(%arg0: i32, %arg1: i32) -> (i32, i32) {
    %c2_i32 = arith.constant 2 : i32
    %0 = arith.muli %arg0, %c2_i32 : i32
    %1 = arith.addi %0, %arg1 : i32
    %c0_i32 = arith.constant 0 : i32
    %c0_i32_0 = arith.constant 0 : i32
    return %c0_i32, %1 : i32, i32
  }
  func.func @transform_2(%arg0: i32, %arg1: i32) -> (i32, i32, i32) {
    %c0_i32 = arith.constant 0 : i32
    %c0_i32_0 = arith.constant 0 : i32
    %c0_i32_1 = arith.constant 0 : i32
    return %arg0, %c0_i32, %c0_i32_0 : i32, i32, i32
  }
}

</mosaic_0001>

<llo_original>
// kernel: tpu_custom_call.1
$region0: #{tpu_custom_call.1}
  #allocation0 [shape = 'u32[]', space=smem, size = 0x4, offset = 0x4, fixed_abs, tag = 'smem constant byte address 0x4 - core index']
  #allocation1 [shape = 'u32[144,128]{1,0:T(1,128)}', space=vmem, size = 0x12000, scoped, tag = 'internal scratch']
  %s0 = inlined_call_operand.hbm [shape: f32[8,100352], index: 0, kind: input, shape index: {}]
  %s1 = inlined_call_operand.hbm [shape: f32[5,100352], index: 1, kind: input, shape index: {}]
  %s2 = inlined_call_operand.vmem [shape: f32[2,8,5], index: 2, kind: output, shape index: {}]
  %s3 = sld [smem:[#allocation0]]
  $region53: #{tpu_custom_call.1} parent=0
    _
  %s5 = ssub.s32 1, %s3
  %s6 = scalar_select 0, %s5, %s3
  $region1: #{tpu_custom_call.1} parent=0
    #allocation2 [shape = 'u8[1605632]{0}', space=vmem, size = 0x188000, scoped, tag = 'input window, operand 0']
    #allocation3 [shape = 's32[2]{0}', space=sflag, size = 0x8, scoped, tag = 'scoped memory for tpu_custom_call.1']
    #allocation4 [shape = 'u8[1605632]{0}', space=vmem, size = 0x188000, scoped, tag = 'input window, operand 1']
    #allocation5 [shape = 's32[2]{0}', space=sflag, size = 0x8, scoped, tag = 'scoped memory for tpu_custom_call.1']
    %7 = vsyncpa [#allocation3], 0
    %s8 = scalar_lea.sflag [#allocation3], 1
    %9 = vsyncpa %s8, 0
    %10 = vsyncpa [#allocation5], 0
    %s11 = scalar_lea.sflag [#allocation5], 1
    %12 = vsyncpa %s11, 0
    loop: start=0, step=1, limit=6
    $region2: #{tpu_custom_call.1} parent=1 // loop_pre_header
      _
    $region3: #{tpu_custom_call.1} parent=1 // loop_header
      %s14 = sphi 0, %s18
      %p15 = scmp.ge.s32.totalorder %s14, 6
      %s21 = sphi 0, %s33
      %s22 = sphi 0, %s29
      %s23 = sphi 0, %s21
      %s24 = sphi 0, %s22
      %s25 = sphi 0, %s23
      %s26 = sphi 0, %s24
      %s40 = sphi 0, %s42
      %s43 = sphi 0, %s40
      %s44 = sphi 0, %s43
      %s60 = sphi 0, %s44
      %s70 = sphi 0, %s72
      %s73 = sphi 0, %s70
      %s74 = sphi 0, %s73
      %s90 = sphi 0, %s74
      %s96 = sphi 0, %s98
      %s99 = sphi 0, %s96
      %s100 = sphi 0, %s99
      %s116 = sphi 0, %s100
    $region4: #{tpu_custom_call.1} parent=1 // loop_header_branch
      %17 = sbr.rel (%p15) target = $region8
    $region5: #{tpu_custom_call.1} parent=1 // loop_body
      %s19 = ssub.s32 %s14, 1
      %s20 = ssub.s32 %s14, 2
      %s27 = sadd.s32 1, %s22
      %p28 = scmp.ge.s32.totalorder %s27, 2
      %s29 = scalar_select %p28, 0, %s27
      %s30 = sadd.s32 1, %s21
      %s31 = scalar_select %p28, %s30, %s21
      %p32 = scmp.ge.s32.totalorder %s31, 2
      %s33 = scalar_select %p32, 0, %s31
      %s34 = smul.u32 %s21, 2
      %s35 = sadd.s32 %s34, %s22
      %s36 = smul.u32 %s33, 2
      %s37 = sadd.s32 %s36, %s29
      %s38 = ssub.s32 %s35, %s37
      %p39 = scmp.eq.s32.totalorder %s38, 0
      %s41 = sadd.s32 %s40, 1
      %s42 = scalar_select %p39, %s40, %s41
      %p45 = pneg %p39
      %p46 = scmp.eq.s32.totalorder %s14, 3
      %p47 = por %p45, %p46
      %p48 = scmp.ne.s32.totalorder %s40, %s43
      %p49 = scmp.eq.s32.totalorder %s14, 0
      %p50 = por %p48, %p49
      %p51 = scmp.ne.s32.totalorder %s40, %s43
      %p52 = scmp.eq.s32.totalorder %s19, 3
      %p53 = por %p51, %p52
      %p54 = scmp.ne.s32.totalorder %s43, %s44
      %p55 = scmp.eq.s32.totalorder %s19, 0
      %p56 = por %p54, %p55
      %p57 = scmp.ne.s32.totalorder %s43, %s44
      %p58 = scmp.eq.s32.totalorder %s20, 3
      %p59 = por %p57, %p58
      %p61 = scmp.ne.s32.totalorder %s44, %s60
      %p62 = scmp.eq.s32.totalorder %s20, 0
      %p63 = por %p61, %p62
      %s64 = smul.u32 %s21, 2
      %s65 = sadd.s32 %s64, %s22
      %s66 = smul.u32 %s33, 2
      %s67 = sadd.s32 %s66, %s29
      %s68 = ssub.s32 %s65, %s67
      %p69 = scmp.eq.s32.totalorder %s68, 0
      %s71 = sadd.s32 %s70, 1
      %s72 = scalar_select %p69, %s70, %s71
      %p75 = pneg %p69
      %p76 = scmp.eq.s32.totalorder %s14, 3
      %p77 = por %p75, %p76
      %p78 = scmp.ne.s32.totalorder %s70, %s73
      %p79 = scmp.eq.s32.totalorder %s14, 0
      %p80 = por %p78, %p79
      %p81 = scmp.ne.s32.totalorder %s70, %s73
      %p82 = scmp.eq.s32.totalorder %s19, 3
      %p83 = por %p81, %p82
      %p84 = scmp.ne.s32.totalorder %s73, %s74
      %p85 = scmp.eq.s32.totalorder %s19, 0
      %p86 = por %p84, %p85
      %p87 = scmp.ne.s32.totalorder %s73, %s74
      %p88 = scmp.eq.s32.totalorder %s20, 3
      %p89 = por %p87, %p88
      %p91 = scmp.ne.s32.totalorder %s74, %s90
      %p92 = scmp.eq.s32.totalorder %s20, 0
      %p93 = por %p91, %p92
      %s94 = ssub.s32 %s21, %s33
      %p95 = scmp.eq.s32.totalorder %s94, 0
      %s97 = sadd.s32 %s96, 1
      %s98 = scalar_select %p95, %s96, %s97
      %p101 = pneg %p95
      %p102 = scmp.eq.s32.totalorder %s14, 3
      %p103 = por %p101, %p102
      %p104 = scmp.ne.s32.totalorder %s96, %s99
      %p105 = scmp.eq.s32.totalorder %s14, 0
      %p106 = por %p104, %p105
      %p107 = scmp.ne.s32.totalorder %s96, %s99
      %p108 = scmp.eq.s32.totalorder %s19, 3
      %p109 = por %p107, %p108
      %p110 = scmp.ne.s32.totalorder %s99, %s100
      %p111 = scmp.eq.s32.totalorder %s19, 0
      %p112 = por %p110, %p111
      %p113 = scmp.ne.s32.totalorder %s99, %s100
      %p114 = scmp.eq.s32.totalorder %s20, 3
      %p115 = por %p113, %p114
      %p117 = scmp.ne.s32.totalorder %s100, %s116
      %p118 = scmp.eq.s32.totalorder %s20, 0
      %p119 = por %p117, %p118
      %p120 = scmp.le.s32.totalorder 1, %s14
      %p121 = scmp.lt.s32.totalorder %s14, 5
      %p122 = pnand %p120, %p121
      %p123 = pneg %p122
      // Predicated region
      $region9: #{tpu_custom_call.1} parent=5 // pred_check
        _
      $region10: #{tpu_custom_call.1} parent=5 // pred_check_branch
        %125 = sbr.rel (%p122) target = $region12
      $region11: #{tpu_custom_call.1} parent=5 // pred_region
        %s126 = ssub.s32 %s14, 1
      $region12: #{tpu_custom_call.1} parent=5 // pred_fallthru
        _
      %p127 = scmp.lt.s32.totalorder %s14, 4
      // Predicated region
      $region13: #{tpu_custom_call.1} parent=5 // pred_check
        %p128 = pneg %p127
      $region14: #{tpu_custom_call.1} parent=5 // pred_check_branch
        %130 = sbr.rel (%p128) target = $region16
      $region15: #{tpu_custom_call.1} parent=5 // pred_region
        // Predicated region
        $region17: #{tpu_custom_call.1} parent=15 // pred_check
          %p131 = pneg %p50
        $region18: #{tpu_custom_call.1} parent=15 // pred_check_branch
          %133 = sbr.rel (%p131) target = $region20
        $region19: #{tpu_custom_call.1} parent=15 // pred_region
          %s134 = sand.u32 %s40, 1
          %s135 = scalar_lea.sflag [#allocation3], %s134
          %s136 = sand.u32 %s40, 1
          %s137 = smul.addr %s136, 1568
          %s138 = scalar_lea.vmem [#allocation2], %s137
          %s139 = smul.u32 %s21, 2
          %s140 = sadd.s32 %s139, %s22
          %s141 = smul.u32 196, %s140
          %s143 = ssub.s32 25088, 25088
          %144 = vsyncadd %s135, %s143
          %s145 = smul.addr %s141, 128
          %s146 = scalar_lea.hbm %s0, %s145
          %s148 = sshll.u32 %s138, 4
          %s149 = int_to_ptr.vmem [resolvable:$true] %s148
          %151 = dma.hbm_to_vmem [thread:$0]  %s146, 25088, %s149, %s135
        $region20: #{tpu_custom_call.1} parent=15 // pred_fallthru
          _
        // Predicated region
        $region21: #{tpu_custom_call.1} parent=15 // pred_check
          %p152 = pneg %p80
        $region22: #{tpu_custom_call.1} parent=15 // pred_check_branch
          %154 = sbr.rel (%p152) target = $region24
        $region23: #{tpu_custom_call.1} parent=15 // pred_region
          %s155 = sand.u32 %s70, 1
          %s156 = scalar_lea.sflag [#allocation5], %s155
          %s157 = sand.u32 %s70, 1
          %s158 = smul.addr %s157, 1568
          %s159 = scalar_lea.vmem [#allocation4], %s158
          %s160 = smul.u32 %s21, 2
          %s161 = sadd.s32 %s160, %s22
          %s162 = smul.u32 196, %s161
          %s164 = ssub.s32 25088, 25088
          %165 = vsyncadd %s156, %s164
          %s166 = smul.addr %s162, 128
          %s167 = scalar_lea.hbm %s1, %s166
          %s169 = sshll.u32 %s159, 4
          %s170 = int_to_ptr.vmem [resolvable:$true] %s169
          %172 = dma.hbm_to_vmem [thread:$0]  %s167, 25088, %s170, %s156
        $region24: #{tpu_custom_call.1} parent=15 // pred_fallthru
          _
      $region16: #{tpu_custom_call.1} parent=5 // pred_fallthru
        _
      %p173 = scmp.le.s32.totalorder 1, %s14
      %p174 = scmp.lt.s32.totalorder %s14, 5
      %p175 = pnand %p173, %p174
      %p176 = pneg %p175
      // Predicated region
      $region25: #{tpu_custom_call.1} parent=5 // pred_check
        _
      $region26: #{tpu_custom_call.1} parent=5 // pred_check_branch
        %178 = sbr.rel (%p175) target = $region28
      $region27: #{tpu_custom_call.1} parent=5 // pred_region
        %s179 = ssub.s32 %s14, 1
        %s180 = sand.u32 %s43, 1
        %s181 = scalar_lea.sflag [#allocation3], %s180
        %s182 = sand.u32 %s43, 1
        %s183 = smul.addr %s182, 1568
        %s184 = scalar_lea.vmem [#allocation2], %s183
        // Predicated region
        $region29: #{tpu_custom_call.1} parent=27 // pred_check
          %p185 = pneg %p56
        $region30: #{tpu_custom_call.1} parent=27 // pred_check_branch
          %187 = sbr.rel (%p185) target = $region32
        $region31: #{tpu_custom_call.1} parent=27 // pred_region
          %188 = dma.done %s181, 25088
        $region32: #{tpu_custom_call.1} parent=27 // pred_fallthru
          _
        %s189 = sand.u32 %s73, 1
        %s190 = scalar_lea.sflag [#allocation5], %s189
        %s191 = sand.u32 %s73, 1
        %s192 = smul.addr %s191, 1568
        %s193 = scalar_lea.vmem [#allocation4], %s192
        // Predicated region
        $region33: #{tpu_custom_call.1} parent=27 // pred_check
          %p194 = pneg %p86
        $region34: #{tpu_custom_call.1} parent=27 // pred_check_branch
          %196 = sbr.rel (%p194) target = $region36
        $region35: #{tpu_custom_call.1} parent=27 // pred_region
          %197 = dma.done %s190, 25088
        $region36: #{tpu_custom_call.1} parent=27 // pred_fallthru
          _
        %s198 = sand.u32 %s43, 1
        %s199 = scalar_lea.sflag [#allocation3], %s198
        %s200 = sand.u32 %s43, 1
        %s201 = smul.addr %s200, 1568
        %s202 = scalar_lea.vmem [#allocation2], %s201
        %p203 = pneg %p56
        %p204 = pneg %p53
        %s205 = sand.u32 %s73, 1
        %s206 = scalar_lea.sflag [#allocation5], %s205
        %s207 = sand.u32 %s73, 1
        %s208 = smul.addr %s207, 1568
        %s209 = scalar_lea.vmem [#allocation4], %s208
        %p210 = pneg %p86
        %p211 = pneg %p83
        %p212 = pneg %p112
        %p213 = pneg %p109
        %p214 = scmp.lt.s32.totalorder %s23, 1
        %s215 = scalar_select %p214, %s23, 1
        %s216 = smul.addr %s215, 8
        %s217 = scalar_lea.vmem %s2, %s216
        %s218 = smul.u32 %s23, 2
        %s219 = sadd.s32 %s218, %s24
        %s220 = smul.u32 196, %s219
        %s221 = smul.u32 %s23, 2
        %s222 = sadd.s32 %s221, %s24
        %s223 = smul.u32 196, %s222
        %p224 = scmp.lt.s32.totalorder %s23, 1
        %s225 = scalar_select %p224, %s23, 1
        %s226 = smul.addr %s225, 8
        %s227 = scalar_lea.vmem %s2, %s226
        %p228 = scmp.eq.s32.totalorder %s24, 0
        // Predicated region
        $region37: #{tpu_custom_call.1} parent=27 // pred_check
          %p229 = pneg %p228
        $region38: #{tpu_custom_call.1} parent=27 // pred_check_branch
          %231 = sbr.rel (%p229) target = $region40
        $region39: #{tpu_custom_call.1} parent=27 // pred_region
          %vm232 = vcmask 39936
          %233 = vst.msk [vmem:[%s227] sm:$0xff] %vm232, 0.0
        $region40: #{tpu_custom_call.1} parent=27 // pred_fallthru
          _
        %v234 = vld [vmem:[%s227] sm:$0xff]
        %v235 = vld [vmem:[%s184] sm:$0xff]
        %v236 = vld [vmem:[%s184 + $0x8] sm:$0xff]
        %v237 = vld [vmem:[%s184 + $0x10] sm:$0xff]
        %v238 = vld [vmem:[%s184 + $0x18] sm:$0xff]
        %v239 = vld [vmem:[%s184 + $0x20] sm:$0xff]
        %v240 = vld [vmem:[%s184 + $0x28] sm:$0xff]
        %v241 = vld [vmem:[%s184 + $0x30] sm:$0xff]
        %v242 = vld [vmem:[%s184 + $0x38] sm:$0xff]
        %v243 = vld [vmem:[%s184 + $0x40] sm:$0xff]
        %v244 = vld [vmem:[%s184 + $0x48] sm:$0xff]
        %v245 = vld [vmem:[%s184 + $0x50] sm:$0xff]
        %v246 = vld [vmem:[%s184 + $0x58] sm:$0xff]
        %v247 = vld [vmem:[%s184 + $0x60] sm:$0xff]
        %v248 = vld [vmem:[%s184 + $0x68] sm:$0xff]
        %v249 = vld [vmem:[%s184 + $0x70] sm:$0xff]
        %v250 = vld [vmem:[%s184 + $0x78] sm:$0xff]
        %v251 = vld [vmem:[%s184 + $0x80] sm:$0xff]
        %v252 = vld [vmem:[%s184 + $0x88] sm:$0xff]
        %v253 = vld [vmem:[%s184 + $0x90] sm:$0xff]
        %v254 = vld [vmem:[%s184 + $0x98] sm:$0xff]
        %v255 = vld [vmem:[%s184 + $0xa0] sm:$0xff]
        %v256 = vld [vmem:[%s184 + $0xa8] sm:$0xff]
        %v257 = vld [vmem:[%s184 + $0xb0] sm:$0xff]
        %v258 = vld [vmem:[%s184 + $0xb8] sm:$0xff]
        %v259 = vld [vmem:[%s184 + $0xc0] sm:$0xff]
        %v260 = vld [vmem:[%s184 + $0xc8] sm:$0xff]
        %v261 = vld [vmem:[%s184 + $0xd0] sm:$0xff]
        %v262 = vld [vmem:[%s184 + $0xd8] sm:$0xff]
        %v263 = vld [vmem:[%s184 + $0xe0] sm:$0xff]
        %v264 = vld [vmem:[%s184 + $0xe8] sm:$0xff]
        %v265 = vld [vmem:[%s184 + $0xf0] sm:$0xff]
        %v266 = vld [vmem:[%s184 + $0xf8] sm:$0xff]
        %v267 = vld [vmem:[%s184 + $0x100] sm:$0xff]
        %v268 = vld [vmem:[%s184 + $0x108] sm:$0xff]
        %v269 = vld [vmem:[%s184 + $0x110] sm:$0xff]
        %v270 = vld [vmem:[%s184 + $0x118] sm:$0xff]
        %v271 = vld [vmem:[%s184 + $0x120] sm:$0xff]
        %v272 = vld [vmem:[%s184 + $0x128] sm:$0xff]
        %v273 = vld [vmem:[%s184 + $0x130] sm:$0xff]
        %v274 = vld [vmem:[%s184 + $0x138] sm:$0xff]
        %v275 = vld [vmem:[%s184 + $0x140] sm:$0xff]
        %v276 = vld [vmem:[%s184 + $0x148] sm:$0xff]
        %v277 = vld [vmem:[%s184 + $0x150] sm:$0xff]
        %v278 = vld [vmem:[%s184 + $0x158] sm:$0xff]
        %v279 = vld [vmem:[%s184 + $0x160] sm:$0xff]
        %v280 = vld [vmem:[%s184 + $0x168] sm:$0xff]
        %v281 = vld [vmem:[%s184 + $0x170] sm:$0xff]
        %v282 = vld [vmem:[%s184 + $0x178] sm:$0xff]
        %v283 = vld [vmem:[%s184 + $0x180] sm:$0xff]
        %v284 = vld [vmem:[%s184 + $0x188] sm:$0xff]
        %v285 = vld [vmem:[%s184 + $0x190] sm:$0xff]
        %v286 = vld [vmem:[%s184 + $0x198] sm:$0xff]
        %v287 = vld [vmem:[%s184 + $0x1a0] sm:$0xff]
        %v288 = vld [vmem:[%s184 + $0x1a8] sm:$0xff]
        %v289 = vld [vmem:[%s184 + $0x1b0] sm:$0xff]
        %v290 = vld [vmem:[%s184 + $0x1b8] sm:$0xff]
        %v291 = vld [vmem:[%s184 + $0x1c0] sm:$0xff]
        %v292 = vld [vmem:[%s184 + $0x1c8] sm:$0xff]
        %v293 = vld [vmem:[%s184 + $0x1d0] sm:$0xff]
        %v294 = vld [vmem:[%s184 + $0x1d8] sm:$0xff]
        %v295 = vld [vmem:[%s184 + $0x1e0] sm:$0xff]
        %v296 = vld [vmem:[%s184 + $0x1e8] sm:$0xff]
        %v297 = vld [vmem:[%s184 + $0x1f0] sm:$0xff]
        %v298 = vld [vmem:[%s184 + $0x1f8] sm:$0xff]
        %v299 = vld [vmem:[%s184 + $0x200] sm:$0xff]
        %v300 = vld [vmem:[%s184 + $0x208] sm:$0xff]
        %v301 = vld [vmem:[%s184 + $0x210] sm:$0xff]
        %v302 = vld [vmem:[%s184 + $0x218] sm:$0xff]
        %v303 = vld [vmem:[%s184 + $0x220] sm:$0xff]
        %v304 = vld [vmem:[%s184 + $0x228] sm:$0xff]
        %v305 = vld [vmem:[%s184 + $0x230] sm:$0xff]
        %v306 = vld [vmem:[%s184 + $0x238] sm:$0xff]
        %v307 = vld [vmem:[%s184 + $0x240] sm:$0xff]
        %v308 = vld [vmem:[%s184 + $0x248] sm:$0xff]
        %v309 = vld [vmem:[%s184 + $0x250] sm:$0xff]
        %v310 = vld [vmem:[%s184 + $0x258] sm:$0xff]
        %v311 = vld [vmem:[%s184 + $0x260] sm:$0xff]
        %v312 = vld [vmem:[%s184 + $0x268] sm:$0xff]
        %v313 = vld [vmem:[%s184 + $0x270] sm:$0xff]
        %v314 = vld [vmem:[%s184 + $0x278] sm:$0xff]
        %v315 = vld [vmem:[%s184 + $0x280] sm:$0xff]
        %v316 = vld [vmem:[%s184 + $0x288] sm:$0xff]
        %v317 = vld [vmem:[%s184 + $0x290] sm:$0xff]
        %v318 = vld [vmem:[%s184 + $0x298] sm:$0xff]
        %v319 = vld [vmem:[%s184 + $0x2a0] sm:$0xff]
        %v320 = vld [vmem:[%s184 + $0x2a8] sm:$0xff]
        %v321 = vld [vmem:[%s184 + $0x2b0] sm:$0xff]
        %v322 = vld [vmem:[%s184 + $0x2b8] sm:$0xff]
        %v323 = vld [vmem:[%s184 + $0x2c0] sm:$0xff]
        %v324 = vld [vmem:[%s184 + $0x2c8] sm:$0xff]
        %v325 = vld [vmem:[%s184 + $0x2d0] sm:$0xff]
        %v326 = vld [vmem:[%s184 + $0x2d8] sm:$0xff]
        %v327 = vld [vmem:[%s184 + $0x2e0] sm:$0xff]
        %v328 = vld [vmem:[%s184 + $0x2e8] sm:$0xff]
        %v329 = vld [vmem:[%s184 + $0x2f0] sm:$0xff]
        %v330 = vld [vmem:[%s184 + $0x2f8] sm:$0xff]
        %v331 = vld [vmem:[%s184 + $0x300] sm:$0xff]
        %v332 = vld [vmem:[%s184 + $0x308] sm:$0xff]
        %v333 = vld [vmem:[%s184 + $0x310] sm:$0xff]
        %v334 = vld [vmem:[%s184 + $0x318] sm:$0xff]
        %v335 = vld [vmem:[%s184 + $0x320] sm:$0xff]
        %v336 = vld [vmem:[%s184 + $0x328] sm:$0xff]
        %v337 = vld [vmem:[%s184 + $0x330] sm:$0xff]
        %v338 = vld [vmem:[%s184 + $0x338] sm:$0xff]
        %v339 = vld [vmem:[%s184 + $0x340] sm:$0xff]
        %v340 = vld [vmem:[%s184 + $0x348] sm:$0xff]
        %v341 = vld [vmem:[%s184 + $0x350] sm:$0xff]
        %v342 = vld [vmem:[%s184 + $0x358] sm:$0xff]
        %v343 = vld [vmem:[%s184 + $0x360] sm:$0xff]
        %v344 = vld [vmem:[%s184 + $0x368] sm:$0xff]
        %v345 = vld [vmem:[%s184 + $0x370] sm:$0xff]
        %v346 = vld [vmem:[%s184 + $0x378] sm:$0xff]
        %v347 = vld [vmem:[%s184 + $0x380] sm:$0xff]
        %v348 = vld [vmem:[%s184 + $0x388] sm:$0xff]
        %v349 = vld [vmem:[%s184 + $0x390] sm:$0xff]
        %v350 = vld [vmem:[%s184 + $0x398] sm:$0xff]
        %v351 = vld [vmem:[%s184 + $0x3a0] sm:$0xff]
        %v352 = vld [vmem:[%s184 + $0x3a8] sm:$0xff]
        %v353 = vld [vmem:[%s184 + $0x3b0] sm:$0xff]
        %v354 = vld [vmem:[%s184 + $0x3b8] sm:$0xff]
        %v355 = vld [vmem:[%s184 + $0x3c0] sm:$0xff]
        %v356 = vld [vmem:[%s184 + $0x3c8] sm:$0xff]
        %v357 = vld [vmem:[%s184 + $0x3d0] sm:$0xff]
        %v358 = vld [vmem:[%s184 + $0x3d8] sm:$0xff]
        %v359 = vld [vmem:[%s184 + $0x3e0] sm:$0xff]
        %v360 = vld [vmem:[%s184 + $0x3e8] sm:$0xff]
        %v361 = vld [vmem:[%s184 + $0x3f0] sm:$0xff]
        %v362 = vld [vmem:[%s184 + $0x3f8] sm:$0xff]
        %v363 = vld [vmem:[%s184 + $0x400] sm:$0xff]
        %v364 = vld [vmem:[%s184 + $0x408] sm:$0xff]
        %v365 = vld [vmem:[%s184 + $0x410] sm:$0xff]
        %v366 = vld [vmem:[%s184 + $0x418] sm:$0xff]
        %v367 = vld [vmem:[%s184 + $0x420] sm:$0xff]
        %v368 = vld [vmem:[%s184 + $0x428] sm:$0xff]
        %v369 = vld [vmem:[%s184 + $0x430] sm:$0xff]
        %v370 = vld [vmem:[%s184 + $0x438] sm:$0xff]
        %v371 = vld [vmem:[%s184 + $0x440] sm:$0xff]
        %v372 = vld [vmem:[%s184 + $0x448] sm:$0xff]
        %v373 = vld [vmem:[%s184 + $0x450] sm:$0xff]
        %v374 = vld [vmem:[%s184 + $0x458] sm:$0xff]
        %v375 = vld [vmem:[%s184 + $0x460] sm:$0xff]
        %v376 = vld [vmem:[%s184 + $0x468] sm:$0xff]
        %v377 = vld [vmem:[%s184 + $0x470] sm:$0xff]
        %v378 = vld [vmem:[%s184 + $0x478] sm:$0xff]
        %v379 = vld [vmem:[%s184 + $0x480] sm:$0xff]
        %v380 = vld [vmem:[%s184 + $0x488] sm:$0xff]
        %v381 = vld [vmem:[%s184 + $0x490] sm:$0xff]
        %v382 = vld [vmem:[%s184 + $0x498] sm:$0xff]
        %v383 = vld [vmem:[%s184 + $0x4a0] sm:$0xff]
        %v384 = vld [vmem:[%s184 + $0x4a8] sm:$0xff]
        %v385 = vld [vmem:[%s184 + $0x4b0] sm:$0xff]
        %v386 = vld [vmem:[%s184 + $0x4b8] sm:$0xff]
        %v387 = vld [vmem:[%s184 + $0x4c0] sm:$0xff]
        %v388 = vld [vmem:[%s184 + $0x4c8] sm:$0xff]
        %v389 = vld [vmem:[%s184 + $0x4d0] sm:$0xff]
        %v390 = vld [vmem:[%s184 + $0x4d8] sm:$0xff]
        %v391 = vld [vmem:[%s184 + $0x4e0] sm:$0xff]
        %v392 = vld [vmem:[%s184 + $0x4e8] sm:$0xff]
        %v393 = vld [vmem:[%s184 + $0x4f0] sm:$0xff]
        %v394 = vld [vmem:[%s184 + $0x4f8] sm:$0xff]
        %v395 = vld [vmem:[%s184 + $0x500] sm:$0xff]
        %v396 = vld [vmem:[%s184 + $0x508] sm:$0xff]
        %v397 = vld [vmem:[%s184 + $0x510] sm:$0xff]
        %v398 = vld [vmem:[%s184 + $0x518] sm:$0xff]
        %v399 = vld [vmem:[%s184 + $0x520] sm:$0xff]
        %v400 = vld [vmem:[%s184 + $0x528] sm:$0xff]
        %v401 = vld [vmem:[%s184 + $0x530] sm:$0xff]
        %v402 = vld [vmem:[%s184 + $0x538] sm:$0xff]
        %v403 = vld [vmem:[%s184 + $0x540] sm:$0xff]
        %v404 = vld [vmem:[%s184 + $0x548] sm:$0xff]
        %v405 = vld [vmem:[%s184 + $0x550] sm:$0xff]
        %v406 = vld [vmem:[%s184 + $0x558] sm:$0xff]
        %v407 = vld [vmem:[%s184 + $0x560] sm:$0xff]
        %v408 = vld [vmem:[%s184 + $0x568] sm:$0xff]
        %v409 = vld [vmem:[%s184 + $0x570] sm:$0xff]
        %v410 = vld [vmem:[%s184 + $0x578] sm:$0xff]
        %v411 = vld [vmem:[%s184 + $0x580] sm:$0xff]
        %v412 = vld [vmem:[%s184 + $0x588] sm:$0xff]
        %v413 = vld [vmem:[%s184 + $0x590] sm:$0xff]
        %v414 = vld [vmem:[%s184 + $0x598] sm:$0xff]
        %v415 = vld [vmem:[%s184 + $0x5a0] sm:$0xff]
        %v416 = vld [vmem:[%s184 + $0x5a8] sm:$0xff]
        %v417 = vld [vmem:[%s184 + $0x5b0] sm:$0xff]
        %v418 = vld [vmem:[%s184 + $0x5b8] sm:$0xff]
        %v419 = vld [vmem:[%s184 + $0x5c0] sm:$0xff]
        %v420 = vld [vmem:[%s184 + $0x5c8] sm:$0xff]
        %v421 = vld [vmem:[%s184 + $0x5d0] sm:$0xff]
        %v422 = vld [vmem:[%s184 + $0x5d8] sm:$0xff]
        %v423 = vld [vmem:[%s184 + $0x5e0] sm:$0xff]
        %v424 = vld [vmem:[%s184 + $0x5e8] sm:$0xff]
        %v425 = vld [vmem:[%s184 + $0x5f0] sm:$0xff]
        %v426 = vld [vmem:[%s184 + $0x5f8] sm:$0xff]
        %v427 = vld [vmem:[%s184 + $0x600] sm:$0xff]
        %v428 = vld [vmem:[%s184 + $0x608] sm:$0xff]
        %v429 = vld [vmem:[%s184 + $0x610] sm:$0xff]
        %v430 = vld [vmem:[%s184 + $0x618] sm:$0xff]
        %v431 = vld [vmem:[%s193] sm:$0x1f]
        %v432 = vld [vmem:[%s193 + $0x8] sm:$0x1f]
        %v433 = vld [vmem:[%s193 + $0x10] sm:$0x1f]
        %v434 = vld [vmem:[%s193 + $0x18] sm:$0x1f]
        %v435 = vld [vmem:[%s193 + $0x20] sm:$0x1f]
        %v436 = vld [vmem:[%s193 + $0x28] sm:$0x1f]
        %v437 = vld [vmem:[%s193 + $0x30] sm:$0x1f]
        %v438 = vld [vmem:[%s193 + $0x38] sm:$0x1f]
        %v439 = vld [vmem:[%s193 + $0x40] sm:$0x1f]
        %v440 = vld [vmem:[%s193 + $0x48] sm:$0x1f]
        %v441 = vld [vmem:[%s193 + $0x50] sm:$0x1f]
        %v442 = vld [vmem:[%s193 + $0x58] sm:$0x1f]
        %v443 = vld [vmem:[%s193 + $0x60] sm:$0x1f]
        %v444 = vld [vmem:[%s193 + $0x68] sm:$0x1f]
        %v445 = vld [vmem:[%s193 + $0x70] sm:$0x1f]
        %v446 = vld [vmem:[%s193 + $0x78] sm:$0x1f]
        %v447 = vld [vmem:[%s193 + $0x80] sm:$0x1f]
        %v448 = vld [vmem:[%s193 + $0x88] sm:$0x1f]
        %v449 = vld [vmem:[%s193 + $0x90] sm:$0x1f]
        %v450 = vld [vmem:[%s193 + $0x98] sm:$0x1f]
        %v451 = vld [vmem:[%s193 + $0xa0] sm:$0x1f]
        %v452 = vld [vmem:[%s193 + $0xa8] sm:$0x1f]
        %v453 = vld [vmem:[%s193 + $0xb0] sm:$0x1f]
        %v454 = vld [vmem:[%s193 + $0xb8] sm:$0x1f]
        %v455 = vld [vmem:[%s193 + $0xc0] sm:$0x1f]
        %v456 = vld [vmem:[%s193 + $0xc8] sm:$0x1f]
        %v457 = vld [vmem:[%s193 + $0xd0] sm:$0x1f]
        %v458 = vld [vmem:[%s193 + $0xd8] sm:$0x1f]
        %v459 = vld [vmem:[%s193 + $0xe0] sm:$0x1f]
        %v460 = vld [vmem:[%s193 + $0xe8] sm:$0x1f]
        %v461 = vld [vmem:[%s193 + $0xf0] sm:$0x1f]
        %v462 = vld [vmem:[%s193 + $0xf8] sm:$0x1f]
        %v463 = vld [vmem:[%s193 + $0x100] sm:$0x1f]
        %v464 = vld [vmem:[%s193 + $0x108] sm:$0x1f]
        %v465 = vld [vmem:[%s193 + $0x110] sm:$0x1f]
        %v466 = vld [vmem:[%s193 + $0x118] sm:$0x1f]
        %v467 = vld [vmem:[%s193 + $0x120] sm:$0x1f]
        %v468 = vld [vmem:[%s193 + $0x128] sm:$0x1f]
        %v469 = vld [vmem:[%s193 + $0x130] sm:$0x1f]
        %v470 = vld [vmem:[%s193 + $0x138] sm:$0x1f]
        %v471 = vld [vmem:[%s193 + $0x140] sm:$0x1f]
        %v472 = vld [vmem:[%s193 + $0x148] sm:$0x1f]
        %v473 = vld [vmem:[%s193 + $0x150] sm:$0x1f]
        %v474 = vld [vmem:[%s193 + $0x158] sm:$0x1f]
        %v475 = vld [vmem:[%s193 + $0x160] sm:$0x1f]
        %v476 = vld [vmem:[%s193 + $0x168] sm:$0x1f]
        %v477 = vld [vmem:[%s193 + $0x170] sm:$0x1f]
        %v478 = vld [vmem:[%s193 + $0x178] sm:$0x1f]
        %v479 = vld [vmem:[%s193 + $0x180] sm:$0x1f]
        %v480 = vld [vmem:[%s193 + $0x188] sm:$0x1f]
        %v481 = vld [vmem:[%s193 + $0x190] sm:$0x1f]
        %v482 = vld [vmem:[%s193 + $0x198] sm:$0x1f]
        %v483 = vld [vmem:[%s193 + $0x1a0] sm:$0x1f]
        %v484 = vld [vmem:[%s193 + $0x1a8] sm:$0x1f]
        %v485 = vld [vmem:[%s193 + $0x1b0] sm:$0x1f]
        %v486 = vld [vmem:[%s193 + $0x1b8] sm:$0x1f]
        %v487 = vld [vmem:[%s193 + $0x1c0] sm:$0x1f]
        %v488 = vld [vmem:[%s193 + $0x1c8] sm:$0x1f]
        %v489 = vld [vmem:[%s193 + $0x1d0] sm:$0x1f]
        %v490 = vld [vmem:[%s193 + $0x1d8] sm:$0x1f]
        %v491 = vld [vmem:[%s193 + $0x1e0] sm:$0x1f]
        %v492 = vld [vmem:[%s193 + $0x1e8] sm:$0x1f]
        %v493 = vld [vmem:[%s193 + $0x1f0] sm:$0x1f]
        %v494 = vld [vmem:[%s193 + $0x1f8] sm:$0x1f]
        %v495 = vld [vmem:[%s193 + $0x200] sm:$0x1f]
        %v496 = vld [vmem:[%s193 + $0x208] sm:$0x1f]
        %v497 = vld [vmem:[%s193 + $0x210] sm:$0x1f]
        %v498 = vld [vmem:[%s193 + $0x218] sm:$0x1f]
        %v499 = vld [vmem:[%s193 + $0x220] sm:$0x1f]
        %v500 = vld [vmem:[%s193 + $0x228] sm:$0x1f]
        %v501 = vld [vmem:[%s193 + $0x230] sm:$0x1f]
        %v502 = vld [vmem:[%s193 + $0x238] sm:$0x1f]
        %v503 = vld [vmem:[%s193 + $0x240] sm:$0x1f]
        %v504 = vld [vmem:[%s193 + $0x248] sm:$0x1f]
        %v505 = vld [vmem:[%s193 + $0x250] sm:$0x1f]
        %v506 = vld [vmem:[%s193 + $0x258] sm:$0x1f]
        %v507 = vld [vmem:[%s193 + $0x260] sm:$0x1f]
        %v508 = vld [vmem:[%s193 + $0x268] sm:$0x1f]
        %v509 = vld [vmem:[%s193 + $0x270] sm:$0x1f]
        %v510 = vld [vmem:[%s193 + $0x278] sm:$0x1f]
        %v511 = vld [vmem:[%s193 + $0x280] sm:$0x1f]
        %v512 = vld [vmem:[%s193 + $0x288] sm:$0x1f]
        %v513 = vld [vmem:[%s193 + $0x290] sm:$0x1f]
        %v514 = vld [vmem:[%s193 + $0x298] sm:$0x1f]
        %v515 = vld [vmem:[%s193 + $0x2a0] sm:$0x1f]
        %v516 = vld [vmem:[%s193 + $0x2a8] sm:$0x1f]
        %v517 = vld [vmem:[%s193 + $0x2b0] sm:$0x1f]
        %v518 = vld [vmem:[%s193 + $0x2b8] sm:$0x1f]
        %v519 = vld [vmem:[%s193 + $0x2c0] sm:$0x1f]
        %v520 = vld [vmem:[%s193 + $0x2c8] sm:$0x1f]
        %v521 = vld [vmem:[%s193 + $0x2d0] sm:$0x1f]
        %v522 = vld [vmem:[%s193 + $0x2d8] sm:$0x1f]
        %v523 = vld [vmem:[%s193 + $0x2e0] sm:$0x1f]
        %v524 = vld [vmem:[%s193 + $0x2e8] sm:$0x1f]
        %v525 = vld [vmem:[%s193 + $0x2f0] sm:$0x1f]
        %v526 = vld [vmem:[%s193 + $0x2f8] sm:$0x1f]
        %v527 = vld [vmem:[%s193 + $0x300] sm:$0x1f]
        %v528 = vld [vmem:[%s193 + $0x308] sm:$0x1f]
        %v529 = vld [vmem:[%s193 + $0x310] sm:$0x1f]
        %v530 = vld [vmem:[%s193 + $0x318] sm:$0x1f]
        %v531 = vld [vmem:[%s193 + $0x320] sm:$0x1f]
        %v532 = vld [vmem:[%s193 + $0x328] sm:$0x1f]
        %v533 = vld [vmem:[%s193 + $0x330] sm:$0x1f]
        %v534 = vld [vmem:[%s193 + $0x338] sm:$0x1f]
        %v535 = vld [vmem:[%s193 + $0x340] sm:$0x1f]
        %v536 = vld [vmem:[%s193 + $0x348] sm:$0x1f]
        %v537 = vld [vmem:[%s193 + $0x350] sm:$0x1f]
        %v538 = vld [vmem:[%s193 + $0x358] sm:$0x1f]
        %v539 = vld [vmem:[%s193 + $0x360] sm:$0x1f]
        %v540 = vld [vmem:[%s193 + $0x368] sm:$0x1f]
        %v541 = vld [vmem:[%s193 + $0x370] sm:$0x1f]
        %v542 = vld [vmem:[%s193 + $0x378] sm:$0x1f]
        %v543 = vld [vmem:[%s193 + $0x380] sm:$0x1f]
        %v544 = vld [vmem:[%s193 + $0x388] sm:$0x1f]
        %v545 = vld [vmem:[%s193 + $0x390] sm:$0x1f]
        %v546 = vld [vmem:[%s193 + $0x398] sm:$0x1f]
        %v547 = vld [vmem:[%s193 + $0x3a0] sm:$0x1f]
        %v548 = vld [vmem:[%s193 + $0x3a8] sm:$0x1f]
        %v549 = vld [vmem:[%s193 + $0x3b0] sm:$0x1f]
        %v550 = vld [vmem:[%s193 + $0x3b8] sm:$0x1f]
        %v551 = vld [vmem:[%s193 + $0x3c0] sm:$0x1f]
        %v552 = vld [vmem:[%s193 + $0x3c8] sm:$0x1f]
        %v553 = vld [vmem:[%s193 + $0x3d0] sm:$0x1f]
        %v554 = vld [vmem:[%s193 + $0x3d8] sm:$0x1f]
        %v555 = vld [vmem:[%s193 + $0x3e0] sm:$0x1f]
        %v556 = vld [vmem:[%s193 + $0x3e8] sm:$0x1f]
        %v557 = vld [vmem:[%s193 + $0x3f0] sm:$0x1f]
        %v558 = vld [vmem:[%s193 + $0x3f8] sm:$0x1f]
        %v559 = vld [vmem:[%s193 + $0x400] sm:$0x1f]
        %v560 = vld [vmem:[%s193 + $0x408] sm:$0x1f]
        %v561 = vld [vmem:[%s193 + $0x410] sm:$0x1f]
        %v562 = vld [vmem:[%s193 + $0x418] sm:$0x1f]
        %v563 = vld [vmem:[%s193 + $0x420] sm:$0x1f]
        %v564 = vld [vmem:[%s193 + $0x428] sm:$0x1f]
        %v565 = vld [vmem:[%s193 + $0x430] sm:$0x1f]
        %v566 = vld [vmem:[%s193 + $0x438] sm:$0x1f]
        %v567 = vld [vmem:[%s193 + $0x440] sm:$0x1f]
        %v568 = vld [vmem:[%s193 + $0x448] sm:$0x1f]
        %v569 = vld [vmem:[%s193 + $0x450] sm:$0x1f]
        %v570 = vld [vmem:[%s193 + $0x458] sm:$0x1f]
        %v571 = vld [vmem:[%s193 + $0x460] sm:$0x1f]
        %v572 = vld [vmem:[%s193 + $0x468] sm:$0x1f]
        %v573 = vld [vmem:[%s193 + $0x470] sm:$0x1f]
        %v574 = vld [vmem:[%s193 + $0x478] sm:$0x1f]
        %v575 = vld [vmem:[%s193 + $0x480] sm:$0x1f]
        %v576 = vld [vmem:[%s193 + $0x488] sm:$0x1f]
        %v577 = vld [vmem:[%s193 + $0x490] sm:$0x1f]
        %v578 = vld [vmem:[%s193 + $0x498] sm:$0x1f]
        %v579 = vld [vmem:[%s193 + $0x4a0] sm:$0x1f]
        %v580 = vld [vmem:[%s193 + $0x4a8] sm:$0x1f]
        %v581 = vld [vmem:[%s193 + $0x4b0] sm:$0x1f]
        %v582 = vld [vmem:[%s193 + $0x4b8] sm:$0x1f]
        %v583 = vld [vmem:[%s193 + $0x4c0] sm:$0x1f]
        %v584 = vld [vmem:[%s193 + $0x4c8] sm:$0x1f]
        %v585 = vld [vmem:[%s193 + $0x4d0] sm:$0x1f]
        %v586 = vld [vmem:[%s193 + $0x4d8] sm:$0x1f]
        %v587 = vld [vmem:[%s193 + $0x4e0] sm:$0x1f]
        %v588 = vld [vmem:[%s193 + $0x4e8] sm:$0x1f]
        %v589 = vld [vmem:[%s193 + $0x4f0] sm:$0x1f]
        %v590 = vld [vmem:[%s193 + $0x4f8] sm:$0x1f]
        %v591 = vld [vmem:[%s193 + $0x500] sm:$0x1f]
        %v592 = vld [vmem:[%s193 + $0x508] sm:$0x1f]
        %v593 = vld [vmem:[%s193 + $0x510] sm:$0x1f]
        %v594 = vld [vmem:[%s193 + $0x518] sm:$0x1f]
        %v595 = vld [vmem:[%s193 + $0x520] sm:$0x1f]
        %v596 = vld [vmem:[%s193 + $0x528] sm:$0x1f]
        %v597 = vld [vmem:[%s193 + $0x530] sm:$0x1f]
        %v598 = vld [vmem:[%s193 + $0x538] sm:$0x1f]
        %v599 = vld [vmem:[%s193 + $0x540] sm:$0x1f]
        %v600 = vld [vmem:[%s193 + $0x548] sm:$0x1f]
        %v601 = vld [vmem:[%s193 + $0x550] sm:$0x1f]
        %v602 = vld [vmem:[%s193 + $0x558] sm:$0x1f]
        %v603 = vld [vmem:[%s193 + $0x560] sm:$0x1f]
        %v604 = vld [vmem:[%s193 + $0x568] sm:$0x1f]
        %v605 = vld [vmem:[%s193 + $0x570] sm:$0x1f]
        %v606 = vld [vmem:[%s193 + $0x578] sm:$0x1f]
        %v607 = vld [vmem:[%s193 + $0x580] sm:$0x1f]
        %v608 = vld [vmem:[%s193 + $0x588] sm:$0x1f]
        %v609 = vld [vmem:[%s193 + $0x590] sm:$0x1f]
        %v610 = vld [vmem:[%s193 + $0x598] sm:$0x1f]
        %v611 = vld [vmem:[%s193 + $0x5a0] sm:$0x1f]
        %v612 = vld [vmem:[%s193 + $0x5a8] sm:$0x1f]
        %v613 = vld [vmem:[%s193 + $0x5b0] sm:$0x1f]
        %v614 = vld [vmem:[%s193 + $0x5b8] sm:$0x1f]
        %v615 = vld [vmem:[%s193 + $0x5c0] sm:$0x1f]
        %v616 = vld [vmem:[%s193 + $0x5c8] sm:$0x1f]
        %v617 = vld [vmem:[%s193 + $0x5d0] sm:$0x1f]
        %v618 = vld [vmem:[%s193 + $0x5d8] sm:$0x1f]
        %v619 = vld [vmem:[%s193 + $0x5e0] sm:$0x1f]
        %v620 = vld [vmem:[%s193 + $0x5e8] sm:$0x1f]
        %v621 = vld [vmem:[%s193 + $0x5f0] sm:$0x1f]
        %v622 = vld [vmem:[%s193 + $0x5f8] sm:$0x1f]
        %v623 = vld [vmem:[%s193 + $0x600] sm:$0x1f]
        %v624 = vld [vmem:[%s193 + $0x608] sm:$0x1f]
        %v625 = vld [vmem:[%s193 + $0x610] sm:$0x1f]
        %v626 = vld [vmem:[%s193 + $0x618] sm:$0x1f]
        %627 = vmatprep.subr.mxu0 %v432
        %628 = vmatpush1.xpose.msra.mxu0 %v431
        %629 = vmatprep.subr.mxu0 0.0
        %630 = vmatpush1.xpose.msra.mxu0 0.0
        %631 = vmatprep.subr.mxu0 0.0
        %632 = vmatpush1.xpose.msra.mxu0 0.0
        %633 = vmatprep.subr.mxu0 0.0
        %634 = vmatpush1.xpose.msra.mxu0 0.0
        %635 = vmatprep.subr.mxu0 0.0
        %636 = vmatpush1.xpose.msra.mxu0 0.0
        %637 = vmatprep.subr.mxu0 0.0
        %638 = vmatpush1.xpose.msra.mxu0 0.0
        %639 = vmatprep.subr.mxu0 0.0
        %640 = vmatpush1.xpose.msra.mxu0 0.0
        %641 = vmatprep.subr.mxu0 0.0
        %642 = vmatpush1.xpose.msra.mxu0 0.0
        %643 = vmatprep.subr.mxu0 0.0
        %644 = vmatpush1.xpose.msra.mxu0 0.0
        %645 = vmatprep.subr.mxu0 0.0
        %646 = vmatpush1.xpose.msra.mxu0 0.0
        %647 = vmatprep.subr.mxu0 0.0
        %648 = vmatpush1.xpose.msra.mxu0 0.0
        %649 = vmatprep.subr.mxu0 0.0
        %650 = vmatpush1.xpose.msra.mxu0 0.0
        %651 = vmatprep.subr.mxu0 0.0
        %652 = vmatpush1.xpose.msra.mxu0 0.0
        %653 = vmatprep.subr.mxu0 0.0
        %654 = vmatpush1.xpose.msra.mxu0 0.0
        %655 = vmatprep.subr.mxu0 0.0
        %656 = vmatpush1.xpose.msra.mxu0 0.0
        %657 = vmatprep.subr.mxu0 0.0
        %658 = vmatpush1.xpose.msra.mxu0 0.0
        %659 = vmatprep.subr.mxu0 0.0
        %660 = vmatpush1.xpose.msra.mxu0 0.0
        %661 = vmatprep.subr.mxu0 0.0
        %662 = vmatpush1.xpose.msra.mxu0 0.0
        %663 = vmatprep.subr.mxu0 0.0
        %664 = vmatpush1.xpose.msra.mxu0 0.0
        %665 = vmatprep.subr.mxu0 0.0
        %666 = vmatpush1.xpose.msra.mxu0 0.0
        %667 = vmatprep.subr.mxu0 0.0
        %668 = vmatpush1.xpose.msra.mxu0 0.0
        %669 = vmatprep.subr.mxu0 0.0
        %670 = vmatpush1.xpose.msra.mxu0 0.0
        %671 = vmatprep.subr.mxu0 0.0
        %672 = vmatpush1.xpose.msra.mxu0 0.0
        %673 = vmatprep.subr.mxu0 0.0
        %674 = vmatpush1.xpose.msra.mxu0 0.0
        %675 = vmatprep.subr.mxu0 0.0
        %676 = vmatpush1.xpose.msra.mxu0 0.0
        %677 = vmatprep.subr.mxu0 0.0
        %678 = vmatpush1.xpose.msra.mxu0 0.0
        %679 = vmatprep.subr.mxu0 0.0
        %680 = vmatpush1.xpose.msra.mxu0 0.0
        %681 = vmatprep.subr.mxu0 0.0
        %682 = vmatpush1.xpose.msra.mxu0 0.0
        %683 = vmatprep.subr.mxu0 0.0
        %684 = vmatpush1.xpose.msra.mxu0 0.0
        %685 = vmatprep.subr.mxu0 0.0
        %686 = vmatpush1.xpose.msra.mxu0 0.0
        %687 = vmatprep.subr.mxu0 0.0
        %688 = vmatpush1.xpose.msra.mxu0 0.0
        %689 = vmatprep.subr.mxu0 0.0
        %690 = vmatpush1.xpose.msra.mxu0 0.0
        %691 = vmatprep.mubr.f32.mxu0 %v236
        %692 = vmatmul.mubr.f32.gmra.mrb[0].mxu0 %v235
        %v693 = vpop.f32.mrb[0].mxu0
        %v694 = vadd.f32 0.0, %v693
        %v695 = vpop.f32.mrb[0].mxu0
        %696 = vdwg.mxu0
        %697 = vmatprep.subr.mxu0 %v434
        %698 = vmatpush1.xpose.msra.mxu0 %v433
        %699 = vmatprep.subr.mxu0 0.0
        %700 = vmatpush1.xpose.msra.mxu0 0.0
        %701 = vmatprep.subr.mxu0 0.0
        %702 = vmatpush1.xpose.msra.mxu0 0.0
        %703 = vmatprep.subr.mxu0 0.0
        %704 = vmatpush1.xpose.msra.mxu0 0.0
        %705 = vmatprep.subr.mxu0 0.0
        %706 = vmatpush1.xpose.msra.mxu0 0.0
        %707 = vmatprep.subr.mxu0 0.0
        %708 = vmatpush1.xpose.msra.mxu0 0.0
        %709 = vmatprep.subr.mxu0 0.0
        %710 = vmatpush1.xpose.msra.mxu0 0.0
        %711 = vmatprep.subr.mxu0 0.0
        %712 = vmatpush1.xpose.msra.mxu0 0.0
        %713 = vmatprep.subr.mxu0 0.0
        %714 = vmatpush1.xpose.msra.mxu0 0.0
        %715 = vmatprep.subr.mxu0 0.0
        %716 = vmatpush1.xpose.msra.mxu0 0.0
        %717 = vmatprep.subr.mxu0 0.0
        %718 = vmatpush1.xpose.msra.mxu0 0.0
        %719 = vmatprep.subr.mxu0 0.0
        %720 = vmatpush1.xpose.msra.mxu0 0.0
        %721 = vmatprep.subr.mxu0 0.0
        %722 = vmatpush1.xpose.msra.mxu0 0.0
        %723 = vmatprep.subr.mxu0 0.0
        %724 = vmatpush1.xpose.msra.mxu0 0.0
        %725 = vmatprep.subr.mxu0 0.0
        %726 = vmatpush1.xpose.msra.mxu0 0.0
        %727 = vmatprep.subr.mxu0 0.0
        %728 = vmatpush1.xpose.msra.mxu0 0.0
        %729 = vmatprep.subr.mxu0 0.0
        %730 = vmatpush1.xpose.msra.mxu0 0.0
        %731 = vmatprep.subr.mxu0 0.0
        %732 = vmatpush1.xpose.msra.mxu0 0.0
        %733 = vmatprep.subr.mxu0 0.0
        %734 = vmatpush1.xpose.msra.mxu0 0.0
        %735 = vmatprep.subr.mxu0 0.0
        %736 = vmatpush1.xpose.msra.mxu0 0.0
        %737 = vmatprep.subr.mxu0 0.0
        %738 = vmatpush1.xpose.msra.mxu0 0.0
        %739 = vmatprep.subr.mxu0 0.0
        %740 = vmatpush1.xpose.msra.mxu0 0.0
        %741 = vmatprep.subr.mxu0 0.0
        %742 = vmatpush1.xpose.msra.mxu0 0.0
        %743 = vmatprep.subr.mxu0 0.0
        %744 = vmatpush1.xpose.msra.mxu0 0.0
        %745 = vmatprep.subr.mxu0 0.0
        %746 = vmatpush1.xpose.msra.mxu0 0.0
        %747 = vmatprep.subr.mxu0 0.0
        %748 = vmatpush1.xpose.msra.mxu0 0.0
        %749 = vmatprep.subr.mxu0 0.0
        %750 = vmatpush1.xpose.msra.mxu0 0.0
        %751 = vmatprep.subr.mxu0 0.0
        %752 = vmatpush1.xpose.msra.mxu0 0.0
        %753 = vmatprep.subr.mxu0 0.0
        %754 = vmatpush1.xpose.msra.mxu0 0.0
        %755 = vmatprep.subr.mxu0 0.0
        %756 = vmatpush1.xpose.msra.mxu0 0.0
        %757 = vmatprep.subr.mxu0 0.0
        %758 = vmatpush1.xpose.msra.mxu0 0.0
        %759 = vmatprep.subr.mxu0 0.0
        %760 = vmatpush1.xpose.msra.mxu0 0.0
        %761 = vmatprep.mubr.f32.mxu0 %v238
        %762 = vmatmul.mubr.f32.gmra.mrb[0].mxu0 %v237
        %v763 = vpop.f32.mrb[0].mxu0
        %v764 = vadd.f32 %v694, %v763
        %v765 = vpop.f32.mrb[0].mxu0
        %766 = vdwg.mxu0
        %767 = vmatprep.subr.mxu0 %v436
        %768 = vmatpush1.xpose.msra.mxu0 %v435
        %769 = vmatprep.subr.mxu0 0.0
        %770 = vmatpush1.xpose.msra.mxu0 0.0
        %771 = vmatprep.subr.mxu0 0.0
        %772 = vmatpush1.xpose.msra.mxu0 0.0
        %773 = vmatprep.subr.mxu0 0.0
        %774 = vmatpush1.xpose.msra.mxu0 0.0
        %775 = vmatprep.subr.mxu0 0.0
        %776 = vmatpush1.xpose.msra.mxu0 0.0
        %777 = vmatprep.subr.mxu0 0.0
        %778 = vmatpush1.xpose.msra.mxu0 0.0
        %779 = vmatprep.subr.mxu0 0.0
        %780 = vmatpush1.xpose.msra.mxu0 0.0
        %781 = vmatprep.subr.mxu0 0.0
        %782 = vmatpush1.xpose.msra.mxu0 0.0
        %783 = vmatprep.subr.mxu0 0.0
        %784 = vmatpush1.xpose.msra.mxu0 0.0
        %785 = vmatprep.subr.mxu0 0.0
        %786 = vmatpush1.xpose.msra.mxu0 0.0
        %787 = vmatprep.subr.mxu0 0.0
        %788 = vmatpush1.xpose.msra.mxu0 0.0
        %789 = vmatprep.subr.mxu0 0.0
        %790 = vmatpush1.xpose.msra.mxu0 0.0
        %791 = vmatprep.subr.mxu0 0.0
        %792 = vmatpush1.xpose.msra.mxu0 0.0
        %793 = vmatprep.subr.mxu0 0.0
        %794 = vmatpush1.xpose.msra.mxu0 0.0
        %795 = vmatprep.subr.mxu0 0.0
        %796 = vmatpush1.xpose.msra.mxu0 0.0
        %797 = vmatprep.subr.mxu0 0.0
        %798 = vmatpush1.xpose.msra.mxu0 0.0
        %799 = vmatprep.subr.mxu0 0.0
        %800 = vmatpush1.xpose.msra.mxu0 0.0
        %801 = vmatprep.subr.mxu0 0.0
        %802 = vmatpush1.xpose.msra.mxu0 0.0
        %803 = vmatprep.subr.mxu0 0.0
        %804 = vmatpush1.xpose.msra.mxu0 0.0
        %805 = vmatprep.subr.mxu0 0.0
        %806 = vmatpush1.xpose.msra.mxu0 0.0
        %807 = vmatprep.subr.mxu0 0.0
        %808 = vmatpush1.xpose.msra.mxu0 0.0
        %809 = vmatprep.subr.mxu0 0.0
        %810 = vmatpush1.xpose.msra.mxu0 0.0
        %811 = vmatprep.subr.mxu0 0.0
        %812 = vmatpush1.xpose.msra.mxu0 0.0
        %813 = vmatprep.subr.mxu0 0.0
        %814 = vmatpush1.xpose.msra.mxu0 0.0
        %815 = vmatprep.subr.mxu0 0.0
        %816 = vmatpush1.xpose.msra.mxu0 0.0
        %817 = vmatprep.subr.mxu0 0.0
        %818 = vmatpush1.xpose.msra.mxu0 0.0
        %819 = vmatprep.subr.mxu0 0.0
        %820 = vmatpush1.xpose.msra.mxu0 0.0
        %821 = vmatprep.subr.mxu0 0.0
        %822 = vmatpush1.xpose.msra.mxu0 0.0
        %823 = vmatprep.subr.mxu0 0.0
        %824 = vmatpush1.xpose.msra.mxu0 0.0
        %825 = vmatprep.subr.mxu0 0.0
        %826 = vmatpush1.xpose.msra.mxu0 0.0
        %827 = vmatprep.subr.mxu0 0.0
        %828 = vmatpush1.xpose.msra.mxu0 0.0
        %829 = vmatprep.subr.mxu0 0.0
        %830 = vmatpush1.xpose.msra.mxu0 0.0
        %831 = vmatprep.mubr.f32.mxu0 %v240
        %832 = vmatmul.mubr.f32.gmra.mrb[0].mxu0 %v239
        %v833 = vpop.f32.mrb[0].mxu0
        %v834 = vadd.f32 %v764, %v833
        %v835 = vpop.f32.mrb[0].mxu0
        %836 = vdwg.mxu0
        %837 = vmatprep.subr.mxu0 %v438
        %838 = vmatpush1.xpose.msra.mxu0 %v437
        %839 = vmatprep.subr.mxu0 0.0
        %840 = vmatpush1.xpose.msra.mxu0 0.0
        %841 = vmatprep.subr.mxu0 0.0
        %842 = vmatpush1.xpose.msra.mxu0 0.0
        %843 = vmatprep.subr.mxu0 0.0
        %844 = vmatpush1.xpose.msra.mxu0 0.0
        %845 = vmatprep.subr.mxu0 0.0
        %846 = vmatpush1.xpose.msra.mxu0 0.0
        %847 = vmatprep.subr.mxu0 0.0
        %848 = vmatpush1.xpose.msra.mxu0 0.0
        %849 = vmatprep.subr.mxu0 0.0
        %850 = vmatpush1.xpose.msra.mxu0 0.0
        %851 = vmatprep.subr.mxu0 0.0
        %852 = vmatpush1.xpose.msra.mxu0 0.0
        %853 = vmatprep.subr.mxu0 0.0
        %854 = vmatpush1.xpose.msra.mxu0 0.0
        %855 = vmatprep.subr.mxu0 0.0
        %856 = vmatpush1.xpose.msra.mxu0 0.0
        %857 = vmatprep.subr.mxu0 0.0
        %858 = vmatpush1.xpose.msra.mxu0 0.0
        %859 = vmatprep.subr.mxu0 0.0
        %860 = vmatpush1.xpose.msra.mxu0 0.0
        %861 = vmatprep.subr.mxu0 0.0
        %862 = vmatpush1.xpose.msra.mxu0 0.0
        %863 = vmatprep.subr.mxu0 0.0
        %864 = vmatpush1.xpose.msra.mxu0 0.0
        %865 = vmatprep.subr.mxu0 0.0
        %866 = vmatpush1.xpose.msra.mxu0 0.0
        %867 = vmatprep.subr.mxu0 0.0
        %868 = vmatpush1.xpose.msra.mxu0 0.0
        %869 = vmatprep.subr.mxu0 0.0
        %870 = vmatpush1.xpose.msra.mxu0 0.0
        %871 = vmatprep.subr.mxu0 0.0
        %872 = vmatpush1.xpose.msra.mxu0 0.0
        %873 = vmatprep.subr.mxu0 0.0
        %874 = vmatpush1.xpose.msra.mxu0 0.0
        %875 = vmatprep.subr.mxu0 0.0
        %876 = vmatpush1.xpose.msra.mxu0 0.0
        %877 = vmatprep.subr.mxu0 0.0
        %878 = vmatpush1.xpose.msra.mxu0 0.0
        %879 = vmatprep.subr.mxu0 0.0
        %880 = vmatpush1.xpose.msra.mxu0 0.0
        %881 = vmatprep.subr.mxu0 0.0
        %882 = vmatpush1.xpose.msra.mxu0 0.0
        %883 = vmatprep.subr.mxu0 0.0
        %884 = vmatpush1.xpose.msra.mxu0 0.0
        %885 = vmatprep.subr.mxu0 0.0
        %886 = vmatpush1.xpose.msra.mxu0 0.0
        %887 = vmatprep.subr.mxu0 0.0
        %888 = vmatpush1.xpose.msra.mxu0 0.0
        %889 = vmatprep.subr.mxu0 0.0
        %890 = vmatpush1.xpose.msra.mxu0 0.0
        %891 = vmatprep.subr.mxu0 0.0
        %892 = vmatpush1.xpose.msra.mxu0 0.0
        %893 = vmatprep.subr.mxu0 0.0
        %894 = vmatpush1.xpose.msra.mxu0 0.0
        %895 = vmatprep.subr.mxu0 0.0
        %896 = vmatpush1.xpose.msra.mxu0 0.0
        %897 = vmatprep.subr.mxu0 0.0
        %898 = vmatpush1.xpose.msra.mxu0 0.0
        %899 = vmatprep.subr.mxu0 0.0
        %900 = vmatpush1.xpose.msra.mxu0 0.0
        %901 = vmatprep.mubr.f32.mxu0 %v242
        %902 = vmatmul.mubr.f32.gmra.mrb[0].mxu0 %v241
        %v903 = vpop.f32.mrb[0].mxu0
        %v904 = vadd.f32 %v834, %v903
        %v905 = vpop.f32.mrb[0].mxu0
        %906 = vdwg.mxu0
        %907 = vmatprep.subr.mxu0 %v440
        %908 = vmatpush1.xpose.msra.mxu0 %v439
        %909 = vmatprep.subr.mxu0 0.0
        %910 = vmatpush1.xpose.msra.mxu0 0.0
        %911 = vmatprep.subr.mxu0 0.0
        %912 = vmatpush1.xpose.msra.mxu0 0.0
        %913 = vmatprep.subr.mxu0 0.0
        %914 = vmatpush1.xpose.msra.mxu0 0.0
        %915 = vmatprep.subr.mxu0 0.0
        %916 = vmatpush1.xpose.msra.mxu0 0.0
        %917 = vmatprep.subr.mxu0 0.0
        %918 = vmatpush1.xpose.msra.mxu0 0.0
        %919 = vmatprep.subr.mxu0 0.0
        %920 = vmatpush1.xpose.msra.mxu0 0.0
        %921 = vmatprep.subr.mxu0 0.0
        %922 = vmatpush1.xpose.msra.mxu0 0.0
        %923 = vmatprep.subr.mxu0 0.0
        %924 = vmatpush1.xpose.msra.mxu0 0.0
        %925 = vmatprep.subr.mxu0 0.0
        %926 = vmatpush1.xpose.msra.mxu0 0.0
        %927 = vmatprep.subr.mxu0 0.0
        %928 = vmatpush1.xpose.msra.mxu0 0.0
        %929 = vmatprep.subr.mxu0 0.0
        %930 = vmatpush1.xpose.msra.mxu0 0.0
        %931 = vmatprep.subr.mxu0 0.0
        %932 = vmatpush1.xpose.msra.mxu0 0.0
        %933 = vmatprep.subr.mxu0 0.0
        %934 = vmatpush1.xpose.msra.mxu0 0.0
        %935 = vmatprep.subr.mxu0 0.0
        %936 = vmatpush1.xpose.msra.mxu0 0.0
        %937 = vmatprep.subr.mxu0 0.0
        %938 = vmatpush1.xpose.msra.mxu0 0.0
        %939 = vmatprep.subr.mxu0 0.0
        %940 = vmatpush1.xpose.msra.mxu0 0.0
        %941 = vmatprep.subr.mxu0 0.0
        %942 = vmatpush1.xpose.msra.mxu0 0.0
        %943 = vmatprep.subr.mxu0 0.0
        %944 = vmatpush1.xpose.msra.mxu0 0.0
        %945 = vmatprep.subr.mxu0 0.0
        %946 = vmatpush1.xpose.msra.mxu0 0.0
        %947 = vmatprep.subr.mxu0 0.0
        %948 = vmatpush1.xpose.msra.mxu0 0.0
        %949 = vmatprep.subr.mxu0 0.0
        %950 = vmatpush1.xpose.msra.mxu0 0.0
        %951 = vmatprep.subr.mxu0 0.0
        %952 = vmatpush1.xpose.msra.mxu0 0.0
        %953 = vmatprep.subr.mxu0 0.0
        %954 = vmatpush1.xpose.msra.mxu0 0.0
        %955 = vmatprep.subr.mxu0 0.0
        %956 = vmatpush1.xpose.msra.mxu0 0.0
        %957 = vmatprep.subr.mxu0 0.0
        %958 = vmatpush1.xpose.msra.mxu0 0.0
        %959 = vmatprep.subr.mxu0 0.0
        %960 = vmatpush1.xpose.msra.mxu0 0.0
        %961 = vmatprep.subr.mxu0 0.0
        %962 = vmatpush1.xpose.msra.mxu0 0.0
        %963 = vmatprep.subr.mxu0 0.0
        %964 = vmatpush1.xpose.msra.mxu0 0.0
        %965 = vmatprep.subr.mxu0 0.0
        %966 = vmatpush1.xpose.msra.mxu0 0.0
        %967 = vmatprep.subr.mxu0 0.0
        %968 = vmatpush1.xpose.msra.mxu0 0.0
        %969 = vmatprep.subr.mxu0 0.0
        %970 = vmatpush1.xpose.msra.mxu0 0.0
        %971 = vmatprep.mubr.f32.mxu0 %v244
        %972 = vmatmul.mubr.f32.gmra.mrb[0].mxu0 %v243
        %v973 = vpop.f32.mrb[0].mxu0
        %v974 = vadd.f32 %v904, %v973
        %v975 = vpop.f32.mrb[0].mxu0
        %976 = vdwg.mxu0
        %977 = vmatprep.subr.mxu0 %v442
        %978 = vmatpush1.xpose.msra.mxu0 %v441
        %979 = vmatprep.subr.mxu0 0.0
        %980 = vmatpush1.xpose.msra.mxu0 0.0
        %981 = vmatprep.subr.mxu0 0.0
        %982 = vmatpush1.xpose.msra.mxu0 0.0
        %983 = vmatprep.subr.mxu0 0.0
        %984 = vmatpush1.xpose.msra.mxu0 0.0
        %985 = vmatprep.subr.mxu0 0.0
        %986 = vmatpush1.xpose.msra.mxu0 0.0
        %987 = vmatprep.subr.mxu0 0.0
        %988 = vmatpush1.xpose.msra.mxu0 0.0
        %989 = vmatprep.subr.mxu0 0.0
        %990 = vmatpush1.xpose.msra.mxu0 0.0
        %991 = vmatprep.subr.mxu0 0.0
        %992 = vmatpush1.xpose.msra.mxu0 0.0
        %993 = vmatprep.subr.mxu0 0.0
        %994 = vmatpush1.xpose.msra.mxu0 0.0
        %995 = vmatprep.subr.mxu0 0.0
        %996 = vmatpush1.xpose.msra.mxu0 0.0
        %997 = vmatprep.subr.mxu0 0.0
        %998 = vmatpush1.xpose.msra.mxu0 0.0
        %999 = vmatprep.subr.mxu0 0.0
        %1000 = vmatpush1.xpose.msra.mxu0 0.0
        %1001 = vmatprep.subr.mxu0 0.0
        %1002 = vmatpush1.xpose.msra.mxu0 0.0
        %1003 = vmatprep.subr.mxu0 0.0
        %1004 = vmatpush1.xpose.msra.mxu0 0.0
        %1005 = vmatprep.subr.mxu0 0.0
        %1006 = vmatpush1.xpose.msra.mxu0 0.0
        %1007 = vmatprep.subr.mxu0 0.0
        %1008 = vmatpush1.xpose.msra.mxu0 0.0
        %1009 = vmatprep.subr.mxu0 0.0
        %1010 = vmatpush1.xpose.msra.mxu0 0.0
        %1011 = vmatprep.subr.mxu0 0.0
        %1012 = vmatpush1.xpose.msra.mxu0 0.0
        %1013 = vmatprep.subr.mxu0 0.0
        %1014 = vmatpush1.xpose.msra.mxu0 0.0
        %1015 = vmatprep.subr.mxu0 0.0
        %1016 = vmatpush1.xpose.msra.mxu0 0.0
        %1017 = vmatprep.subr.mxu0 0.0
        %1018 = vmatpush1.xpose.msra.mxu0 0.0
        %1019 = vmatprep.subr.mxu0 0.0
        %1020 = vmatpush1.xpose.msra.mxu0 0.0
        %1021 = vmatprep.subr.mxu0 0.0
        %1022 = vmatpush1.xpose.msra.mxu0 0.0
        %1023 = vmatprep.subr.mxu0 0.0
        %1024 = vmatpush1.xpose.msra.mxu0 0.0
        %1025 = vmatprep.subr.mxu0 0.0
        %1026 = vmatpush1.xpose.msra.mxu0 0.0
        %1027 = vmatprep.subr.mxu0 0.0
        %1028 = vmatpush1.xpose.msra.mxu0 0.0
        %1029 = vmatprep.subr.mxu0 0.0
        %1030 = vmatpush1.xpose.msra.mxu0 0.0
        %1031 = vmatprep.subr.mxu0 0.0
        %1032 = vmatpush1.xpose.msra.mxu0 0.0
        %1033 = vmatprep.subr.mxu0 0.0
        %1034 = vmatpush1.xpose.msra.mxu0 0.0
        %1035 = vmatprep.subr.mxu0 0.0
        %1036 = vmatpush1.xpose.msra.mxu0 0.0
        %1037 = vmatprep.subr.mxu0 0.0
        %1038 = vmatpush1.xpose.msra.mxu0 0.0
        %1039 = vmatprep.subr.mxu0 0.0
        %1040 = vmatpush1.xpose.msra.mxu0 0.0
        %1041 = vmatprep.mubr.f32.mxu0 %v246
        %1042 = vmatmul.mubr.f32.gmra.mrb[0].mxu0 %v245
        %v1043 = vpop.f32.mrb[0].mxu0
        %v1044 = vadd.f32 %v974, %v1043
        %v1045 = vpop.f32.mrb[0].mxu0
        %1046 = vdwg.mxu0
        %1047 = vmatprep.subr.mxu0 %v444
        %1048 = vmatpush1.xpose.msra.mxu0 %v443
        %1049 = vmatprep.subr.mxu0 0.0
        %1050 = vmatpush1.xpose.msra.mxu0 0.0
        %1051 = vmatprep.subr.mxu0 0.0
        %1052 = vmatpush1.xpose.msra.mxu0 0.0
        %1053 = vmatprep.subr.mxu0 0.0
        %1054 = vmatpush1.xpose.msra.mxu0 0.0
        %1055 = vmatprep.subr.mxu0 0.0
        %1056 = vmatpush1.xpose.msra.mxu0 0.0
        %1057 = vmatprep.subr.mxu0 0.0
        %1058 = vmatpush1.xpose.msra.mxu0 0.0
        %1059 = vmatprep.subr.mxu0 0.0
        %1060 = vmatpush1.xpose.msra.mxu0 0.0
        %1061 = vmatprep.subr.mxu0 0.0
        %1062 = vmatpush1.xpose.msra.mxu0 0.0
        %1063 = vmatprep.subr.mxu0 0.0
        %1064 = vmatpush1.xpose.msra.mxu0 0.0
        %1065 = vmatprep.subr.mxu0 0.0
        %1066 = vmatpush1.xpose.msra.mxu0 0.0
        %1067 = vmatprep.subr.mxu0 0.0
        %1068 = vmatpush1.xpose.msra.mxu0 0.0
        %1069 = vmatprep.subr.mxu0 0.0
        %1070 = vmatpush1.xpose.msra.mxu0 0.0
        %1071 = vmatprep.subr.mxu0 0.0
        %1072 = vmatpush1.xpose.msra.mxu0 0.0
        %1073 = vmatprep.subr.mxu0 0.0
        %1074 = vmatpush1.xpose.msra.mxu0 0.0
        %1075 = vmatprep.subr.mxu0 0.0
        %1076 = vmatpush1.xpose.msra.mxu0 0.0
        %1077 = vmatprep.subr.mxu0 0.0
        %1078 = vmatpush1.xpose.msra.mxu0 0.0
        %1079 = vmatprep.subr.mxu0 0.0
        %1080 = vmatpush1.xpose.msra.mxu0 0.0
        %1081 = vmatprep.subr.mxu0 0.0
        %1082 = vmatpush1.xpose.msra.mxu0 0.0
        %1083 = vmatprep.subr.mxu0 0.0
        %1084 = vmatpush1.xpose.msra.mxu0 0.0
        %1085 = vmatprep.subr.mxu0 0.0
        %1086 = vmatpush1.xpose.msra.mxu0 0.0
        %1087 = vmatprep.subr.mxu0 0.0
        %1088 = vmatpush1.xpose.msra.mxu0 0.0
        %1089 = vmatprep.subr.mxu0 0.0
        %1090 = vmatpush1.xpose.msra.mxu0 0.0
        %1091 = vmatprep.subr.mxu0 0.0
        %1092 = vmatpush1.xpose.msra.mxu0 0.0
        %1093 = vmatprep.subr.mxu0 0.0
        %1094 = vmatpush1.xpose.msra.mxu0 0.0
        %1095 = vmatprep.subr.mxu0 0.0
        %1096 = vmatpush1.xpose.msra.mxu0 0.0
        %1097 = vmatprep.subr.mxu0 0.0
        %1098 = vmatpush1.xpose.msra.mxu0 0.0
        %1099 = vmatprep.subr.mxu0 0.0
        %1100 = vmatpush1.xpose.msra.mxu0 0.0
        %1101 = vmatprep.subr.mxu0 0.0
        %1102 = vmatpush1.xpose.msra.mxu0 0.0
        %1103 = vmatprep.subr.mxu0 0.0
        %1104 = vmatpush1.xpose.msra.mxu0 0.0
        %1105 = vmatprep.subr.mxu0 0.0
        %1106 = vmatpush1.xpose.msra.mxu0 0.0
        %1107 = vmatprep.subr.mxu0 0.0
        %1108 = vmatpush1.xpose.msra.mxu0 0.0
        %1109 = vmatprep.subr.mxu0 0.0
        %1110 = vmatpush1.xpose.msra.mxu0 0.0
        %1111 = vmatprep.mubr.f32.mxu0 %v248
        %1112 = vmatmul.mubr.f32.gmra.mrb[0].mxu0 %v247
        %v1113 = vpop.f32.mrb[0].mxu0
        %v1114 = vadd.f32 %v1044, %v1113
        %v1115 = vpop.f32.mrb[0].mxu0
        %1116 = vdwg.mxu0
        %1117 = vmatprep.subr.mxu0 %v446
        %1118 = vmatpush1.xpose.msra.mxu0 %v445
        %1119 = vmatprep.subr.mxu0 0.0
        %1120 = vmatpush1.xpose.msra.mxu0 0.0
        %1121 = vmatprep.subr.mxu0 0.0
        %1122 = vmatpush1.xpose.msra.mxu0 0.0
        %1123 = vmatprep.subr.mxu0 0.0
        %1124 = vmatpush1.xpose.msra.mxu0 0.0
        %1125 = vmatprep.subr.mxu0 0.0
        %1126 = vmatpush1.xpose.msra.mxu0 0.0
        %1127 = vmatprep.subr.mxu0 0.0
        %1128 = vmatpush1.xpose.msra.mxu0 0.0
        %1129 = vmatprep.subr.mxu0 0.0
        %1130 = vmatpush1.xpose.msra.mxu0 0.0
        %1131 = vmatprep.subr.mxu0 0.0
        %1132 = vmatpush1.xpose.msra.mxu0 0.0
        %1133 = vmatprep.subr.mxu0 0.0
        %1134 = vmatpush1.xpose.msra.mxu0 0.0
        %1135 = vmatprep.subr.mxu0 0.0
        %1136 = vmatpush1.xpose.msra.mxu0 0.0
        %1137 = vmatprep.subr.mxu0 0.0
        %1138 = vmatpush1.xpose.msra.mxu0 0.0
        %1139 = vmatprep.subr.mxu0 0.0
        %1140 = vmatpush1.xpose.msra.mxu0 0.0
        %1141 = vmatprep.subr.mxu0 0.0
        %1142 = vmatpush1.xpose.msra.mxu0 0.0
        %1143 = vmatprep.subr.mxu0 0.0
        %1144 = vmatpush1.xpose.msra.mxu0 0.0
        %1145 = vmatprep.subr.mxu0 0.0
        %1146 = vmatpush1.xpose.msra.mxu0 0.0
        %1147 = vmatprep.subr.mxu0 0.0
        %1148 = vmatpush1.xpose.msra.mxu0 0.0
        %1149 = vmatprep.subr.mxu0 0.0
        %1150 = vmatpush1.xpose.msra.mxu0 0.0
        %1151 = vmatprep.subr.mxu0 0.0
        %1152 = vmatpush1.xpose.msra.mxu0 0.0
        %1153 = vmatprep.subr.mxu0 0.0
        %1154 = vmatpush1.xpose.msra.mxu0 0.0
        %1155 = vmatprep.subr.mxu0 0.0
        %1156 = vmatpush1.xpose.msra.mxu0 0.0
        %1157 = vmatprep.subr.mxu0 0.0
        %1158 = vmatpush1.xpose.msra.mxu0 0.0
        %1159 = vmatprep.subr.mxu0 0.0
        %1160 = vmatpush1.xpose.msra.mxu0 0.0
        %1161 = vmatprep.subr.mxu0 0.0
        %1162 = vmatpush1.xpose.msra.mxu0 0.0
        %1163 = vmatprep.subr.mxu0 0.0
        %1164 = vmatpush1.xpose.msra.mxu0 0.0
        %1165 = vmatprep.subr.mxu0 0.0
        %1166 = vmatpush1.xpose.msra.mxu0 0.0
        %1167 = vmatprep.subr.mxu0 0.0
        %1168 = vmatpush1.xpose.msra.mxu0 0.0
        %1169 = vmatprep.subr.mxu0 0.0
        %1170 = vmatpush1.xpose.msra.mxu0 0.0
        %1171 = vmatprep.subr.mxu0 0.0
        %1172 = vmatpush1.xpose.msra.mxu0 0.0
        %1173 = vmatprep.subr.mxu0 0.0
        %1174 = vmatpush1.xpose.msra.mxu0 0.0
        %1175 = vmatprep.subr.mxu0 0.0
        %1176 = vmatpush1.xpose.msra.mxu0 0.0
        %1177 = vmatprep.subr.mxu0 0.0
        %1178 = vmatpush1.xpose.msra.mxu0 0.0
        %1179 = vmatprep.subr.mxu0 0.0
        %1180 = vmatpush1.xpose.msra.mxu0 0.0
        %1181 = vmatprep.mubr.f32.mxu0 %v250
        %1182 = vmatmul.mubr.f32.gmra.mrb[0].mxu0 %v249
        %v1183 = vpop.f32.mrb[0].mxu0
        %v1184 = vadd.f32 %v1114, %v1183
        %v1185 = vpop.f32.mrb[0].mxu0
        %1186 = vdwg.mxu0
        %1187 = vmatprep.subr.mxu0 %v448
        %1188 = vmatpush1.xpose.msra.mxu0 %v447
        %1189 = vmatprep.subr.mxu0 0.0
        %1190 = vmatpush1.xpose.msra.mxu0 0.0
        %1191 = vmatprep.subr.mxu0 0.0
        %1192 = vmatpush1.xpose.msra.mxu0 0.0
        %1193 = vmatprep.subr.mxu0 0.0
        %1194 = vmatpush1.xpose.msra.mxu0 0.0
        %1195 = vmatprep.subr.mxu0 0.0
        %1196 = vmatpush1.xpose.msra.mxu0 0.0
        %1197 = vmatprep.subr.mxu0 0.0
        %1198 = vmatpush1.xpose.msra.mxu0 0.0
        %1199 = vmatprep.subr.mxu0 0.0
        %1200 = vmatpush1.xpose.msra.mxu0 0.0
        %1201 = vmatprep.subr.mxu0 0.0
        %1202 = vmatpush1.xpose.msra.mxu0 0.0
        %1203 = vmatprep.subr.mxu0 0.0
        %1204 = vmatpush1.xpose.msra.mxu0 0.0
        %1205 = vmatprep.subr.mxu0 0.0
        %1206 = vmatpush1.xpose.msra.mxu0 0.0
        %1207 = vmatprep.subr.mxu0 0.0
        %1208 = vmatpush1.xpose.msra.mxu0 0.0
        %1209 = vmatprep.subr.mxu0 0.0
        %1210 = vmatpush1.xpose.msra.mxu0 0.0
        %1211 = vmatprep.subr.mxu0 0.0
        %1212 = vmatpush1.xpose.msra.mxu0 0.0
        %1213 = vmatprep.subr.mxu0 0.0
        %1214 = vmatpush1.xpose.msra.mxu0 0.0
        %1215 = vmatprep.subr.mxu0 0.0
        %1216 = vmatpush1.xpose.msra.mxu0 0.0
        %1217 = vmatprep.subr.mxu0 0.0
        %1218 = vmatpush1.xpose.msra.mxu0 0.0
        %1219 = vmatprep.subr.mxu0 0.0
        %1220 = vmatpush1.xpose.msra.mxu0 0.0
        %1221 = vmatprep.subr.mxu0 0.0
        %1222 = vmatpush1.xpose.msra.mxu0 0.0
        %1223 = vmatprep.subr.mxu0 0.0
        %1224 = vmatpush1.xpose.msra.mxu0 0.0
        %1225 = vmatprep.subr.mxu0 0.0
        %1226 = vmatpush1.xpose.msra.mxu0 0.0
        %1227 = vmatprep.subr.mxu0 0.0
        %1228 = vmatpush1.xpose.msra.mxu0 0.0
        %1229 = vmatprep.subr.mxu0 0.0
        %1230 = vmatpush1.xpose.msra.mxu0 0.0
        %1231 = vmatprep.subr.mxu0 0.0
        %1232 = vmatpush1.xpose.msra.mxu0 0.0
        %1233 = vmatprep.subr.mxu0 0.0
        %1234 = vmatpush1.xpose.msra.mxu0 0.0
        %1235 = vmatprep.subr.mxu0 0.0
        %1236 = vmatpush1.xpose.msra.mxu0 0.0
        %1237 = vmatprep.subr.mxu0 0.0
        %1238 = vmatpush1.xpose.msra.mxu0 0.0
        %1239 = vmatprep.subr.mxu0 0.0
        %1240 = vmatpush1.xpose.msra.mxu0 0.0
        %1241 = vmatprep.subr.mxu0 0.0
        %1242 = vmatpush1.xpose.msra.mxu0 0.0
        %1243 = vmatprep.subr.mxu0 0.0
        %1244 = vmatpush1.xpose.msra.mxu0 0.0
        %1245 = vmatprep.subr.mxu0 0.0
        %1246 = vmatpush1.xpose.msra.mxu0 0.0
        %1247 = vmatprep.subr.mxu0 0.0
        %1248 = vmatpush1.xpose.msra.mxu0 0.0
        %1249 = vmatprep.subr.mxu0 0.0
        %1250 = vmatpush1.xpose.msra.mxu0 0.0
        %1251 = vmatprep.mubr.f32.mxu0 %v252
        %1252 = vmatmul.mubr.f32.gmra.mrb[0].mxu0 %v251
        %v1253 = vpop.f32.mrb[0].mxu0
        %v1254 = vadd.f32 %v1184, %v1253
        %v1255 = vpop.f32.mrb[0].mxu0
        %1256 = vdwg.mxu0
        %1257 = vmatprep.subr.mxu0 %v450
        %1258 = vmatpush1.xpose.msra.mxu0 %v449
        %1259 = vmatprep.subr.mxu0 0.0
        %1260 = vmatpush1.xpose.msra.mxu0 0.0
        %1261 = vmatprep.subr.mxu0 0.0
        %1262 = vmatpush1.xpose.msra.mxu0 0.0
        %1263 = vmatprep.subr.mxu0 0.0
        %1264 = vmatpush1.xpose.msra.mxu0 0.0
        %1265 = vmatprep.subr.mxu0 0.0
        %1266 = vmatpush1.xpose.msra.mxu0 0.0
        %1267 = vmatprep.subr.mxu0 0.0
        %1268 = vmatpush1.xpose.msra.mxu0 0.0
        %1269 = vmatprep.subr.mxu0 0.0
        %1270 = vmatpush1.xpose.msra.mxu0 0.0
        %1271 = vmatprep.subr.mxu0 0.0
        %1272 = vmatpush1.xpose.msra.mxu0 0.0
        %1273 = vmatprep.subr.mxu0 0.0
        %1274 = vmatpush1.xpose.msra.mxu0 0.0
        %1275 = vmatprep.subr.mxu0 0.0
        %1276 = vmatpush1.xpose.msra.mxu0 0.0
        %1277 = vmatprep.subr.mxu0 0.0
        %1278 = vmatpush1.xpose.msra.mxu0 0.0
        %1279 = vmatprep.subr.mxu0 0.0
        %1280 = vmatpush1.xpose.msra.mxu0 0.0
        %1281 = vmatprep.subr.mxu0 0.0
        %1282 = vmatpush1.xpose.msra.mxu0 0.0
        %1283 = vmatprep.subr.mxu0 0.0
        %1284 = vmatpush1.xpose.msra.mxu0 0.0
        %1285 = vmatprep.subr.mxu0 0.0
        %1286 = vmatpush1.xpose.msra.mxu0 0.0
        %1287 = vmatprep.subr.mxu0 0.0
        %1288 = vmatpush1.xpose.msra.mxu0 0.0
        %1289 = vmatprep.subr.mxu0 0.0
        %1290 = vmatpush1.xpose.msra.mxu0 0.0
        %1291 = vmatprep.subr.mxu0 0.0
        %1292 = vmatpush1.xpose.msra.mxu0 0.0
        %1293 = vmatprep.subr.mxu0 0.0
        %1294 = vmatpush1.xpose.msra.mxu0 0.0
        %1295 = vmatprep.subr.mxu0 0.0
        %1296 = vmatpush1.xpose.msra.mxu0 0.0
        %1297 = vmatprep.subr.mxu0 0.0
        %1298 = vmatpush1.xpose.msra.mxu0 0.0
        %1299 = vmatprep.subr.mxu0 0.0
        %1300 = vmatpush1.xpose.msra.mxu0 0.0
        %1301 = vmatprep.subr.mxu0 0.0
        %1302 = vmatpush1.xpose.msra.mxu0 0.0
        %1303 = vmatprep.subr.mxu0 0.0
        %1304 = vmatpush1.xpose.msra.mxu0 0.0
        %1305 = vmatprep.subr.mxu0 0.0
        %1306 = vmatpush1.xpose.msra.mxu0 0.0
        %1307 = vmatprep.subr.mxu0 0.0
        %1308 = vmatpush1.xpose.msra.mxu0 0.0
        %1309 = vmatprep.subr.mxu0 0.0
        %1310 = vmatpush1.xpose.msra.mxu0 0.0
        %1311 = vmatprep.subr.mxu0 0.0
        %1312 = vmatpush1.xpose.msra.mxu0 0.0
        %1313 = vmatprep.subr.mxu0 0.0
        %1314 = vmatpush1.xpose.msra.mxu0 0.0
        %1315 = vmatprep.subr.mxu0 0.0
        %1316 = vmatpush1.xpose.msra.mxu0 0.0
        %1317 = vmatprep.subr.mxu0 0.0
        %1318 = vmatpush1.xpose.msra.mxu0 0.0
        %1319 = vmatprep.subr.mxu0 0.0
        %1320 = vmatpush1.xpose.msra.mxu0 0.0
        %1321 = vmatprep.mubr.f32.mxu0 %v254
        %1322 = vmatmul.mubr.f32.gmra.mrb[0].mxu0 %v253
        %v1323 = vpop.f32.mrb[0].mxu0
        %v1324 = vadd.f32 %v1254, %v1323
        %v1325 = vpop.f32.mrb[0].mxu0
        %1326 = vdwg.mxu0
        %1327 = vmatprep.subr.mxu0 %v452
        %1328 = vmatpush1.xpose.msra.mxu0 %v451
        %1329 = vmatprep.subr.mxu0 0.0
        %1330 = vmatpush1.xpose.msra.mxu0 0.0
        %1331 = vmatprep.subr.mxu0 0.0
        %1332 = vmatpush1.xpose.msra.mxu0 0.0
        %1333 = vmatprep.subr.mxu0 0.0
        %1334 = vmatpush1.xpose.msra.mxu0 0.0
        %1335 = vmatprep.subr.mxu0 0.0
        %1336 = vmatpush1.xpose.msra.mxu0 0.0
        %1337 = vmatprep.subr.mxu0 0.0
        %1338 = vmatpush1.xpose.msra.mxu0 0.0
        %1339 = vmatprep.subr.mxu0 0.0
        %1340 = vmatpush1.xpose.msra.mxu0 0.0
        %1341 = vmatprep.subr.mxu0 0.0
        %1342 = vmatpush1.xpose.msra.mxu0 0.0
        %1343 = vmatprep.subr.mxu0 0.0
        %1344 = vmatpush1.xpose.msra.mxu0 0.0
        %1345 = vmatprep.subr.mxu0 0.0
        %1346 = vmatpush1.xpose.msra.mxu0 0.0
        %1347 = vmatprep.subr.mxu0 0.0
        %1348 = vmatpush1.xpose.msra.mxu0 0.0
        %1349 = vmatprep.subr.mxu0 0.0
        %1350 = vmatpush1.xpose.msra.mxu0 0.0
        %1351 = vmatprep.subr.mxu0 0.0
        %1352 = vmatpush1.xpose.msra.mxu0 0.0
        %1353 = vmatprep.subr.mxu0 0.0
        %1354 = vmatpush1.xpose.msra.mxu0 0.0
        %1355 = vmatprep.subr.mxu0 0.0
        %1356 = vmatpush1.xpose.msra.mxu0 0.0
        %1357 = vmatprep.subr.mxu0 0.0
        %1358 = vmatpush1.xpose.msra.mxu0 0.0
        %1359 = vmatprep.subr.mxu0 0.0
        %1360 = vmatpush1.xpose.msra.mxu0 0.0
        %1361 = vmatprep.subr.mxu0 0.0
        %1362 = vmatpush1.xpose.msra.mxu0 0.0
        %1363 = vmatprep.subr.mxu0 0.0
        %1364 = vmatpush1.xpose.msra.mxu0 0.0
        %1365 = vmatprep.subr.mxu0 0.0
        %1366 = vmatpush1.xpose.msra.mxu0 0.0
        %1367 = vmatprep.subr.mxu0 0.0
        %1368 = vmatpush1.xpose.msra.mxu0 0.0
        %1369 = vmatprep.subr.mxu0 0.0
        %1370 = vmatpush1.xpose.msra.mxu0 0.0
        %1371 = vmatprep.subr.mxu0 0.0
        %1372 = vmatpush1.xpose.msra.mxu0 0.0
        %1373 = vmatprep.subr.mxu0 0.0
        %1374 = vmatpush1.xpose.msra.mxu0 0.0
        %1375 = vmatprep.subr.mxu0 0.0
        %1376 = vmatpush1.xpose.msra.mxu0 0.0
        %1377 = vmatprep.subr.mxu0 0.0
        %1378 = vmatpush1.xpose.msra.mxu0 0.0
        %1379 = vmatprep.subr.mxu0 0.0
        %1380 = vmatpush1.xpose.msra.mxu0 0.0
        %1381 = vmatprep.subr.mxu0 0.0
        %1382 = vmatpush1.xpose.msra.mxu0 0.0
        %1383 = vmatprep.subr.mxu0 0.0
        %1384 = vmatpush1.xpose.msra.mxu0 0.0
        %1385 = vmatprep.subr.mxu0 0.0
        %1386 = vmatpush1.xpose.msra.mxu0 0.0
        %1387 = vmatprep.subr.mxu0 0.0
        %1388 = vmatpush1.xpose.msra.mxu0 0.0
        %1389 = vmatprep.subr.mxu0 0.0
        %1390 = vmatpush1.xpose.msra.mxu0 0.0
        %1391 = vmatprep.mubr.f32.mxu0 %v256
        %1392 = vmatmul.mubr.f32.gmra.mrb[0].mxu0 %v255
        %v1393 = vpop.f32.mrb[0].mxu0
        %v1394 = vadd.f32 %v1324, %v1393
        %v1395 = vpop.f32.mrb[0].mxu0
        %1396 = vdwg.mxu0
        %1397 = vmatprep.subr.mxu0 %v454
        %1398 = vmatpush1.xpose.msra.mxu0 %v453
        %1399 = vmatprep.subr.mxu0 0.0
        %1400 = vmatpush1.xpose.msra.mxu0 0.0
        %1401 = vmatprep.subr.mxu0 0.0
        %1402 = vmatpush1.xpose.msra.mxu0 0.0
        %1403 = vmatprep.subr.mxu0 0.0
        %1404 = vmatpush1.xpose.msra.mxu0 0.0
        %1405 = vmatprep.subr.mxu0 0.0
        %1406 = vmatpush1.xpose.msra.mxu0 0.0
        %1407 = vmatprep.subr.mxu0 0.0
        %1408 = vmatpush1.xpose.msra.mxu0 0.0
        %1409 = vmatprep.subr.mxu0 0.0
        %1410 = vmatpush1.xpose.msra.mxu0 0.0
        %1411 = vmatprep.subr.mxu0 0.0
        %1412 = vmatpush1.xpose.msra.mxu0 0.0
        %1413 = vmatprep.subr.mxu0 0.0
        %1414 = vmatpush1.xpose.msra.mxu0 0.0
        %1415 = vmatprep.subr.mxu0 0.0
        %1416 = vmatpush1.xpose.msra.mxu0 0.0
        %1417 = vmatprep.subr.mxu0 0.0
        %1418 = vmatpush1.xpose.msra.mxu0 0.0
        %1419 = vmatprep.subr.mxu0 0.0
        %1420 = vmatpush1.xpose.msra.mxu0 0.0
        %1421 = vmatprep.subr.mxu0 0.0
        %1422 = vmatpush1.xpose.msra.mxu0 0.0
        %1423 = vmatprep.subr.mxu0 0.0
        %1424 = vmatpush1.xpose.msra.mxu0 0.0
        %1425 = vmatprep.subr.mxu0 0.0
        %1426 = vmatpush1.xpose.msra.mxu0 0.0
        %1427 = vmatprep.subr.mxu0 0.0
        %1428 = vmatpush1.xpose.msra.mxu0 0.0
        %1429 = vmatprep.subr.mxu0 0.0
        %1430 = vmatpush1.xpose.msra.mxu0 0.0
        %1431 = vmatprep.subr.mxu0 0.0
        %1432 = vmatpush1.xpose.msra.mxu0 0.0
        %1433 = vmatprep.subr.mxu0 0.0
        %1434 = vmatpush1.xpose.msra.mxu0 0.0
        %1435 = vmatprep.subr.mxu0 0.0
        %1436 = vmatpush1.xpose.msra.mxu0 0.0
        %1437 = vmatprep.subr.mxu0 0.0
        %1438 = vmatpush1.xpose.msra.mxu0 0.0
        %1439 = vmatprep.subr.mxu0 0.0
        %1440 = vmatpush1.xpose.msra.mxu0 0.0
        %1441 = vmatprep.subr.mxu0 0.0
        %1442 = vmatpush1.xpose.msra.mxu0 0.0
        %1443 = vmatprep.subr.mxu0 0.0
        %1444 = vmatpush1.xpose.msra.mxu0 0.0
        %1445 = vmatprep.subr.mxu0 0.0
        %1446 = vmatpush1.xpose.msra.mxu0 0.0
        %1447 = vmatprep.subr.mxu0 0.0
        %1448 = vmatpush1.xpose.msra.mxu0 0.0
        %1449 = vmatprep.subr.mxu0 0.0
        %1450 = vmatpush1.xpose.msra.mxu0 0.0
        %1451 = vmatprep.subr.mxu0 0.0
        %1452 = vmatpush1.xpose.msra.mxu0 0.0
        %1453 = vmatprep.subr.mxu0 0.0
        %1454 = vmatpush1.xpose.msra.mxu0 0.0
        %1455 = vmatprep.subr.mxu0 0.0
        %1456 = vmatpush1.xpose.msra.mxu0 0.0
        %1457 = vmatprep.subr.mxu0 0.0
        %1458 = vmatpush1.xpose.msra.mxu0 0.0
        %1459 = vmatprep.subr.mxu0 0.0
        %1460 = vmatpush1.xpose.msra.mxu0 0.0
        %1461 = vmatprep.mubr.f32.mxu0 %v258
        %1462 = vmatmul.mubr.f32.gmra.mrb[0].mxu0 %v257
        %v1463 = vpop.f32.mrb[0].mxu0
        %v1464 = vadd.f32 %v1394, %v1463
        %v1465 = vpop.f32.mrb[0].mxu0
        %1466 = vdwg.mxu0
        %1467 = vmatprep.subr.mxu0 %v456
        %1468 = vmatpush1.xpose.msra.mxu0 %v455
        %1469 = vmatprep.subr.mxu0 0.0
        %1470 = vmatpush1.xpose.msra.mxu0 0.0
        %1471 = vmatprep.subr.mxu0 0.0
        %1472 = vmatpush1.xpose.msra.mxu0 0.0
        %1473 = vmatprep.subr.mxu0 0.0
        %1474 = vmatpush1.xpose.msra.mxu0 0.0
        %1475 = vmatprep.subr.mxu0 0.0
        %1476 = vmatpush1.xpose.msra.mxu0 0.0
        %1477 = vmatprep.subr.mxu0 0.0
        %1478 = vmatpush1.xpose.msra.mxu0 0.0
        %1479 = vmatprep.subr.mxu0 0.0
        %1480 = vmatpush1.xpose.msra.mxu0 0.0
        %1481 = vmatprep.subr.mxu0 0.0
        %1482 = vmatpush1.xpose.msra.mxu0 0.0
        %1483 = vmatprep.subr.mxu0 0.0
        %1484 = vmatpush1.xpose.msra.mxu0 0.0
        %1485 = vmatprep.subr.mxu0 0.0
        %1486 = vmatpush1.xpose.msra.mxu0 0.0
        %1487 = vmatprep.subr.mxu0 0.0
        %1488 = vmatpush1.xpose.msra.mxu0 0.0
        %1489 = vmatprep.subr.mxu0 0.0
        %1490 = vmatpush1.xpose.msra.mxu0 0.0
        %1491 = vmatprep.subr.mxu0 0.0
        %1492 = vmatpush1.xpose.msra.mxu0 0.0
        %1493 = vmatprep.subr.mxu0 0.0
        %1494 = vmatpush1.xpose.msra.mxu0 0.0
        %1495 = vmatprep.subr.mxu0 0.0
        %1496 = vmatpush1.xpose.msra.mxu0 0.0
        %1497 = vmatprep.subr.mxu0 0.0
        %1498 = vmatpush1.xpose.msra.mxu0 0.0
        %1499 = vmatprep.subr.mxu0 0.0
        %1500 = vmatpush1.xpose.msra.mxu0 0.0
        %1501 = vmatprep.subr.mxu0 0.0
        %1502 = vmatpush1.xpose.msra.mxu0 0.0
        %1503 = vmatprep.subr.mxu0 0.0
        %1504 = vmatpush1.xpose.msra.mxu0 0.0
        %1505 = vmatprep.subr.mxu0 0.0
        %1506 = vmatpush1.xpose.msra.mxu0 0.0
        %1507 = vmatprep.subr.mxu0 0.0
        %1508 = vmatpush1.xpose.msra.mxu0 0.0
        %1509 = vmatprep.subr.mxu0 0.0
        %1510 = vmatpush1.xpose.msra.mxu0 0.0
        %1511 = vmatprep.subr.mxu0 0.0
        %1512 = vmatpush1.xpose.msra.mxu0 0.0
        %1513 = vmatprep.subr.mxu0 0.0
        %1514 = vmatpush1.xpose.msra.mxu0 0.0
        %1515 = vmatprep.subr.mxu0 0.0
        %1516 = vmatpush1.xpose.msra.mxu0 0.0
        %1517 = vmatprep.subr.mxu0 0.0
        %1518 = vmatpush1.xpose.msra.mxu0 0.0
        %1519 = vmatprep.subr.mxu0 0.0
        %1520 = vmatpush1.xpose.msra.mxu0 0.0
        %1521 = vmatprep.subr.mxu0 0.0
        %1522 = vmatpush1.xpose.msra.mxu0 0.0
        %1523 = vmatprep.subr.mxu0 0.0
        %1524 = vmatpush1.xpose.msra.mxu0 0.0
        %1525 = vmatprep.subr.mxu0 0.0
        %1526 = vmatpush1.xpose.msra.mxu0 0.0
        %1527 = vmatprep.subr.mxu0 0.0
        %1528 = vmatpush1.xpose.msra.mxu0 0.0
        %1529 = vmatprep.subr.mxu0 0.0
        %1530 = vmatpush1.xpose.msra.mxu0 0.0
        %1531 = vmatprep.mubr.f32.mxu0 %v260
        %1532 = vmatmul.mubr.f32.gmra.mrb[0].mxu0 %v259
        %v1533 = vpop.f32.mrb[0].mxu0
        %v1534 = vadd.f32 %v1464, %v1533
        %v1535 = vpop.f32.mrb[0].mxu0
        %1536 = vdwg.mxu0
        %1537 = vmatprep.subr.mxu0 %v458
        %1538 = vmatpush1.xpose.msra.mxu0 %v457
        %1539 = vmatprep.subr.mxu0 0.0
        %1540 = vmatpush1.xpose.msra.mxu0 0.0
        %1541 = vmatprep.subr.mxu0 0.0
        %1542 = vmatpush1.xpose.msra.mxu0 0.0
        %1543 = vmatprep.subr.mxu0 0.0
        %1544 = vmatpush1.xpose.msra.mxu0 0.0
        %1545 = vmatprep.subr.mxu0 0.0
        %1546 = vmatpush1.xpose.msra.mxu0 0.0
        %1547 = vmatprep.subr.mxu0 0.0
        %1548 = vmatpush1.xpose.msra.mxu0 0.0
        %1549 = vmatprep.subr.mxu0 0.0
        %1550 = vmatpush1.xpose.msra.mxu0 0.0
        %1551 = vmatprep.subr.mxu0 0.0
        %1552 = vmatpush1.xpose.msra.mxu0 0.0
        %1553 = vmatprep.subr.mxu0 0.0
        %1554 = vmatpush1.xpose.msra.mxu0 0.0
        %1555 = vmatprep.subr.mxu0 0.0
        %1556 = vmatpush1.xpose.msra.mxu0 0.0
        %1557 = vmatprep.subr.mxu0 0.0
        %1558 = vmatpush1.xpose.msra.mxu0 0.0
        %1559 = vmatprep.subr.mxu0 0.0
        %1560 = vmatpush1.xpose.msra.mxu0 0.0
        %1561 = vmatprep.subr.mxu0 0.0
        %1562 = vmatpush1.xpose.msra.mxu0 0.0
        %1563 = vmatprep.subr.mxu0 0.0
        %1564 = vmatpush1.xpose.msra.mxu0 0.0
        %1565 = vmatprep.subr.mxu0 0.0
        %1566 = vmatpush1.xpose.msra.mxu0 0.0
        %1567 = vmatprep.subr.mxu0 0.0
        %1568 = vmatpush1.xpose.msra.mxu0 0.0
        %1569 = vmatprep.subr.mxu0 0.0
        %1570 = vmatpush1.xpose.msra.mxu0 0.0
        %1571 = vmatprep.subr.mxu0 0.0
        %1572 = vmatpush1.xpose.msra.mxu0 0.0
        %1573 = vmatprep.subr.mxu0 0.0
        %1574 = vmatpush1.xpose.msra.mxu0 0.0
        %1575 = vmatprep.subr.mxu0 0.0
        %1576 = vmatpush1.xpose.msra.mxu0 0.0
        %1577 = vmatprep.subr.mxu0 0.0
        %1578 = vmatpush1.xpose.msra.mxu0 0.0
        %1579 = vmatprep.subr.mxu0 0.0
        %1580 = vmatpush1.xpose.msra.mxu0 0.0
        %1581 = vmatprep.subr.mxu0 0.0
        %1582 = vmatpush1.xpose.msra.mxu0 0.0
        %1583 = vmatprep.subr.mxu0 0.0
        %1584 = vmatpush1.xpose.msra.mxu0 0.0
        %1585 = vmatprep.subr.mxu0 0.0
        %1586 = vmatpush1.xpose.msra.mxu0 0.0
        %1587 = vmatprep.subr.mxu0 0.0
        %1588 = vmatpush1.xpose.msra.mxu0 0.0
        %1589 = vmatprep.subr.mxu0 0.0
        %1590 = vmatpush1.xpose.msra.mxu0 0.0
        %1591 = vmatprep.subr.mxu0 0.0
        %1592 = vmatpush1.xpose.msra.mxu0 0.0
        %1593 = vmatprep.subr.mxu0 0.0
        %1594 = vmatpush1.xpose.msra.mxu0 0.0
        %1595 = vmatprep.subr.mxu0 0.0
        %1596 = vmatpush1.xpose.msra.mxu0 0.0
        %1597 = vmatprep.subr.mxu0 0.0
        %1598 = vmatpush1.xpose.msra.mxu0 0.0
        %1599 = vmatprep.subr.mxu0 0.0
        %1600 = vmatpush1.xpose.msra.mxu0 0.0
        %1601 = vmatprep.mubr.f32.mxu0 %v262
        %1602 = vmatmul.mubr.f32.gmra.mrb[0].mxu0 %v261
        %v1603 = vpop.f32.mrb[0].mxu0
        %v1604 = vadd.f32 %v1534, %v1603
        %v1605 = vpop.f32.mrb[0].mxu0
        %1606 = vdwg.mxu0
        %1607 = vmatprep.subr.mxu0 %v460
        %1608 = vmatpush1.xpose.msra.mxu0 %v459
        %1609 = vmatprep.subr.mxu0 0.0
        %1610 = vmatpush1.xpose.msra.mxu0 0.0
        %1611 = vmatprep.subr.mxu0 0.0
        %1612 = vmatpush1.xpose.msra.mxu0 0.0
        %1613 = vmatprep.subr.mxu0 0.0
        %1614 = vmatpush1.xpose.msra.mxu0 0.0
        %1615 = vmatprep.subr.mxu0 0.0
        %1616 = vmatpush1.xpose.msra.mxu0 0.0
        %1617 = vmatprep.subr.mxu0 0.0
        %1618 = vmatpush1.xpose.msra.mxu0 0.0
        %1619 = vmatprep.subr.mxu0 0.0
        %1620 = vmatpush1.xpose.msra.mxu0 0.0
        %1621 = vmatprep.subr.mxu0 0.0
        %1622 = vmatpush1.xpose.msra.mxu0 0.0
        %1623 = vmatprep.subr.mxu0 0.0
        %1624 = vmatpush1.xpose.msra.mxu0 0.0
        %1625 = vmatprep.subr.mxu0 0.0
        %1626 = vmatpush1.xpose.msra.mxu0 0.0
        %1627 = vmatprep.subr.mxu0 0.0
        %1628 = vmatpush1.xpose.msra.mxu0 0.0
        %1629 = vmatprep.subr.mxu0 0.0
        %1630 = vmatpush1.xpose.msra.mxu0 0.0
        %1631 = vmatprep.subr.mxu0 0.0
        %1632 = vmatpush1.xpose.msra.mxu0 0.0
        %1633 = vmatprep.subr.mxu0 0.0
        %1634 = vmatpush1.xpose.msra.mxu0 0.0
        %1635 = vmatprep.subr.mxu0 0.0
        %1636 = vmatpush1.xpose.msra.mxu0 0.0
        %1637 = vmatprep.subr.mxu0 0.0
        %1638 = vmatpush1.xpose.msra.mxu0 0.0
        %1639 = vmatprep.subr.mxu0 0.0
        %1640 = vmatpush1.xpose.msra.mxu0 0.0
        %1641 = vmatprep.subr.mxu0 0.0
        %1642 = vmatpush1.xpose.msra.mxu0 0.0
        %1643 = vmatprep.subr.mxu0 0.0
        %1644 = vmatpush1.xpose.msra.mxu0 0.0
        %1645 = vmatprep.subr.mxu0 0.0
        %1646 = vmatpush1.xpose.msra.mxu0 0.0
        %1647 = vmatprep.subr.mxu0 0.0
        %1648 = vmatpush1.xpose.msra.mxu0 0.0
        %1649 = vmatprep.subr.mxu0 0.0
        %1650 = vmatpush1.xpose.msra.mxu0 0.0
        %1651 = vmatprep.subr.mxu0 0.0
        %1652 = vmatpush1.xpose.msra.mxu0 0.0
        %1653 = vmatprep.subr.mxu0 0.0
        %1654 = vmatpush1.xpose.msra.mxu0 0.0
        %1655 = vmatprep.subr.mxu0 0.0
        %1656 = vmatpush1.xpose.msra.mxu0 0.0
        %1657 = vmatprep.subr.mxu0 0.0
        %1658 = vmatpush1.xpose.msra.mxu0 0.0
        %1659 = vmatprep.subr.mxu0 0.0
        %1660 = vmatpush1.xpose.msra.mxu0 0.0
        %1661 = vmatprep.subr.mxu0 0.0
        %1662 = vmatpush1.xpose.msra.mxu0 0.0
        %1663 = vmatprep.subr.mxu0 0.0
        %1664 = vmatpush1.xpose.msra.mxu0 0.0
        %1665 = vmatprep.subr.mxu0 0.0
        %1666 = vmatpush1.xpose.msra.mxu0 0.0
        %1667 = vmatprep.subr.mxu0 0.0
        %1668 = vmatpush1.xpose.msra.mxu0 0.0
        %1669 = vmatprep.subr.mxu0 0.0
        %1670 = vmatpush1.xpose.msra.mxu0 0.0
        %1671 = vmatprep.mubr.f32.mxu0 %v264
        %1672 = vmatmul.mubr.f32.gmra.mrb[0].mxu0 %v263
        %v1673 = vpop.f32.mrb[0].mxu0
        %v1674 = vadd.f32 %v1604, %v1673
        %v1675 = vpop.f32.mrb[0].mxu0
        %1676 = vdwg.mxu0
        %1677 = vmatprep.subr.mxu0 %v462
        %1678 = vmatpush1.xpose.msra.mxu0 %v461
        %1679 = vmatprep.subr.mxu0 0.0
        %1680 = vmatpush1.xpose.msra.mxu0 0.0
        %1681 = vmatprep.subr.mxu0 0.0
        %1682 = vmatpush1.xpose.msra.mxu0 0.0
        %1683 = vmatprep.subr.mxu0 0.0
        %1684 = vmatpush1.xpose.msra.mxu0 0.0
        %1685 = vmatprep.subr.mxu0 0.0
        %1686 = vmatpush1.xpose.msra.mxu0 0.0
        %1687 = vmatprep.subr.mxu0 0.0
        %1688 = vmatpush1.xpose.msra.mxu0 0.0
        %1689 = vmatprep.subr.mxu0 0.0
        %1690 = vmatpush1.xpose.msra.mxu0 0.0
        %1691 = vmatprep.subr.mxu0 0.0
        %1692 = vmatpush1.xpose.msra.mxu0 0.0
        %1693 = vmatprep.subr.mxu0 0.0
        %1694 = vmatpush1.xpose.msra.mxu0 0.0
        %1695 = vmatprep.subr.mxu0 0.0
        %1696 = vmatpush1.xpose.msra.mxu0 0.0
        %1697 = vmatprep.subr.mxu0 0.0
        %1698 = vmatpush1.xpose.msra.mxu0 0.0
        %1699 = vmatprep.subr.mxu0 0.0
        %1700 = vmatpush1.xpose.msra.mxu0 0.0
        %1701 = vmatprep.subr.mxu0 0.0
        %1702 = vmatpush1.xpose.msra.mxu0 0.0
        %1703 = vmatprep.subr.mxu0 0.0
        %1704 = vmatpush1.xpose.msra.mxu0 0.0
        %1705 = vmatprep.subr.mxu0 0.0
        %1706 = vmatpush1.xpose.msra.mxu0 0.0
        %1707 = vmatprep.subr.mxu0 0.0
        %1708 = vmatpush1.xpose.msra.mxu0 0.0
        %1709 = vmatprep.subr.mxu0 0.0
        %1710 = vmatpush1.xpose.msra.mxu0 0.0
        %1711 = vmatprep.subr.mxu0 0.0
        %1712 = vmatpush1.xpose.msra.mxu0 0.0
        %1713 = vmatprep.subr.mxu0 0.0
        %1714 = vmatpush1.xpose.msra.mxu0 0.0
        %1715 = vmatprep.subr.mxu0 0.0
        %1716 = vmatpush1.xpose.msra.mxu0 0.0
        %1717 = vmatprep.subr.mxu0 0.0
        %1718 = vmatpush1.xpose.msra.mxu0 0.0
        %1719 = vmatprep.subr.mxu0 0.0
        %1720 = vmatpush1.xpose.msra.mxu0 0.0
        %1721 = vmatprep.subr.mxu0 0.0
        %1722 = vmatpush1.xpose.msra.mxu0 0.0
        %1723 = vmatprep.subr.mxu0 0.0
        %1724 = vmatpush1.xpose.msra.mxu0 0.0
        %1725 = vmatprep.subr.mxu0 0.0
        %1726 = vmatpush1.xpose.msra.mxu0 0.0
        %1727 = vmatprep.subr.mxu0 0.0
        %1728 = vmatpush1.xpose.msra.mxu0 0.0
        %1729 = vmatprep.subr.mxu0 0.0
        %1730 = vmatpush1.xpose.msra.mxu0 0.0
        %1731 = vmatprep.subr.mxu0 0.0
        %1732 = vmatpush1.xpose.msra.mxu0 0.0
        %1733 = vmatprep.subr.mxu0 0.0
        %1734 = vmatpush1.xpose.msra.mxu0 0.0
        %1735 = vmatprep.subr.mxu0 0.0
        %1736 = vmatpush1.xpose.msra.mxu0 0.0
        %1737 = vmatprep.subr.mxu0 0.0
        %1738 = vmatpush1.xpose.msra.mxu0 0.0
        %1739 = vmatprep.subr.mxu0 0.0
        %1740 = vmatpush1.xpose.msra.mxu0 0.0
        %1741 = vmatprep.mubr.f32.mxu0 %v266
        %1742 = vmatmul.mubr.f32.gmra.mrb[0].mxu0 %v265
        %v1743 = vpop.f32.mrb[0].mxu0
        %v1744 = vadd.f32 %v1674, %v1743
        %v1745 = vpop.f32.mrb[0].mxu0
        %1746 = vdwg.mxu0
        %1747 = vmatprep.subr.mxu0 %v464
        %1748 = vmatpush1.xpose.msra.mxu0 %v463
        %1749 = vmatprep.subr.mxu0 0.0
        %1750 = vmatpush1.xpose.msra.mxu0 0.0
        %1751 = vmatprep.subr.mxu0 0.0
        %1752 = vmatpush1.xpose.msra.mxu0 0.0
        %1753 = vmatprep.subr.mxu0 0.0
        %1754 = vmatpush1.xpose.msra.mxu0 0.0
        %1755 = vmatprep.subr.mxu0 0.0
        %1756 = vmatpush1.xpose.msra.mxu0 0.0
        %1757 = vmatprep.subr.mxu0 0.0
        %1758 = vmatpush1.xpose.msra.mxu0 0.0
        %1759 = vmatprep.subr.mxu0 0.0
        %1760 = vmatpush1.xpose.msra.mxu0 0.0
        %1761 = vmatprep.subr.mxu0 0.0
        %1762 = vmatpush1.xpose.msra.mxu0 0.0
        %1763 = vmatprep.subr.mxu0 0.0
        %1764 = vmatpush1.xpose.msra.mxu0 0.0
        %1765 = vmatprep.subr.mxu0 0.0
        %1766 = vmatpush1.xpose.msra.mxu0 0.0
        %1767 = vmatprep.subr.mxu0 0.0
        %1768 = vmatpush1.xpose.msra.mxu0 0.0
        %1769 = vmatprep.subr.mxu0 0.0
        %1770 = vmatpush1.xpose.msra.mxu0 0.0
        %1771 = vmatprep.subr.mxu0 0.0
        %1772 = vmatpush1.xpose.msra.mxu0 0.0
        %1773 = vmatprep.subr.mxu0 0.0
        %1774 = vmatpush1.xpose.msra.mxu0 0.0
        %1775 = vmatprep.subr.mxu0 0.0
        %1776 = vmatpush1.xpose.msra.mxu0 0.0
        %1777 = vmatprep.subr.mxu0 0.0
        %1778 = vmatpush1.xpose.msra.mxu0 0.0
        %1779 = vmatprep.subr.mxu0 0.0
        %1780 = vmatpush1.xpose.msra.mxu0 0.0
        %1781 = vmatprep.subr.mxu0 0.0
        %1782 = vmatpush1.xpose.msra.mxu0 0.0
        %1783 = vmatprep.subr.mxu0 0.0
        %1784 = vmatpush1.xpose.msra.mxu0 0.0
        %1785 = vmatprep.subr.mxu0 0.0
        %1786 = vmatpush1.xpose.msra.mxu0 0.0
        %1787 = vmatprep.subr.mxu0 0.0
        %1788 = vmatpush1.xpose.msra.mxu0 0.0
        %1789 = vmatprep.subr.mxu0 0.0
        %1790 = vmatpush1.xpose.msra.mxu0 0.0
        %1791 = vmatprep.subr.mxu0 0.0
        %1792 = vmatpush1.xpose.msra.mxu0 0.0
        %1793 = vmatprep.subr.mxu0 0.0
        %1794 = vmatpush1.xpose.msra.mxu0 0.0
        %1795 = vmatprep.subr.mxu0 0.0
        %1796 = vmatpush1.xpose.msra.mxu0 0.0
        %1797 = vmatprep.subr.mxu0 0.0
        %1798 = vmatpush1.xpose.msra.mxu0 0.0
        %1799 = vmatprep.subr.mxu0 0.0
        %1800 = vmatpush1.xpose.msra.mxu0 0.0
        %1801 = vmatprep.subr.mxu0 0.0
        %1802 = vmatpush1.xpose.msra.mxu0 0.0
        %1803 = vmatprep.subr.mxu0 0.0
        %1804 = vmatpush1.xpose.msra.mxu0 0.0
        %1805 = vmatprep.subr.mxu0 0.0
        %1806 = vmatpush1.xpose.msra.mxu0 0.0
        %1807 = vmatprep.subr.mxu0 0.0
        %1808 = vmatpush1.xpose.msra.mxu0 0.0
        %1809 = vmatprep.subr.mxu0 0.0
        %1810 = vmatpush1.xpose.msra.mxu0 0.0
        %1811 = vmatprep.mubr.f32.mxu0 %v268
        %1812 = vmatmul.mubr.f32.gmra.mrb[0].mxu0 %v267
        %v1813 = vpop.f32.mrb[0].mxu0
        %v1814 = vadd.f32 %v1744, %v1813
        %v1815 = vpop.f32.mrb[0].mxu0
        %1816 = vdwg.mxu0
        %1817 = vmatprep.subr.mxu0 %v466
        %1818 = vmatpush1.xpose.msra.mxu0 %v465
        %1819 = vmatprep.subr.mxu0 0.0
        %1820 = vmatpush1.xpose.msra.mxu0 0.0
        %1821 = vmatprep.subr.mxu0 0.0
        %1822 = vmatpush1.xpose.msra.mxu0 0.0
        %1823 = vmatprep.subr.mxu0 0.0
        %1824 = vmatpush1.xpose.msra.mxu0 0.0
        %1825 = vmatprep.subr.mxu0 0.0
        %1826 = vmatpush1.xpose.msra.mxu0 0.0
        %1827 = vmatprep.subr.mxu0 0.0
        %1828 = vmatpush1.xpose.msra.mxu0 0.0
        %1829 = vmatprep.subr.mxu0 0.0
        %1830 = vmatpush1.xpose.msra.mxu0 0.0
        %1831 = vmatprep.subr.mxu0 0.0
        %1832 = vmatpush1.xpose.msra.mxu0 0.0
        %1833 = vmatprep.subr.mxu0 0.0
        %1834 = vmatpush1.xpose.msra.mxu0 0.0
        %1835 = vmatprep.subr.mxu0 0.0
        %1836 = vmatpush1.xpose.msra.mxu0 0.0
        %1837 = vmatprep.subr.mxu0 0.0
        %1838 = vmatpush1.xpose.msra.mxu0 0.0
        %1839 = vmatprep.subr.mxu0 0.0
        %1840 = vmatpush1.xpose.msra.mxu0 0.0
        %1841 = vmatprep.subr.mxu0 0.0
        %1842 = vmatpush1.xpose.msra.mxu0 0.0
        %1843 = vmatprep.subr.mxu0 0.0
        %1844 = vmatpush1.xpose.msra.mxu0 0.0
        %1845 = vmatprep.subr.mxu0 0.0
        %1846 = vmatpush1.xpose.msra.mxu0 0.0
        %1847 = vmatprep.subr.mxu0 0.0
        %1848 = vmatpush1.xpose.msra.mxu0 0.0
        %1849 = vmatprep.subr.mxu0 0.0
        %1850 = vmatpush1.xpose.msra.mxu0 0.0
        %1851 = vmatprep.subr.mxu0 0.0
        %1852 = vmatpush1.xpose.msra.mxu0 0.0
        %1853 = vmatprep.subr.mxu0 0.0
        %1854 = vmatpush1.xpose.msra.mxu0 0.0
        %1855 = vmatprep.subr.mxu0 0.0
        %1856 = vmatpush1.xpose.msra.mxu0 0.0
        %1857 = vmatprep.subr.mxu0 0.0
        %1858 = vmatpush1.xpose.msra.mxu0 0.0
        %1859 = vmatprep.subr.mxu0 0.0
        %1860 = vmatpush1.xpose.msra.mxu0 0.0
        %1861 = vmatprep.subr.mxu0 0.0
        %1862 = vmatpush1.xpose.msra.mxu0 0.0
        %1863 = vmatprep.subr.mxu0 0.0
        %1864 = vmatpush1.xpose.msra.mxu0 0.0
        %1865 = vmatprep.subr.mxu0 0.0
        %1866 = vmatpush1.xpose.msra.mxu0 0.0
        %1867 = vmatprep.subr.mxu0 0.0
        %1868 = vmatpush1.xpose.msra.mxu0 0.0
        %1869 = vmatprep.subr.mxu0 0.0
        %1870 = vmatpush1.xpose.msra.mxu0 0.0
        %1871 = vmatprep.subr.mxu0 0.0
        %1872 = vmatpush1.xpose.msra.mxu0 0.0
        %1873 = vmatprep.subr.mxu0 0.0
        %1874 = vmatpush1.xpose.msra.mxu0 0.0
        %1875 = vmatprep.subr.mxu0 0.0
        %1876 = vmatpush1.xpose.msra.mxu0 0.0
        %1877 = vmatprep.subr.mxu0 0.0
        %1878 = vmatpush1.xpose.msra.mxu0 0.0
        %1879 = vmatprep.subr.mxu0 0.0
        %1880 = vmatpush1.xpose.msra.mxu0 0.0
        %1881 = vmatprep.mubr.f32.mxu0 %v270
        %1882 = vmatmul.mubr.f32.gmra.mrb[0].mxu0 %v269
        %v1883 = vpop.f32.mrb[0].mxu0
        %v1884 = vadd.f32 %v1814, %v1883
        %v1885 = vpop.f32.mrb[0].mxu0
        %1886 = vdwg.mxu0
        %1887 = vmatprep.subr.mxu0 %v468
        %1888 = vmatpush1.xpose.msra.mxu0 %v467
        %1889 = vmatprep.subr.mxu0 0.0
        %1890 = vmatpush1.xpose.msra.mxu0 0.0
        %1891 = vmatprep.subr.mxu0 0.0
        %1892 = vmatpush1.xpose.msra.mxu0 0.0
        %1893 = vmatprep.subr.mxu0 0.0
        %1894 = vmatpush1.xpose.msra.mxu0 0.0
        %1895 = vmatprep.subr.mxu0 0.0
        %1896 = vmatpush1.xpose.msra.mxu0 0.0
        %1897 = vmatprep.subr.mxu0 0.0
        %1898 = vmatpush1.xpose.msra.mxu0 0.0
        %1899 = vmatprep.subr.mxu0 0.0
        %1900 = vmatpush1.xpose.msra.mxu0 0.0
        %1901 = vmatprep.subr.mxu0 0.0
        %1902 = vmatpush1.xpose.msra.mxu0 0.0
        %1903 = vmatprep.subr.mxu0 0.0
        %1904 = vmatpush1.xpose.msra.mxu0 0.0
        %1905 = vmatprep.subr.mxu0 0.0
        %1906 = vmatpush1.xpose.msra.mxu0 0.0
        %1907 = vmatprep.subr.mxu0 0.0
        %1908 = vmatpush1.xpose.msra.mxu0 0.0
        %1909 = vmatprep.subr.mxu0 0.0
        %1910 = vmatpush1.xpose.msra.mxu0 0.0
        %1911 = vmatprep.subr.mxu0 0.0
        %1912 = vmatpush1.xpose.msra.mxu0 0.0
        %1913 = vmatprep.subr.mxu0 0.0
        %1914 = vmatpush1.xpose.msra.mxu0 0.0
        %1915 = vmatprep.subr.mxu0 0.0
        %1916 = vmatpush1.xpose.msra.mxu0 0.0
        %1917 = vmatprep.subr.mxu0 0.0
        %1918 = vmatpush1.xpose.msra.mxu0 0.0
        %1919 = vmatprep.subr.mxu0 0.0
        %1920 = vmatpush1.xpose.msra.mxu0 0.0
        %1921 = vmatprep.subr.mxu0 0.0
        %1922 = vmatpush1.xpose.msra.mxu0 0.0
        %1923 = vmatprep.subr.mxu0 0.0
        %1924 = vmatpush1.xpose.msra.mxu0 0.0
        %1925 = vmatprep.subr.mxu0 0.0
        %1926 = vmatpush1.xpose.msra.mxu0 0.0
        %1927 = vmatprep.subr.mxu0 0.0
        %1928 = vmatpush1.xpose.msra.mxu0 0.0
        %1929 = vmatprep.subr.mxu0 0.0
        %1930 = vmatpush1.xpose.msra.mxu0 0.0
        %1931 = vmatprep.subr.mxu0 0.0
        %1932 = vmatpush1.xpose.msra.mxu0 0.0
        %1933 = vmatprep.subr.mxu0 0.0
        %1934 = vmatpush1.xpose.msra.mxu0 0.0
        %1935 = vmatprep.subr.mxu0 0.0
        %1936 = vmatpush1.xpose.msra.mxu0 0.0
        %1937 = vmatprep.subr.mxu0 0.0
        %1938 = vmatpush1.xpose.msra.mxu0 0.0
        %1939 = vmatprep.subr.mxu0 0.0
        %1940 = vmatpush1.xpose.msra.mxu0 0.0
        %1941 = vmatprep.subr.mxu0 0.0
        %1942 = vmatpush1.xpose.msra.mxu0 0.0
        %1943 = vmatprep.subr.mxu0 0.0
        %1944 = vmatpush1.xpose.msra.mxu0 0.0
        %1945 = vmatprep.subr.mxu0 0.0
        %1946 = vmatpush1.xpose.msra.mxu0 0.0
        %1947 = vmatprep.subr.mxu0 0.0
        %1948 = vmatpush1.xpose.msra.mxu0 0.0
        %1949 = vmatprep.subr.mxu0 0.0
        %1950 = vmatpush1.xpose.msra.mxu0 0.0
        %1951 = vmatprep.mubr.f32.mxu0 %v272
        %1952 = vmatmul.mubr.f32.gmra.mrb[0].mxu0 %v271
        %v1953 = vpop.f32.mrb[0].mxu0
        %v1954 = vadd.f32 %v1884, %v1953
        %v1955 = vpop.f32.mrb[0].mxu0
        %1956 = vdwg.mxu0
        %1957 = vmatprep.subr.mxu0 %v470
        %1958 = vmatpush1.xpose.msra.mxu0 %v469
        %1959 = vmatprep.subr.mxu0 0.0
        %1960 = vmatpush1.xpose.msra.mxu0 0.0
        %1961 = vmatprep.subr.mxu0 0.0
        %1962 = vmatpush1.xpose.msra.mxu0 0.0
        %1963 = vmatprep.subr.mxu0 0.0
        %1964 = vmatpush1.xpose.msra.mxu0 0.0
        %1965 = vmatprep.subr.mxu0 0.0
        %1966 = vmatpush1.xpose.msra.mxu0 0.0
        %1967 = vmatprep.subr.mxu0 0.0
        %1968 = vmatpush1.xpose.msra.mxu0 0.0
        %1969 = vmatprep.subr.mxu0 0.0
        %1970 = vmatpush1.xpose.msra.mxu0 0.0
        %1971 = vmatprep.subr.mxu0 0.0
        %1972 = vmatpush1.xpose.msra.mxu0 0.0
        %1973 = vmatprep.subr.mxu0 0.0
        %1974 = vmatpush1.xpose.msra.mxu0 0.0
        %1975 = vmatprep.subr.mxu0 0.0
        %1976 = vmatpush1.xpose.msra.mxu0 0.0
        %1977 = vmatprep.subr.mxu0 0.0
        %1978 = vmatpush1.xpose.msra.mxu0 0.0
        %1979 = vmatprep.subr.mxu0 0.0
        %1980 = vmatpush1.xpose.msra.mxu0 0.0
        %1981 = vmatprep.subr.mxu0 0.0
        %1982 = vmatpush1.xpose.msra.mxu0 0.0
        %1983 = vmatprep.subr.mxu0 0.0
        %1984 = vmatpush1.xpose.msra.mxu0 0.0
        %1985 = vmatprep.subr.mxu0 0.0
        %1986 = vmatpush1.xpose.msra.mxu0 0.0
        %1987 = vmatprep.subr.mxu0 0.0
        %1988 = vmatpush1.xpose.msra.mxu0 0.0
        %1989 = vmatprep.subr.mxu0 0.0
        %1990 = vmatpush1.xpose.msra.mxu0 0.0
        %1991 = vmatprep.subr.mxu0 0.0
        %1992 = vmatpush1.xpose.msra.mxu0 0.0
        %1993 = vmatprep.subr.mxu0 0.0
        %1994 = vmatpush1.xpose.msra.mxu0 0.0
        %1995 = vmatprep.subr.mxu0 0.0
        %1996 = vmatpush1.xpose.msra.mxu0 0.0
        %1997 = vmatprep.subr.mxu0 0.0
        %1998 = vmatpush1.xpose.msra.mxu0 0.0
        %1999 = vmatprep.subr.mxu0 0.0
        %2000 = vmatpush1.xpose.msra.mxu0 0.0
        %2001 = vmatprep.subr.mxu0 0.0
        %2002 = vmatpush1.xpose.msra.mxu0 0.0
        %2003 = vmatprep.subr.mxu0 0.0
        %2004 = vmatpush1.xpose.msra.mxu0 0.0
        %2005 = vmatprep.subr.mxu0 0.0
        %2006 = vmatpush1.xpose.msra.mxu0 0.0
        %2007 = vmatprep.subr.mxu0 0.0
        %2008 = vmatpush1.xpose.msra.mxu0 0.0
        %2009 = vmatprep.subr.mxu0 0.0
        %2010 = vmatpush1.xpose.msra.mxu0 0.0
        %2011 = vmatprep.subr.mxu0 0.0
        %2012 = vmatpush1.xpose.msra.mxu0 0.0
        %2013 = vmatprep.subr.mxu0 0.0
        %2014 = vmatpush1.xpose.msra.mxu0 0.0
        %2015 = vmatprep.subr.mxu0 0.0
        %2016 = vmatpush1.xpose.msra.mxu0 0.0
        %2017 = vmatprep.subr.mxu0 0.0
        %2018 = vmatpush1.xpose.msra.mxu0 0.0
        %2019 = vmatprep.subr.mxu0 0.0
        %2020 = vmatpush1.xpose.msra.mxu0 0.0
        %2021 = vmatprep.mubr.f32.mxu0 %v274
        %2022 = vmatmul.mubr.f32.gmra.mrb[0].mxu0 %v273
        %v2023 = vpop.f32.mrb[0].mxu0
        %v2024 = vadd.f32 %v1954, %v2023
        %v2025 = vpop.f32.mrb[0].mxu0
        %2026 = vdwg.mxu0
        %2027 = vmatprep.subr.mxu0 %v472
        %2028 = vmatpush1.xpose.msra.mxu0 %v471
        %2029 = vmatprep.subr.mxu0 0.0
        %2030 = vmatpush1.xpose.msra.mxu0 0.0
        %2031 = vmatprep.subr.mxu0 0.0
        %2032 = vmatpush1.xpose.msra.mxu0 0.0
        %2033 = vmatprep.subr.mxu0 0.0
        %2034 = vmatpush1.xpose.msra.mxu0 0.0
        %2035 = vmatprep.subr.mxu0 0.0
        %2036 = vmatpush1.xpose.msra.mxu0 0.0
        %2037 = vmatprep.subr.mxu0 0.0
        %2038 = vmatpush1.xpose.msra.mxu0 0.0
        %2039 = vmatprep.subr.mxu0 0.0
        %2040 = vmatpush1.xpose.msra.mxu0 0.0
        %2041 = vmatprep.subr.mxu0 0.0
        %2042 = vmatpush1.xpose.msra.mxu0 0.0
        %2043 = vmatprep.subr.mxu0 0.0
        %2044 = vmatpush1.xpose.msra.mxu0 0.0
        %2045 = vmatprep.subr.mxu0 0.0
        %2046 = vmatpush1.xpose.msra.mxu0 0.0
        %2047 = vmatprep.subr.mxu0 0.0
        %2048 = vmatpush1.xpose.msra.mxu0 0.0
        %2049 = vmatprep.subr.mxu0 0.0
        %2050 = vmatpush1.xpose.msra.mxu0 0.0
        %2051 = vmatprep.subr.mxu0 0.0
        %2052 = vmatpush1.xpose.msra.mxu0 0.0
        %2053 = vmatprep.subr.mxu0 0.0
        %2054 = vmatpush1.xpose.msra.mxu0 0.0
        %2055 = vmatprep.subr.mxu0 0.0
        %2056 = vmatpush1.xpose.msra.mxu0 0.0
        %2057 = vmatprep.subr.mxu0 0.0
        %2058 = vmatpush1.xpose.msra.mxu0 0.0
        %2059 = vmatprep.subr.mxu0 0.0
        %2060 = vmatpush1.xpose.msra.mxu0 0.0
        %2061 = vmatprep.subr.mxu0 0.0
        %2062 = vmatpush1.xpose.msra.mxu0 0.0
        %2063 = vmatprep.subr.mxu0 0.0
        %2064 = vmatpush1.xpose.msra.mxu0 0.0
        %2065 = vmatprep.subr.mxu0 0.0
        %2066 = vmatpush1.xpose.msra.mxu0 0.0
        %2067 = vmatprep.subr.mxu0 0.0
        %2068 = vmatpush1.xpose.msra.mxu0 0.0
        %2069 = vmatprep.subr.mxu0 0.0
        %2070 = vmatpush1.xpose.msra.mxu0 0.0
        %2071 = vmatprep.subr.mxu0 0.0
        %2072 = vmatpush1.xpose.msra.mxu0 0.0
        %2073 = vmatprep.subr.mxu0 0.0
        %2074 = vmatpush1.xpose.msra.mxu0 0.0
        %2075 = vmatprep.subr.mxu0 0.0
        %2076 = vmatpush1.xpose.msra.mxu0 0.0
        %2077 = vmatprep.subr.mxu0 0.0
        %2078 = vmatpush1.xpose.msra.mxu0 0.0
        %2079 = vmatprep.subr.mxu0 0.0
        %2080 = vmatpush1.xpose.msra.mxu0 0.0
        %2081 = vmatprep.subr.mxu0 0.0
        %2082 = vmatpush1.xpose.msra.mxu0 0.0
        %2083 = vmatprep.subr.mxu0 0.0
        %2084 = vmatpush1.xpose.msra.mxu0 0.0
        %2085 = vmatprep.subr.mxu0 0.0
        %2086 = vmatpush1.xpose.msra.mxu0 0.0
        %2087 = vmatprep.subr.mxu0 0.0
        %2088 = vmatpush1.xpose.msra.mxu0 0.0
        %2089 = vmatprep.subr.mxu0 0.0
        %2090 = vmatpush1.xpose.msra.mxu0 0.0
        %2091 = vmatprep.mubr.f32.mxu0 %v276
        %2092 = vmatmul.mubr.f32.gmra.mrb[0].mxu0 %v275
        %v2093 = vpop.f32.mrb[0].mxu0
        %v2094 = vadd.f32 %v2024, %v2093
        %v2095 = vpop.f32.mrb[0].mxu0
        %2096 = vdwg.mxu0
        %2097 = vmatprep.subr.mxu0 %v474
        %2098 = vmatpush1.xpose.msra.mxu0 %v473
        %2099 = vmatprep.subr.mxu0 0.0
        %2100 = vmatpush1.xpose.msra.mxu0 0.0
        %2101 = vmatprep.subr.mxu0 0.0
        %2102 = vmatpush1.xpose.msra.mxu0 0.0
        %2103 = vmatprep.subr.mxu0 0.0
        %2104 = vmatpush1.xpose.msra.mxu0 0.0
        %2105 = vmatprep.subr.mxu0 0.0
        %2106 = vmatpush1.xpose.msra.mxu0 0.0
        %2107 = vmatprep.subr.mxu0 0.0
        %2108 = vmatpush1.xpose.msra.mxu0 0.0
        %2109 = vmatprep.subr.mxu0 0.0
        %2110 = vmatpush1.xpose.msra.mxu0 0.0
        %2111 = vmatprep.subr.mxu0 0.0
        %2112 = vmatpush1.xpose.msra.mxu0 0.0
        %2113 = vmatprep.subr.mxu0 0.0
        %2114 = vmatpush1.xpose.msra.mxu0 0.0
        %2115 = vmatprep.subr.mxu0 0.0
        %2116 = vmatpush1.xpose.msra.mxu0 0.0
        %2117 = vmatprep.subr.mxu0 0.0
        %2118 = vmatpush1.xpose.msra.mxu0 0.0
        %2119 = vmatprep.subr.mxu0 0.0
        %2120 = vmatpush1.xpose.msra.mxu0 0.0
        %2121 = vmatprep.subr.mxu0 0.0
        %2122 = vmatpush1.xpose.msra.mxu0 0.0
        %2123 = vmatprep.subr.mxu0 0.0
        %2124 = vmatpush1.xpose.msra.mxu0 0.0
        %2125 = vmatprep.subr.mxu0 0.0
        %2126 = vmatpush1.xpose.msra.mxu0 0.0
        %2127 = vmatprep.subr.mxu0 0.0
        %2128 = vmatpush1.xpose.msra.mxu0 0.0
        %2129 = vmatprep.subr.mxu0 0.0
        %2130 = vmatpush1.xpose.msra.mxu0 0.0
        %2131 = vmatprep.subr.mxu0 0.0
        %2132 = vmatpush1.xpose.msra.mxu0 0.0
        %2133 = vmatprep.subr.mxu0 0.0
        %2134 = vmatpush1.xpose.msra.mxu0 0.0
        %2135 = vmatprep.subr.mxu0 0.0
        %2136 = vmatpush1.xpose.msra.mxu0 0.0
        %2137 = vmatprep.subr.mxu0 0.0
        %2138 = vmatpush1.xpose.msra.mxu0 0.0
        %2139 = vmatprep.subr.mxu0 0.0
        %2140 = vmatpush1.xpose.msra.mxu0 0.0
        %2141 = vmatprep.subr.mxu0 0.0
        %2142 = vmatpush1.xpose.msra.mxu0 0.0
        %2143 = vmatprep.subr.mxu0 0.0
        %2144 = vmatpush1.xpose.msra.mxu0 0.0
        %2145 = vmatprep.subr.mxu0 0.0
        %2146 = vmatpush1.xpose.msra.mxu0 0.0
        %2147 = vmatprep.subr.mxu0 0.0
        %2148 = vmatpush1.xpose.msra.mxu0 0.0
        %2149 = vmatprep.subr.mxu0 0.0
        %2150 = vmatpush1.xpose.msra.mxu0 0.0
        %2151 = vmatprep.subr.mxu0 0.0
        %2152 = vmatpush1.xpose.msra.mxu0 0.0
        %2153 = vmatprep.subr.mxu0 0.0
        %2154 = vmatpush1.xpose.msra.mxu0 0.0
        %2155 = vmatprep.subr.mxu0 0.0
        %2156 = vmatpush1.xpose.msra.mxu0 0.0
        %2157 = vmatprep.subr.mxu0 0.0
        %2158 = vmatpush1.xpose.msra.mxu0 0.0
        %2159 = vmatprep.subr.mxu0 0.0
        %2160 = vmatpush1.xpose.msra.mxu0 0.0
        %2161 = vmatprep.mubr.f32.mxu0 %v278
        %2162 = vmatmul.mubr.f32.gmra.mrb[0].mxu0 %v277
        %v2163 = vpop.f32.mrb[0].mxu0
        %v2164 = vadd.f32 %v2094, %v2163
        %v2165 = vpop.f32.mrb[0].mxu0
        %2166 = vdwg.mxu0
        %2167 = vmatprep.subr.mxu0 %v476
        %2168 = vmatpush1.xpose.msra.mxu0 %v475
        %2169 = vmatprep.subr.mxu0 0.0
        %2170 = vmatpush1.xpose.msra.mxu0 0.0
        %2171 = vmatprep.subr.mxu0 0.0
        %2172 = vmatpush1.xpose.msra.mxu0 0.0
        %2173 = vmatprep.subr.mxu0 0.0
        %2174 = vmatpush1.xpose.msra.mxu0 0.0
        %2175 = vmatprep.subr.mxu0 0.0
        %2176 = vmatpush1.xpose.msra.mxu0 0.0
        %2177 = vmatprep.subr.mxu0 0.0
        %2178 = vmatpush1.xpose.msra.mxu0 0.0
        %2179 = vmatprep.subr.mxu0 0.0
        %2180 = vmatpush1.xpose.msra.mxu0 0.0
        %2181 = vmatprep.subr.mxu0 0.0
        %2182 = vmatpush1.xpose.msra.mxu0 0.0
        %2183 = vmatprep.subr.mxu0 0.0
        %2184 = vmatpush1.xpose.msra.mxu0 0.0
        %2185 = vmatprep.subr.mxu0 0.0
        %2186 = vmatpush1.xpose.msra.mxu0 0.0
        %2187 = vmatprep.subr.mxu0 0.0
        %2188 = vmatpush1.xpose.msra.mxu0 0.0
        %2189 = vmatprep.subr.mxu0 0.0
        %2190 = vmatpush1.xpose.msra.mxu0 0.0
        %2191 = vmatprep.subr.mxu0 0.0
        %2192 = vmatpush1.xpose.msra.mxu0 0.0
        %2193 = vmatprep.subr.mxu0 0.0
        %2194 = vmatpush1.xpose.msra.mxu0 0.0
        %2195 = vmatprep.subr.mxu0 0.0
        %2196 = vmatpush1.xpose.msra.mxu0 0.0
        %2197 = vmatprep.subr.mxu0 0.0
        %2198 = vmatpush1.xpose.msra.mxu0 0.0
        %2199 = vmatprep.subr.mxu0 0.0
        %2200 = vmatpush1.xpose.msra.mxu0 0.0
        %2201 = vmatprep.subr.mxu0 0.0
        %2202 = vmatpush1.xpose.msra.mxu0 0.0
        %2203 = vmatprep.subr.mxu0 0.0
        %2204 = vmatpush1.xpose.msra.mxu0 0.0
        %2205 = vmatprep.subr.mxu0 0.0
        %2206 = vmatpush1.xpose.msra.mxu0 0.0
        %2207 = vmatprep.subr.mxu0 0.0
        %2208 = vmatpush1.xpose.msra.mxu0 0.0
        %2209 = vmatprep.subr.mxu0 0.0
        %2210 = vmatpush1.xpose.msra.mxu0 0.0
        %2211 = vmatprep.subr.mxu0 0.0
        %2212 = vmatpush1.xpose.msra.mxu0 0.0
        %2213 = vmatprep.subr.mxu0 0.0
        %2214 = vmatpush1.xpose.msra.mxu0 0.0
        %2215 = vmatprep.subr.mxu0 0.0
        %2216 = vmatpush1.xpose.msra.mxu0 0.0
        %2217 = vmatprep.subr.mxu0 0.0
        %2218 = vmatpush1.xpose.msra.mxu0 0.0
        %2219 = vmatprep.subr.mxu0 0.0
        %2220 = vmatpush1.xpose.msra.mxu0 0.0
        %2221 = vmatprep.subr.mxu0 0.0
        %2222 = vmatpush1.xpose.msra.mxu0 0.0
        %2223 = vmatprep.subr.mxu0 0.0
        %2224 = vmatpush1.xpose.msra.mxu0 0.0
        %2225 = vmatprep.subr.mxu0 0.0
        %2226 = vmatpush1.xpose.msra.mxu0 0.0
        %2227 = vmatprep.subr.mxu0 0.0
        %2228 = vmatpush1.xpose.msra.mxu0 0.0
        %2229 = vmatprep.subr.mxu0 0.0
        %2230 = vmatpush1.xpose.msra.mxu0 0.0
        %2231 = vmatprep.mubr.f32.mxu0 %v280
        %2232 = vmatmul.mubr.f32.gmra.mrb[0].mxu0 %v279
        %v2233 = vpop.f32.mrb[0].mxu0
        %v2234 = vadd.f32 %v2164, %v2233
        %v2235 = vpop.f32.mrb[0].mxu0
        %2236 = vdwg.mxu0
        %2237 = vmatprep.subr.mxu0 %v478
        %2238 = vmatpush1.xpose.msra.mxu0 %v477
        %2239 = vmatprep.subr.mxu0 0.0
        %2240 = vmatpush1.xpose.msra.mxu0 0.0
        %2241 = vmatprep.subr.mxu0 0.0
        %2242 = vmatpush1.xpose.msra.mxu0 0.0
        %2243 = vmatprep.subr.mxu0 0.0
        %2244 = vmatpush1.xpose.msra.mxu0 0.0
        %2245 = vmatprep.subr.mxu0 0.0
        %2246 = vmatpush1.xpose.msra.mxu0 0.0
        %2247 = vmatprep.subr.mxu0 0.0
        %2248 = vmatpush1.xpose.msra.mxu0 0.0
        %2249 = vmatprep.subr.mxu0 0.0
        %2250 = vmatpush1.xpose.msra.mxu0 0.0
        %2251 = vmatprep.subr.mxu0 0.0
        %2252 = vmatpush1.xpose.msra.mxu0 0.0
        %2253 = vmatprep.subr.mxu0 0.0
        %2254 = vmatpush1.xpose.msra.mxu0 0.0
        %2255 = vmatprep.subr.mxu0 0.0
        %2256 = vmatpush1.xpose.msra.mxu0 0.0
        %2257 = vmatprep.subr.mxu0 0.0
        %2258 = vmatpush1.xpose.msra.mxu0 0.0
        %2259 = vmatprep.subr.mxu0 0.0
        %2260 = vmatpush1.xpose.msra.mxu0 0.0
        %2261 = vmatprep.subr.mxu0 0.0
        %2262 = vmatpush1.xpose.msra.mxu0 0.0
        %2263 = vmatprep.subr.mxu0 0.0
        %2264 = vmatpush1.xpose.msra.mxu0 0.0
        %2265 = vmatprep.subr.mxu0 0.0
        %2266 = vmatpush1.xpose.msra.mxu0 0.0
        %2267 = vmatprep.subr.mxu0 0.0
        %2268 = vmatpush1.xpose.msra.mxu0 0.0
        %2269 = vmatprep.subr.mxu0 0.0
        %2270 = vmatpush1.xpose.msra.mxu0 0.0
        %2271 = vmatprep.subr.mxu0 0.0
        %2272 = vmatpush1.xpose.msra.mxu0 0.0
        %2273 = vmatprep.subr.mxu0 0.0
        %2274 = vmatpush1.xpose.msra.mxu0 0.0
        %2275 = vmatprep.subr.mxu0 0.0
        %2276 = vmatpush1.xpose.msra.mxu0 0.0
        %2277 = vmatprep.subr.mxu0 0.0
        %2278 = vmatpush1.xpose.msra.mxu0 0.0
        %2279 = vmatprep.subr.mxu0 0.0
        %2280 = vmatpush1.xpose.msra.mxu0 0.0
        %2281 = vmatprep.subr.mxu0 0.0
        %2282 = vmatpush1.xpose.msra.mxu0 0.0
        %2283 = vmatprep.subr.mxu0 0.0
        %2284 = vmatpush1.xpose.msra.mxu0 0.0
        %2285 = vmatprep.subr.mxu0 0.0
        %2286 = vmatpush1.xpose.msra.mxu0 0.0
        %2287 = vmatprep.subr.mxu0 0.0
        %2288 = vmatpush1.xpose.msra.mxu0 0.0
        %2289 = vmatprep.subr.mxu0 0.0
        %2290 = vmatpush1.xpose.msra.mxu0 0.0
        %2291 = vmatprep.subr.mxu0 0.0
        %2292 = vmatpush1.xpose.msra.mxu0 0.0
        %2293 = vmatprep.subr.mxu0 0.0
        %2294 = vmatpush1.xpose.msra.mxu0 0.0
        %2295 = vmatprep.subr.mxu0 0.0
        %2296 = vmatpush1.xpose.msra.mxu0 0.0
        %2297 = vmatprep.subr.mxu0 0.0
        %2298 = vmatpush1.xpose.msra.mxu0 0.0
        %2299 = vmatprep.subr.mxu0 0.0
        %2300 = vmatpush1.xpose.msra.mxu0 0.0
        %2301 = vmatprep.mubr.f32.mxu0 %v282
        %2302 = vmatmul.mubr.f32.gmra.mrb[0].mxu0 %v281
        %v2303 = vpop.f32.mrb[0].mxu0
        %v2304 = vadd.f32 %v2234, %v2303
        %v2305 = vpop.f32.mrb[0].mxu0
        %2306 = vdwg.mxu0
        %2307 = vmatprep.subr.mxu0 %v480
        %2308 = vmatpush1.xpose.msra.mxu0 %v479
        %2309 = vmatprep.subr.mxu0 0.0
        %2310 = vmatpush1.xpose.msra.mxu0 0.0
        %2311 = vmatprep.subr.mxu0 0.0
        %2312 = vmatpush1.xpose.msra.mxu0 0.0
        %2313 = vmatprep.subr.mxu0 0.0
        %2314 = vmatpush1.xpose.msra.mxu0 0.0
        %2315 = vmatprep.subr.mxu0 0.0
        %2316 = vmatpush1.xpose.msra.mxu0 0.0
        %2317 = vmatprep.subr.mxu0 0.0
        %2318 = vmatpush1.xpose.msra.mxu0 0.0
        %2319 = vmatprep.subr.mxu0 0.0
        %2320 = vmatpush1.xpose.msra.mxu0 0.0
        %2321 = vmatprep.subr.mxu0 0.0
        %2322 = vmatpush1.xpose.msra.mxu0 0.0
        %2323 = vmatprep.subr.mxu0 0.0
        %2324 = vmatpush1.xpose.msra.mxu0 0.0
        %2325 = vmatprep.subr.mxu0 0.0
        %2326 = vmatpush1.xpose.msra.mxu0 0.0
        %2327 = vmatprep.subr.mxu0 0.0
        %2328 = vmatpush1.xpose.msra.mxu0 0.0
        %2329 = vmatprep.subr.mxu0 0.0
        %2330 = vmatpush1.xpose.msra.mxu0 0.0
        %2331 = vmatprep.subr.mxu0 0.0
        %2332 = vmatpush1.xpose.msra.mxu0 0.0
        %2333 = vmatprep.subr.mxu0 0.0
        %2334 = vmatpush1.xpose.msra.mxu0 0.0
        %2335 = vmatprep.subr.mxu0 0.0
        %2336 = vmatpush1.xpose.msra.mxu0 0.0
        %2337 = vmatprep.subr.mxu0 0.0
        %2338 = vmatpush1.xpose.msra.mxu0 0.0
        %2339 = vmatprep.subr.mxu0 0.0
        %2340 = vmatpush1.xpose.msra.mxu0 0.0
        %2341 = vmatprep.subr.mxu0 0.0
        %2342 = vmatpush1.xpose.msra.mxu0 0.0
        %2343 = vmatprep.subr.mxu0 0.0
        %2344 = vmatpush1.xpose.msra.mxu0 0.0
        %2345 = vmatprep.subr.mxu0 0.0
        %2346 = vmatpush1.xpose.msra.mxu0 0.0
        %2347 = vmatprep.subr.mxu0 0.0
        %2348 = vmatpush1.xpose.msra.mxu0 0.0
        %2349 = vmatprep.subr.mxu0 0.0
        %2350 = vmatpush1.xpose.msra.mxu0 0.0
        %2351 = vmatprep.subr.mxu0 0.0
        %2352 = vmatpush1.xpose.msra.mxu0 0.0
        %2353 = vmatprep.subr.mxu0 0.0
        %2354 = vmatpush1.xpose.msra.mxu0 0.0
        %2355 = vmatprep.subr.mxu0 0.0
        %2356 = vmatpush1.xpose.msra.mxu0 0.0
        %2357 = vmatprep.subr.mxu0 0.0
        %2358 = vmatpush1.xpose.msra.mxu0 0.0
        %2359 = vmatprep.subr.mxu0 0.0
        %2360 = vmatpush1.xpose.msra.mxu0 0.0
        %2361 = vmatprep.subr.mxu0 0.0
        %2362 = vmatpush1.xpose.msra.mxu0 0.0
        %2363 = vmatprep.subr.mxu0 0.0
        %2364 = vmatpush1.xpose.msra.mxu0 0.0
        %2365 = vmatprep.subr.mxu0 0.0
        %2366 = vmatpush1.xpose.msra.mxu0 0.0
        %2367 = vmatprep.subr.mxu0 0.0
        %2368 = vmatpush1.xpose.msra.mxu0 0.0
        %2369 = vmatprep.subr.mxu0 0.0
        %2370 = vmatpush1.xpose.msra.mxu0 0.0
        %2371 = vmatprep.mubr.f32.mxu0 %v284
        %2372 = vmatmul.mubr.f32.gmra.mrb[0].mxu0 %v283
        %v2373 = vpop.f32.mrb[0].mxu0
        %v2374 = vadd.f32 %v2304, %v2373
        %v2375 = vpop.f32.mrb[0].mxu0
        %2376 = vdwg.mxu0
        %2377 = vmatprep.subr.mxu0 %v482
        %2378 = vmatpush1.xpose.msra.mxu0 %v481
        %2379 = vmatprep.subr.mxu0 0.0
        %2380 = vmatpush1.xpose.msra.mxu0 0.0
        %2381 = vmatprep.subr.mxu0 0.0
        %2382 = vmatpush1.xpose.msra.mxu0 0.0
        %2383 = vmatprep.subr.mxu0 0.0
        %2384 = vmatpush1.xpose.msra.mxu0 0.0
        %2385 = vmatprep.subr.mxu0 0.0
        %2386 = vmatpush1.xpose.msra.mxu0 0.0
        %2387 = vmatprep.subr.mxu0 0.0
        %2388 = vmatpush1.xpose.msra.mxu0 0.0
        %2389 = vmatprep.subr.mxu0 0.0
        %2390 = vmatpush1.xpose.msra.mxu0 0.0
        %2391 = vmatprep.subr.mxu0 0.0
        %2392 = vmatpush1.xpose.msra.mxu0 0.0
        %2393 = vmatprep.subr.mxu0 0.0
        %2394 = vmatpush1.xpose.msra.mxu0 0.0
        %2395 = vmatprep.subr.mxu0 0.0
        %2396 = vmatpush1.xpose.msra.mxu0 0.0
        %2397 = vmatprep.subr.mxu0 0.0
        %2398 = vmatpush1.xpose.msra.mxu0 0.0
        %2399 = vmatprep.subr.mxu0 0.0
        %2400 = vmatpush1.xpose.msra.mxu0 0.0
        %2401 = vmatprep.subr.mxu0 0.0
        %2402 = vmatpush1.xpose.msra.mxu0 0.0
        %2403 = vmatprep.subr.mxu0 0.0
        %2404 = vmatpush1.xpose.msra.mxu0 0.0
        %2405 = vmatprep.subr.mxu0 0.0
        %2406 = vmatpush1.xpose.msra.mxu0 0.0
        %2407 = vmatprep.subr.mxu0 0.0
        %2408 = vmatpush1.xpose.msra.mxu0 0.0
        %2409 = vmatprep.subr.mxu0 0.0
        %2410 = vmatpush1.xpose.msra.mxu0 0.0
        %2411 = vmatprep.subr.mxu0 0.0
        %2412 = vmatpush1.xpose.msra.mxu0 0.0
        %2413 = vmatprep.subr.mxu0 0.0
        %2414 = vmatpush1.xpose.msra.mxu0 0.0
        %2415 = vmatprep.subr.mxu0 0.0
        %2416 = vmatpush1.xpose.msra.mxu0 0.0
        %2417 = vmatprep.subr.mxu0 0.0
        %2418 = vmatpush1.xpose.msra.mxu0 0.0
        %2419 = vmatprep.subr.mxu0 0.0
        %2420 = vmatpush1.xpose.msra.mxu0 0.0
        %2421 = vmatprep.subr.mxu0 0.0
        %2422 = vmatpush1.xpose.msra.mxu0 0.0
        %2423 = vmatprep.subr.mxu0 0.0
        %2424 = vmatpush1.xpose.msra.mxu0 0.0
        %2425 = vmatprep.subr.mxu0 0.0
        %2426 = vmatpush1.xpose.msra.mxu0 0.0
        %2427 = vmatprep.subr.mxu0 0.0
        %2428 = vmatpush1.xpose.msra.mxu0 0.0
        %2429 = vmatprep.subr.mxu0 0.0
        %2430 = vmatpush1.xpose.msra.mxu0 0.0
        %2431 = vmatprep.subr.mxu0 0.0
        %2432 = vmatpush1.xpose.msra.mxu0 0.0
        %2433 = vmatprep.subr.mxu0 0.0
        %2434 = vmatpush1.xpose.msra.mxu0 0.0
        %2435 = vmatprep.subr.mxu0 0.0
        %2436 = vmatpush1.xpose.msra.mxu0 0.0
        %2437 = vmatprep.subr.mxu0 0.0
        %2438 = vmatpush1.xpose.msra.mxu0 0.0
        %2439 = vmatprep.subr.mxu0 0.0
        %2440 = vmatpush1.xpose.msra.mxu0 0.0
        %2441 = vmatprep.mubr.f32.mxu0 %v286
        %2442 = vmatmul.mubr.f32.gmra.mrb[0].mxu0 %v285
        %v2443 = vpop.f32.mrb[0].mxu0
        %v2444 = vadd.f32 %v2374, %v2443
        %v2445 = vpop.f32.mrb[0].mxu0
        %2446 = vdwg.mxu0
        %2447 = vmatprep.subr.mxu0 %v484
        %2448 = vmatpush1.xpose.msra.mxu0 %v483
        %2449 = vmatprep.subr.mxu0 0.0
        %2450 = vmatpush1.xpose.msra.mxu0 0.0
        %2451 = vmatprep.subr.mxu0 0.0
        %2452 = vmatpush1.xpose.msra.mxu0 0.0
        %2453 = vmatprep.subr.mxu0 0.0
        %2454 = vmatpush1.xpose.msra.mxu0 0.0
        %2455 = vmatprep.subr.mxu0 0.0
        %2456 = vmatpush1.xpose.msra.mxu0 0.0
        %2457 = vmatprep.subr.mxu0 0.0
        %2458 = vmatpush1.xpose.msra.mxu0 0.0
        %2459 = vmatprep.subr.mxu0 0.0
        %2460 = vmatpush1.xpose.msra.mxu0 0.0
        %2461 = vmatprep.subr.mxu0 0.0
        %2462 = vmatpush1.xpose.msra.mxu0 0.0
        %2463 = vmatprep.subr.mxu0 0.0
        %2464 = vmatpush1.xpose.msra.mxu0 0.0
        %2465 = vmatprep.subr.mxu0 0.0
        %2466 = vmatpush1.xpose.msra.mxu0 0.0
        %2467 = vmatprep.subr.mxu0 0.0
        %2468 = vmatpush1.xpose.msra.mxu0 0.0
        %2469 = vmatprep.subr.mxu0 0.0
        %2470 = vmatpush1.xpose.msra.mxu0 0.0
        %2471 = vmatprep.subr.mxu0 0.0
        %2472 = vmatpush1.xpose.msra.mxu0 0.0
        %2473 = vmatprep.subr.mxu0 0.0
        %2474 = vmatpush1.xpose.msra.mxu0 0.0
        %2475 = vmatprep.subr.mxu0 0.0
        %2476 = vmatpush1.xpose.msra.mxu0 0.0
        %2477 = vmatprep.subr.mxu0 0.0
        %2478 = vmatpush1.xpose.msra.mxu0 0.0
        %2479 = vmatprep.subr.mxu0 0.0
        %2480 = vmatpush1.xpose.msra.mxu0 0.0
        %2481 = vmatprep.subr.mxu0 0.0
        %2482 = vmatpush1.xpose.msra.mxu0 0.0
        %2483 = vmatprep.subr.mxu0 0.0
        %2484 = vmatpush1.xpose.msra.mxu0 0.0
        %2485 = vmatprep.subr.mxu0 0.0
        %2486 = vmatpush1.xpose.msra.mxu0 0.0
        %2487 = vmatprep.subr.mxu0 0.0
        %2488 = vmatpush1.xpose.msra.mxu0 0.0
        %2489 = vmatprep.subr.mxu0 0.0
        %2490 = vmatpush1.xpose.msra.mxu0 0.0
        %2491 = vmatprep.subr.mxu0 0.0
        %2492 = vmatpush1.xpose.msra.mxu0 0.0
        %2493 = vmatprep.subr.mxu0 0.0
        %2494 = vmatpush1.xpose.msra.mxu0 0.0
        %2495 = vmatprep.subr.mxu0 0.0
        %2496 = vmatpush1.xpose.msra.mxu0 0.0
        %2497 = vmatprep.subr.mxu0 0.0
        %2498 = vmatpush1.xpose.msra.mxu0 0.0
        %2499 = vmatprep.subr.mxu0 0.0
        %2500 = vmatpush1.xpose.msra.mxu0 0.0
        %2501 = vmatprep.subr.mxu0 0.0
        %2502 = vmatpush1.xpose.msra.mxu0 0.0
        %2503 = vmatprep.subr.mxu0 0.0
        %2504 = vmatpush1.xpose.msra.mxu0 0.0
        %2505 = vmatprep.subr.mxu0 0.0
        %2506 = vmatpush1.xpose.msra.mxu0 0.0
        %2507 = vmatprep.subr.mxu0 0.0
        %2508 = vmatpush1.xpose.msra.mxu0 0.0
        %2509 = vmatprep.subr.mxu0 0.0
        %2510 = vmatpush1.xpose.msra.mxu0 0.0
        %2511 = vmatprep.mubr.f32.mxu0 %v288
        %2512 = vmatmul.mubr.f32.gmra.mrb[0].mxu0 %v287
        %v2513 = vpop.f32.mrb[0].mxu0
        %v2514 = vadd.f32 %v2444, %v2513
        %v2515 = vpop.f32.mrb[0].mxu0
        %2516 = vdwg.mxu0
        %2517 = vmatprep.subr.mxu0 %v486
        %2518 = vmatpush1.xpose.msra.mxu0 %v485
        %2519 = vmatprep.subr.mxu0 0.0
        %2520 = vmatpush1.xpose.msra.mxu0 0.0
        %2521 = vmatprep.subr.mxu0 0.0
        %2522 = vmatpush1.xpose.msra.mxu0 0.0
        %2523 = vmatprep.subr.mxu0 0.0
        %2524 = vmatpush1.xpose.msra.mxu0 0.0
        %2525 = vmatprep.subr.mxu0 0.0
        %2526 = vmatpush1.xpose.msra.mxu0 0.0
        %2527 = vmatprep.subr.mxu0 0.0
        %2528 = vmatpush1.xpose.msra.mxu0 0.0
        %2529 = vmatprep.subr.mxu0 0.0
        %2530 = vmatpush1.xpose.msra.mxu0 0.0
        %2531 = vmatprep.subr.mxu0 0.0
        %2532 = vmatpush1.xpose.msra.mxu0 0.0
        %2533 = vmatprep.subr.mxu0 0.0
        %2534 = vmatpush1.xpose.msra.mxu0 0.0
        %2535 = vmatprep.subr.mxu0 0.0
        %2536 = vmatpush1.xpose.msra.mxu0 0.0
        %2537 = vmatprep.subr.mxu0 0.0
        %2538 = vmatpush1.xpose.msra.mxu0 0.0
        %2539 = vmatprep.subr.mxu0 0.0
        %2540 = vmatpush1.xpose.msra.mxu0 0.0
        %2541 = vmatprep.subr.mxu0 0.0
        %2542 = vmatpush1.xpose.msra.mxu0 0.0
        %2543 = vmatprep.subr.mxu0 0.0
        %2544 = vmatpush1.xpose.msra.mxu0 0.0
        %2545 = vmatprep.subr.mxu0 0.0
        %2546 = vmatpush1.xpose.msra.mxu0 0.0
        %2547 = vmatprep.subr.mxu0 0.0
        %2548 = vmatpush1.xpose.msra.mxu0 0.0
        %2549 = vmatprep.subr.mxu0 0.0
        %2550 = vmatpush1.xpose.msra.mxu0 0.0
        %2551 = vmatprep.subr.mxu0 0.0
        %2552 = vmatpush1.xpose.msra.mxu0 0.0
        %2553 = vmatprep.subr.mxu0 0.0
        %2554 = vmatpush1.xpose.msra.mxu0 0.0
        %2555 = vmatprep.subr.mxu0 0.0
        %2556 = vmatpush1.xpose.msra.mxu0 0.0
        %2557 = vmatprep.subr.mxu0 0.0
        %2558 = vmatpush1.xpose.msra.mxu0 0.0
        %2559 = vmatprep.subr.mxu0 0.0
        %2560 = vmatpush1.xpose.msra.mxu0 0.0
        %2561 = vmatprep.subr.mxu0 0.0
        %2562 = vmatpush1.xpose.msra.mxu0 0.0
        %2563 = vmatprep.subr.mxu0 0.0
        %2564 = vmatpush1.xpose.msra.mxu0 0.0
        %2565 = vmatprep.subr.mxu0 0.0
        %2566 = vmatpush1.xpose.msra.mxu0 0.0
        %2567 = vmatprep.subr.mxu0 0.0
        %2568 = vmatpush1.xpose.msra.mxu0 0.0
        %2569 = vmatprep.subr.mxu0 0.0
        %2570 = vmatpush1.xpose.msra.mxu0 0.0
        %2571 = vmatprep.subr.mxu0 0.0
        %2572 = vmatpush1.xpose.msra.mxu0 0.0
        %2573 = vmatprep.subr.mxu0 0.0
        %2574 = vmatpush1.xpose.msra.mxu0 0.0
        %2575 = vmatprep.subr.mxu0 0.0
        %2576 = vmatpush1.xpose.msra.mxu0 0.0
        %2577 = vmatprep.subr.mxu0 0.0
        %2578 = vmatpush1.xpose.msra.mxu0 0.0
        %2579 = vmatprep.subr.mxu0 0.0
        %2580 = vmatpush1.xpose.msra.mxu0 0.0
        %2581 = vmatprep.mubr.f32.mxu0 %v290
        %2582 = vmatmul.mubr.f32.gmra.mrb[0].mxu0 %v289
        %v2583 = vpop.f32.mrb[0].mxu0
        %v2584 = vadd.f32 %v2514, %v2583
        %v2585 = vpop.f32.mrb[0].mxu0
        %2586 = vdwg.mxu0
        %2587 = vmatprep.subr.mxu0 %v488
        %2588 = vmatpush1.xpose.msra.mxu0 %v487
        %2589 = vmatprep.subr.mxu0 0.0
        %2590 = vmatpush1.xpose.msra.mxu0 0.0
        %2591 = vmatprep.subr.mxu0 0.0
        %2592 = vmatpush1.xpose.msra.mxu0 0.0
        %2593 = vmatprep.subr.mxu0 0.0
        %2594 = vmatpush1.xpose.msra.mxu0 0.0
        %2595 = vmatprep.subr.mxu0 0.0
        %2596 = vmatpush1.xpose.msra.mxu0 0.0
        %2597 = vmatprep.subr.mxu0 0.0
        %2598 = vmatpush1.xpose.msra.mxu0 0.0
        %2599 = vmatprep.subr.mxu0 0.0
        %2600 = vmatpush1.xpose.msra.mxu0 0.0
        %2601 = vmatprep.subr.mxu0 0.0
        %2602 = vmatpush1.xpose.msra.mxu0 0.0
        %2603 = vmatprep.subr.mxu0 0.0
        %2604 = vmatpush1.xpose.msra.mxu0 0.0
        %2605 = vmatprep.subr.mxu0 0.0
        %2606 = vmatpush1.xpose.msra.mxu0 0.0
        %2607 = vmatprep.subr.mxu0 0.0
        %2608 = vmatpush1.xpose.msra.mxu0 0.0
        %2609 = vmatprep.subr.mxu0 0.0
        %2610 = vmatpush1.xpose.msra.mxu0 0.0
        %2611 = vmatprep.subr.mxu0 0.0
        %2612 = vmatpush1.xpose.msra.mxu0 0.0
        %2613 = vmatprep.subr.mxu0 0.0
        %2614 = vmatpush1.xpose.msra.mxu0 0.0
        %2615 = vmatprep.subr.mxu0 0.0
        %2616 = vmatpush1.xpose.msra.mxu0 0.0
        %2617 = vmatprep.subr.mxu0 0.0
        %2618 = vmatpush1.xpose.msra.mxu0 0.0
        %2619 = vmatprep.subr.mxu0 0.0
        %2620 = vmatpush1.xpose.msra.mxu0 0.0
        %2621 = vmatprep.subr.mxu0 0.0
        %2622 = vmatpush1.xpose.msra.mxu0 0.0
        %2623 = vmatprep.subr.mxu0 0.0
        %2624 = vmatpush1.xpose.msra.mxu0 0.0
        %2625 = vmatprep.subr.mxu0 0.0
        %2626 = vmatpush1.xpose.msra.mxu0 0.0
        %2627 = vmatprep.subr.mxu0 0.0
        %2628 = vmatpush1.xpose.msra.mxu0 0.0
        %2629 = vmatprep.subr.mxu0 0.0
        %2630 = vmatpush1.xpose.msra.mxu0 0.0
        %2631 = vmatprep.subr.mxu0 0.0
        %2632 = vmatpush1.xpose.msra.mxu0 0.0
        %2633 = vmatprep.subr.mxu0 0.0
        %2634 = vmatpush1.xpose.msra.mxu0 0.0
        %2635 = vmatprep.subr.mxu0 0.0
        %2636 = vmatpush1.xpose.msra.mxu0 0.0
        %2637 = vmatprep.subr.mxu0 0.0
        %2638 = vmatpush1.xpose.msra.mxu0 0.0
        %2639 = vmatprep.subr.mxu0 0.0
        %2640 = vmatpush1.xpose.msra.mxu0 0.0
        %2641 = vmatprep.subr.mxu0 0.0
        %2642 = vmatpush1.xpose.msra.mxu0 0.0
        %2643 = vmatprep.subr.mxu0 0.0
        %2644 = vmatpush1.xpose.msra.mxu0 0.0
        %2645 = vmatprep.subr.mxu0 0.0
        %2646 = vmatpush1.xpose.msra.mxu0 0.0
        %2647 = vmatprep.subr.mxu0 0.0
        %2648 = vmatpush1.xpose.msra.mxu0 0.0
        %2649 = vmatprep.subr.mxu0 0.0
        %2650 = vmatpush1.xpose.msra.mxu0 0.0
        %2651 = vmatprep.mubr.f32.mxu0 %v292
        %2652 = vmatmul.mubr.f32.gmra.mrb[0].mxu0 %v291
        %v2653 = vpop.f32.mrb[0].mxu0
        %v2654 = vadd.f32 %v2584, %v2653
        %v2655 = vpop.f32.mrb[0].mxu0
        %2656 = vdwg.mxu0
        %2657 = vmatprep.subr.mxu0 %v490
        %2658 = vmatpush1.xpose.msra.mxu0 %v489
        %2659 = vmatprep.subr.mxu0 0.0
        %2660 = vmatpush1.xpose.msra.mxu0 0.0
        %2661 = vmatprep.subr.mxu0 0.0
        %2662 = vmatpush1.xpose.msra.mxu0 0.0
        %2663 = vmatprep.subr.mxu0 0.0
        %2664 = vmatpush1.xpose.msra.mxu0 0.0
        %2665 = vmatprep.subr.mxu0 0.0
        %2666 = vmatpush1.xpose.msra.mxu0 0.0
        %2667 = vmatprep.subr.mxu0 0.0
        %2668 = vmatpush1.xpose.msra.mxu0 0.0
        %2669 = vmatprep.subr.mxu0 0.0
        %2670 = vmatpush1.xpose.msra.mxu0 0.0
        %2671 = vmatprep.subr.mxu0 0.0
        %2672 = vmatpush1.xpose.msra.mxu0 0.0
        %2673 = vmatprep.subr.mxu0 0.0
        %2674 = vmatpush1.xpose.msra.mxu0 0.0
        %2675 = vmatprep.subr.mxu0 0.0
        %2676 = vmatpush1.xpose.msra.mxu0 0.0
        %2677 = vmatprep.subr.mxu0 0.0
        %2678 = vmatpush1.xpose.msra.mxu0 0.0
        %2679 = vmatprep.subr.mxu0 0.0
        %2680 = vmatpush1.xpose.msra.mxu0 0.0
        %2681 = vmatprep.subr.mxu0 0.0
        %2682 = vmatpush1.xpose.msra.mxu0 0.0
        %2683 = vmatprep.subr.mxu0 0.0
        %2684 = vmatpush1.xpose.msra.mxu0 0.0
        %2685 = vmatprep.subr.mxu0 0.0
        %2686 = vmatpush1.xpose.msra.mxu0 0.0
        %2687 = vmatprep.subr.mxu0 0.0
        %2688 = vmatpush1.xpose.msra.mxu0 0.0
        %2689 = vmatprep.subr.mxu0 0.0
        %2690 = vmatpush1.xpose.msra.mxu0 0.0
        %2691 = vmatprep.subr.mxu0 0.0
        %2692 = vmatpush1.xpose.msra.mxu0 0.0
        %2693 = vmatprep.subr.mxu0 0.0
        %2694 = vmatpush1.xpose.msra.mxu0 0.0
        %2695 = vmatprep.subr.mxu0 0.0
        %2696 = vmatpush1.xpose.msra.mxu0 0.0
        %2697 = vmatprep.subr.mxu0 0.0
        %2698 = vmatpush1.xpose.msra.mxu0 0.0
        %2699 = vmatprep.subr.mxu0 0.0
        %2700 = vmatpush1.xpose.msra.mxu0 0.0
        %2701 = vmatprep.subr.mxu0 0.0
        %2702 = vmatpush1.xpose.msra.mxu0 0.0
        %2703 = vmatprep.subr.mxu0 0.0
        %2704 = vmatpush1.xpose.msra.mxu0 0.0
        %2705 = vmatprep.subr.mxu0 0.0
        %2706 = vmatpush1.xpose.msra.mxu0 0.0
        %2707 = vmatprep.subr.mxu0 0.0
        %2708 = vmatpush1.xpose.msra.mxu0 0.0
        %2709 = vmatprep.subr.mxu0 0.0
        %2710 = vmatpush1.xpose.msra.mxu0 0.0
        %2711 = vmatprep.subr.mxu0 0.0
        %2712 = vmatpush1.xpose.msra.mxu0 0.0
        %2713 = vmatprep.subr.mxu0 0.0
        %2714 = vmatpush1.xpose.msra.mxu0 0.0
        %2715 = vmatprep.subr.mxu0 0.0
        %2716 = vmatpush1.xpose.msra.mxu0 0.0
        %2717 = vmatprep.subr.mxu0 0.0
        %2718 = vmatpush1.xpose.msra.mxu0 0.0
        %2719 = vmatprep.subr.mxu0 0.0
        %2720 = vmatpush1.xpose.msra.mxu0 0.0
        %2721 = vmatprep.mubr.f32.mxu0 %v294
        %2722 = vmatmul.mubr.f32.gmra.mrb[0].mxu0 %v293
        %v2723 = vpop.f32.mrb[0].mxu0
        %v2724 = vadd.f32 %v2654, %v2723
        %v2725 = vpop.f32.mrb[0].mxu0
        %2726 = vdwg.mxu0
        %2727 = vmatprep.subr.mxu0 %v492
        %2728 = vmatpush1.xpose.msra.mxu0 %v491
        %2729 = vmatprep.subr.mxu0 0.0
        %2730 = vmatpush1.xpose.msra.mxu0 0.0
        %2731 = vmatprep.subr.mxu0 0.0
        %2732 = vmatpush1.xpose.msra.mxu0 0.0
        %2733 = vmatprep.subr.mxu0 0.0
        %2734 = vmatpush1.xpose.msra.mxu0 0.0
        %2735 = vmatprep.subr.mxu0 0.0
        %2736 = vmatpush1.xpose.msra.mxu0 0.0
        %2737 = vmatprep.subr.mxu0 0.0
        %2738 = vmatpush1.xpose.msra.mxu0 0.0
        %2739 = vmatprep.subr.mxu0 0.0
        %2740 = vmatpush1.xpose.msra.mxu0 0.0
        %2741 = vmatprep.subr.mxu0 0.0
        %2742 = vmatpush1.xpose.msra.mxu0 0.0
        %2743 = vmatprep.subr.mxu0 0.0
        %2744 = vmatpush1.xpose.msra.mxu0 0.0
        %2745 = vmatprep.subr.mxu0 0.0
        %2746 = vmatpush1.xpose.msra.mxu0 0.0
        %2747 = vmatprep.subr.mxu0 0.0
        %2748 = vmatpush1.xpose.msra.mxu0 0.0
        %2749 = vmatprep.subr.mxu0 0.0
        %2750 = vmatpush1.xpose.msra.mxu0 0.0
        %2751 = vmatprep.subr.mxu0 0.0
        %2752 = vmatpush1.xpose.msra.mxu0 0.0
        %2753 = vmatprep.subr.mxu0 0.0
        %2754 = vmatpush1.xpose.msra.mxu0 0.0
        %2755 = vmatprep.subr.mxu0 0.0
        %2756 = vmatpush1.xpose.msra.mxu0 0.0
        %2757 = vmatprep.subr.mxu0 0.0
        %2758 = vmatpush1.xpose.msra.mxu0 0.0
        %2759 = vmatprep.subr.mxu0 0.0
        %2760 = vmatpush1.xpose.msra.mxu0 0.0
        %2761 = vmatprep.subr.mxu0 0.0
        %2762 = vmatpush1.xpose.msra.mxu0 0.0
        %2763 = vmatprep.subr.mxu0 0.0
        %2764 = vmatpush1.xpose.msra.mxu0 0.0
        %2765 = vmatprep.subr.mxu0 0.0
        %2766 = vmatpush1.xpose.msra.mxu0 0.0
        %2767 = vmatprep.subr.mxu0 0.0
        %2768 = vmatpush1.xpose.msra.mxu0 0.0
        %2769 = vmatprep.subr.mxu0 0.0
        %2770 = vmatpush1.xpose.msra.mxu0 0.0
        %2771 = vmatprep.subr.mxu0 0.0
        %2772 = vmatpush1.xpose.msra.mxu0 0.0
        %2773 = vmatprep.subr.mxu0 0.0
        %2774 = vmatpush1.xpose.msra.mxu0 0.0
        %2775 = vmatprep.subr.mxu0 0.0
        %2776 = vmatpush1.xpose.msra.mxu0 0.0
        %2777 = vmatprep.subr.mxu0 0.0
        %2778 = vmatpush1.xpose.msra.mxu0 0.0
        %2779 = vmatprep.subr.mxu0 0.0
        %2780 = vmatpush1.xpose.msra.mxu0 0.0
        %2781 = vmatprep.subr.mxu0 0.0
        %2782 = vmatpush1.xpose.msra.mxu0 0.0
        %2783 = vmatprep.subr.mxu0 0.0
        %2784 = vmatpush1.xpose.msra.mxu0 0.0
        %2785 = vmatprep.subr.mxu0 0.0
        %2786 = vmatpush1.xpose.msra.mxu0 0.0
        %2787 = vmatprep.subr.mxu0 0.0
        %2788 = vmatpush1.xpose.msra.mxu0 0.0
        %2789 = vmatprep.subr.mxu0 0.0
        %2790 = vmatpush1.xpose.msra.mxu0 0.0
        %2791 = vmatprep.mubr.f32.mxu0 %v296
        %2792 = vmatmul.mubr.f32.gmra.mrb[0].mxu0 %v295
        %v2793 = vpop.f32.mrb[0].mxu0
        %v2794 = vadd.f32 %v2724, %v2793
        %v2795 = vpop.f32.mrb[0].mxu0
        %2796 = vdwg.mxu0
        %2797 = vmatprep.subr.mxu0 %v494
        %2798 = vmatpush1.xpose.msra.mxu0 %v493
        %2799 = vmatprep.subr.mxu0 0.0
        %2800 = vmatpush1.xpose.msra.mxu0 0.0
        %2801 = vmatprep.subr.mxu0 0.0
        %2802 = vmatpush1.xpose.msra.mxu0 0.0
        %2803 = vmatprep.subr.mxu0 0.0
        %2804 = vmatpush1.xpose.msra.mxu0 0.0
        %2805 = vmatprep.subr.mxu0 0.0
        %2806 = vmatpush1.xpose.msra.mxu0 0.0
        %2807 = vmatprep.subr.mxu0 0.0
        %2808 = vmatpush1.xpose.msra.mxu0 0.0
        %2809 = vmatprep.subr.mxu0 0.0
        %2810 = vmatpush1.xpose.msra.mxu0 0.0
        %2811 = vmatprep.subr.mxu0 0.0
        %2812 = vmatpush1.xpose.msra.mxu0 0.0
        %2813 = vmatprep.subr.mxu0 0.0
        %2814 = vmatpush1.xpose.msra.mxu0 0.0
        %2815 = vmatprep.subr.mxu0 0.0
        %2816 = vmatpush1.xpose.msra.mxu0 0.0
        %2817 = vmatprep.subr.mxu0 0.0
        %2818 = vmatpush1.xpose.msra.mxu0 0.0
        %2819 = vmatprep.subr.mxu0 0.0
        %2820 = vmatpush1.xpose.msra.mxu0 0.0
        %2821 = vmatprep.subr.mxu0 0.0
        %2822 = vmatpush1.xpose.msra.mxu0 0.0
        %2823 = vmatprep.subr.mxu0 0.0
        %2824 = vmatpush1.xpose.msra.mxu0 0.0
        %2825 = vmatprep.subr.mxu0 0.0
        %2826 = vmatpush1.xpose.msra.mxu0 0.0
        %2827 = vmatprep.subr.mxu0 0.0
        %2828 = vmatpush1.xpose.msra.mxu0 0.0
        %2829 = vmatprep.subr.mxu0 0.0
        %2830 = vmatpush1.xpose.msra.mxu0 0.0
        %2831 = vmatprep.subr.mxu0 0.0
        %2832 = vmatpush1.xpose.msra.mxu0 0.0
        %2833 = vmatprep.subr.mxu0 0.0
        %2834 = vmatpush1.xpose.msra.mxu0 0.0
        %2835 = vmatprep.subr.mxu0 0.0
        %2836 = vmatpush1.xpose.msra.mxu0 0.0
        %2837 = vmatprep.subr.mxu0 0.0
        %2838 = vmatpush1.xpose.msra.mxu0 0.0
        %2839 = vmatprep.subr.mxu0 0.0
        %2840 = vmatpush1.xpose.msra.mxu0 0.0
        %2841 = vmatprep.subr.mxu0 0.0
        %2842 = vmatpush1.xpose.msra.mxu0 0.0
        %2843 = vmatprep.subr.mxu0 0.0
        %2844 = vmatpush1.xpose.msra.mxu0 0.0
        %2845 = vmatprep.subr.mxu0 0.0
        %2846 = vmatpush1.xpose.msra.mxu0 0.0
        %2847 = vmatprep.subr.mxu0 0.0
        %2848 = vmatpush1.xpose.msra.mxu0 0.0
        %2849 = vmatprep.subr.mxu0 0.0
        %2850 = vmatpush1.xpose.msra.mxu0 0.0
        %2851 = vmatprep.subr.mxu0 0.0
        %2852 = vmatpush1.xpose.msra.mxu0 0.0
        %2853 = vmatprep.subr.mxu0 0.0
        %2854 = vmatpush1.xpose.msra.mxu0 0.0
        %2855 = vmatprep.subr.mxu0 0.0
        %2856 = vmatpush1.xpose.msra.mxu0 0.0
        %2857 = vmatprep.subr.mxu0 0.0
        %2858 = vmatpush1.xpose.msra.mxu0 0.0
        %2859 = vmatprep.subr.mxu0 0.0
        %2860 = vmatpush1.xpose.msra.mxu0 0.0
        %2861 = vmatprep.mubr.f32.mxu0 %v298
        %2862 = vmatmul.mubr.f32.gmra.mrb[0].mxu0 %v297
        %v2863 = vpop.f32.mrb[0].mxu0
        %v2864 = vadd.f32 %v2794, %v2863
        %v2865 = vpop.f32.mrb[0].mxu0
        %2866 = vdwg.mxu0
        %2867 = vmatprep.subr.mxu0 %v496
        %2868 = vmatpush1.xpose.msra.mxu0 %v495
        %2869 = vmatprep.subr.mxu0 0.0
        %2870 = vmatpush1.xpose.msra.mxu0 0.0
        %2871 = vmatprep.subr.mxu0 0.0
        %2872 = vmatpush1.xpose.msra.mxu0 0.0
        %2873 = vmatprep.subr.mxu0 0.0
        %2874 = vmatpush1.xpose.msra.mxu0 0.0
        %2875 = vmatprep.subr.mxu0 0.0
        %2876 = vmatpush1.xpose.msra.mxu0 0.0
        %2877 = vmatprep.subr.mxu0 0.0
        %2878 = vmatpush1.xpose.msra.mxu0 0.0
        %2879 = vmatprep.subr.mxu0 0.0
        %2880 = vmatpush1.xpose.msra.mxu0 0.0
        %2881 = vmatprep.subr.mxu0 0.0
        %2882 = vmatpush1.xpose.msra.mxu0 0.0
        %2883 = vmatprep.subr.mxu0 0.0
        %2884 = vmatpush1.xpose.msra.mxu0 0.0
        %2885 = vmatprep.subr.mxu0 0.0
        %2886 = vmatpush1.xpose.msra.mxu0 0.0
        %2887 = vmatprep.subr.mxu0 0.0
        %2888 = vmatpush1.xpose.msra.mxu0 0.0
        %2889 = vmatprep.subr.mxu0 0.0
        %2890 = vmatpush1.xpose.msra.mxu0 0.0
        %2891 = vmatprep.subr.mxu0 0.0
        %2892 = vmatpush1.xpose.msra.mxu0 0.0
        %2893 = vmatprep.subr.mxu0 0.0
        %2894 = vmatpush1.xpose.msra.mxu0 0.0
        %2895 = vmatprep.subr.mxu0 0.0
        %2896 = vmatpush1.xpose.msra.mxu0 0.0
        %2897 = vmatprep.subr.mxu0 0.0
        %2898 = vmatpush1.xpose.msra.mxu0 0.0
        %2899 = vmatprep.subr.mxu0 0.0
        %2900 = vmatpush1.xpose.msra.mxu0 0.0
        %2901 = vmatprep.subr.mxu0 0.0
        %2902 = vmatpush1.xpose.msra.mxu0 0.0
        %2903 = vmatprep.subr.mxu0 0.0
        %2904 = vmatpush1.xpose.msra.mxu0 0.0
        %2905 = vmatprep.subr.mxu0 0.0
        %2906 = vmatpush1.xpose.msra.mxu0 0.0
        %2907 = vmatprep.subr.mxu0 0.0
        %2908 = vmatpush1.xpose.msra.mxu0 0.0
        %2909 = vmatprep.subr.mxu0 0.0
        %2910 = vmatpush1.xpose.msra.mxu0 0.0
        %2911 = vmatprep.subr.mxu0 0.0
        %2912 = vmatpush1.xpose.msra.mxu0 0.0
        %2913 = vmatprep.subr.mxu0 0.0
        %2914 = vmatpush1.xpose.msra.mxu0 0.0
        %2915 = vmatprep.subr.mxu0 0.0
        %2916 = vmatpush1.xpose.msra.mxu0 0.0
        %2917 = vmatprep.subr.mxu0 0.0
        %2918 = vmatpush1.xpose.msra.mxu0 0.0
        %2919 = vmatprep.subr.mxu0 0.0
        %2920 = vmatpush1.xpose.msra.mxu0 0.0
        %2921 = vmatprep.subr.mxu0 0.0
        %2922 = vmatpush1.xpose.msra.mxu0 0.0
        %2923 = vmatprep.subr.mxu0 0.0
        %2924 = vmatpush1.xpose.msra.mxu0 0.0
        %2925 = vmatprep.subr.mxu0 0.0
        %2926 = vmatpush1.xpose.msra.mxu0 0.0
        %2927 = vmatprep.subr.mxu0 0.0
        %2928 = vmatpush1.xpose.msra.mxu0 0.0
        %2929 = vmatprep.subr.mxu0 0.0
        %2930 = vmatpush1.xpose.msra.mxu0 0.0
        %2931 = vmatprep.mubr.f32.mxu0 %v300
        %2932 = vmatmul.mubr.f32.gmra.mrb[0].mxu0 %v299
        %v2933 = vpop.f32.mrb[0].mxu0
        %v2934 = vadd.f32 %v2864, %v2933
        %v2935 = vpop.f32.mrb[0].mxu0
        %2936 = vdwg.mxu0
        %2937 = vmatprep.subr.mxu0 %v498
        %2938 = vmatpush1.xpose.msra.mxu0 %v497
        %2939 = vmatprep.subr.mxu0 0.0
        %2940 = vmatpush1.xpose.msra.mxu0 0.0
        %2941 = vmatprep.subr.mxu0 0.0
        %2942 = vmatpush1.xpose.msra.mxu0 0.0
        %2943 = vmatprep.subr.mxu0 0.0
        %2944 = vmatpush1.xpose.msra.mxu0 0.0
        %2945 = vmatprep.subr.mxu0 0.0
        %2946 = vmatpush1.xpose.msra.mxu0 0.0
        %2947 = vmatprep.subr.mxu0 0.0
        %2948 = vmatpush1.xpose.msra.mxu0 0.0
        %2949 = vmatprep.subr.mxu0 0.0
        %2950 = vmatpush1.xpose.msra.mxu0 0.0
        %2951 = vmatprep.subr.mxu0 0.0
        %2952 = vmatpush1.xpose.msra.mxu0 0.0
        %2953 = vmatprep.subr.mxu0 0.0
        %2954 = vmatpush1.xpose.msra.mxu0 0.0
        %2955 = vmatprep.subr.mxu0 0.0
        %2956 = vmatpush1.xpose.msra.mxu0 0.0
        %2957 = vmatprep.subr.mxu0 0.0
        %2958 = vmatpush1.xpose.msra.mxu0 0.0
        %2959 = vmatprep.subr.mxu0 0.0
        %2960 = vmatpush1.xpose.msra.mxu0 0.0
        %2961 = vmatprep.subr.mxu0 0.0
        %2962 = vmatpush1.xpose.msra.mxu0 0.0
        %2963 = vmatprep.subr.mxu0 0.0
        %2964 = vmatpush1.xpose.msra.mxu0 0.0
        %2965 = vmatprep.subr.mxu0 0.0
        %2966 = vmatpush1.xpose.msra.mxu0 0.0
        %2967 = vmatprep.subr.mxu0 0.0
        %2968 = vmatpush1.xpose.msra.mxu0 0.0
        %2969 = vmatprep.subr.mxu0 0.0
        %2970 = vmatpush1.xpose.msra.mxu0 0.0
        %2971 = vmatprep.subr.mxu0 0.0
        %2972 = vmatpush1.xpose.msra.mxu0 0.0
        %2973 = vmatprep.subr.mxu0 0.0
        %2974 = vmatpush1.xpose.msra.mxu0 0.0
        %2975 = vmatprep.subr.mxu0 0.0
        %2976 = vmatpush1.xpose.msra.mxu0 0.0
        %2977 = vmatprep.subr.mxu0 0.0
        %2978 = vmatpush1.xpose.msra.mxu0 0.0
        %2979 = vmatprep.subr.mxu0 0.0
        %2980 = vmatpush1.xpose.msra.mxu0 0.0
        %2981 = vmatprep.subr.mxu0 0.0
        %2982 = vmatpush1.xpose.msra.mxu0 0.0
        %2983 = vmatprep.subr.mxu0 0.0
        %2984 = vmatpush1.xpose.msra.mxu0 0.0
        %2985 = vmatprep.subr.mxu0 0.0
        %2986 = vmatpush1.xpose.msra.mxu0 0.0
        %2987 = vmatprep.subr.mxu0 0.0
        %2988 = vmatpush1.xpose.msra.mxu0 0.0
        %2989 = vmatprep.subr.mxu0 0.0
        %2990 = vmatpush1.xpose.msra.mxu0 0.0
        %2991 = vmatprep.subr.mxu0 0.0
        %2992 = vmatpush1.xpose.msra.mxu0 0.0
        %2993 = vmatprep.subr.mxu0 0.0
        %2994 = vmatpush1.xpose.msra.mxu0 0.0
        %2995 = vmatprep.subr.mxu0 0.0
        %2996 = vmatpush1.xpose.msra.mxu0 0.0
        %2997 = vmatprep.subr.mxu0 0.0
        %2998 = vmatpush1.xpose.msra.mxu0 0.0
        %2999 = vmatprep.subr.mxu0 0.0
        %3000 = vmatpush1.xpose.msra.mxu0 0.0
        %3001 = vmatprep.mubr.f32.mxu0 %v302
        %3002 = vmatmul.mubr.f32.gmra.mrb[0].mxu0 %v301
        %v3003 = vpop.f32.mrb[0].mxu0
        %v3004 = vadd.f32 %v2934, %v3003
        %v3005 = vpop.f32.mrb[0].mxu0
        %3006 = vdwg.mxu0
        %3007 = vmatprep.subr.mxu0 %v500
        %3008 = vmatpush1.xpose.msra.mxu0 %v499
        %3009 = vmatprep.subr.mxu0 0.0
        %3010 = vmatpush1.xpose.msra.mxu0 0.0
        %3011 = vmatprep.subr.mxu0 0.0
        %3012 = vmatpush1.xpose.msra.mxu0 0.0
        %3013 = vmatprep.subr.mxu0 0.0
        %3014 = vmatpush1.xpose.msra.mxu0 0.0
        %3015 = vmatprep.subr.mxu0 0.0
        %3016 = vmatpush1.xpose.msra.mxu0 0.0
        %3017 = vmatprep.subr.mxu0 0.0
        %3018 = vmatpush1.xpose.msra.mxu0 0.0
        %3019 = vmatprep.subr.mxu0 0.0
        %3020 = vmatpush1.xpose.msra.mxu0 0.0
        %3021 = vmatprep.subr.mxu0 0.0
        %3022 = vmatpush1.xpose.msra.mxu0 0.0
        %3023 = vmatprep.subr.mxu0 0.0
        %3024 = vmatpush1.xpose.msra.mxu0 0.0
        %3025 = vmatprep.subr.mxu0 0.0
        %3026 = vmatpush1.xpose.msra.mxu0 0.0
        %3027 = vmatprep.subr.mxu0 0.0
        %3028 = vmatpush1.xpose.msra.mxu0 0.0
        %3029 = vmatprep.subr.mxu0 0.0
        %3030 = vmatpush1.xpose.msra.mxu0 0.0
        %3031 = vmatprep.subr.mxu0 0.0
        %3032 = vmatpush1.xpose.msra.mxu0 0.0
        %3033 = vmatprep.subr.mxu0 0.0
        %3034 = vmatpush1.xpose.msra.mxu0 0.0
        %3035 = vmatprep.subr.mxu0 0.0
        %3036 = vmatpush1.xpose.msra.mxu0 0.0
        %3037 = vmatprep.subr.mxu0 0.0
        %3038 = vmatpush1.xpose.msra.mxu0 0.0
        %3039 = vmatprep.subr.mxu0 0.0
        %3040 = vmatpush1.xpose.msra.mxu0 0.0
        %3041 = vmatprep.subr.mxu0 0.0
        %3042 = vmatpush1.xpose.msra.mxu0 0.0
        %3043 = vmatprep.subr.mxu0 0.0
        %3044 = vmatpush1.xpose.msra.mxu0 0.0
        %3045 = vmatprep.subr.mxu0 0.0
        %3046 = vmatpush1.xpose.msra.mxu0 0.0
        %3047 = vmatprep.subr.mxu0 0.0
        %3048 = vmatpush1.xpose.msra.mxu0 0.0
        %3049 = vmatprep.subr.mxu0 0.0
        %3050 = vmatpush1.xpose.msra.mxu0 0.0
        %3051 = vmatprep.subr.mxu0 0.0
        %3052 = vmatpush1.xpose.msra.mxu0 0.0
        %3053 = vmatprep.subr.mxu0 0.0
        %3054 = vmatpush1.xpose.msra.mxu0 0.0
        %3055 = vmatprep.subr.mxu0 0.0
        %3056 = vmatpush1.xpose.msra.mxu0 0.0
        %3057 = vmatprep.subr.mxu0 0.0
        %3058 = vmatpush1.xpose.msra.mxu0 0.0
        %3059 = vmatprep.subr.mxu0 0.0
        %3060 = vmatpush1.xpose.msra.mxu0 0.0
        %3061 = vmatprep.subr.mxu0 0.0
        %3062 = vmatpush1.xpose.msra.mxu0 0.0
        %3063 = vmatprep.subr.mxu0 0.0
        %3064 = vmatpush1.xpose.msra.mxu0 0.0
        %3065 = vmatprep.subr.mxu0 0.0
        %3066 = vmatpush1.xpose.msra.mxu0 0.0
        %3067 = vmatprep.subr.mxu0 0.0
        %3068 = vmatpush1.xpose.msra.mxu0 0.0
        %3069 = vmatprep.subr.mxu0 0.0
        %3070 = vmatpush1.xpose.msra.mxu0 0.0
        %3071 = vmatprep.mubr.f32.mxu0 %v304
        %3072 = vmatmul.mubr.f32.gmra.mrb[0].mxu0 %v303
        %v3073 = vpop.f32.mrb[0].mxu0
        %v3074 = vadd.f32 %v3004, %v3073
        %v3075 = vpop.f32.mrb[0].mxu0
        %3076 = vdwg.mxu0
        %3077 = vmatprep.subr.mxu0 %v502
        %3078 = vmatpush1.xpose.msra.mxu0 %v501
        %3079 = vmatprep.subr.mxu0 0.0
        %3080 = vmatpush1.xpose.msra.mxu0 0.0
        %3081 = vmatprep.subr.mxu0 0.0
        %3082 = vmatpush1.xpose.msra.mxu0 0.0
        %3083 = vmatprep.subr.mxu0 0.0
        %3084 = vmatpush1.xpose.msra.mxu0 0.0
        %3085 = vmatprep.subr.mxu0 0.0
        %3086 = vmatpush1.xpose.msra.mxu0 0.0
        %3087 = vmatprep.subr.mxu0 0.0
        %3088 = vmatpush1.xpose.msra.mxu0 0.0
        %3089 = vmatprep.subr.mxu0 0.0
        %3090 = vmatpush1.xpose.msra.mxu0 0.0
        %3091 = vmatprep.subr.mxu0 0.0
        %3092 = vmatpush1.xpose.msra.mxu0 0.0
        %3093 = vmatprep.subr.mxu0 0.0
        %3094 = vmatpush1.xpose.msra.mxu0 0.0
        %3095 = vmatprep.subr.mxu0 0.0
        %3096 = vmatpush1.xpose.msra.mxu0 0.0
        %3097 = vmatprep.subr.mxu0 0.0
        %3098 = vmatpush1.xpose.msra.mxu0 0.0
        %3099 = vmatprep.subr.mxu0 0.0
        %3100 = vmatpush1.xpose.msra.mxu0 0.0
        %3101 = vmatprep.subr.mxu0 0.0
        %3102 = vmatpush1.xpose.msra.mxu0 0.0
        %3103 = vmatprep.subr.mxu0 0.0
        %3104 = vmatpush1.xpose.msra.mxu0 0.0
        %3105 = vmatprep.subr.mxu0 0.0
        %3106 = vmatpush1.xpose.msra.mxu0 0.0
        %3107 = vmatprep.subr.mxu0 0.0
        %3108 = vmatpush1.xpose.msra.mxu0 0.0
        %3109 = vmatprep.subr.mxu0 0.0
        %3110 = vmatpush1.xpose.msra.mxu0 0.0
        %3111 = vmatprep.subr.mxu0 0.0
        %3112 = vmatpush1.xpose.msra.mxu0 0.0
        %3113 = vmatprep.subr.mxu0 0.0
        %3114 = vmatpush1.xpose.msra.mxu0 0.0
        %3115 = vmatprep.subr.mxu0 0.0
        %3116 = vmatpush1.xpose.msra.mxu0 0.0
        %3117 = vmatprep.subr.mxu0 0.0
        %3118 = vmatpush1.xpose.msra.mxu0 0.0
        %3119 = vmatprep.subr.mxu0 0.0
        %3120 = vmatpush1.xpose.msra.mxu0 0.0
        %3121 = vmatprep.subr.mxu0 0.0
        %3122 = vmatpush1.xpose.msra.mxu0 0.0
        %3123 = vmatprep.subr.mxu0 0.0
        %3124 = vmatpush1.xpose.msra.mxu0 0.0
        %3125 = vmatprep.subr.mxu0 0.0
        %3126 = vmatpush1.xpose.msra.mxu0 0.0
        %3127 = vmatprep.subr.mxu0 0.0
        %3128 = vmatpush1.xpose.msra.mxu0 0.0
        %3129 = vmatprep.subr.mxu0 0.0
        %3130 = vmatpush1.xpose.msra.mxu0 0.0
        %3131 = vmatprep.subr.mxu0 0.0
        %3132 = vmatpush1.xpose.msra.mxu0 0.0
        %3133 = vmatprep.subr.mxu0 0.0
        %3134 = vmatpush1.xpose.msra.mxu0 0.0
        %3135 = vmatprep.subr.mxu0 0.0
        %3136 = vmatpush1.xpose.msra.mxu0 0.0
        %3137 = vmatprep.subr.mxu0 0.0
        %3138 = vmatpush1.xpose.msra.mxu0 0.0
        %3139 = vmatprep.subr.mxu0 0.0
        %3140 = vmatpush1.xpose.msra.mxu0 0.0
        %3141 = vmatprep.mubr.f32.mxu0 %v306
        %3142 = vmatmul.mubr.f32.gmra.mrb[0].mxu0 %v305
        %v3143 = vpop.f32.mrb[0].mxu0
        %v3144 = vadd.f32 %v3074, %v3143
        %v3145 = vpop.f32.mrb[0].mxu0
        %3146 = vdwg.mxu0
        %3147 = vmatprep.subr.mxu0 %v504
        %3148 = vmatpush1.xpose.msra.mxu0 %v503
        %3149 = vmatprep.subr.mxu0 0.0
        %3150 = vmatpush1.xpose.msra.mxu0 0.0
        %3151 = vmatprep.subr.mxu0 0.0
        %3152 = vmatpush1.xpose.msra.mxu0 0.0
        %3153 = vmatprep.subr.mxu0 0.0
        %3154 = vmatpush1.xpose.msra.mxu0 0.0
        %3155 = vmatprep.subr.mxu0 0.0
        %3156 = vmatpush1.xpose.msra.mxu0 0.0
        %3157 = vmatprep.subr.mxu0 0.0
        %3158 = vmatpush1.xpose.msra.mxu0 0.0
        %3159 = vmatprep.subr.mxu0 0.0
        %3160 = vmatpush1.xpose.msra.mxu0 0.0
        %3161 = vmatprep.subr.mxu0 0.0
        %3162 = vmatpush1.xpose.msra.mxu0 0.0
        %3163 = vmatprep.subr.mxu0 0.0
        %3164 = vmatpush1.xpose.msra.mxu0 0.0
        %3165 = vmatprep.subr.mxu0 0.0
        %3166 = vmatpush1.xpose.msra.mxu0 0.0
        %3167 = vmatprep.subr.mxu0 0.0
        %3168 = vmatpush1.xpose.msra.mxu0 0.0
        %3169 = vmatprep.subr.mxu0 0.0
        %3170 = vmatpush1.xpose.msra.mxu0 0.0
        %3171 = vmatprep.subr.mxu0 0.0
        %3172 = vmatpush1.xpose.msra.mxu0 0.0
        %3173 = vmatprep.subr.mxu0 0.0
        %3174 = vmatpush1.xpose.msra.mxu0 0.0
        %3175 = vmatprep.subr.mxu0 0.0
        %3176 = vmatpush1.xpose.msra.mxu0 0.0
        %3177 = vmatprep.subr.mxu0 0.0
        %3178 = vmatpush1.xpose.msra.mxu0 0.0
        %3179 = vmatprep.subr.mxu0 0.0
        %3180 = vmatpush1.xpose.msra.mxu0 0.0
        %3181 = vmatprep.subr.mxu0 0.0
        %3182 = vmatpush1.xpose.msra.mxu0 0.0
        %3183 = vmatprep.subr.mxu0 0.0
        %3184 = vmatpush1.xpose.msra.mxu0 0.0
        %3185 = vmatprep.subr.mxu0 0.0
        %3186 = vmatpush1.xpose.msra.mxu0 0.0
        %3187 = vmatprep.subr.mxu0 0.0
        %3188 = vmatpush1.xpose.msra.mxu0 0.0
        %3189 = vmatprep.subr.mxu0 0.0
        %3190 = vmatpush1.xpose.msra.mxu0 0.0
        %3191 = vmatprep.subr.mxu0 0.0
        %3192 = vmatpush1.xpose.msra.mxu0 0.0
        %3193 = vmatprep.subr.mxu0 0.0
        %3194 = vmatpush1.xpose.msra.mxu0 0.0
        %3195 = vmatprep.subr.mxu0 0.0
        %3196 = vmatpush1.xpose.msra.mxu0 0.0
        %3197 = vmatprep.subr.mxu0 0.0
        %3198 = vmatpush1.xpose.msra.mxu0 0.0
        %3199 = vmatprep.subr.mxu0 0.0
        %3200 = vmatpush1.xpose.msra.mxu0 0.0
        %3201 = vmatprep.subr.mxu0 0.0
        %3202 = vmatpush1.xpose.msra.mxu0 0.0
        %3203 = vmatprep.subr.mxu0 0.0
        %3204 = vmatpush1.xpose.msra.mxu0 0.0
        %3205 = vmatprep.subr.mxu0 0.0
        %3206 = vmatpush1.xpose.msra.mxu0 0.0
        %3207 = vmatprep.subr.mxu0 0.0
        %3208 = vmatpush1.xpose.msra.mxu0 0.0
        %3209 = vmatprep.subr.mxu0 0.0
        %3210 = vmatpush1.xpose.msra.mxu0 0.0
        %3211 = vmatprep.mubr.f32.mxu0 %v308
        %3212 = vmatmul.mubr.f32.gmra.mrb[0].mxu0 %v307
        %v3213 = vpop.f32.mrb[0].mxu0
        %v3214 = vadd.f32 %v3144, %v3213
        %v3215 = vpop.f32.mrb[0].mxu0
        %3216 = vdwg.mxu0
        %3217 = vmatprep.subr.mxu0 %v506
        %3218 = vmatpush1.xpose.msra.mxu0 %v505
        %3219 = vmatprep.subr.mxu0 0.0
        %3220 = vmatpush1.xpose.msra.mxu0 0.0
        %3221 = vmatprep.subr.mxu0 0.0
        %3222 = vmatpush1.xpose.msra.mxu0 0.0
        %3223 = vmatprep.subr.mxu0 0.0
        %3224 = vmatpush1.xpose.msra.mxu0 0.0
        %3225 = vmatprep.subr.mxu0 0.0
        %3226 = vmatpush1.xpose.msra.mxu0 0.0
        %3227 = vmatprep.subr.mxu0 0.0
        %3228 = vmatpush1.xpose.msra.mxu0 0.0
        %3229 = vmatprep.subr.mxu0 0.0
        %3230 = vmatpush1.xpose.msra.mxu0 0.0
        %3231 = vmatprep.subr.mxu0 0.0
        %3232 = vmatpush1.xpose.msra.mxu0 0.0
        %3233 = vmatprep.subr.mxu0 0.0
        %3234 = vmatpush1.xpose.msra.mxu0 0.0
        %3235 = vmatprep.subr.mxu0 0.0
        %3236 = vmatpush1.xpose.msra.mxu0 0.0
        %3237 = vmatprep.subr.mxu0 0.0
        %3238 = vmatpush1.xpose.msra.mxu0 0.0
        %3239 = vmatprep.subr.mxu0 0.0
        %3240 = vmatpush1.xpose.msra.mxu0 0.0
        %3241 = vmatprep.subr.mxu0 0.0
        %3242 = vmatpush1.xpose.msra.mxu0 0.0
        %3243 = vmatprep.subr.mxu0 0.0
        %3244 = vmatpush1.xpose.msra.mxu0 0.0
        %3245 = vmatprep.subr.mxu0 0.0
        %3246 = vmatpush1.xpose.msra.mxu0 0.0
        %3247 = vmatprep.subr.mxu0 0.0
        %3248 = vmatpush1.xpose.msra.mxu0 0.0
        %3249 = vmatprep.subr.mxu0 0.0
        %3250 = vmatpush1.xpose.msra.mxu0 0.0
        %3251 = vmatprep.subr.mxu0 0.0
        %3252 = vmatpush1.xpose.msra.mxu0 0.0
        %3253 = vmatprep.subr.mxu0 0.0
        %3254 = vmatpush1.xpose.msra.mxu0 0.0
        %3255 = vmatprep.subr.mxu0 0.0
        %3256 = vmatpush1.xpose.msra.mxu0 0.0
        %3257 = vmatprep.subr.mxu0 0.0
        %3258 = vmatpush1.xpose.msra.mxu0 0.0
        %3259 = vmatprep.subr.mxu0 0.0
        %3260 = vmatpush1.xpose.msra.mxu0 0.0
        %3261 = vmatprep.subr.mxu0 0.0
        %3262 = vmatpush1.xpose.msra.mxu0 0.0
        %3263 = vmatprep.subr.mxu0 0.0
        %3264 = vmatpush1.xpose.msra.mxu0 0.0
        %3265 = vmatprep.subr.mxu0 0.0
        %3266 = vmatpush1.xpose.msra.mxu0 0.0
        %3267 = vmatprep.subr.mxu0 0.0
        %3268 = vmatpush1.xpose.msra.mxu0 0.0
        %3269 = vmatprep.subr.mxu0 0.0
        %3270 = vmatpush1.xpose.msra.mxu0 0.0
        %3271 = vmatprep.subr.mxu0 0.0
        %3272 = vmatpush1.xpose.msra.mxu0 0.0
        %3273 = vmatprep.subr.mxu0 0.0
        %3274 = vmatpush1.xpose.msra.mxu0 0.0
        %3275 = vmatprep.subr.mxu0 0.0
        %3276 = vmatpush1.xpose.msra.mxu0 0.0
        %3277 = vmatprep.subr.mxu0 0.0
        %3278 = vmatpush1.xpose.msra.mxu0 0.0
        %3279 = vmatprep.subr.mxu0 0.0
        %3280 = vmatpush1.xpose.msra.mxu0 0.0
        %3281 = vmatprep.mubr.f32.mxu0 %v310
        %3282 = vmatmul.mubr.f32.gmra.mrb[0].mxu0 %v309
        %v3283 = vpop.f32.mrb[0].mxu0
        %v3284 = vadd.f32 %v3214, %v3283
        %v3285 = vpop.f32.mrb[0].mxu0
        %3286 = vdwg.mxu0
        %3287 = vmatprep.subr.mxu0 %v508
        %3288 = vmatpush1.xpose.msra.mxu0 %v507
        %3289 = vmatprep.subr.mxu0 0.0
        %3290 = vmatpush1.xpose.msra.mxu0 0.0
        %3291 = vmatprep.subr.mxu0 0.0
        %3292 = vmatpush1.xpose.msra.mxu0 0.0
        %3293 = vmatprep.subr.mxu0 0.0
        %3294 = vmatpush1.xpose.msra.mxu0 0.0
        %3295 = vmatprep.subr.mxu0 0.0
        %3296 = vmatpush1.xpose.msra.mxu0 0.0
        %3297 = vmatprep.subr.mxu0 0.0
        %3298 = vmatpush1.xpose.msra.mxu0 0.0
        %3299 = vmatprep.subr.mxu0 0.0
        %3300 = vmatpush1.xpose.msra.mxu0 0.0
        %3301 = vmatprep.subr.mxu0 0.0
        %3302 = vmatpush1.xpose.msra.mxu0 0.0
        %3303 = vmatprep.subr.mxu0 0.0
        %3304 = vmatpush1.xpose.msra.mxu0 0.0
        %3305 = vmatprep.subr.mxu0 0.0
        %3306 = vmatpush1.xpose.msra.mxu0 0.0
        %3307 = vmatprep.subr.mxu0 0.0
        %3308 = vmatpush1.xpose.msra.mxu0 0.0
        %3309 = vmatprep.subr.mxu0 0.0
        %3310 = vmatpush1.xpose.msra.mxu0 0.0
        %3311 = vmatprep.subr.mxu0 0.0
        %3312 = vmatpush1.xpose.msra.mxu0 0.0
        %3313 = vmatprep.subr.mxu0 0.0
        %3314 = vmatpush1.xpose.msra.mxu0 0.0
        %3315 = vmatprep.subr.mxu0 0.0
        %3316 = vmatpush1.xpose.msra.mxu0 0.0
        %3317 = vmatprep.subr.mxu0 0.0
        %3318 = vmatpush1.xpose.msra.mxu0 0.0
        %3319 = vmatprep.subr.mxu0 0.0
        %3320 = vmatpush1.xpose.msra.mxu0 0.0
        %3321 = vmatprep.subr.mxu0 0.0
        %3322 = vmatpush1.xpose.msra.mxu0 0.0
        %3323 = vmatprep.subr.mxu0 0.0
        %3324 = vmatpush1.xpose.msra.mxu0 0.0
        %3325 = vmatprep.subr.mxu0 0.0
        %3326 = vmatpush1.xpose.msra.mxu0 0.0
        %3327 = vmatprep.subr.mxu0 0.0
        %3328 = vmatpush1.xpose.msra.mxu0 0.0
        %3329 = vmatprep.subr.mxu0 0.0
        %3330 = vmatpush1.xpose.msra.mxu0 0.0
        %3331 = vmatprep.subr.mxu0 0.0
        %3332 = vmatpush1.xpose.msra.mxu0 0.0
        %3333 = vmatprep.subr.mxu0 0.0
        %3334 = vmatpush1.xpose.msra.mxu0 0.0
        %3335 = vmatprep.subr.mxu0 0.0
        %3336 = vmatpush1.xpose.msra.mxu0 0.0
        %3337 = vmatprep.subr.mxu0 0.0
        %3338 = vmatpush1.xpose.msra.mxu0 0.0
        %3339 = vmatprep.subr.mxu0 0.0
        %3340 = vmatpush1.xpose.msra.mxu0 0.0
        %3341 = vmatprep.subr.mxu0 0.0
        %3342 = vmatpush1.xpose.msra.mxu0 0.0
        %3343 = vmatprep.subr.mxu0 0.0
        %3344 = vmatpush1.xpose.msra.mxu0 0.0
        %3345 = vmatprep.subr.mxu0 0.0
        %3346 = vmatpush1.xpose.msra.mxu0 0.0
        %3347 = vmatprep.subr.mxu0 0.0
        %3348 = vmatpush1.xpose.msra.mxu0 0.0
        %3349 = vmatprep.subr.mxu0 0.0
        %3350 = vmatpush1.xpose.msra.mxu0 0.0
        %3351 = vmatprep.mubr.f32.mxu0 %v312
        %3352 = vmatmul.mubr.f32.gmra.mrb[0].mxu0 %v311
        %v3353 = vpop.f32.mrb[0].mxu0
        %v3354 = vadd.f32 %v3284, %v3353
        %v3355 = vpop.f32.mrb[0].mxu0
        %3356 = vdwg.mxu0
        %3357 = vmatprep.subr.mxu0 %v510
        %3358 = vmatpush1.xpose.msra.mxu0 %v509
        %3359 = vmatprep.subr.mxu0 0.0
        %3360 = vmatpush1.xpose.msra.mxu0 0.0
        %3361 = vmatprep.subr.mxu0 0.0
        %3362 = vmatpush1.xpose.msra.mxu0 0.0
        %3363 = vmatprep.subr.mxu0 0.0
        %3364 = vmatpush1.xpose.msra.mxu0 0.0
        %3365 = vmatprep.subr.mxu0 0.0
        %3366 = vmatpush1.xpose.msra.mxu0 0.0
        %3367 = vmatprep.subr.mxu0 0.0
        %3368 = vmatpush1.xpose.msra.mxu0 0.0
        %3369 = vmatprep.subr.mxu0 0.0
        %3370 = vmatpush1.xpose.msra.mxu0 0.0
        %3371 = vmatprep.subr.mxu0 0.0
        %3372 = vmatpush1.xpose.msra.mxu0 0.0
        %3373 = vmatprep.subr.mxu0 0.0
        %3374 = vmatpush1.xpose.msra.mxu0 0.0
        %3375 = vmatprep.subr.mxu0 0.0
        %3376 = vmatpush1.xpose.msra.mxu0 0.0
        %3377 = vmatprep.subr.mxu0 0.0
        %3378 = vmatpush1.xpose.msra.mxu0 0.0
        %3379 = vmatprep.subr.mxu0 0.0
        %3380 = vmatpush1.xpose.msra.mxu0 0.0
        %3381 = vmatprep.subr.mxu0 0.0
        %3382 = vmatpush1.xpose.msra.mxu0 0.0
        %3383 = vmatprep.subr.mxu0 0.0
        %3384 = vmatpush1.xpose.msra.mxu0 0.0
        %3385 = vmatprep.subr.mxu0 0.0
        %3386 = vmatpush1.xpose.msra.mxu0 0.0
        %3387 = vmatprep.subr.mxu0 0.0
        %3388 = vmatpush1.xpose.msra.mxu0 0.0
        %3389 = vmatprep.subr.mxu0 0.0
        %3390 = vmatpush1.xpose.msra.mxu0 0.0
        %3391 = vmatprep.subr.mxu0 0.0
        %3392 = vmatpush1.xpose.msra.mxu0 0.0
        %3393 = vmatprep.subr.mxu0 0.0
        %3394 = vmatpush1.xpose.msra.mxu0 0.0
        %3395 = vmatprep.subr.mxu0 0.0
        %3396 = vmatpush1.xpose.msra.mxu0 0.0
        %3397 = vmatprep.subr.mxu0 0.0
        %3398 = vmatpush1.xpose.msra.mxu0 0.0
        %3399 = vmatprep.subr.mxu0 0.0
        %3400 = vmatpush1.xpose.msra.mxu0 0.0
        %3401 = vmatprep.subr.mxu0 0.0
        %3402 = vmatpush1.xpose.msra.mxu0 0.0
        %3403 = vmatprep.subr.mxu0 0.0
        %3404 = vmatpush1.xpose.msra.mxu0 0.0
        %3405 = vmatprep.subr.mxu0 0.0
        %3406 = vmatpush1.xpose.msra.mxu0 0.0
        %3407 = vmatprep.subr.mxu0 0.0
        %3408 = vmatpush1.xpose.msra.mxu0 0.0
        %3409 = vmatprep.subr.mxu0 0.0
        %3410 = vmatpush1.xpose.msra.mxu0 0.0
        %3411 = vmatprep.subr.mxu0 0.0
        %3412 = vmatpush1.xpose.msra.mxu0 0.0
        %3413 = vmatprep.subr.mxu0 0.0
        %3414 = vmatpush1.xpose.msra.mxu0 0.0
        %3415 = vmatprep.subr.mxu0 0.0
        %3416 = vmatpush1.xpose.msra.mxu0 0.0
        %3417 = vmatprep.subr.mxu0 0.0
        %3418 = vmatpush1.xpose.msra.mxu0 0.0
        %3419 = vmatprep.subr.mxu0 0.0
        %3420 = vmatpush1.xpose.msra.mxu0 0.0
        %3421 = vmatprep.mubr.f32.mxu0 %v314
        %3422 = vmatmul.mubr.f32.gmra.mrb[0].mxu0 %v313
        %v3423 = vpop.f32.mrb[0].mxu0
        %v3424 = vadd.f32 %v3354, %v3423
        %v3425 = vpop.f32.mrb[0].mxu0
        %3426 = vdwg.mxu0
        %3427 = vmatprep.subr.mxu0 %v512
        %3428 = vmatpush1.xpose.msra.mxu0 %v511
        %3429 = vmatprep.subr.mxu0 0.0
        %3430 = vmatpush1.xpose.msra.mxu0 0.0
        %3431 = vmatprep.subr.mxu0 0.0
        %3432 = vmatpush1.xpose.msra.mxu0 0.0
        %3433 = vmatprep.subr.mxu0 0.0
        %3434 = vmatpush1.xpose.msra.mxu0 0.0
        %3435 = vmatprep.subr.mxu0 0.0
        %3436 = vmatpush1.xpose.msra.mxu0 0.0
        %3437 = vmatprep.subr.mxu0 0.0
        %3438 = vmatpush1.xpose.msra.mxu0 0.0
        %3439 = vmatprep.subr.mxu0 0.0
        %3440 = vmatpush1.xpose.msra.mxu0 0.0
        %3441 = vmatprep.subr.mxu0 0.0
        %3442 = vmatpush1.xpose.msra.mxu0 0.0
        %3443 = vmatprep.subr.mxu0 0.0
        %3444 = vmatpush1.xpose.msra.mxu0 0.0
        %3445 = vmatprep.subr.mxu0 0.0
        %3446 = vmatpush1.xpose.msra.mxu0 0.0
        %3447 = vmatprep.subr.mxu0 0.0
        %3448 = vmatpush1.xpose.msra.mxu0 0.0
        %3449 = vmatprep.subr.mxu0 0.0
        %3450 = vmatpush1.xpose.msra.mxu0 0.0
        %3451 = vmatprep.subr.mxu0 0.0
        %3452 = vmatpush1.xpose.msra.mxu0 0.0
        %3453 = vmatprep.subr.mxu0 0.0
        %3454 = vmatpush1.xpose.msra.mxu0 0.0
        %3455 = vmatprep.subr.mxu0 0.0
        %3456 = vmatpush1.xpose.msra.mxu0 0.0
        %3457 = vmatprep.subr.mxu0 0.0
        %3458 = vmatpush1.xpose.msra.mxu0 0.0
        %3459 = vmatprep.subr.mxu0 0.0
        %3460 = vmatpush1.xpose.msra.mxu0 0.0
        %3461 = vmatprep.subr.mxu0 0.0
        %3462 = vmatpush1.xpose.msra.mxu0 0.0
        %3463 = vmatprep.subr.mxu0 0.0
        %3464 = vmatpush1.xpose.msra.mxu0 0.0
        %3465 = vmatprep.subr.mxu0 0.0
        %3466 = vmatpush1.xpose.msra.mxu0 0.0
        %3467 = vmatprep.subr.mxu0 0.0
        %3468 = vmatpush1.xpose.msra.mxu0 0.0
        %3469 = vmatprep.subr.mxu0 0.0
        %3470 = vmatpush1.xpose.msra.mxu0 0.0
        %3471 = vmatprep.subr.mxu0 0.0
        %3472 = vmatpush1.xpose.msra.mxu0 0.0
        %3473 = vmatprep.subr.mxu0 0.0
        %3474 = vmatpush1.xpose.msra.mxu0 0.0
        %3475 = vmatprep.subr.mxu0 0.0
        %3476 = vmatpush1.xpose.msra.mxu0 0.0
        %3477 = vmatprep.subr.mxu0 0.0
        %3478 = vmatpush1.xpose.msra.mxu0 0.0
        %3479 = vmatprep.subr.mxu0 0.0
        %3480 = vmatpush1.xpose.msra.mxu0 0.0
        %3481 = vmatprep.subr.mxu0 0.0
        %3482 = vmatpush1.xpose.msra.mxu0 0.0
        %3483 = vmatprep.subr.mxu0 0.0
        %3484 = vmatpush1.xpose.msra.mxu0 0.0
        %3485 = vmatprep.subr.mxu0 0.0
        %3486 = vmatpush1.xpose.msra.mxu0 0.0
        %3487 = vmatprep.subr.mxu0 0.0
        %3488 = vmatpush1.xpose.msra.mxu0 0.0
        %3489 = vmatprep.subr.mxu0 0.0
        %3490 = vmatpush1.xpose.msra.mxu0 0.0
        %3491 = vmatprep.mubr.f32.mxu0 %v316
        %3492 = vmatmul.mubr.f32.gmra.mrb[0].mxu0 %v315
        %v3493 = vpop.f32.mrb[0].mxu0
        %v3494 = vadd.f32 %v3424, %v3493
        %v3495 = vpop.f32.mrb[0].mxu0
        %3496 = vdwg.mxu0
        %3497 = vmatprep.subr.mxu0 %v514
        %3498 = vmatpush1.xpose.msra.mxu0 %v513
        %3499 = vmatprep.subr.mxu0 0.0
        %3500 = vmatpush1.xpose.msra.mxu0 0.0
        %3501 = vmatprep.subr.mxu0 0.0
        %3502 = vmatpush1.xpose.msra.mxu0 0.0
        %3503 = vmatprep.subr.mxu0 0.0
        %3504 = vmatpush1.xpose.msra.mxu0 0.0
        %3505 = vmatprep.subr.mxu0 0.0
        %3506 = vmatpush1.xpose.msra.mxu0 0.0
        %3507 = vmatprep.subr.mxu0 0.0
        %3508 = vmatpush1.xpose.msra.mxu0 0.0
        %3509 = vmatprep.subr.mxu0 0.0
        %3510 = vmatpush1.xpose.msra.mxu0 0.0
        %3511 = vmatprep.subr.mxu0 0.0
        %3512 = vmatpush1.xpose.msra.mxu0 0.0
        %3513 = vmatprep.subr.mxu0 0.0
        %3514 = vmatpush1.xpose.msra.mxu0 0.0
        %3515 = vmatprep.subr.mxu0 0.0
        %3516 = vmatpush1.xpose.msra.mxu0 0.0
        %3517 = vmatprep.subr.mxu0 0.0
        %3518 = vmatpush1.xpose.msra.mxu0 0.0
        %3519 = vmatprep.subr.mxu0 0.0
        %3520 = vmatpush1.xpose.msra.mxu0 0.0
        %3521 = vmatprep.subr.mxu0 0.0
        %3522 = vmatpush1.xpose.msra.mxu0 0.0
        %3523 = vmatprep.subr.mxu0 0.0
        %3524 = vmatpush1.xpose.msra.mxu0 0.0
        %3525 = vmatprep.subr.mxu0 0.0
        %3526 = vmatpush1.xpose.msra.mxu0 0.0
        %3527 = vmatprep.subr.mxu0 0.0
        %3528 = vmatpush1.xpose.msra.mxu0 0.0
        %3529 = vmatprep.subr.mxu0 0.0
        %3530 = vmatpush1.xpose.msra.mxu0 0.0
        %3531 = vmatprep.subr.mxu0 0.0
        %3532 = vmatpush1.xpose.msra.mxu0 0.0
        %3533 = vmatprep.subr.mxu0 0.0
        %3534 = vmatpush1.xpose.msra.mxu0 0.0
        %3535 = vmatprep.subr.mxu0 0.0
        %3536 = vmatpush1.xpose.msra.mxu0 0.0
        %3537 = vmatprep.subr.mxu0 0.0
        %3538 = vmatpush1.xpose.msra.mxu0 0.0
        %3539 = vmatprep.subr.mxu0 0.0
        %3540 = vmatpush1.xpose.msra.mxu0 0.0
        %3541 = vmatprep.subr.mxu0 0.0
        %3542 = vmatpush1.xpose.msra.mxu0 0.0
        %3543 = vmatprep.subr.mxu0 0.0
        %3544 = vmatpush1.xpose.msra.mxu0 0.0
        %3545 = vmatprep.subr.mxu0 0.0
        %3546 = vmatpush1.xpose.msra.mxu0 0.0
        %3547 = vmatprep.subr.mxu0 0.0
        %3548 = vmatpush1.xpose.msra.mxu0 0.0
        %3549 = vmatprep.subr.mxu0 0.0
        %3550 = vmatpush1.xpose.msra.mxu0 0.0
        %3551 = vmatprep.subr.mxu0 0.0
        %3552 = vmatpush1.xpose.msra.mxu0 0.0
        %3553 = vmatprep.subr.mxu0 0.0
        %3554 = vmatpush1.xpose.msra.mxu0 0.0
        %3555 = vmatprep.subr.mxu0 0.0
        %3556 = vmatpush1.xpose.msra.mxu0 0.0
        %3557 = vmatprep.subr.mxu0 0.0
        %3558 = vmatpush1.xpose.msra.mxu0 0.0
        %3559 = vmatprep.subr.mxu0 0.0
        %3560 = vmatpush1.xpose.msra.mxu0 0.0
        %3561 = vmatprep.mubr.f32.mxu0 %v318
        %3562 = vmatmul.mubr.f32.gmra.mrb[0].mxu0 %v317
        %v3563 = vpop.f32.mrb[0].mxu0
        %v3564 = vadd.f32 %v3494, %v3563
        %v3565 = vpop.f32.mrb[0].mxu0
        %3566 = vdwg.mxu0
        %3567 = vmatprep.subr.mxu0 %v516
        %3568 = vmatpush1.xpose.msra.mxu0 %v515
        %3569 = vmatprep.subr.mxu0 0.0
        %3570 = vmatpush1.xpose.msra.mxu0 0.0
        %3571 = vmatprep.subr.mxu0 0.0
        %3572 = vmatpush1.xpose.msra.mxu0 0.0
        %3573 = vmatprep.subr.mxu0 0.0
        %3574 = vmatpush1.xpose.msra.mxu0 0.0
        %3575 = vmatprep.subr.mxu0 0.0
        %3576 = vmatpush1.xpose.msra.mxu0 0.0
        %3577 = vmatprep.subr.mxu0 0.0
        %3578 = vmatpush1.xpose.msra.mxu0 0.0
        %3579 = vmatprep.subr.mxu0 0.0
        %3580 = vmatpush1.xpose.msra.mxu0 0.0
        %3581 = vmatprep.subr.mxu0 0.0
        %3582 = vmatpush1.xpose.msra.mxu0 0.0
        %3583 = vmatprep.subr.mxu0 0.0
        %3584 = vmatpush1.xpose.msra.mxu0 0.0
        %3585 = vmatprep.subr.mxu0 0.0
        %3586 = vmatpush1.xpose.msra.mxu0 0.0
        %3587 = vmatprep.subr.mxu0 0.0
        %3588 = vmatpush1.xpose.msra.mxu0 0.0
        %3589 = vmatprep.subr.mxu0 0.0
        %3590 = vmatpush1.xpose.msra.mxu0 0.0
        %3591 = vmatprep.subr.mxu0 0.0
        %3592 = vmatpush1.xpose.msra.mxu0 0.0
        %3593 = vmatprep.subr.mxu0 0.0
        %3594 = vmatpush1.xpose.msra.mxu0 0.0
        %3595 = vmatprep.subr.mxu0 0.0
        %3596 = vmatpush1.xpose.msra.mxu0 0.0
        %3597 = vmatprep.subr.mxu0 0.0
        %3598 = vmatpush1.xpose.msra.mxu0 0.0
        %3599 = vmatprep.subr.mxu0 0.0
        %3600 = vmatpush1.xpose.msra.mxu0 0.0
        %3601 = vmatprep.subr.mxu0 0.0
        %3602 = vmatpush1.xpose.msra.mxu0 0.0
        %3603 = vmatprep.subr.mxu0 0.0
        %3604 = vmatpush1.xpose.msra.mxu0 0.0
        %3605 = vmatprep.subr.mxu0 0.0
        %3606 = vmatpush1.xpose.msra.mxu0 0.0
        %3607 = vmatprep.subr.mxu0 0.0
        %3608 = vmatpush1.xpose.msra.mxu0 0.0
        %3609 = vmatprep.subr.mxu0 0.0
        %3610 = vmatpush1.xpose.msra.mxu0 0.0
        %3611 = vmatprep.subr.mxu0 0.0
        %3612 = vmatpush1.xpose.msra.mxu0 0.0
        %3613 = vmatprep.subr.mxu0 0.0
        %3614 = vmatpush1.xpose.msra.mxu0 0.0
        %3615 = vmatprep.subr.mxu0 0.0
        %3616 = vmatpush1.xpose.msra.mxu0 0.0
        %3617 = vmatprep.subr.mxu0 0.0
        %3618 = vmatpush1.xpose.msra.mxu0 0.0
        %3619 = vmatprep.subr.mxu0 0.0
        %3620 = vmatpush1.xpose.msra.mxu0 0.0
        %3621 = vmatprep.subr.mxu0 0.0
        %3622 = vmatpush1.xpose.msra.mxu0 0.0
        %3623 = vmatprep.subr.mxu0 0.0
        %3624 = vmatpush1.xpose.msra.mxu0 0.0
        %3625 = vmatprep.subr.mxu0 0.0
        %3626 = vmatpush1.xpose.msra.mxu0 0.0
        %3627 = vmatprep.subr.mxu0 0.0
        %3628 = vmatpush1.xpose.msra.mxu0 0.0
        %3629 = vmatprep.subr.mxu0 0.0
        %3630 = vmatpush1.xpose.msra.mxu0 0.0
        %3631 = vmatprep.mubr.f32.mxu0 %v320
        %3632 = vmatmul.mubr.f32.gmra.mrb[0].mxu0 %v319
        %v3633 = vpop.f32.mrb[0].mxu0
        %v3634 = vadd.f32 %v3564, %v3633
        %v3635 = vpop.f32.mrb[0].mxu0
        %3636 = vdwg.mxu0
        %3637 = vmatprep.subr.mxu0 %v518
        %3638 = vmatpush1.xpose.msra.mxu0 %v517
        %3639 = vmatprep.subr.mxu0 0.0
        %3640 = vmatpush1.xpose.msra.mxu0 0.0
        %3641 = vmatprep.subr.mxu0 0.0
        %3642 = vmatpush1.xpose.msra.mxu0 0.0
        %3643 = vmatprep.subr.mxu0 0.0
        %3644 = vmatpush1.xpose.msra.mxu0 0.0
        %3645 = vmatprep.subr.mxu0 0.0
        %3646 = vmatpush1.xpose.msra.mxu0 0.0
        %3647 = vmatprep.subr.mxu0 0.0
        %3648 = vmatpush1.xpose.msra.mxu0 0.0
        %3649 = vmatprep.subr.mxu0 0.0
        %3650 = vmatpush1.xpose.msra.mxu0 0.0
        %3651 = vmatprep.subr.mxu0 0.0
        %3652 = vmatpush1.xpose.msra.mxu0 0.0
        %3653 = vmatprep.subr.mxu0 0.0
        %3654 = vmatpush1.xpose.msra.mxu0 0.0
        %3655 = vmatprep.subr.mxu0 0.0
        %3656 = vmatpush1.xpose.msra.mxu0 0.0
        %3657 = vmatprep.subr.mxu0 0.0
        %3658 = vmatpush1.xpose.msra.mxu0 0.0
        %3659 = vmatprep.subr.mxu0 0.0
        %3660 = vmatpush1.xpose.msra.mxu0 0.0
        %3661 = vmatprep.subr.mxu0 0.0
        %3662 = vmatpush1.xpose.msra.mxu0 0.0
        %3663 = vmatprep.subr.mxu0 0.0
        %3664 = vmatpush1.xpose.msra.mxu0 0.0
        %3665 = vmatprep.subr.mxu0 0.0
        %3666 = vmatpush1.xpose.msra.mxu0 0.0
        %3667 = vmatprep.subr.mxu0 0.0
        %3668 = vmatpush1.xpose.msra.mxu0 0.0
        %3669 = vmatprep.subr.mxu0 0.0
        %3670 = vmatpush1.xpose.msra.mxu0 0.0
        %3671 = vmatprep.subr.mxu0 0.0
        %3672 = vmatpush1.xpose.msra.mxu0 0.0
        %3673 = vmatprep.subr.mxu0 0.0
        %3674 = vmatpush1.xpose.msra.mxu0 0.0
        %3675 = vmatprep.subr.mxu0 0.0
        %3676 = vmatpush1.xpose.msra.mxu0 0.0
        %3677 = vmatprep.subr.mxu0 0.0
        %3678 = vmatpush1.xpose.msra.mxu0 0.0
        %3679 = vmatprep.subr.mxu0 0.0
        %3680 = vmatpush1.xpose.msra.mxu0 0.0
        %3681 = vmatprep.subr.mxu0 0.0
        %3682 = vmatpush1.xpose.msra.mxu0 0.0
        %3683 = vmatprep.subr.mxu0 0.0
        %3684 = vmatpush1.xpose.msra.mxu0 0.0
        %3685 = vmatprep.subr.mxu0 0.0
        %3686 = vmatpush1.xpose.msra.mxu0 0.0
        %3687 = vmatprep.subr.mxu0 0.0
        %3688 = vmatpush1.xpose.msra.mxu0 0.0
        %3689 = vmatprep.subr.mxu0 0.0
        %3690 = vmatpush1.xpose.msra.mxu0 0.0
        %3691 = vmatprep.subr.mxu0 0.0
        %3692 = vmatpush1.xpose.msra.mxu0 0.0
        %3693 = vmatprep.subr.mxu0 0.0
        %3694 = vmatpush1.xpose.msra.mxu0 0.0
        %3695 = vmatprep.subr.mxu0 0.0
        %3696 = vmatpush1.xpose.msra.mxu0 0.0
        %3697 = vmatprep.subr.mxu0 0.0
        %3698 = vmatpush1.xpose.msra.mxu0 0.0
        %3699 = vmatprep.subr.mxu0 0.0
        %3700 = vmatpush1.xpose.msra.mxu0 0.0
        %3701 = vmatprep.mubr.f32.mxu0 %v322
        %3702 = vmatmul.mubr.f32.gmra.mrb[0].mxu0 %v321
        %v3703 = vpop.f32.mrb[0].mxu0
        %v3704 = vadd.f32 %v3634, %v3703
        %v3705 = vpop.f32.mrb[0].mxu0
        %3706 = vdwg.mxu0
        %3707 = vmatprep.subr.mxu0 %v520
        %3708 = vmatpush1.xpose.msra.mxu0 %v519
        %3709 = vmatprep.subr.mxu0 0.0
        %3710 = vmatpush1.xpose.msra.mxu0 0.0
        %3711 = vmatprep.subr.mxu0 0.0
        %3712 = vmatpush1.xpose.msra.mxu0 0.0
        %3713 = vmatprep.subr.mxu0 0.0
        %3714 = vmatpush1.xpose.msra.mxu0 0.0
        %3715 = vmatprep.subr.mxu0 0.0
        %3716 = vmatpush1.xpose.msra.mxu0 0.0
        %3717 = vmatprep.subr.mxu0 0.0
        %3718 = vmatpush1.xpose.msra.mxu0 0.0
        %3719 = vmatprep.subr.mxu0 0.0
        %3720 = vmatpush1.xpose.msra.mxu0 0.0
        %3721 = vmatprep.subr.mxu0 0.0
        %3722 = vmatpush1.xpose.msra.mxu0 0.0
        %3723 = vmatprep.subr.mxu0 0.0
        %3724 = vmatpush1.xpose.msra.mxu0 0.0
        %3725 = vmatprep.subr.mxu0 0.0
        %3726 = vmatpush1.xpose.msra.mxu0 0.0
        %3727 = vmatprep.subr.mxu0 0.0
        %3728 = vmatpush1.xpose.msra.mxu0 0.0
        %3729 = vmatprep.subr.mxu0 0.0
        %3730 = vmatpush1.xpose.msra.mxu0 0.0
        %3731 = vmatprep.subr.mxu0 0.0
        %3732 = vmatpush1.xpose.msra.mxu0 0.0
        %3733 = vmatprep.subr.mxu0 0.0
        %3734 = vmatpush1.xpose.msra.mxu0 0.0
        %3735 = vmatprep.subr.mxu0 0.0
        %3736 = vmatpush1.xpose.msra.mxu0 0.0
        %3737 = vmatprep.subr.mxu0 0.0
        %3738 = vmatpush1.xpose.msra.mxu0 0.0
        %3739 = vmatprep.subr.mxu0 0.0
        %3740 = vmatpush1.xpose.msra.mxu0 0.0
        %3741 = vmatprep.subr.mxu0 0.0
        %3742 = vmatpush1.xpose.msra.mxu0 0.0
        %3743 = vmatprep.subr.mxu0 0.0
        %3744 = vmatpush1.xpose.msra.mxu0 0.0
        %3745 = vmatprep.subr.mxu0 0.0
        %3746 = vmatpush1.xpose.msra.mxu0 0.0
        %3747 = vmatprep.subr.mxu0 0.0
        %3748 = vmatpush1.xpose.msra.mxu0 0.0
        %3749 = vmatprep.subr.mxu0 0.0
        %3750 = vmatpush1.xpose.msra.mxu0 0.0
        %3751 = vmatprep.subr.mxu0 0.0
        %3752 = vmatpush1.xpose.msra.mxu0 0.0
        %3753 = vmatprep.subr.mxu0 0.0
        %3754 = vmatpush1.xpose.msra.mxu0 0.0
        %3755 = vmatprep.subr.mxu0 0.0
        %3756 = vmatpush1.xpose.msra.mxu0 0.0
        %3757 = vmatprep.subr.mxu0 0.0
        %3758 = vmatpush1.xpose.msra.mxu0 0.0
        %3759 = vmatprep.subr.mxu0 0.0
        %3760 = vmatpush1.xpose.msra.mxu0 0.0
        %3761 = vmatprep.subr.mxu0 0.0
        %3762 = vmatpush1.xpose.msra.mxu0 0.0
        %3763 = vmatprep.subr.mxu0 0.0
        %3764 = vmatpush1.xpose.msra.mxu0 0.0
        %3765 = vmatprep.subr.mxu0 0.0
        %3766 = vmatpush1.xpose.msra.mxu0 0.0
        %3767 = vmatprep.subr.mxu0 0.0
        %3768 = vmatpush1.xpose.msra.mxu0 0.0
        %3769 = vmatprep.subr.mxu0 0.0
        %3770 = vmatpush1.xpose.msra.mxu0 0.0
        %3771 = vmatprep.mubr.f32.mxu0 %v324
        %3772 = vmatmul.mubr.f32.gmra.mrb[0].mxu0 %v323
        %v3773 = vpop.f32.mrb[0].mxu0
        %v3774 = vadd.f32 %v3704, %v3773
        %v3775 = vpop.f32.mrb[0].mxu0
        %3776 = vdwg.mxu0
        %3777 = vmatprep.subr.mxu0 %v522
        %3778 = vmatpush1.xpose.msra.mxu0 %v521
        %3779 = vmatprep.subr.mxu0 0.0
        %3780 = vmatpush1.xpose.msra.mxu0 0.0
        %3781 = vmatprep.subr.mxu0 0.0
        %3782 = vmatpush1.xpose.msra.mxu0 0.0
        %3783 = vmatprep.subr.mxu0 0.0
        %3784 = vmatpush1.xpose.msra.mxu0 0.0
        %3785 = vmatprep.subr.mxu0 0.0
        %3786 = vmatpush1.xpose.msra.mxu0 0.0
        %3787 = vmatprep.subr.mxu0 0.0
        %3788 = vmatpush1.xpose.msra.mxu0 0.0
        %3789 = vmatprep.subr.mxu0 0.0
        %3790 = vmatpush1.xpose.msra.mxu0 0.0
        %3791 = vmatprep.subr.mxu0 0.0
        %3792 = vmatpush1.xpose.msra.mxu0 0.0
        %3793 = vmatprep.subr.mxu0 0.0
        %3794 = vmatpush1.xpose.msra.mxu0 0.0
        %3795 = vmatprep.subr.mxu0 0.0
        %3796 = vmatpush1.xpose.msra.mxu0 0.0
        %3797 = vmatprep.subr.mxu0 0.0
        %3798 = vmatpush1.xpose.msra.mxu0 0.0
        %3799 = vmatprep.subr.mxu0 0.0
        %3800 = vmatpush1.xpose.msra.mxu0 0.0
        %3801 = vmatprep.subr.mxu0 0.0
        %3802 = vmatpush1.xpose.msra.mxu0 0.0
        %3803 = vmatprep.subr.mxu0 0.0
        %3804 = vmatpush1.xpose.msra.mxu0 0.0
        %3805 = vmatprep.subr.mxu0 0.0
        %3806 = vmatpush1.xpose.msra.mxu0 0.0
        %3807 = vmatprep.subr.mxu0 0.0
        %3808 = vmatpush1.xpose.msra.mxu0 0.0
        %3809 = vmatprep.subr.mxu0 0.0
        %3810 = vmatpush1.xpose.msra.mxu0 0.0
        %3811 = vmatprep.subr.mxu0 0.0
        %3812 = vmatpush1.xpose.msra.mxu0 0.0
        %3813 = vmatprep.subr.mxu0 0.0
        %3814 = vmatpush1.xpose.msra.mxu0 0.0
        %3815 = vmatprep.subr.mxu0 0.0
        %3816 = vmatpush1.xpose.msra.mxu0 0.0
        %3817 = vmatprep.subr.mxu0 0.0
        %3818 = vmatpush1.xpose.msra.mxu0 0.0
        %3819 = vmatprep.subr.mxu0 0.0
        %3820 = vmatpush1.xpose.msra.mxu0 0.0
        %3821 = vmatprep.subr.mxu0 0.0
        %3822 = vmatpush1.xpose.msra.mxu0 0.0
        %3823 = vmatprep.subr.mxu0 0.0
        %3824 = vmatpush1.xpose.msra.mxu0 0.0
        %3825 = vmatprep.subr.mxu0 0.0
        %3826 = vmatpush1.xpose.msra.mxu0 0.0
        %3827 = vmatprep.subr.mxu0 0.0
        %3828 = vmatpush1.xpose.msra.mxu0 0.0
        %3829 = vmatprep.subr.mxu0 0.0
        %3830 = vmatpush1.xpose.msra.mxu0 0.0
        %3831 = vmatprep.subr.mxu0 0.0
        %3832 = vmatpush1.xpose.msra.mxu0 0.0
        %3833 = vmatprep.subr.mxu0 0.0
        %3834 = vmatpush1.xpose.msra.mxu0 0.0
        %3835 = vmatprep.subr.mxu0 0.0
        %3836 = vmatpush1.xpose.msra.mxu0 0.0
        %3837 = vmatprep.subr.mxu0 0.0
        %3838 = vmatpush1.xpose.msra.mxu0 0.0
        %3839 = vmatprep.subr.mxu0 0.0
        %3840 = vmatpush1.xpose.msra.mxu0 0.0
        %3841 = vmatprep.mubr.f32.mxu0 %v326
        %3842 = vmatmul.mubr.f32.gmra.mrb[0].mxu0 %v325
        %v3843 = vpop.f32.mrb[0].mxu0
        %v3844 = vadd.f32 %v3774, %v3843
        %v3845 = vpop.f32.mrb[0].mxu0
        %3846 = vdwg.mxu0
        %3847 = vmatprep.subr.mxu0 %v524
        %3848 = vmatpush1.xpose.msra.mxu0 %v523
        %3849 = vmatprep.subr.mxu0 0.0
        %3850 = vmatpush1.xpose.msra.mxu0 0.0
        %3851 = vmatprep.subr.mxu0 0.0
        %3852 = vmatpush1.xpose.msra.mxu0 0.0
        %3853 = vmatprep.subr.mxu0 0.0
        %3854 = vmatpush1.xpose.msra.mxu0 0.0
        %3855 = vmatprep.subr.mxu0 0.0
        %3856 = vmatpush1.xpose.msra.mxu0 0.0
        %3857 = vmatprep.subr.mxu0 0.0
        %3858 = vmatpush1.xpose.msra.mxu0 0.0
        %3859 = vmatprep.subr.mxu0 0.0
        %3860 = vmatpush1.xpose.msra.mxu0 0.0
        %3861 = vmatprep.subr.mxu0 0.0
        %3862 = vmatpush1.xpose.msra.mxu0 0.0
        %3863 = vmatprep.subr.mxu0 0.0
        %3864 = vmatpush1.xpose.msra.mxu0 0.0
        %3865 = vmatprep.subr.mxu0 0.0
        %3866 = vmatpush1.xpose.msra.mxu0 0.0
        %3867 = vmatprep.subr.mxu0 0.0
        %3868 = vmatpush1.xpose.msra.mxu0 0.0
        %3869 = vmatprep.subr.mxu0 0.0
        %3870 = vmatpush1.xpose.msra.mxu0 0.0
        %3871 = vmatprep.subr.mxu0 0.0
        %3872 = vmatpush1.xpose.msra.mxu0 0.0
        %3873 = vmatprep.subr.mxu0 0.0
        %3874 = vmatpush1.xpose.msra.mxu0 0.0
        %3875 = vmatprep.subr.mxu0 0.0
        %3876 = vmatpush1.xpose.msra.mxu0 0.0
        %3877 = vmatprep.subr.mxu0 0.0
        %3878 = vmatpush1.xpose.msra.mxu0 0.0
        %3879 = vmatprep.subr.mxu0 0.0
        %3880 = vmatpush1.xpose.msra.mxu0 0.0
        %3881 = vmatprep.subr.mxu0 0.0
        %3882 = vmatpush1.xpose.msra.mxu0 0.0
        %3883 = vmatprep.subr.mxu0 0.0
        %3884 = vmatpush1.xpose.msra.mxu0 0.0
        %3885 = vmatprep.subr.mxu0 0.0
        %3886 = vmatpush1.xpose.msra.mxu0 0.0
        %3887 = vmatprep.subr.mxu0 0.0
        %3888 = vmatpush1.xpose.msra.mxu0 0.0
        %3889 = vmatprep.subr.mxu0 0.0
        %3890 = vmatpush1.xpose.msra.mxu0 0.0
        %3891 = vmatprep.subr.mxu0 0.0
        %3892 = vmatpush1.xpose.msra.mxu0 0.0
        %3893 = vmatprep.subr.mxu0 0.0
        %3894 = vmatpush1.xpose.msra.mxu0 0.0
        %3895 = vmatprep.subr.mxu0 0.0
        %3896 = vmatpush1.xpose.msra.mxu0 0.0
        %3897 = vmatprep.subr.mxu0 0.0
        %3898 = vmatpush1.xpose.msra.mxu0 0.0
        %3899 = vmatprep.subr.mxu0 0.0
        %3900 = vmatpush1.xpose.msra.mxu0 0.0
        %3901 = vmatprep.subr.mxu0 0.0
        %3902 = vmatpush1.xpose.msra.mxu0 0.0
        %3903 = vmatprep.subr.mxu0 0.0
        %3904 = vmatpush1.xpose.msra.mxu0 0.0
        %3905 = vmatprep.subr.mxu0 0.0
        %3906 = vmatpush1.xpose.msra.mxu0 0.0
        %3907 = vmatprep.subr.mxu0 0.0
        %3908 = vmatpush1.xpose.msra.mxu0 0.0
        %3909 = vmatprep.subr.mxu0 0.0
        %3910 = vmatpush1.xpose.msra.mxu0 0.0
        %3911 = vmatprep.mubr.f32.mxu0 %v328
        %3912 = vmatmul.mubr.f32.gmra.mrb[0].mxu0 %v327
        %v3913 = vpop.f32.mrb[0].mxu0
        %v3914 = vadd.f32 %v3844, %v3913
        %v3915 = vpop.f32.mrb[0].mxu0
        %3916 = vdwg.mxu0
        %3917 = vmatprep.subr.mxu0 %v526
        %3918 = vmatpush1.xpose.msra.mxu0 %v525
        %3919 = vmatprep.subr.mxu0 0.0
        %3920 = vmatpush1.xpose.msra.mxu0 0.0
        %3921 = vmatprep.subr.mxu0 0.0
        %3922 = vmatpush1.xpose.msra.mxu0 0.0
        %3923 = vmatprep.subr.mxu0 0.0
        %3924 = vmatpush1.xpose.msra.mxu0 0.0
        %3925 = vmatprep.subr.mxu0 0.0
        %3926 = vmatpush1.xpose.msra.mxu0 0.0
        %3927 = vmatprep.subr.mxu0 0.0
        %3928 = vmatpush1.xpose.msra.mxu0 0.0
        %3929 = vmatprep.subr.mxu0 0.0
        %3930 = vmatpush1.xpose.msra.mxu0 0.0
        %3931 = vmatprep.subr.mxu0 0.0
        %3932 = vmatpush1.xpose.msra.mxu0 0.0
        %3933 = vmatprep.subr.mxu0 0.0
        %3934 = vmatpush1.xpose.msra.mxu0 0.0
        %3935 = vmatprep.subr.mxu0 0.0
        %3936 = vmatpush1.xpose.msra.mxu0 0.0
        %3937 = vmatprep.subr.mxu0 0.0
        %3938 = vmatpush1.xpose.msra.mxu0 0.0
        %3939 = vmatprep.subr.mxu0 0.0
        %3940 = vmatpush1.xpose.msra.mxu0 0.0
        %3941 = vmatprep.subr.mxu0 0.0
        %3942 = vmatpush1.xpose.msra.mxu0 0.0
        %3943 = vmatprep.subr.mxu0 0.0
        %3944 = vmatpush1.xpose.msra.mxu0 0.0
        %3945 = vmatprep.subr.mxu0 0.0
        %3946 = vmatpush1.xpose.msra.mxu0 0.0
        %3947 = vmatprep.subr.mxu0 0.0
        %3948 = vmatpush1.xpose.msra.mxu0 0.0
        %3949 = vmatprep.subr.mxu0 0.0
        %3950 = vmatpush1.xpose.msra.mxu0 0.0
        %3951 = vmatprep.subr.mxu0 0.0
        %3952 = vmatpush1.xpose.msra.mxu0 0.0
        %3953 = vmatprep.subr.mxu0 0.0
        %3954 = vmatpush1.xpose.msra.mxu0 0.0
        %3955 = vmatprep.subr.mxu0 0.0
        %3956 = vmatpush1.xpose.msra.mxu0 0.0
        %3957 = vmatprep.subr.mxu0 0.0
        %3958 = vmatpush1.xpose.msra.mxu0 0.0
        %3959 = vmatprep.subr.mxu0 0.0
        %3960 = vmatpush1.xpose.msra.mxu0 0.0
        %3961 = vmatprep.subr.mxu0 0.0
        %3962 = vmatpush1.xpose.msra.mxu0 0.0
        %3963 = vmatprep.subr.mxu0 0.0
        %3964 = vmatpush1.xpose.msra.mxu0 0.0
        %3965 = vmatprep.subr.mxu0 0.0
        %3966 = vmatpush1.xpose.msra.mxu0 0.0
        %3967 = vmatprep.subr.mxu0 0.0
        %3968 = vmatpush1.xpose.msra.mxu0 0.0
        %3969 = vmatprep.subr.mxu0 0.0
        %3970 = vmatpush1.xpose.msra.mxu0 0.0
        %3971 = vmatprep.subr.mxu0 0.0
        %3972 = vmatpush1.xpose.msra.mxu0 0.0
        %3973 = vmatprep.subr.mxu0 0.0
        %3974 = vmatpush1.xpose.msra.mxu0 0.0
        %3975 = vmatprep.subr.mxu0 0.0
        %3976 = vmatpush1.xpose.msra.mxu0 0.0
        %3977 = vmatprep.subr.mxu0 0.0
        %3978 = vmatpush1.xpose.msra.mxu0 0.0
        %3979 = vmatprep.subr.mxu0 0.0
        %3980 = vmatpush1.xpose.msra.mxu0 0.0
        %3981 = vmatprep.mubr.f32.mxu0 %v330
        %3982 = vmatmul.mubr.f32.gmra.mrb[0].mxu0 %v329
        %v3983 = vpop.f32.mrb[0].mxu0
        %v3984 = vadd.f32 %v3914, %v3983
        %v3985 = vpop.f32.mrb[0].mxu0
        %3986 = vdwg.mxu0
        %3987 = vmatprep.subr.mxu0 %v528
        %3988 = vmatpush1.xpose.msra.mxu0 %v527
        %3989 = vmatprep.subr.mxu0 0.0
        %3990 = vmatpush1.xpose.msra.mxu0 0.0
        %3991 = vmatprep.subr.mxu0 0.0
        %3992 = vmatpush1.xpose.msra.mxu0 0.0
        %3993 = vmatprep.subr.mxu0 0.0
        %3994 = vmatpush1.xpose.msra.mxu0 0.0
        %3995 = vmatprep.subr.mxu0 0.0
        %3996 = vmatpush1.xpose.msra.mxu0 0.0
        %3997 = vmatprep.subr.mxu0 0.0
        %3998 = vmatpush1.xpose.msra.mxu0 0.0
        %3999 = vmatprep.subr.mxu0 0.0
        %4000 = vmatpush1.xpose.msra.mxu0 0.0
        %4001 = vmatprep.subr.mxu0 0.0
        %4002 = vmatpush1.xpose.msra.mxu0 0.0
        %4003 = vmatprep.subr.mxu0 0.0
        %4004 = vmatpush1.xpose.msra.mxu0 0.0
        %4005 = vmatprep.subr.mxu0 0.0
        %4006 = vmatpush1.xpose.msra.mxu0 0.0
        %4007 = vmatprep.subr.mxu0 0.0
        %4008 = vmatpush1.xpose.msra.mxu0 0.0
        %4009 = vmatprep.subr.mxu0 0.0
        %4010 = vmatpush1.xpose.msra.mxu0 0.0
        %4011 = vmatprep.subr.mxu0 0.0
        %4012 = vmatpush1.xpose.msra.mxu0 0.0
        %4013 = vmatprep.subr.mxu0 0.0
        %4014 = vmatpush1.xpose.msra.mxu0 0.0
        %4015 = vmatprep.subr.mxu0 0.0
        %4016 = vmatpush1.xpose.msra.mxu0 0.0
        %4017 = vmatprep.subr.mxu0 0.0
        %4018 = vmatpush1.xpose.msra.mxu0 0.0
        %4019 = vmatprep.subr.mxu0 0.0
        %4020 = vmatpush1.xpose.msra.mxu0 0.0
        %4021 = vmatprep.subr.mxu0 0.0
        %4022 = vmatpush1.xpose.msra.mxu0 0.0
        %4023 = vmatprep.subr.mxu0 0.0
        %4024 = vmatpush1.xpose.msra.mxu0 0.0
        %4025 = vmatprep.subr.mxu0 0.0
        %4026 = vmatpush1.xpose.msra.mxu0 0.0
        %4027 = vmatprep.subr.mxu0 0.0
        %4028 = vmatpush1.xpose.msra.mxu0 0.0
        %4029 = vmatprep.subr.mxu0 0.0
        %4030 = vmatpush1.xpose.msra.mxu0 0.0
        %4031 = vmatprep.subr.mxu0 0.0
        %4032 = vmatpush1.xpose.msra.mxu0 0.0
        %4033 = vmatprep.subr.mxu0 0.0
        %4034 = vmatpush1.xpose.msra.mxu0 0.0
        %4035 = vmatprep.subr.mxu0 0.0
        %4036 = vmatpush1.xpose.msra.mxu0 0.0
        %4037 = vmatprep.subr.mxu0 0.0
        %4038 = vmatpush1.xpose.msra.mxu0 0.0
        %4039 = vmatprep.subr.mxu0 0.0
        %4040 = vmatpush1.xpose.msra.mxu0 0.0
        %4041 = vmatprep.subr.mxu0 0.0
        %4042 = vmatpush1.xpose.msra.mxu0 0.0
        %4043 = vmatprep.subr.mxu0 0.0
        %4044 = vmatpush1.xpose.msra.mxu0 0.0
        %4045 = vmatprep.subr.mxu0 0.0
        %4046 = vmatpush1.xpose.msra.mxu0 0.0
        %4047 = vmatprep.subr.mxu0 0.0
        %4048 = vmatpush1.xpose.msra.mxu0 0.0
        %4049 = vmatprep.subr.mxu0 0.0
        %4050 = vmatpush1.xpose.msra.mxu0 0.0
        %4051 = vmatprep.mubr.f32.mxu0 %v332
        %4052 = vmatmul.mubr.f32.gmra.mrb[0].mxu0 %v331
        %v4053 = vpop.f32.mrb[0].mxu0
        %v4054 = vadd.f32 %v3984, %v4053
        %v4055 = vpop.f32.mrb[0].mxu0
        %4056 = vdwg.mxu0
        %4057 = vmatprep.subr.mxu0 %v530
        %4058 = vmatpush1.xpose.msra.mxu0 %v529
        %4059 = vmatprep.subr.mxu0 0.0
        %4060 = vmatpush1.xpose.msra.mxu0 0.0
        %4061 = vmatprep.subr.mxu0 0.0
        %4062 = vmatpush1.xpose.msra.mxu0 0.0
        %4063 = vmatprep.subr.mxu0 0.0
        %4064 = vmatpush1.xpose.msra.mxu0 0.0
        %4065 = vmatprep.subr.mxu0 0.0
        %4066 = vmatpush1.xpose.msra.mxu0 0.0
        %4067 = vmatprep.subr.mxu0 0.0
        %4068 = vmatpush1.xpose.msra.mxu0 0.0
        %4069 = vmatprep.subr.mxu0 0.0
        %4070 = vmatpush1.xpose.msra.mxu0 0.0
        %4071 = vmatprep.subr.mxu0 0.0
        %4072 = vmatpush1.xpose.msra.mxu0 0.0
        %4073 = vmatprep.subr.mxu0 0.0
        %4074 = vmatpush1.xpose.msra.mxu0 0.0
        %4075 = vmatprep.subr.mxu0 0.0
        %4076 = vmatpush1.xpose.msra.mxu0 0.0
        %4077 = vmatprep.subr.mxu0 0.0
        %4078 = vmatpush1.xpose.msra.mxu0 0.0
        %4079 = vmatprep.subr.mxu0 0.0
        %4080 = vmatpush1.xpose.msra.mxu0 0.0
        %4081 = vmatprep.subr.mxu0 0.0
        %4082 = vmatpush1.xpose.msra.mxu0 0.0
        %4083 = vmatprep.subr.mxu0 0.0
        %4084 = vmatpush1.xpose.msra.mxu0 0.0
        %4085 = vmatprep.subr.mxu0 0.0
        %4086 = vmatpush1.xpose.msra.mxu0 0.0
        %4087 = vmatprep.subr.mxu0 0.0
        %4088 = vmatpush1.xpose.msra.mxu0 0.0
        %4089 = vmatprep.subr.mxu0 0.0
        %4090 = vmatpush1.xpose.msra.mxu0 0.0
        %4091 = vmatprep.subr.mxu0 0.0
        %4092 = vmatpush1.xpose.msra.mxu0 0.0
        %4093 = vmatprep.subr.mxu0 0.0
        %4094 = vmatpush1.xpose.msra.mxu0 0.0
        %4095 = vmatprep.subr.mxu0 0.0
        %4096 = vmatpush1.xpose.msra.mxu0 0.0
        %4097 = vmatprep.subr.mxu0 0.0
        %4098 = vmatpush1.xpose.msra.mxu0 0.0
        %4099 = vmatprep.subr.mxu0 0.0
        %4100 = vmatpush1.xpose.msra.mxu0 0.0
        %4101 = vmatprep.subr.mxu0 0.0
        %4102 = vmatpush1.xpose.msra.mxu0 0.0
        %4103 = vmatprep.subr.mxu0 0.0
        %4104 = vmatpush1.xpose.msra.mxu0 0.0
        %4105 = vmatprep.subr.mxu0 0.0
        %4106 = vmatpush1.xpose.msra.mxu0 0.0
        %4107 = vmatprep.subr.mxu0 0.0
        %4108 = vmatpush1.xpose.msra.mxu0 0.0
        %4109 = vmatprep.subr.mxu0 0.0
        %4110 = vmatpush1.xpose.msra.mxu0 0.0
        %4111 = vmatprep.subr.mxu0 0.0
        %4112 = vmatpush1.xpose.msra.mxu0 0.0
        %4113 = vmatprep.subr.mxu0 0.0
        %4114 = vmatpush1.xpose.msra.mxu0 0.0
        %4115 = vmatprep.subr.mxu0 0.0
        %4116 = vmatpush1.xpose.msra.mxu0 0.0
        %4117 = vmatprep.subr.mxu0 0.0
        %4118 = vmatpush1.xpose.msra.mxu0 0.0
        %4119 = vmatprep.subr.mxu0 0.0
        %4120 = vmatpush1.xpose.msra.mxu0 0.0
        %4121 = vmatprep.mubr.f32.mxu0 %v334
        %4122 = vmatmul.mubr.f32.gmra.mrb[0].mxu0 %v333
        %v4123 = vpop.f32.mrb[0].mxu0
        %v4124 = vadd.f32 %v4054, %v4123
        %v4125 = vpop.f32.mrb[0].mxu0
        %4126 = vdwg.mxu0
        %4127 = vmatprep.subr.mxu0 %v532
        %4128 = vmatpush1.xpose.msra.mxu0 %v531
        %4129 = vmatprep.subr.mxu0 0.0
        %4130 = vmatpush1.xpose.msra.mxu0 0.0
        %4131 = vmatprep.subr.mxu0 0.0
        %4132 = vmatpush1.xpose.msra.mxu0 0.0
        %4133 = vmatprep.subr.mxu0 0.0
        %4134 = vmatpush1.xpose.msra.mxu0 0.0
        %4135 = vmatprep.subr.mxu0 0.0
        %4136 = vmatpush1.xpose.msra.mxu0 0.0
        %4137 = vmatprep.subr.mxu0 0.0
        %4138 = vmatpush1.xpose.msra.mxu0 0.0
        %4139 = vmatprep.subr.mxu0 0.0
        %4140 = vmatpush1.xpose.msra.mxu0 0.0
        %4141 = vmatprep.subr.mxu0 0.0
        %4142 = vmatpush1.xpose.msra.mxu0 0.0
        %4143 = vmatprep.subr.mxu0 0.0
        %4144 = vmatpush1.xpose.msra.mxu0 0.0
        %4145 = vmatprep.subr.mxu0 0.0
        %4146 = vmatpush1.xpose.msra.mxu0 0.0
        %4147 = vmatprep.subr.mxu0 0.0
        %4148 = vmatpush1.xpose.msra.mxu0 0.0
        %4149 = vmatprep.subr.mxu0 0.0
        %4150 = vmatpush1.xpose.msra.mxu0 0.0
        %4151 = vmatprep.subr.mxu0 0.0
        %4152 = vmatpush1.xpose.msra.mxu0 0.0
        %4153 = vmatprep.subr.mxu0 0.0
        %4154 = vmatpush1.xpose.msra.mxu0 0.0
        %4155 = vmatprep.subr.mxu0 0.0
        %4156 = vmatpush1.xpose.msra.mxu0 0.0
        %4157 = vmatprep.subr.mxu0 0.0
        %4158 = vmatpush1.xpose.msra.mxu0 0.0
        %4159 = vmatprep.subr.mxu0 0.0
        %4160 = vmatpush1.xpose.msra.mxu0 0.0
        %4161 = vmatprep.subr.mxu0 0.0
        %4162 = vmatpush1.xpose.msra.mxu0 0.0
        %4163 = vmatprep.subr.mxu0 0.0
        %4164 = vmatpush1.xpose.msra.mxu0 0.0
        %4165 = vmatprep.subr.mxu0 0.0
        %4166 = vmatpush1.xpose.msra.mxu0 0.0
        %4167 = vmatprep.subr.mxu0 0.0
        %4168 = vmatpush1.xpose.msra.mxu0 0.0
        %4169 = vmatprep.subr.mxu0 0.0
        %4170 = vmatpush1.xpose.msra.mxu0 0.0
        %4171 = vmatprep.subr.mxu0 0.0
        %4172 = vmatpush1.xpose.msra.mxu0 0.0
        %4173 = vmatprep.subr.mxu0 0.0
        %4174 = vmatpush1.xpose.msra.mxu0 0.0
        %4175 = vmatprep.subr.mxu0 0.0
        %4176 = vmatpush1.xpose.msra.mxu0 0.0
        %4177 = vmatprep.subr.mxu0 0.0
        %4178 = vmatpush1.xpose.msra.mxu0 0.0
        %4179 = vmatprep.subr.mxu0 0.0
        %4180 = vmatpush1.xpose.msra.mxu0 0.0
        %4181 = vmatprep.subr.mxu0 0.0
        %4182 = vmatpush1.xpose.msra.mxu0 0.0
        %4183 = vmatprep.subr.mxu0 0.0
        %4184 = vmatpush1.xpose.msra.mxu0 0.0
        %4185 = vmatprep.subr.mxu0 0.0
        %4186 = vmatpush1.xpose.msra.mxu0 0.0
        %4187 = vmatprep.subr.mxu0 0.0
        %4188 = vmatpush1.xpose.msra.mxu0 0.0
        %4189 = vmatprep.subr.mxu0 0.0
        %4190 = vmatpush1.xpose.msra.mxu0 0.0
        %4191 = vmatprep.mubr.f32.mxu0 %v336
        %4192 = vmatmul.mubr.f32.gmra.mrb[0].mxu0 %v335
        %v4193 = vpop.f32.mrb[0].mxu0
        %v4194 = vadd.f32 %v4124, %v4193
        %v4195 = vpop.f32.mrb[0].mxu0
        %4196 = vdwg.mxu0
        %4197 = vmatprep.subr.mxu0 %v534
        %4198 = vmatpush1.xpose.msra.mxu0 %v533
        %4199 = vmatprep.subr.mxu0 0.0
        %4200 = vmatpush1.xpose.msra.mxu0 0.0
        %4201 = vmatprep.subr.mxu0 0.0
        %4202 = vmatpush1.xpose.msra.mxu0 0.0
        %4203 = vmatprep.subr.mxu0 0.0
        %4204 = vmatpush1.xpose.msra.mxu0 0.0
        %4205 = vmatprep.subr.mxu0 0.0
        %4206 = vmatpush1.xpose.msra.mxu0 0.0
        %4207 = vmatprep.subr.mxu0 0.0
        %4208 = vmatpush1.xpose.msra.mxu0 0.0
        %4209 = vmatprep.subr.mxu0 0.0
        %4210 = vmatpush1.xpose.msra.mxu0 0.0
        %4211 = vmatprep.subr.mxu0 0.0
        %4212 = vmatpush1.xpose.msra.mxu0 0.0
        %4213 = vmatprep.subr.mxu0 0.0
        %4214 = vmatpush1.xpose.msra.mxu0 0.0
        %4215 = vmatprep.subr.mxu0 0.0
        %4216 = vmatpush1.xpose.msra.mxu0 0.0
        %4217 = vmatprep.subr.mxu0 0.0
        %4218 = vmatpush1.xpose.msra.mxu0 0.0
        %4219 = vmatprep.subr.mxu0 0.0
        %4220 = vmatpush1.xpose.msra.mxu0 0.0
        %4221 = vmatprep.subr.mxu0 0.0
        %4222 = vmatpush1.xpose.msra.mxu0 0.0
        %4223 = vmatprep.subr.mxu0 0.0
        %4224 = vmatpush1.xpose.msra.mxu0 0.0
        %4225 = vmatprep.subr.mxu0 0.0
        %4226 = vmatpush1.xpose.msra.mxu0 0.0
        %4227 = vmatprep.subr.mxu0 0.0
        %4228 = vmatpush1.xpose.msra.mxu0 0.0
        %4229 = vmatprep.subr.mxu0 0.0
        %4230 = vmatpush1.xpose.msra.mxu0 0.0
        %4231 = vmatprep.subr.mxu0 0.0
        %4232 = vmatpush1.xpose.msra.mxu0 0.0
        %4233 = vmatprep.subr.mxu0 0.0
        %4234 = vmatpush1.xpose.msra.mxu0 0.0
        %4235 = vmatprep.subr.mxu0 0.0
        %4236 = vmatpush1.xpose.msra.mxu0 0.0
        %4237 = vmatprep.subr.mxu0 0.0
        %4238 = vmatpush1.xpose.msra.mxu0 0.0
        %4239 = vmatprep.subr.mxu0 0.0
        %4240 = vmatpush1.xpose.msra.mxu0 0.0
        %4241 = vmatprep.subr.mxu0 0.0
        %4242 = vmatpush1.xpose.msra.mxu0 0.0
        %4243 = vmatprep.subr.mxu0 0.0
        %4244 = vmatpush1.xpose.msra.mxu0 0.0
        %4245 = vmatprep.subr.mxu0 0.0
        %4246 = vmatpush1.xpose.msra.mxu0 0.0
        %4247 = vmatprep.subr.mxu0 0.0
        %4248 = vmatpush1.xpose.msra.mxu0 0.0
        %4249 = vmatprep.subr.mxu0 0.0
        %4250 = vmatpush1.xpose.msra.mxu0 0.0
        %4251 = vmatprep.subr.mxu0 0.0
        %4252 = vmatpush1.xpose.msra.mxu0 0.0
        %4253 = vmatprep.subr.mxu0 0.0
        %4254 = vmatpush1.xpose.msra.mxu0 0.0
        %4255 = vmatprep.subr.mxu0 0.0
        %4256 = vmatpush1.xpose.msra.mxu0 0.0
        %4257 = vmatprep.subr.mxu0 0.0
        %4258 = vmatpush1.xpose.msra.mxu0 0.0
        %4259 = vmatprep.subr.mxu0 0.0
        %4260 = vmatpush1.xpose.msra.mxu0 0.0
        %4261 = vmatprep.mubr.f32.mxu0 %v338
        %4262 = vmatmul.mubr.f32.gmra.mrb[0].mxu0 %v337
        %v4263 = vpop.f32.mrb[0].mxu0
        %v4264 = vadd.f32 %v4194, %v4263
        %v4265 = vpop.f32.mrb[0].mxu0
        %4266 = vdwg.mxu0
        %4267 = vmatprep.subr.mxu0 %v536
        %4268 = vmatpush1.xpose.msra.mxu0 %v535
        %4269 = vmatprep.subr.mxu0 0.0
        %4270 = vmatpush1.xpose.msra.mxu0 0.0
        %4271 = vmatprep.subr.mxu0 0.0
        %4272 = vmatpush1.xpose.msra.mxu0 0.0
        %4273 = vmatprep.subr.mxu0 0.0
        %4274 = vmatpush1.xpose.msra.mxu0 0.0
        %4275 = vmatprep.subr.mxu0 0.0
        %4276 = vmatpush1.xpose.msra.mxu0 0.0
        %4277 = vmatprep.subr.mxu0 0.0
        %4278 = vmatpush1.xpose.msra.mxu0 0.0
        %4279 = vmatprep.subr.mxu0 0.0
        %4280 = vmatpush1.xpose.msra.mxu0 0.0
        %4281 = vmatprep.subr.mxu0 0.0
        %4282 = vmatpush1.xpose.msra.mxu0 0.0
        %4283 = vmatprep.subr.mxu0 0.0
        %4284 = vmatpush1.xpose.msra.mxu0 0.0
        %4285 = vmatprep.subr.mxu0 0.0
        %4286 = vmatpush1.xpose.msra.mxu0 0.0
        %4287 = vmatprep.subr.mxu0 0.0
        %4288 = vmatpush1.xpose.msra.mxu0 0.0
        %4289 = vmatprep.subr.mxu0 0.0
        %4290 = vmatpush1.xpose.msra.mxu0 0.0
        %4291 = vmatprep.subr.mxu0 0.0
        %4292 = vmatpush1.xpose.msra.mxu0 0.0
        %4293 = vmatprep.subr.mxu0 0.0
        %4294 = vmatpush1.xpose.msra.mxu0 0.0
        %4295 = vmatprep.subr.mxu0 0.0
        %4296 = vmatpush1.xpose.msra.mxu0 0.0
        %4297 = vmatprep.subr.mxu0 0.0
        %4298 = vmatpush1.xpose.msra.mxu0 0.0
        %4299 = vmatprep.subr.mxu0 0.0
        %4300 = vmatpush1.xpose.msra.mxu0 0.0
        %4301 = vmatprep.subr.mxu0 0.0
        %4302 = vmatpush1.xpose.msra.mxu0 0.0
        %4303 = vmatprep.subr.mxu0 0.0
        %4304 = vmatpush1.xpose.msra.mxu0 0.0
        %4305 = vmatprep.subr.mxu0 0.0
        %4306 = vmatpush1.xpose.msra.mxu0 0.0
        %4307 = vmatprep.subr.mxu0 0.0
        %4308 = vmatpush1.xpose.msra.mxu0 0.0
        %4309 = vmatprep.subr.mxu0 0.0
        %4310 = vmatpush1.xpose.msra.mxu0 0.0
        %4311 = vmatprep.subr.mxu0 0.0
        %4312 = vmatpush1.xpose.msra.mxu0 0.0
        %4313 = vmatprep.subr.mxu0 0.0
        %4314 = vmatpush1.xpose.msra.mxu0 0.0
        %4315 = vmatprep.subr.mxu0 0.0
        %4316 = vmatpush1.xpose.msra.mxu0 0.0
        %4317 = vmatprep.subr.mxu0 0.0
        %4318 = vmatpush1.xpose.msra.mxu0 0.0
        %4319 = vmatprep.subr.mxu0 0.0
        %4320 = vmatpush1.xpose.msra.mxu0 0.0
        %4321 = vmatprep.subr.mxu0 0.0
        %4322 = vmatpush1.xpose.msra.mxu0 0.0
        %4323 = vmatprep.subr.mxu0 0.0
        %4324 = vmatpush1.xpose.msra.mxu0 0.0
        %4325 = vmatprep.subr.mxu0 0.0
        %4326 = vmatpush1.xpose.msra.mxu0 0.0
        %4327 = vmatprep.subr.mxu0 0.0
        %4328 = vmatpush1.xpose.msra.mxu0 0.0
        %4329 = vmatprep.subr.mxu0 0.0
        %4330 = vmatpush1.xpose.msra.mxu0 0.0
        %4331 = vmatprep.mubr.f32.mxu0 %v340
        %4332 = vmatmul.mubr.f32.gmra.mrb[0].mxu0 %v339
        %v4333 = vpop.f32.mrb[0].mxu0
        %v4334 = vadd.f32 %v4264, %v4333
        %v4335 = vpop.f32.mrb[0].mxu0
        %4336 = vdwg.mxu0
        %4337 = vmatprep.subr.mxu0 %v538
        %4338 = vmatpush1.xpose.msra.mxu0 %v537
        %4339 = vmatprep.subr.mxu0 0.0
        %4340 = vmatpush1.xpose.msra.mxu0 0.0
        %4341 = vmatprep.subr.mxu0 0.0
        %4342 = vmatpush1.xpose.msra.mxu0 0.0
        %4343 = vmatprep.subr.mxu0 0.0
        %4344 = vmatpush1.xpose.msra.mxu0 0.0
        %4345 = vmatprep.subr.mxu0 0.0
        %4346 = vmatpush1.xpose.msra.mxu0 0.0
        %4347 = vmatprep.subr.mxu0 0.0
        %4348 = vmatpush1.xpose.msra.mxu0 0.0
        %4349 = vmatprep.subr.mxu0 0.0
        %4350 = vmatpush1.xpose.msra.mxu0 0.0
        %4351 = vmatprep.subr.mxu0 0.0
        %4352 = vmatpush1.xpose.msra.mxu0 0.0
        %4353 = vmatprep.subr.mxu0 0.0
        %4354 = vmatpush1.xpose.msra.mxu0 0.0
        %4355 = vmatprep.subr.mxu0 0.0
        %4356 = vmatpush1.xpose.msra.mxu0 0.0
        %4357 = vmatprep.subr.mxu0 0.0
        %4358 = vmatpush1.xpose.msra.mxu0 0.0
        %4359 = vmatprep.subr.mxu0 0.0
        %4360 = vmatpush1.xpose.msra.mxu0 0.0
        %4361 = vmatprep.subr.mxu0 0.0
        %4362 = vmatpush1.xpose.msra.mxu0 0.0
        %4363 = vmatprep.subr.mxu0 0.0
        %4364 = vmatpush1.xpose.msra.mxu0 0.0
        %4365 = vmatprep.subr.mxu0 0.0
        %4366 = vmatpush1.xpose.msra.mxu0 0.0
        %4367 = vmatprep.subr.mxu0 0.0
        %4368 = vmatpush1.xpose.msra.mxu0 0.0
        %4369 = vmatprep.subr.mxu0 0.0
        %4370 = vmatpush1.xpose.msra.mxu0 0.0
        %4371 = vmatprep.subr.mxu0 0.0
        %4372 = vmatpush1.xpose.msra.mxu0 0.0
        %4373 = vmatprep.subr.mxu0 0.0
        %4374 = vmatpush1.xpose.msra.mxu0 0.0
        %4375 = vmatprep.subr.mxu0 0.0
        %4376 = vmatpush1.xpose.msra.mxu0 0.0
        %4377 = vmatprep.subr.mxu0 0.0
        %4378 = vmatpush1.xpose.msra.mxu0 0.0
        %4379 = vmatprep.subr.mxu0 0.0
        %4380 = vmatpush1.xpose.msra.mxu0 0.0
        %4381 = vmatprep.subr.mxu0 0.0
        %4382 = vmatpush1.xpose.msra.mxu0 0.0
        %4383 = vmatprep.subr.mxu0 0.0
        %4384 = vmatpush1.xpose.msra.mxu0 0.0
        %4385 = vmatprep.subr.mxu0 0.0
        %4386 = vmatpush1.xpose.msra.mxu0 0.0
        %4387 = vmatprep.subr.mxu0 0.0
        %4388 = vmatpush1.xpose.msra.mxu0 0.0
        %4389 = vmatprep.subr.mxu0 0.0
        %4390 = vmatpush1.xpose.msra.mxu0 0.0
        %4391 = vmatprep.subr.mxu0 0.0
        %4392 = vmatpush1.xpose.msra.mxu0 0.0
        %4393 = vmatprep.subr.mxu0 0.0
        %4394 = vmatpush1.xpose.msra.mxu0 0.0
        %4395 = vmatprep.subr.mxu0 0.0
        %4396 = vmatpush1.xpose.msra.mxu0 0.0
        %4397 = vmatprep.subr.mxu0 0.0
        %4398 = vmatpush1.xpose.msra.mxu0 0.0
        %4399 = vmatprep.subr.mxu0 0.0
        %4400 = vmatpush1.xpose.msra.mxu0 0.0
        %4401 = vmatprep.mubr.f32.mxu0 %v342
        %4402 = vmatmul.mubr.f32.gmra.mrb[0].mxu0 %v341
        %v4403 = vpop.f32.mrb[0].mxu0
        %v4404 = vadd.f32 %v4334, %v4403
        %v4405 = vpop.f32.mrb[0].mxu0
        %4406 = vdwg.mxu0
        %4407 = vmatprep.subr.mxu0 %v540
        %4408 = vmatpush1.xpose.msra.mxu0 %v539
        %4409 = vmatprep.subr.mxu0 0.0
        %4410 = vmatpush1.xpose.msra.mxu0 0.0
        %4411 = vmatprep.subr.mxu0 0.0
        %4412 = vmatpush1.xpose.msra.mxu0 0.0
        %4413 = vmatprep.subr.mxu0 0.0
        %4414 = vmatpush1.xpose.msra.mxu0 0.0
        %4415 = vmatprep.subr.mxu0 0.0
        %4416 = vmatpush1.xpose.msra.mxu0 0.0
        %4417 = vmatprep.subr.mxu0 0.0
        %4418 = vmatpush1.xpose.msra.mxu0 0.0
        %4419 = vmatprep.subr.mxu0 0.0
        %4420 = vmatpush1.xpose.msra.mxu0 0.0
        %4421 = vmatprep.subr.mxu0 0.0
        %4422 = vmatpush1.xpose.msra.mxu0 0.0
        %4423 = vmatprep.subr.mxu0 0.0
        %4424 = vmatpush1.xpose.msra.mxu0 0.0
        %4425 = vmatprep.subr.mxu0 0.0
        %4426 = vmatpush1.xpose.msra.mxu0 0.0
        %4427 = vmatprep.subr.mxu0 0.0
        %4428 = vmatpush1.xpose.msra.mxu0 0.0
        %4429 = vmatprep.subr.mxu0 0.0
        %4430 = vmatpush1.xpose.msra.mxu0 0.0
        %4431 = vmatprep.subr.mxu0 0.0
        %4432 = vmatpush1.xpose.msra.mxu0 0.0
        %4433 = vmatprep.subr.mxu0 0.0
        %4434 = vmatpush1.xpose.msra.mxu0 0.0
        %4435 = vmatprep.subr.mxu0 0.0
        %4436 = vmatpush1.xpose.msra.mxu0 0.0
        %4437 = vmatprep.subr.mxu0 0.0
        %4438 = vmatpush1.xpose.msra.mxu0 0.0
        %4439 = vmatprep.subr.mxu0 0.0
        %4440 = vmatpush1.xpose.msra.mxu0 0.0
        %4441 = vmatprep.subr.mxu0 0.0
        %4442 = vmatpush1.xpose.msra.mxu0 0.0
        %4443 = vmatprep.subr.mxu0 0.0
        %4444 = vmatpush1.xpose.msra.mxu0 0.0
        %4445 = vmatprep.subr.mxu0 0.0
        %4446 = vmatpush1.xpose.msra.mxu0 0.0
        %4447 = vmatprep.subr.mxu0 0.0
        %4448 = vmatpush1.xpose.msra.mxu0 0.0
        %4449 = vmatprep.subr.mxu0 0.0
        %4450 = vmatpush1.xpose.msra.mxu0 0.0
        %4451 = vmatprep.subr.mxu0 0.0
        %4452 = vmatpush1.xpose.msra.mxu0 0.0
        %4453 = vmatprep.subr.mxu0 0.0
        %4454 = vmatpush1.xpose.msra.mxu0 0.0
        %4455 = vmatprep.subr.mxu0 0.0
        %4456 = vmatpush1.xpose.msra.mxu0 0.0
        %4457 = vmatprep.subr.mxu0 0.0
        %4458 = vmatpush1.xpose.msra.mxu0 0.0
        %4459 = vmatprep.subr.mxu0 0.0
        %4460 = vmatpush1.xpose.msra.mxu0 0.0
        %4461 = vmatprep.subr.mxu0 0.0
        %4462 = vmatpush1.xpose.msra.mxu0 0.0
        %4463 = vmatprep.subr.mxu0 0.0
        %4464 = vmatpush1.xpose.msra.mxu0 0.0
        %4465 = vmatprep.subr.mxu0 0.0
        %4466 = vmatpush1.xpose.msra.mxu0 0.0
        %4467 = vmatprep.subr.mxu0 0.0
        %4468 = vmatpush1.xpose.msra.mxu0 0.0
        %4469 = vmatprep.subr.mxu0 0.0
        %4470 = vmatpush1.xpose.msra.mxu0 0.0
        %4471 = vmatprep.mubr.f32.mxu0 %v344
        %4472 = vmatmul.mubr.f32.gmra.mrb[0].mxu0 %v343
        %v4473 = vpop.f32.mrb[0].mxu0
        %v4474 = vadd.f32 %v4404, %v4473
        %v4475 = vpop.f32.mrb[0].mxu0
        %4476 = vdwg.mxu0
        %4477 = vmatprep.subr.mxu0 %v542
        %4478 = vmatpush1.xpose.msra.mxu0 %v541
        %4479 = vmatprep.subr.mxu0 0.0
        %4480 = vmatpush1.xpose.msra.mxu0 0.0
        %4481 = vmatprep.subr.mxu0 0.0
        %4482 = vmatpush1.xpose.msra.mxu0 0.0
        %4483 = vmatprep.subr.mxu0 0.0
        %4484 = vmatpush1.xpose.msra.mxu0 0.0
        %4485 = vmatprep.subr.mxu0 0.0
        %4486 = vmatpush1.xpose.msra.mxu0 0.0
        %4487 = vmatprep.subr.mxu0 0.0
        %4488 = vmatpush1.xpose.msra.mxu0 0.0
        %4489 = vmatprep.subr.mxu0 0.0
        %4490 = vmatpush1.xpose.msra.mxu0 0.0
        %4491 = vmatprep.subr.mxu0 0.0
        %4492 = vmatpush1.xpose.msra.mxu0 0.0
        %4493 = vmatprep.subr.mxu0 0.0
        %4494 = vmatpush1.xpose.msra.mxu0 0.0
        %4495 = vmatprep.subr.mxu0 0.0
        %4496 = vmatpush1.xpose.msra.mxu0 0.0
        %4497 = vmatprep.subr.mxu0 0.0
        %4498 = vmatpush1.xpose.msra.mxu0 0.0
        %4499 = vmatprep.subr.mxu0 0.0
        %4500 = vmatpush1.xpose.msra.mxu0 0.0
        %4501 = vmatprep.subr.mxu0 0.0
        %4502 = vmatpush1.xpose.msra.mxu0 0.0
        %4503 = vmatprep.subr.mxu0 0.0
        %4504 = vmatpush1.xpose.msra.mxu0 0.0
        %4505 = vmatprep.subr.mxu0 0.0
        %4506 = vmatpush1.xpose.msra.mxu0 0.0
        %4507 = vmatprep.subr.mxu0 0.0
        %4508 = vmatpush1.xpose.msra.mxu0 0.0
        %4509 = vmatprep.subr.mxu0 0.0
        %4510 = vmatpush1.xpose.msra.mxu0 0.0
        %4511 = vmatprep.subr.mxu0 0.0
        %4512 = vmatpush1.xpose.msra.mxu0 0.0
        %4513 = vmatprep.subr.mxu0 0.0
        %4514 = vmatpush1.xpose.msra.mxu0 0.0
        %4515 = vmatprep.subr.mxu0 0.0
        %4516 = vmatpush1.xpose.msra.mxu0 0.0
        %4517 = vmatprep.subr.mxu0 0.0
        %4518 = vmatpush1.xpose.msra.mxu0 0.0
        %4519 = vmatprep.subr.mxu0 0.0
        %4520 = vmatpush1.xpose.msra.mxu0 0.0
        %4521 = vmatprep.subr.mxu0 0.0
        %4522 = vmatpush1.xpose.msra.mxu0 0.0
        %4523 = vmatprep.subr.mxu0 0.0
        %4524 = vmatpush1.xpose.msra.mxu0 0.0
        %4525 = vmatprep.subr.mxu0 0.0
        %4526 = vmatpush1.xpose.msra.mxu0 0.0
        %4527 = vmatprep.subr.mxu0 0.0
        %4528 = vmatpush1.xpose.msra.mxu0 0.0
        %4529 = vmatprep.subr.mxu0 0.0
        %4530 = vmatpush1.xpose.msra.mxu0 0.0
        %4531 = vmatprep.subr.mxu0 0.0
        %4532 = vmatpush1.xpose.msra.mxu0 0.0
        %4533 = vmatprep.subr.mxu0 0.0
        %4534 = vmatpush1.xpose.msra.mxu0 0.0
        %4535 = vmatprep.subr.mxu0 0.0
        %4536 = vmatpush1.xpose.msra.mxu0 0.0
        %4537 = vmatprep.subr.mxu0 0.0
        %4538 = vmatpush1.xpose.msra.mxu0 0.0
        %4539 = vmatprep.subr.mxu0 0.0
        %4540 = vmatpush1.xpose.msra.mxu0 0.0
        %4541 = vmatprep.mubr.f32.mxu0 %v346
        %4542 = vmatmul.mubr.f32.gmra.mrb[0].mxu0 %v345
        %v4543 = vpop.f32.mrb[0].mxu0
        %v4544 = vadd.f32 %v4474, %v4543
        %v4545 = vpop.f32.mrb[0].mxu0
        %4546 = vdwg.mxu0
        %4547 = vmatprep.subr.mxu0 %v544
        %4548 = vmatpush1.xpose.msra.mxu0 %v543
        %4549 = vmatprep.subr.mxu0 0.0
        %4550 = vmatpush1.xpose.msra.mxu0 0.0
        %4551 = vmatprep.subr.mxu0 0.0
        %4552 = vmatpush1.xpose.msra.mxu0 0.0
        %4553 = vmatprep.subr.mxu0 0.0
        %4554 = vmatpush1.xpose.msra.mxu0 0.0
        %4555 = vmatprep.subr.mxu0 0.0
        %4556 = vmatpush1.xpose.msra.mxu0 0.0
        %4557 = vmatprep.subr.mxu0 0.0
        %4558 = vmatpush1.xpose.msra.mxu0 0.0
        %4559 = vmatprep.subr.mxu0 0.0
        %4560 = vmatpush1.xpose.msra.mxu0 0.0
        %4561 = vmatprep.subr.mxu0 0.0
        %4562 = vmatpush1.xpose.msra.mxu0 0.0
        %4563 = vmatprep.subr.mxu0 0.0
        %4564 = vmatpush1.xpose.msra.mxu0 0.0
        %4565 = vmatprep.subr.mxu0 0.0
        %4566 = vmatpush1.xpose.msra.mxu0 0.0
        %4567 = vmatprep.subr.mxu0 0.0
        %4568 = vmatpush1.xpose.msra.mxu0 0.0
        %4569 = vmatprep.subr.mxu0 0.0
        %4570 = vmatpush1.xpose.msra.mxu0 0.0
        %4571 = vmatprep.subr.mxu0 0.0
        %4572 = vmatpush1.xpose.msra.mxu0 0.0
        %4573 = vmatprep.subr.mxu0 0.0
        %4574 = vmatpush1.xpose.msra.mxu0 0.0
        %4575 = vmatprep.subr.mxu0 0.0
        %4576 = vmatpush1.xpose.msra.mxu0 0.0
        %4577 = vmatprep.subr.mxu0 0.0
        %4578 = vmatpush1.xpose.msra.mxu0 0.0
        %4579 = vmatprep.subr.mxu0 0.0
        %4580 = vmatpush1.xpose.msra.mxu0 0.0
        %4581 = vmatprep.subr.mxu0 0.0
        %4582 = vmatpush1.xpose.msra.mxu0 0.0
        %4583 = vmatprep.subr.mxu0 0.0
        %4584 = vmatpush1.xpose.msra.mxu0 0.0
        %4585 = vmatprep.subr.mxu0 0.0
        %4586 = vmatpush1.xpose.msra.mxu0 0.0
        %4587 = vmatprep.subr.mxu0 0.0
        %4588 = vmatpush1.xpose.msra.mxu0 0.0
        %4589 = vmatprep.subr.mxu0 0.0
        %4590 = vmatpush1.xpose.msra.mxu0 0.0
        %4591 = vmatprep.subr.mxu0 0.0
        %4592 = vmatpush1.xpose.msra.mxu0 0.0
        %4593 = vmatprep.subr.mxu0 0.0
        %4594 = vmatpush1.xpose.msra.mxu0 0.0
        %4595 = vmatprep.subr.mxu0 0.0
        %4596 = vmatpush1.xpose.msra.mxu0 0.0
        %4597 = vmatprep.subr.mxu0 0.0
        %4598 = vmatpush1.xpose.msra.mxu0 0.0
        %4599 = vmatprep.subr.mxu0 0.0
        %4600 = vmatpush1.xpose.msra.mxu0 0.0
        %4601 = vmatprep.subr.mxu0 0.0
        %4602 = vmatpush1.xpose.msra.mxu0 0.0
        %4603 = vmatprep.subr.mxu0 0.0
        %4604 = vmatpush1.xpose.msra.mxu0 0.0
        %4605 = vmatprep.subr.mxu0 0.0
        %4606 = vmatpush1.xpose.msra.mxu0 0.0
        %4607 = vmatprep.subr.mxu0 0.0
        %4608 = vmatpush1.xpose.msra.mxu0 0.0
        %4609 = vmatprep.subr.mxu0 0.0
        %4610 = vmatpush1.xpose.msra.mxu0 0.0
        %4611 = vmatprep.mubr.f32.mxu0 %v348
        %4612 = vmatmul.mubr.f32.gmra.mrb[0].mxu0 %v347
        %v4613 = vpop.f32.mrb[0].mxu0
        %v4614 = vadd.f32 %v4544, %v4613
        %v4615 = vpop.f32.mrb[0].mxu0
        %4616 = vdwg.mxu0
        %4617 = vmatprep.subr.mxu0 %v546
        %4618 = vmatpush1.xpose.msra.mxu0 %v545
        %4619 = vmatprep.subr.mxu0 0.0
        %4620 = vmatpush1.xpose.msra.mxu0 0.0
        %4621 = vmatprep.subr.mxu0 0.0
        %4622 = vmatpush1.xpose.msra.mxu0 0.0
        %4623 = vmatprep.subr.mxu0 0.0
        %4624 = vmatpush1.xpose.msra.mxu0 0.0
        %4625 = vmatprep.subr.mxu0 0.0
        %4626 = vmatpush1.xpose.msra.mxu0 0.0
        %4627 = vmatprep.subr.mxu0 0.0
        %4628 = vmatpush1.xpose.msra.mxu0 0.0
        %4629 = vmatprep.subr.mxu0 0.0
        %4630 = vmatpush1.xpose.msra.mxu0 0.0
        %4631 = vmatprep.subr.mxu0 0.0
        %4632 = vmatpush1.xpose.msra.mxu0 0.0
        %4633 = vmatprep.subr.mxu0 0.0
        %4634 = vmatpush1.xpose.msra.mxu0 0.0
        %4635 = vmatprep.subr.mxu0 0.0
        %4636 = vmatpush1.xpose.msra.mxu0 0.0
        %4637 = vmatprep.subr.mxu0 0.0
        %4638 = vmatpush1.xpose.msra.mxu0 0.0
        %4639 = vmatprep.subr.mxu0 0.0
        %4640 = vmatpush1.xpose.msra.mxu0 0.0
        %4641 = vmatprep.subr.mxu0 0.0
        %4642 = vmatpush1.xpose.msra.mxu0 0.0
        %4643 = vmatprep.subr.mxu0 0.0
        %4644 = vmatpush1.xpose.msra.mxu0 0.0
        %4645 = vmatprep.subr.mxu0 0.0
        %4646 = vmatpush1.xpose.msra.mxu0 0.0
        %4647 = vmatprep.subr.mxu0 0.0
        %4648 = vmatpush1.xpose.msra.mxu0 0.0
        %4649 = vmatprep.subr.mxu0 0.0
        %4650 = vmatpush1.xpose.msra.mxu0 0.0
        %4651 = vmatprep.subr.mxu0 0.0
        %4652 = vmatpush1.xpose.msra.mxu0 0.0
        %4653 = vmatprep.subr.mxu0 0.0
        %4654 = vmatpush1.xpose.msra.mxu0 0.0
        %4655 = vmatprep.subr.mxu0 0.0
        %4656 = vmatpush1.xpose.msra.mxu0 0.0
        %4657 = vmatprep.subr.mxu0 0.0
        %4658 = vmatpush1.xpose.msra.mxu0 0.0
        %4659 = vmatprep.subr.mxu0 0.0
        %4660 = vmatpush1.xpose.msra.mxu0 0.0
        %4661 = vmatprep.subr.mxu0 0.0
        %4662 = vmatpush1.xpose.msra.mxu0 0.0
        %4663 = vmatprep.subr.mxu0 0.0
        %4664 = vmatpush1.xpose.msra.mxu0 0.0
        %4665 = vmatprep.subr.mxu0 0.0
        %4666 = vmatpush1.xpose.msra.mxu0 0.0
        %4667 = vmatprep.subr.mxu0 0.0
        %4668 = vmatpush1.xpose.msra.mxu0 0.0
        %4669 = vmatprep.subr.mxu0 0.0
        %4670 = vmatpush1.xpose.msra.mxu0 0.0
        %4671 = vmatprep.subr.mxu0 0.0
        %4672 = vmatpush1.xpose.msra.mxu0 0.0
        %4673 = vmatprep.subr.mxu0 0.0
        %4674 = vmatpush1.xpose.msra.mxu0 0.0
        %4675 = vmatprep.subr.mxu0 0.0
        %4676 = vmatpush1.xpose.msra.mxu0 0.0
        %4677 = vmatprep.subr.mxu0 0.0
        %4678 = vmatpush1.xpose.msra.mxu0 0.0
        %4679 = vmatprep.subr.mxu0 0.0
        %4680 = vmatpush1.xpose.msra.mxu0 0.0
        %4681 = vmatprep.mubr.f32.mxu0 %v350
        %4682 = vmatmul.mubr.f32.gmra.mrb[0].mxu0 %v349
        %v4683 = vpop.f32.mrb[0].mxu0
        %v4684 = vadd.f32 %v4614, %v4683
        %v4685 = vpop.f32.mrb[0].mxu0
        %4686 = vdwg.mxu0
        %4687 = vmatprep.subr.mxu0 %v548
        %4688 = vmatpush1.xpose.msra.mxu0 %v547
        %4689 = vmatprep.subr.mxu0 0.0
        %4690 = vmatpush1.xpose.msra.mxu0 0.0
        %4691 = vmatprep.subr.mxu0 0.0
        %4692 = vmatpush1.xpose.msra.mxu0 0.0
        %4693 = vmatprep.subr.mxu0 0.0
        %4694 = vmatpush1.xpose.msra.mxu0 0.0
        %4695 = vmatprep.subr.mxu0 0.0
        %4696 = vmatpush1.xpose.msra.mxu0 0.0
        %4697 = vmatprep.subr.mxu0 0.0
        %4698 = vmatpush1.xpose.msra.mxu0 0.0
        %4699 = vmatprep.subr.mxu0 0.0
        %4700 = vmatpush1.xpose.msra.mxu0 0.0
        %4701 = vmatprep.subr.mxu0 0.0
        %4702 = vmatpush1.xpose.msra.mxu0 0.0
        %4703 = vmatprep.subr.mxu0 0.0
        %4704 = vmatpush1.xpose.msra.mxu0 0.0
        %4705 = vmatprep.subr.mxu0 0.0
        %4706 = vmatpush1.xpose.msra.mxu0 0.0
        %4707 = vmatprep.subr.mxu0 0.0
        %4708 = vmatpush1.xpose.msra.mxu0 0.0
        %4709 = vmatprep.subr.mxu0 0.0
        %4710 = vmatpush1.xpose.msra.mxu0 0.0
        %4711 = vmatprep.subr.mxu0 0.0
        %4712 = vmatpush1.xpose.msra.mxu0 0.0
        %4713 = vmatprep.subr.mxu0 0.0
        %4714 = vmatpush1.xpose.msra.mxu0 0.0
        %4715 = vmatprep.subr.mxu0 0.0
        %4716 = vmatpush1.xpose.msra.mxu0 0.0
        %4717 = vmatprep.subr.mxu0 0.0
        %4718 = vmatpush1.xpose.msra.mxu0 0.0
        %4719 = vmatprep.subr.mxu0 0.0
        %4720 = vmatpush1.xpose.msra.mxu0 0.0
        %4721 = vmatprep.subr.mxu0 0.0
        %4722 = vmatpush1.xpose.msra.mxu0 0.0
        %4723 = vmatprep.subr.mxu0 0.0
        %4724 = vmatpush1.xpose.msra.mxu0 0.0
        %4725 = vmatprep.subr.mxu0 0.0
        %4726 = vmatpush1.xpose.msra.mxu0 0.0
        %4727 = vmatprep.subr.mxu0 0.0
        %4728 = vmatpush1.xpose.msra.mxu0 0.0
        %4729 = vmatprep.subr.mxu0 0.0
        %4730 = vmatpush1.xpose.msra.mxu0 0.0
        %4731 = vmatprep.subr.mxu0 0.0
        %4732 = vmatpush1.xpose.msra.mxu0 0.0
        %4733 = vmatprep.subr.mxu0 0.0
        %4734 = vmatpush1.xpose.msra.mxu0 0.0
        %4735 = vmatprep.subr.mxu0 0.0
        %4736 = vmatpush1.xpose.msra.mxu0 0.0
        %4737 = vmatprep.subr.mxu0 0.0
        %4738 = vmatpush1.xpose.msra.mxu0 0.0
        %4739 = vmatprep.subr.mxu0 0.0
        %4740 = vmatpush1.xpose.msra.mxu0 0.0
        %4741 = vmatprep.subr.mxu0 0.0
        %4742 = vmatpush1.xpose.msra.mxu0 0.0
        %4743 = vmatprep.subr.mxu0 0.0
        %4744 = vmatpush1.xpose.msra.mxu0 0.0
        %4745 = vmatprep.subr.mxu0 0.0
        %4746 = vmatpush1.xpose.msra.mxu0 0.0
        %4747 = vmatprep.subr.mxu0 0.0
        %4748 = vmatpush1.xpose.msra.mxu0 0.0
        %4749 = vmatprep.subr.mxu0 0.0
        %4750 = vmatpush1.xpose.msra.mxu0 0.0
        %4751 = vmatprep.mubr.f32.mxu0 %v352
        %4752 = vmatmul.mubr.f32.gmra.mrb[0].mxu0 %v351
        %v4753 = vpop.f32.mrb[0].mxu0
        %v4754 = vadd.f32 %v4684, %v4753
        %v4755 = vpop.f32.mrb[0].mxu0
        %4756 = vdwg.mxu0
        %4757 = vmatprep.subr.mxu0 %v550
        %4758 = vmatpush1.xpose.msra.mxu0 %v549
        %4759 = vmatprep.subr.mxu0 0.0
        %4760 = vmatpush1.xpose.msra.mxu0 0.0
        %4761 = vmatprep.subr.mxu0 0.0
        %4762 = vmatpush1.xpose.msra.mxu0 0.0
        %4763 = vmatprep.subr.mxu0 0.0
        %4764 = vmatpush1.xpose.msra.mxu0 0.0
        %4765 = vmatprep.subr.mxu0 0.0
        %4766 = vmatpush1.xpose.msra.mxu0 0.0
        %4767 = vmatprep.subr.mxu0 0.0
        %4768 = vmatpush1.xpose.msra.mxu0 0.0
        %4769 = vmatprep.subr.mxu0 0.0
        %4770 = vmatpush1.xpose.msra.mxu0 0.0
        %4771 = vmatprep.subr.mxu0 0.0
        %4772 = vmatpush1.xpose.msra.mxu0 0.0
        %4773 = vmatprep.subr.mxu0 0.0
        %4774 = vmatpush1.xpose.msra.mxu0 0.0
        %4775 = vmatprep.subr.mxu0 0.0
        %4776 = vmatpush1.xpose.msra.mxu0 0.0
        %4777 = vmatprep.subr.mxu0 0.0
        %4778 = vmatpush1.xpose.msra.mxu0 0.0
        %4779 = vmatprep.subr.mxu0 0.0
        %4780 = vmatpush1.xpose.msra.mxu0 0.0
        %4781 = vmatprep.subr.mxu0 0.0
        %4782 = vmatpush1.xpose.msra.mxu0 0.0
        %4783 = vmatprep.subr.mxu0 0.0
        %4784 = vmatpush1.xpose.msra.mxu0 0.0
        %4785 = vmatprep.subr.mxu0 0.0
        %4786 = vmatpush1.xpose.msra.mxu0 0.0
        %4787 = vmatprep.subr.mxu0 0.0
        %4788 = vmatpush1.xpose.msra.mxu0 0.0
        %4789 = vmatprep.subr.mxu0 0.0
        %4790 = vmatpush1.xpose.msra.mxu0 0.0
        %4791 = vmatprep.subr.mxu0 0.0
        %4792 = vmatpush1.xpose.msra.mxu0 0.0
        %4793 = vmatprep.subr.mxu0 0.0
        %4794 = vmatpush1.xpose.msra.mxu0 0.0
        %4795 = vmatprep.subr.mxu0 0.0
        %4796 = vmatpush1.xpose.msra.mxu0 0.0
        %4797 = vmatprep.subr.mxu0 0.0
        %4798 = vmatpush1.xpose.msra.mxu0 0.0
        %4799 = vmatprep.subr.mxu0 0.0
        %4800 = vmatpush1.xpose.msra.mxu0 0.0
        %4801 = vmatprep.subr.mxu0 0.0
        %4802 = vmatpush1.xpose.msra.mxu0 0.0
        %4803 = vmatprep.subr.mxu0 0.0
        %4804 = vmatpush1.xpose.msra.mxu0 0.0
        %4805 = vmatprep.subr.mxu0 0.0
        %4806 = vmatpush1.xpose.msra.mxu0 0.0
        %4807 = vmatprep.subr.mxu0 0.0
        %4808 = vmatpush1.xpose.msra.mxu0 0.0
        %4809 = vmatprep.subr.mxu0 0.0
        %4810 = vmatpush1.xpose.msra.mxu0 0.0
        %4811 = vmatprep.subr.mxu0 0.0
        %4812 = vmatpush1.xpose.msra.mxu0 0.0
        %4813 = vmatprep.subr.mxu0 0.0
        %4814 = vmatpush1.xpose.msra.mxu0 0.0
        %4815 = vmatprep.subr.mxu0 0.0
        %4816 = vmatpush1.xpose.msra.mxu0 0.0
        %4817 = vmatprep.subr.mxu0 0.0
        %4818 = vmatpush1.xpose.msra.mxu0 0.0
        %4819 = vmatprep.subr.mxu0 0.0
        %4820 = vmatpush1.xpose.msra.mxu0 0.0
        %4821 = vmatprep.mubr.f32.mxu0 %v354
        %4822 = vmatmul.mubr.f32.gmra.mrb[0].mxu0 %v353
        %v4823 = vpop.f32.mrb[0].mxu0
        %v4824 = vadd.f32 %v4754, %v4823
        %v4825 = vpop.f32.mrb[0].mxu0
        %4826 = vdwg.mxu0
        %4827 = vmatprep.subr.mxu0 %v552
        %4828 = vmatpush1.xpose.msra.mxu0 %v551
        %4829 = vmatprep.subr.mxu0 0.0
        %4830 = vmatpush1.xpose.msra.mxu0 0.0
        %4831 = vmatprep.subr.mxu0 0.0
        %4832 = vmatpush1.xpose.msra.mxu0 0.0
        %4833 = vmatprep.subr.mxu0 0.0
        %4834 = vmatpush1.xpose.msra.mxu0 0.0
        %4835 = vmatprep.subr.mxu0 0.0
        %4836 = vmatpush1.xpose.msra.mxu0 0.0
        %4837 = vmatprep.subr.mxu0 0.0
        %4838 = vmatpush1.xpose.msra.mxu0 0.0
        %4839 = vmatprep.subr.mxu0 0.0
        %4840 = vmatpush1.xpose.msra.mxu0 0.0
        %4841 = vmatprep.subr.mxu0 0.0
        %4842 = vmatpush1.xpose.msra.mxu0 0.0
        %4843 = vmatprep.subr.mxu0 0.0
        %4844 = vmatpush1.xpose.msra.mxu0 0.0
        %4845 = vmatprep.subr.mxu0 0.0
        %4846 = vmatpush1.xpose.msra.mxu0 0.0
        %4847 = vmatprep.subr.mxu0 0.0
        %4848 = vmatpush1.xpose.msra.mxu0 0.0
        %4849 = vmatprep.subr.mxu0 0.0
        %4850 = vmatpush1.xpose.msra.mxu0 0.0
        %4851 = vmatprep.subr.mxu0 0.0
        %4852 = vmatpush1.xpose.msra.mxu0 0.0
        %4853 = vmatprep.subr.mxu0 0.0
        %4854 = vmatpush1.xpose.msra.mxu0 0.0
        %4855 = vmatprep.subr.mxu0 0.0
        %4856 = vmatpush1.xpose.msra.mxu0 0.0
        %4857 = vmatprep.subr.mxu0 0.0
        %4858 = vmatpush1.xpose.msra.mxu0 0.0
        %4859 = vmatprep.subr.mxu0 0.0
        %4860 = vmatpush1.xpose.msra.mxu0 0.0
        %4861 = vmatprep.subr.mxu0 0.0
        %4862 = vmatpush1.xpose.msra.mxu0 0.0
        %4863 = vmatprep.subr.mxu0 0.0
        %4864 = vmatpush1.xpose.msra.mxu0 0.0
        %4865 = vmatprep.subr.mxu0 0.0
        %4866 = vmatpush1.xpose.msra.mxu0 0.0
        %4867 = vmatprep.subr.mxu0 0.0
        %4868 = vmatpush1.xpose.msra.mxu0 0.0
        %4869 = vmatprep.subr.mxu0 0.0
        %4870 = vmatpush1.xpose.msra.mxu0 0.0
        %4871 = vmatprep.subr.mxu0 0.0
        %4872 = vmatpush1.xpose.msra.mxu0 0.0
        %4873 = vmatprep.subr.mxu0 0.0
        %4874 = vmatpush1.xpose.msra.mxu0 0.0
        %4875 = vmatprep.subr.mxu0 0.0
        %4876 = vmatpush1.xpose.msra.mxu0 0.0
        %4877 = vmatprep.subr.mxu0 0.0
        %4878 = vmatpush1.xpose.msra.mxu0 0.0
        %4879 = vmatprep.subr.mxu0 0.0
        %4880 = vmatpush1.xpose.msra.mxu0 0.0
        %4881 = vmatprep.subr.mxu0 0.0
        %4882 = vmatpush1.xpose.msra.mxu0 0.0
        %4883 = vmatprep.subr.mxu0 0.0
        %4884 = vmatpush1.xpose.msra.mxu0 0.0
        %4885 = vmatprep.subr.mxu0 0.0
        %4886 = vmatpush1.xpose.msra.mxu0 0.0
        %4887 = vmatprep.subr.mxu0 0.0
        %4888 = vmatpush1.xpose.msra.mxu0 0.0
        %4889 = vmatprep.subr.mxu0 0.0
        %4890 = vmatpush1.xpose.msra.mxu0 0.0
        %4891 = vmatprep.mubr.f32.mxu0 %v356
        %4892 = vmatmul.mubr.f32.gmra.mrb[0].mxu0 %v355
        %v4893 = vpop.f32.mrb[0].mxu0
        %v4894 = vadd.f32 %v4824, %v4893
        %v4895 = vpop.f32.mrb[0].mxu0
        %4896 = vdwg.mxu0
        %4897 = vmatprep.subr.mxu0 %v554
        %4898 = vmatpush1.xpose.msra.mxu0 %v553
        %4899 = vmatprep.subr.mxu0 0.0
        %4900 = vmatpush1.xpose.msra.mxu0 0.0
        %4901 = vmatprep.subr.mxu0 0.0
        %4902 = vmatpush1.xpose.msra.mxu0 0.0
        %4903 = vmatprep.subr.mxu0 0.0
        %4904 = vmatpush1.xpose.msra.mxu0 0.0
        %4905 = vmatprep.subr.mxu0 0.0
        %4906 = vmatpush1.xpose.msra.mxu0 0.0
        %4907 = vmatprep.subr.mxu0 0.0
        %4908 = vmatpush1.xpose.msra.mxu0 0.0
        %4909 = vmatprep.subr.mxu0 0.0
        %4910 = vmatpush1.xpose.msra.mxu0 0.0
        %4911 = vmatprep.subr.mxu0 0.0
        %4912 = vmatpush1.xpose.msra.mxu0 0.0
        %4913 = vmatprep.subr.mxu0 0.0
        %4914 = vmatpush1.xpose.msra.mxu0 0.0
        %4915 = vmatprep.subr.mxu0 0.0
        %4916 = vmatpush1.xpose.msra.mxu0 0.0
        %4917 = vmatprep.subr.mxu0 0.0
        %4918 = vmatpush1.xpose.msra.mxu0 0.0
        %4919 = vmatprep.subr.mxu0 0.0
        %4920 = vmatpush1.xpose.msra.mxu0 0.0
        %4921 = vmatprep.subr.mxu0 0.0
        %4922 = vmatpush1.xpose.msra.mxu0 0.0
        %4923 = vmatprep.subr.mxu0 0.0
        %4924 = vmatpush1.xpose.msra.mxu0 0.0
        %4925 = vmatprep.subr.mxu0 0.0
        %4926 = vmatpush1.xpose.msra.mxu0 0.0
        %4927 = vmatprep.subr.mxu0 0.0
        %4928 = vmatpush1.xpose.msra.mxu0 0.0
        %4929 = vmatprep.subr.mxu0 0.0
        %4930 = vmatpush1.xpose.msra.mxu0 0.0
        %4931 = vmatprep.subr.mxu0 0.0
        %4932 = vmatpush1.xpose.msra.mxu0 0.0
        %4933 = vmatprep.subr.mxu0 0.0
        %4934 = vmatpush1.xpose.msra.mxu0 0.0
        %4935 = vmatprep.subr.mxu0 0.0
        %4936 = vmatpush1.xpose.msra.mxu0 0.0
        %4937 = vmatprep.subr.mxu0 0.0
        %4938 = vmatpush1.xpose.msra.mxu0 0.0
        %4939 = vmatprep.subr.mxu0 0.0
        %4940 = vmatpush1.xpose.msra.mxu0 0.0
        %4941 = vmatprep.subr.mxu0 0.0
        %4942 = vmatpush1.xpose.msra.mxu0 0.0
        %4943 = vmatprep.subr.mxu0 0.0
        %4944 = vmatpush1.xpose.msra.mxu0 0.0
        %4945 = vmatprep.subr.mxu0 0.0
        %4946 = vmatpush1.xpose.msra.mxu0 0.0
        %4947 = vmatprep.subr.mxu0 0.0
        %4948 = vmatpush1.xpose.msra.mxu0 0.0
        %4949 = vmatprep.subr.mxu0 0.0
        %4950 = vmatpush1.xpose.msra.mxu0 0.0
        %4951 = vmatprep.subr.mxu0 0.0
        %4952 = vmatpush1.xpose.msra.mxu0 0.0
        %4953 = vmatprep.subr.mxu0 0.0
        %4954 = vmatpush1.xpose.msra.mxu0 0.0
        %4955 = vmatprep.subr.mxu0 0.0
        %4956 = vmatpush1.xpose.msra.mxu0 0.0
        %4957 = vmatprep.subr.mxu0 0.0
        %4958 = vmatpush1.xpose.msra.mxu0 0.0
        %4959 = vmatprep.subr.mxu0 0.0
        %4960 = vmatpush1.xpose.msra.mxu0 0.0
        %4961 = vmatprep.mubr.f32.mxu0 %v358
        %4962 = vmatmul.mubr.f32.gmra.mrb[0].mxu0 %v357
        %v4963 = vpop.f32.mrb[0].mxu0
        %v4964 = vadd.f32 %v4894, %v4963
        %v4965 = vpop.f32.mrb[0].mxu0
        %4966 = vdwg.mxu0
        %4967 = vmatprep.subr.mxu0 %v556
        %4968 = vmatpush1.xpose.msra.mxu0 %v555
        %4969 = vmatprep.subr.mxu0 0.0
        %4970 = vmatpush1.xpose.msra.mxu0 0.0
        %4971 = vmatprep.subr.mxu0 0.0
        %4972 = vmatpush1.xpose.msra.mxu0 0.0
        %4973 = vmatprep.subr.mxu0 0.0
        %4974 = vmatpush1.xpose.msra.mxu0 0.0
        %4975 = vmatprep.subr.mxu0 0.0
        %4976 = vmatpush1.xpose.msra.mxu0 0.0
        %4977 = vmatprep.subr.mxu0 0.0
        %4978 = vmatpush1.xpose.msra.mxu0 0.0
        %4979 = vmatprep.subr.mxu0 0.0
        %4980 = vmatpush1.xpose.msra.mxu0 0.0
        %4981 = vmatprep.subr.mxu0 0.0
        %4982 = vmatpush1.xpose.msra.mxu0 0.0
        %4983 = vmatprep.subr.mxu0 0.0
        %4984 = vmatpush1.xpose.msra.mxu0 0.0
        %4985 = vmatprep.subr.mxu0 0.0
        %4986 = vmatpush1.xpose.msra.mxu0 0.0
        %4987 = vmatprep.subr.mxu0 0.0
        %4988 = vmatpush1.xpose.msra.mxu0 0.0
        %4989 = vmatprep.subr.mxu0 0.0
        %4990 = vmatpush1.xpose.msra.mxu0 0.0
        %4991 = vmatprep.subr.mxu0 0.0
        %4992 = vmatpush1.xpose.msra.mxu0 0.0
        %4993 = vmatprep.subr.mxu0 0.0
        %4994 = vmatpush1.xpose.msra.mxu0 0.0
        %4995 = vmatprep.subr.mxu0 0.0
        %4996 = vmatpush1.xpose.msra.mxu0 0.0
        %4997 = vmatprep.subr.mxu0 0.0
        %4998 = vmatpush1.xpose.msra.mxu0 0.0
        %4999 = vmatprep.subr.mxu0 0.0
        %5000 = vmatpush1.xpose.msra.mxu0 0.0
        %5001 = vmatprep.subr.mxu0 0.0
        %5002 = vmatpush1.xpose.msra.mxu0 0.0
        %5003 = vmatprep.subr.mxu0 0.0
        %5004 = vmatpush1.xpose.msra.mxu0 0.0
        %5005 = vmatprep.subr.mxu0 0.0
        %5006 = vmatpush1.xpose.msra.mxu0 0.0
        %5007 = vmatprep.subr.mxu0 0.0
        %5008 = vmatpush1.xpose.msra.mxu0 0.0
        %5009 = vmatprep.subr.mxu0 0.0
        %5010 = vmatpush1.xpose.msra.mxu0 0.0
        %5011 = vmatprep.subr.mxu0 0.0
        %5012 = vmatpush1.xpose.msra.mxu0 0.0
        %5013 = vmatprep.subr.mxu0 0.0
        %5014 = vmatpush1.xpose.msra.mxu0 0.0
        %5015 = vmatprep.subr.mxu0 0.0
        %5016 = vmatpush1.xpose.msra.mxu0 0.0
        %5017 = vmatprep.subr.mxu0 0.0
        %5018 = vmatpush1.xpose.msra.mxu0 0.0
        %5019 = vmatprep.subr.mxu0 0.0
        %5020 = vmatpush1.xpose.msra.mxu0 0.0
        %5021 = vmatprep.subr.mxu0 0.0
        %5022 = vmatpush1.xpose.msra.mxu0 0.0
        %5023 = vmatprep.subr.mxu0 0.0
        %5024 = vmatpush1.xpose.msra.mxu0 0.0
        %5025 = vmatprep.subr.mxu0 0.0
        %5026 = vmatpush1.xpose.msra.mxu0 0.0
        %5027 = vmatprep.subr.mxu0 0.0
        %5028 = vmatpush1.xpose.msra.mxu0 0.0
        %5029 = vmatprep.subr.mxu0 0.0
        %5030 = vmatpush1.xpose.msra.mxu0 0.0
        %5031 = vmatprep.mubr.f32.mxu0 %v360
        %5032 = vmatmul.mubr.f32.gmra.mrb[0].mxu0 %v359
        %v5033 = vpop.f32.mrb[0].mxu0
        %v5034 = vadd.f32 %v4964, %v5033
        %v5035 = vpop.f32.mrb[0].mxu0
        %5036 = vdwg.mxu0
        %5037 = vmatprep.subr.mxu0 %v558
        %5038 = vmatpush1.xpose.msra.mxu0 %v557
        %5039 = vmatprep.subr.mxu0 0.0
        %5040 = vmatpush1.xpose.msra.mxu0 0.0
        %5041 = vmatprep.subr.mxu0 0.0
        %5042 = vmatpush1.xpose.msra.mxu0 0.0
        %5043 = vmatprep.subr.mxu0 0.0
        %5044 = vmatpush1.xpose.msra.mxu0 0.0
        %5045 = vmatprep.subr.mxu0 0.0
        %5046 = vmatpush1.xpose.msra.mxu0 0.0
        %5047 = vmatprep.subr.mxu0 0.0
        %5048 = vmatpush1.xpose.msra.mxu0 0.0
        %5049 = vmatprep.subr.mxu0 0.0
        %5050 = vmatpush1.xpose.msra.mxu0 0.0
        %5051 = vmatprep.subr.mxu0 0.0
        %5052 = vmatpush1.xpose.msra.mxu0 0.0
        %5053 = vmatprep.subr.mxu0 0.0
        %5054 = vmatpush1.xpose.msra.mxu0 0.0
        %5055 = vmatprep.subr.mxu0 0.0
        %5056 = vmatpush1.xpose.msra.mxu0 0.0
        %5057 = vmatprep.subr.mxu0 0.0
        %5058 = vmatpush1.xpose.msra.mxu0 0.0
        %5059 = vmatprep.subr.mxu0 0.0
        %5060 = vmatpush1.xpose.msra.mxu0 0.0
        %5061 = vmatprep.subr.mxu0 0.0
        %5062 = vmatpush1.xpose.msra.mxu0 0.0
        %5063 = vmatprep.subr.mxu0 0.0
        %5064 = vmatpush1.xpose.msra.mxu0 0.0
        %5065 = vmatprep.subr.mxu0 0.0
        %5066 = vmatpush1.xpose.msra.mxu0 0.0
        %5067 = vmatprep.subr.mxu0 0.0
        %5068 = vmatpush1.xpose.msra.mxu0 0.0
        %5069 = vmatprep.subr.mxu0 0.0
        %5070 = vmatpush1.xpose.msra.mxu0 0.0
        %5071 = vmatprep.subr.mxu0 0.0
        %5072 = vmatpush1.xpose.msra.mxu0 0.0
        %5073 = vmatprep.subr.mxu0 0.0
        %5074 = vmatpush1.xpose.msra.mxu0 0.0
        %5075 = vmatprep.subr.mxu0 0.0
        %5076 = vmatpush1.xpose.msra.mxu0 0.0
        %5077 = vmatprep.subr.mxu0 0.0
        %5078 = vmatpush1.xpose.msra.mxu0 0.0
        %5079 = vmatprep.subr.mxu0 0.0
        %5080 = vmatpush1.xpose.msra.mxu0 0.0
        %5081 = vmatprep.subr.mxu0 0.0
        %5082 = vmatpush1.xpose.msra.mxu0 0.0
        %5083 = vmatprep.subr.mxu0 0.0
        %5084 = vmatpush1.xpose.msra.mxu0 0.0
        %5085 = vmatprep.subr.mxu0 0.0
        %5086 = vmatpush1.xpose.msra.mxu0 0.0
        %5087 = vmatprep.subr.mxu0 0.0
        %5088 = vmatpush1.xpose.msra.mxu0 0.0
        %5089 = vmatprep.subr.mxu0 0.0
        %5090 = vmatpush1.xpose.msra.mxu0 0.0
        %5091 = vmatprep.subr.mxu0 0.0
        %5092 = vmatpush1.xpose.msra.mxu0 0.0
        %5093 = vmatprep.subr.mxu0 0.0
        %5094 = vmatpush1.xpose.msra.mxu0 0.0
        %5095 = vmatprep.subr.mxu0 0.0
        %5096 = vmatpush1.xpose.msra.mxu0 0.0
        %5097 = vmatprep.subr.mxu0 0.0
        %5098 = vmatpush1.xpose.msra.mxu0 0.0
        %5099 = vmatprep.subr.mxu0 0.0
        %5100 = vmatpush1.xpose.msra.mxu0 0.0
        %5101 = vmatprep.mubr.f32.mxu0 %v362
        %5102 = vmatmul.mubr.f32.gmra.mrb[0].mxu0 %v361
        %v5103 = vpop.f32.mrb[0].mxu0
        %v5104 = vadd.f32 %v5034, %v5103
        %v5105 = vpop.f32.mrb[0].mxu0
        %5106 = vdwg.mxu0
        %5107 = vmatprep.subr.mxu0 %v560
        %5108 = vmatpush1.xpose.msra.mxu0 %v559
        %5109 = vmatprep.subr.mxu0 0.0
        %5110 = vmatpush1.xpose.msra.mxu0 0.0
        %5111 = vmatprep.subr.mxu0 0.0
        %5112 = vmatpush1.xpose.msra.mxu0 0.0
        %5113 = vmatprep.subr.mxu0 0.0
        %5114 = vmatpush1.xpose.msra.mxu0 0.0
        %5115 = vmatprep.subr.mxu0 0.0
        %5116 = vmatpush1.xpose.msra.mxu0 0.0
        %5117 = vmatprep.subr.mxu0 0.0
        %5118 = vmatpush1.xpose.msra.mxu0 0.0
        %5119 = vmatprep.subr.mxu0 0.0
        %5120 = vmatpush1.xpose.msra.mxu0 0.0
        %5121 = vmatprep.subr.mxu0 0.0
        %5122 = vmatpush1.xpose.msra.mxu0 0.0
        %5123 = vmatprep.subr.mxu0 0.0
        %5124 = vmatpush1.xpose.msra.mxu0 0.0
        %5125 = vmatprep.subr.mxu0 0.0
        %5126 = vmatpush1.xpose.msra.mxu0 0.0
        %5127 = vmatprep.subr.mxu0 0.0
        %5128 = vmatpush1.xpose.msra.mxu0 0.0
        %5129 = vmatprep.subr.mxu0 0.0
        %5130 = vmatpush1.xpose.msra.mxu0 0.0
        %5131 = vmatprep.subr.mxu0 0.0
        %5132 = vmatpush1.xpose.msra.mxu0 0.0
        %5133 = vmatprep.subr.mxu0 0.0
        %5134 = vmatpush1.xpose.msra.mxu0 0.0
        %5135 = vmatprep.subr.mxu0 0.0
        %5136 = vmatpush1.xpose.msra.mxu0 0.0
        %5137 = vmatprep.subr.mxu0 0.0
        %5138 = vmatpush1.xpose.msra.mxu0 0.0
        %5139 = vmatprep.subr.mxu0 0.0
        %5140 = vmatpush1.xpose.msra.mxu0 0.0
        %5141 = vmatprep.subr.mxu0 0.0
        %5142 = vmatpush1.xpose.msra.mxu0 0.0
        %5143 = vmatprep.subr.mxu0 0.0
        %5144 = vmatpush1.xpose.msra.mxu0 0.0
        %5145 = vmatprep.subr.mxu0 0.0
        %5146 = vmatpush1.xpose.msra.mxu0 0.0
        %5147 = vmatprep.subr.mxu0 0.0
        %5148 = vmatpush1.xpose.msra.mxu0 0.0
        %5149 = vmatprep.subr.mxu0 0.0
        %5150 = vmatpush1.xpose.msra.mxu0 0.0
        %5151 = vmatprep.subr.mxu0 0.0
        %5152 = vmatpush1.xpose.msra.mxu0 0.0
        %5153 = vmatprep.subr.mxu0 0.0
        %5154 = vmatpush1.xpose.msra.mxu0 0.0
        %5155 = vmatprep.subr.mxu0 0.0
        %5156 = vmatpush1.xpose.msra.mxu0 0.0
        %5157 = vmatprep.subr.mxu0 0.0
        %5158 = vmatpush1.xpose.msra.mxu0 0.0
        %5159 = vmatprep.subr.mxu0 0.0
        %5160 = vmatpush1.xpose.msra.mxu0 0.0
        %5161 = vmatprep.subr.mxu0 0.0
        %5162 = vmatpush1.xpose.msra.mxu0 0.0
        %5163 = vmatprep.subr.mxu0 0.0
        %5164 = vmatpush1.xpose.msra.mxu0 0.0
        %5165 = vmatprep.subr.mxu0 0.0
        %5166 = vmatpush1.xpose.msra.mxu0 0.0
        %5167 = vmatprep.subr.mxu0 0.0
        %5168 = vmatpush1.xpose.msra.mxu0 0.0
        %5169 = vmatprep.subr.mxu0 0.0
        %5170 = vmatpush1.xpose.msra.mxu0 0.0
        %5171 = vmatprep.mubr.f32.mxu0 %v364
        %5172 = vmatmul.mubr.f32.gmra.mrb[0].mxu0 %v363
        %v5173 = vpop.f32.mrb[0].mxu0
        %v5174 = vadd.f32 %v5104, %v5173
        %v5175 = vpop.f32.mrb[0].mxu0
        %5176 = vdwg.mxu0
        %5177 = vmatprep.subr.mxu0 %v562
        %5178 = vmatpush1.xpose.msra.mxu0 %v561
        %5179 = vmatprep.subr.mxu0 0.0
        %5180 = vmatpush1.xpose.msra.mxu0 0.0
        %5181 = vmatprep.subr.mxu0 0.0
        %5182 = vmatpush1.xpose.msra.mxu0 0.0
        %5183 = vmatprep.subr.mxu0 0.0
        %5184 = vmatpush1.xpose.msra.mxu0 0.0
        %5185 = vmatprep.subr.mxu0 0.0
        %5186 = vmatpush1.xpose.msra.mxu0 0.0
        %5187 = vmatprep.subr.mxu0 0.0
        %5188 = vmatpush1.xpose.msra.mxu0 0.0
        %5189 = vmatprep.subr.mxu0 0.0
        %5190 = vmatpush1.xpose.msra.mxu0 0.0
        %5191 = vmatprep.subr.mxu0 0.0
        %5192 = vmatpush1.xpose.msra.mxu0 0.0
        %5193 = vmatprep.subr.mxu0 0.0
        %5194 = vmatpush1.xpose.msra.mxu0 0.0
        %5195 = vmatprep.subr.mxu0 0.0
        %5196 = vmatpush1.xpose.msra.mxu0 0.0
        %5197 = vmatprep.subr.mxu0 0.0
        %5198 = vmatpush1.xpose.msra.mxu0 0.0
        %5199 = vmatprep.subr.mxu0 0.0
        %5200 = vmatpush1.xpose.msra.mxu0 0.0
        %5201 = vmatprep.subr.mxu0 0.0
        %5202 = vmatpush1.xpose.msra.mxu0 0.0
        %5203 = vmatprep.subr.mxu0 0.0
        %5204 = vmatpush1.xpose.msra.mxu0 0.0
        %5205 = vmatprep.subr.mxu0 0.0
        %5206 = vmatpush1.xpose.msra.mxu0 0.0
        %5207 = vmatprep.subr.mxu0 0.0
        %5208 = vmatpush1.xpose.msra.mxu0 0.0
        %5209 = vmatprep.subr.mxu0 0.0
        %5210 = vmatpush1.xpose.msra.mxu0 0.0
        %5211 = vmatprep.subr.mxu0 0.0
        %5212 = vmatpush1.xpose.msra.mxu0 0.0
        %5213 = vmatprep.subr.mxu0 0.0
        %5214 = vmatpush1.xpose.msra.mxu0 0.0
        %5215 = vmatprep.subr.mxu0 0.0
        %5216 = vmatpush1.xpose.msra.mxu0 0.0
        %5217 = vmatprep.subr.mxu0 0.0
        %5218 = vmatpush1.xpose.msra.mxu0 0.0
        %5219 = vmatprep.subr.mxu0 0.0
        %5220 = vmatpush1.xpose.msra.mxu0 0.0
        %5221 = vmatprep.subr.mxu0 0.0
        %5222 = vmatpush1.xpose.msra.mxu0 0.0
        %5223 = vmatprep.subr.mxu0 0.0
        %5224 = vmatpush1.xpose.msra.mxu0 0.0
        %5225 = vmatprep.subr.mxu0 0.0
        %5226 = vmatpush1.xpose.msra.mxu0 0.0
        %5227 = vmatprep.subr.mxu0 0.0
        %5228 = vmatpush1.xpose.msra.mxu0 0.0
        %5229 = vmatprep.subr.mxu0 0.0
        %5230 = vmatpush1.xpose.msra.mxu0 0.0
        %5231 = vmatprep.subr.mxu0 0.0
        %5232 = vmatpush1.xpose.msra.mxu0 0.0
        %5233 = vmatprep.subr.mxu0 0.0
        %5234 = vmatpush1.xpose.msra.mxu0 0.0
        %5235 = vmatprep.subr.mxu0 0.0
        %5236 = vmatpush1.xpose.msra.mxu0 0.0
        %5237 = vmatprep.subr.mxu0 0.0
        %5238 = vmatpush1.xpose.msra.mxu0 0.0
        %5239 = vmatprep.subr.mxu0 0.0
        %5240 = vmatpush1.xpose.msra.mxu0 0.0
        %5241 = vmatprep.mubr.f32.mxu0 %v366
        %5242 = vmatmul.mubr.f32.gmra.mrb[0].mxu0 %v365
        %v5243 = vpop.f32.mrb[0].mxu0
        %v5244 = vadd.f32 %v5174, %v5243
        %v5245 = vpop.f32.mrb[0].mxu0
        %5246 = vdwg.mxu0
        %5247 = vmatprep.subr.mxu0 %v564
        %5248 = vmatpush1.xpose.msra.mxu0 %v563
        %5249 = vmatprep.subr.mxu0 0.0
        %5250 = vmatpush1.xpose.msra.mxu0 0.0
        %5251 = vmatprep.subr.mxu0 0.0
        %5252 = vmatpush1.xpose.msra.mxu0 0.0
        %5253 = vmatprep.subr.mxu0 0.0
        %5254 = vmatpush1.xpose.msra.mxu0 0.0
        %5255 = vmatprep.subr.mxu0 0.0
        %5256 = vmatpush1.xpose.msra.mxu0 0.0
        %5257 = vmatprep.subr.mxu0 0.0
        %5258 = vmatpush1.xpose.msra.mxu0 0.0
        %5259 = vmatprep.subr.mxu0 0.0
        %5260 = vmatpush1.xpose.msra.mxu0 0.0
        %5261 = vmatprep.subr.mxu0 0.0
        %5262 = vmatpush1.xpose.msra.mxu0 0.0
        %5263 = vmatprep.subr.mxu0 0.0
        %5264 = vmatpush1.xpose.msra.mxu0 0.0
        %5265 = vmatprep.subr.mxu0 0.0
        %5266 = vmatpush1.xpose.msra.mxu0 0.0
        %5267 = vmatprep.subr.mxu0 0.0
        %5268 = vmatpush1.xpose.msra.mxu0 0.0
        %5269 = vmatprep.subr.mxu0 0.0
        %5270 = vmatpush1.xpose.msra.mxu0 0.0
        %5271 = vmatprep.subr.mxu0 0.0
        %5272 = vmatpush1.xpose.msra.mxu0 0.0
        %5273 = vmatprep.subr.mxu0 0.0
        %5274 = vmatpush1.xpose.msra.mxu0 0.0
        %5275 = vmatprep.subr.mxu0 0.0
        %5276 = vmatpush1.xpose.msra.mxu0 0.0
        %5277 = vmatprep.subr.mxu0 0.0
        %5278 = vmatpush1.xpose.msra.mxu0 0.0
        %5279 = vmatprep.subr.mxu0 0.0
        %5280 = vmatpush1.xpose.msra.mxu0 0.0
        %5281 = vmatprep.subr.mxu0 0.0
        %5282 = vmatpush1.xpose.msra.mxu0 0.0
        %5283 = vmatprep.subr.mxu0 0.0
        %5284 = vmatpush1.xpose.msra.mxu0 0.0
        %5285 = vmatprep.subr.mxu0 0.0
        %5286 = vmatpush1.xpose.msra.mxu0 0.0
        %5287 = vmatprep.subr.mxu0 0.0
        %5288 = vmatpush1.xpose.msra.mxu0 0.0
        %5289 = vmatprep.subr.mxu0 0.0
        %5290 = vmatpush1.xpose.msra.mxu0 0.0
        %5291 = vmatprep.subr.mxu0 0.0
        %5292 = vmatpush1.xpose.msra.mxu0 0.0
        %5293 = vmatprep.subr.mxu0 0.0
        %5294 = vmatpush1.xpose.msra.mxu0 0.0
        %5295 = vmatprep.subr.mxu0 0.0
        %5296 = vmatpush1.xpose.msra.mxu0 0.0
        %5297 = vmatprep.subr.mxu0 0.0
        %5298 = vmatpush1.xpose.msra.mxu0 0.0
        %5299 = vmatprep.subr.mxu0 0.0
        %5300 = vmatpush1.xpose.msra.mxu0 0.0
        %5301 = vmatprep.subr.mxu0 0.0
        %5302 = vmatpush1.xpose.msra.mxu0 0.0
        %5303 = vmatprep.subr.mxu0 0.0
        %5304 = vmatpush1.xpose.msra.mxu0 0.0
        %5305 = vmatprep.subr.mxu0 0.0
        %5306 = vmatpush1.xpose.msra.mxu0 0.0
        %5307 = vmatprep.subr.mxu0 0.0
        %5308 = vmatpush1.xpose.msra.mxu0 0.0
        %5309 = vmatprep.subr.mxu0 0.0
        %5310 = vmatpush1.xpose.msra.mxu0 0.0
        %5311 = vmatprep.mubr.f32.mxu0 %v368
        %5312 = vmatmul.mubr.f32.gmra.mrb[0].mxu0 %v367
        %v5313 = vpop.f32.mrb[0].mxu0
        %v5314 = vadd.f32 %v5244, %v5313
        %v5315 = vpop.f32.mrb[0].mxu0
        %5316 = vdwg.mxu0
        %5317 = vmatprep.subr.mxu0 %v566
        %5318 = vmatpush1.xpose.msra.mxu0 %v565
        %5319 = vmatprep.subr.mxu0 0.0
        %5320 = vmatpush1.xpose.msra.mxu0 0.0
        %5321 = vmatprep.subr.mxu0 0.0
        %5322 = vmatpush1.xpose.msra.mxu0 0.0
        %5323 = vmatprep.subr.mxu0 0.0
        %5324 = vmatpush1.xpose.msra.mxu0 0.0
        %5325 = vmatprep.subr.mxu0 0.0
        %5326 = vmatpush1.xpose.msra.mxu0 0.0
        %5327 = vmatprep.subr.mxu0 0.0
        %5328 = vmatpush1.xpose.msra.mxu0 0.0
        %5329 = vmatprep.subr.mxu0 0.0
        %5330 = vmatpush1.xpose.msra.mxu0 0.0
        %5331 = vmatprep.subr.mxu0 0.0
        %5332 = vmatpush1.xpose.msra.mxu0 0.0
        %5333 = vmatprep.subr.mxu0 0.0
        %5334 = vmatpush1.xpose.msra.mxu0 0.0
        %5335 = vmatprep.subr.mxu0 0.0
        %5336 = vmatpush1.xpose.msra.mxu0 0.0
        %5337 = vmatprep.subr.mxu0 0.0
        %5338 = vmatpush1.xpose.msra.mxu0 0.0
        %5339 = vmatprep.subr.mxu0 0.0
        %5340 = vmatpush1.xpose.msra.mxu0 0.0
        %5341 = vmatprep.subr.mxu0 0.0
        %5342 = vmatpush1.xpose.msra.mxu0 0.0
        %5343 = vmatprep.subr.mxu0 0.0
        %5344 = vmatpush1.xpose.msra.mxu0 0.0
        %5345 = vmatprep.subr.mxu0 0.0
        %5346 = vmatpush1.xpose.msra.mxu0 0.0
        %5347 = vmatprep.subr.mxu0 0.0
        %5348 = vmatpush1.xpose.msra.mxu0 0.0
        %5349 = vmatprep.subr.mxu0 0.0
        %5350 = vmatpush1.xpose.msra.mxu0 0.0
        %5351 = vmatprep.subr.mxu0 0.0
        %5352 = vmatpush1.xpose.msra.mxu0 0.0
        %5353 = vmatprep.subr.mxu0 0.0
        %5354 = vmatpush1.xpose.msra.mxu0 0.0
        %5355 = vmatprep.subr.mxu0 0.0
        %5356 = vmatpush1.xpose.msra.mxu0 0.0
        %5357 = vmatprep.subr.mxu0 0.0
        %5358 = vmatpush1.xpose.msra.mxu0 0.0
        %5359 = vmatprep.subr.mxu0 0.0
        %5360 = vmatpush1.xpose.msra.mxu0 0.0
        %5361 = vmatprep.subr.mxu0 0.0
        %5362 = vmatpush1.xpose.msra.mxu0 0.0
        %5363 = vmatprep.subr.mxu0 0.0
        %5364 = vmatpush1.xpose.msra.mxu0 0.0
        %5365 = vmatprep.subr.mxu0 0.0
        %5366 = vmatpush1.xpose.msra.mxu0 0.0
        %5367 = vmatprep.subr.mxu0 0.0
        %5368 = vmatpush1.xpose.msra.mxu0 0.0
        %5369 = vmatprep.subr.mxu0 0.0
        %5370 = vmatpush1.xpose.msra.mxu0 0.0
        %5371 = vmatprep.subr.mxu0 0.0
        %5372 = vmatpush1.xpose.msra.mxu0 0.0
        %5373 = vmatprep.subr.mxu0 0.0
        %5374 = vmatpush1.xpose.msra.mxu0 0.0
        %5375 = vmatprep.subr.mxu0 0.0
        %5376 = vmatpush1.xpose.msra.mxu0 0.0
        %5377 = vmatprep.subr.mxu0 0.0
        %5378 = vmatpush1.xpose.msra.mxu0 0.0
        %5379 = vmatprep.subr.mxu0 0.0
        %5380 = vmatpush1.xpose.msra.mxu0 0.0
        %5381 = vmatprep.mubr.f32.mxu0 %v370
        %5382 = vmatmul.mubr.f32.gmra.mrb[0].mxu0 %v369
        %v5383 = vpop.f32.mrb[0].mxu0
        %v5384 = vadd.f32 %v5314, %v5383
        %v5385 = vpop.f32.mrb[0].mxu0
        %5386 = vdwg.mxu0
        %5387 = vmatprep.subr.mxu0 %v568
        %5388 = vmatpush1.xpose.msra.mxu0 %v567
        %5389 = vmatprep.subr.mxu0 0.0
        %5390 = vmatpush1.xpose.msra.mxu0 0.0
        %5391 = vmatprep.subr.mxu0 0.0
        %5392 = vmatpush1.xpose.msra.mxu0 0.0
        %5393 = vmatprep.subr.mxu0 0.0
        %5394 = vmatpush1.xpose.msra.mxu0 0.0
        %5395 = vmatprep.subr.mxu0 0.0
        %5396 = vmatpush1.xpose.msra.mxu0 0.0
        %5397 = vmatprep.subr.mxu0 0.0
        %5398 = vmatpush1.xpose.msra.mxu0 0.0
        %5399 = vmatprep.subr.mxu0 0.0
        %5400 = vmatpush1.xpose.msra.mxu0 0.0
        %5401 = vmatprep.subr.mxu0 0.0
        %5402 = vmatpush1.xpose.msra.mxu0 0.0
        %5403 = vmatprep.subr.mxu0 0.0
        %5404 = vmatpush1.xpose.msra.mxu0 0.0
        %5405 = vmatprep.subr.mxu0 0.0
        %5406 = vmatpush1.xpose.msra.mxu0 0.0
        %5407 = vmatprep.subr.mxu0 0.0
        %5408 = vmatpush1.xpose.msra.mxu0 0.0
        %5409 = vmatprep.subr.mxu0 0.0
        %5410 = vmatpush1.xpose.msra.mxu0 0.0
        %5411 = vmatprep.subr.mxu0 0.0
        %5412 = vmatpush1.xpose.msra.mxu0 0.0
        %5413 = vmatprep.subr.mxu0 0.0
        %5414 = vmatpush1.xpose.msra.mxu0 0.0
        %5415 = vmatprep.subr.mxu0 0.0
        %5416 = vmatpush1.xpose.msra.mxu0 0.0
        %5417 = vmatprep.subr.mxu0 0.0
        %5418 = vmatpush1.xpose.msra.mxu0 0.0
        %5419 = vmatprep.subr.mxu0 0.0
        %5420 = vmatpush1.xpose.msra.mxu0 0.0
        %5421 = vmatprep.subr.mxu0 0.0
        %5422 = vmatpush1.xpose.msra.mxu0 0.0
        %5423 = vmatprep.subr.mxu0 0.0
        %5424 = vmatpush1.xpose.msra.mxu0 0.0
        %5425 = vmatprep.subr.mxu0 0.0
        %5426 = vmatpush1.xpose.msra.mxu0 0.0
        %5427 = vmatprep.subr.mxu0 0.0
        %5428 = vmatpush1.xpose.msra.mxu0 0.0
        %5429 = vmatprep.subr.mxu0 0.0
        %5430 = vmatpush1.xpose.msra.mxu0 0.0
        %5431 = vmatprep.subr.mxu0 0.0
        %5432 = vmatpush1.xpose.msra.mxu0 0.0
        %5433 = vmatprep.subr.mxu0 0.0
        %5434 = vmatpush1.xpose.msra.mxu0 0.0
        %5435 = vmatprep.subr.mxu0 0.0
        %5436 = vmatpush1.xpose.msra.mxu0 0.0
        %5437 = vmatprep.subr.mxu0 0.0
        %5438 = vmatpush1.xpose.msra.mxu0 0.0
        %5439 = vmatprep.subr.mxu0 0.0
        %5440 = vmatpush1.xpose.msra.mxu0 0.0
        %5441 = vmatprep.subr.mxu0 0.0
        %5442 = vmatpush1.xpose.msra.mxu0 0.0
        %5443 = vmatprep.subr.mxu0 0.0
        %5444 = vmatpush1.xpose.msra.mxu0 0.0
        %5445 = vmatprep.subr.mxu0 0.0
        %5446 = vmatpush1.xpose.msra.mxu0 0.0
        %5447 = vmatprep.subr.mxu0 0.0
        %5448 = vmatpush1.xpose.msra.mxu0 0.0
        %5449 = vmatprep.subr.mxu0 0.0
        %5450 = vmatpush1.xpose.msra.mxu0 0.0
        %5451 = vmatprep.mubr.f32.mxu0 %v372
        %5452 = vmatmul.mubr.f32.gmra.mrb[0].mxu0 %v371
        %v5453 = vpop.f32.mrb[0].mxu0
        %v5454 = vadd.f32 %v5384, %v5453
        %v5455 = vpop.f32.mrb[0].mxu0
        %5456 = vdwg.mxu0
        %5457 = vmatprep.subr.mxu0 %v570
        %5458 = vmatpush1.xpose.msra.mxu0 %v569
        %5459 = vmatprep.subr.mxu0 0.0
        %5460 = vmatpush1.xpose.msra.mxu0 0.0
        %5461 = vmatprep.subr.mxu0 0.0
        %5462 = vmatpush1.xpose.msra.mxu0 0.0
        %5463 = vmatprep.subr.mxu0 0.0
        %5464 = vmatpush1.xpose.msra.mxu0 0.0
        %5465 = vmatprep.subr.mxu0 0.0
        %5466 = vmatpush1.xpose.msra.mxu0 0.0
        %5467 = vmatprep.subr.mxu0 0.0
        %5468 = vmatpush1.xpose.msra.mxu0 0.0
        %5469 = vmatprep.subr.mxu0 0.0
        %5470 = vmatpush1.xpose.msra.mxu0 0.0
        %5471 = vmatprep.subr.mxu0 0.0
        %5472 = vmatpush1.xpose.msra.mxu0 0.0
        %5473 = vmatprep.subr.mxu0 0.0
        %5474 = vmatpush1.xpose.msra.mxu0 0.0
        %5475 = vmatprep.subr.mxu0 0.0
        %5476 = vmatpush1.xpose.msra.mxu0 0.0
        %5477 = vmatprep.subr.mxu0 0.0
        %5478 = vmatpush1.xpose.msra.mxu0 0.0
        %5479 = vmatprep.subr.mxu0 0.0
        %5480 = vmatpush1.xpose.msra.mxu0 0.0
        %5481 = vmatprep.subr.mxu0 0.0
        %5482 = vmatpush1.xpose.msra.mxu0 0.0
        %5483 = vmatprep.subr.mxu0 0.0
        %5484 = vmatpush1.xpose.msra.mxu0 0.0
        %5485 = vmatprep.subr.mxu0 0.0
        %5486 = vmatpush1.xpose.msra.mxu0 0.0
        %5487 = vmatprep.subr.mxu0 0.0
        %5488 = vmatpush1.xpose.msra.mxu0 0.0
        %5489 = vmatprep.subr.mxu0 0.0
        %5490 = vmatpush1.xpose.msra.mxu0 0.0
        %5491 = vmatprep.subr.mxu0 0.0
        %5492 = vmatpush1.xpose.msra.mxu0 0.0
        %5493 = vmatprep.subr.mxu0 0.0
        %5494 = vmatpush1.xpose.msra.mxu0 0.0
        %5495 = vmatprep.subr.mxu0 0.0
        %5496 = vmatpush1.xpose.msra.mxu0 0.0
        %5497 = vmatprep.subr.mxu0 0.0
        %5498 = vmatpush1.xpose.msra.mxu0 0.0
        %5499 = vmatprep.subr.mxu0 0.0
        %5500 = vmatpush1.xpose.msra.mxu0 0.0
        %5501 = vmatprep.subr.mxu0 0.0
        %5502 = vmatpush1.xpose.msra.mxu0 0.0
        %5503 = vmatprep.subr.mxu0 0.0
        %5504 = vmatpush1.xpose.msra.mxu0 0.0
        %5505 = vmatprep.subr.mxu0 0.0
        %5506 = vmatpush1.xpose.msra.mxu0 0.0
        %5507 = vmatprep.subr.mxu0 0.0
        %5508 = vmatpush1.xpose.msra.mxu0 0.0
        %5509 = vmatprep.subr.mxu0 0.0
        %5510 = vmatpush1.xpose.msra.mxu0 0.0
        %5511 = vmatprep.subr.mxu0 0.0
        %5512 = vmatpush1.xpose.msra.mxu0 0.0
        %5513 = vmatprep.subr.mxu0 0.0
        %5514 = vmatpush1.xpose.msra.mxu0 0.0
        %5515 = vmatprep.subr.mxu0 0.0
        %5516 = vmatpush1.xpose.msra.mxu0 0.0
        %5517 = vmatprep.subr.mxu0 0.0
        %5518 = vmatpush1.xpose.msra.mxu0 0.0
        %5519 = vmatprep.subr.mxu0 0.0
        %5520 = vmatpush1.xpose.msra.mxu0 0.0
        %5521 = vmatprep.mubr.f32.mxu0 %v374
        %5522 = vmatmul.mubr.f32.gmra.mrb[0].mxu0 %v373
        %v5523 = vpop.f32.mrb[0].mxu0
        %v5524 = vadd.f32 %v5454, %v5523
        %v5525 = vpop.f32.mrb[0].mxu0
        %5526 = vdwg.mxu0
        %5527 = vmatprep.subr.mxu0 %v572
        %5528 = vmatpush1.xpose.msra.mxu0 %v571
        %5529 = vmatprep.subr.mxu0 0.0
        %5530 = vmatpush1.xpose.msra.mxu0 0.0
        %5531 = vmatprep.subr.mxu0 0.0
        %5532 = vmatpush1.xpose.msra.mxu0 0.0
        %5533 = vmatprep.subr.mxu0 0.0
        %5534 = vmatpush1.xpose.msra.mxu0 0.0
        %5535 = vmatprep.subr.mxu0 0.0
        %5536 = vmatpush1.xpose.msra.mxu0 0.0
        %5537 = vmatprep.subr.mxu0 0.0
        %5538 = vmatpush1.xpose.msra.mxu0 0.0
        %5539 = vmatprep.subr.mxu0 0.0
        %5540 = vmatpush1.xpose.msra.mxu0 0.0
        %5541 = vmatprep.subr.mxu0 0.0
        %5542 = vmatpush1.xpose.msra.mxu0 0.0
        %5543 = vmatprep.subr.mxu0 0.0
        %5544 = vmatpush1.xpose.msra.mxu0 0.0
        %5545 = vmatprep.subr.mxu0 0.0
        %5546 = vmatpush1.xpose.msra.mxu0 0.0
        %5547 = vmatprep.subr.mxu0 0.0
        %5548 = vmatpush1.xpose.msra.mxu0 0.0
        %5549 = vmatprep.subr.mxu0 0.0
        %5550 = vmatpush1.xpose.msra.mxu0 0.0
        %5551 = vmatprep.subr.mxu0 0.0
        %5552 = vmatpush1.xpose.msra.mxu0 0.0
        %5553 = vmatprep.subr.mxu0 0.0
        %5554 = vmatpush1.xpose.msra.mxu0 0.0
        %5555 = vmatprep.subr.mxu0 0.0
        %5556 = vmatpush1.xpose.msra.mxu0 0.0
        %5557 = vmatprep.subr.mxu0 0.0
        %5558 = vmatpush1.xpose.msra.mxu0 0.0
        %5559 = vmatprep.subr.mxu0 0.0
        %5560 = vmatpush1.xpose.msra.mxu0 0.0
        %5561 = vmatprep.subr.mxu0 0.0
        %5562 = vmatpush1.xpose.msra.mxu0 0.0
        %5563 = vmatprep.subr.mxu0 0.0
        %5564 = vmatpush1.xpose.msra.mxu0 0.0
        %5565 = vmatprep.subr.mxu0 0.0
        %5566 = vmatpush1.xpose.msra.mxu0 0.0
        %5567 = vmatprep.subr.mxu0 0.0
        %5568 = vmatpush1.xpose.msra.mxu0 0.0
        %5569 = vmatprep.subr.mxu0 0.0
        %5570 = vmatpush1.xpose.msra.mxu0 0.0
        %5571 = vmatprep.subr.mxu0 0.0
        %5572 = vmatpush1.xpose.msra.mxu0 0.0
        %5573 = vmatprep.subr.mxu0 0.0
        %5574 = vmatpush1.xpose.msra.mxu0 0.0
        %5575 = vmatprep.subr.mxu0 0.0
        %5576 = vmatpush1.xpose.msra.mxu0 0.0
        %5577 = vmatprep.subr.mxu0 0.0
        %5578 = vmatpush1.xpose.msra.mxu0 0.0
        %5579 = vmatprep.subr.mxu0 0.0
        %5580 = vmatpush1.xpose.msra.mxu0 0.0
        %5581 = vmatprep.subr.mxu0 0.0
        %5582 = vmatpush1.xpose.msra.mxu0 0.0
        %5583 = vmatprep.subr.mxu0 0.0
        %5584 = vmatpush1.xpose.msra.mxu0 0.0
        %5585 = vmatprep.subr.mxu0 0.0
        %5586 = vmatpush1.xpose.msra.mxu0 0.0
        %5587 = vmatprep.subr.mxu0 0.0
        %5588 = vmatpush1.xpose.msra.mxu0 0.0
        %5589 = vmatprep.subr.mxu0 0.0
        %5590 = vmatpush1.xpose.msra.mxu0 0.0
        %5591 = vmatprep.mubr.f32.mxu0 %v376
        %5592 = vmatmul.mubr.f32.gmra.mrb[0].mxu0 %v375
        %v5593 = vpop.f32.mrb[0].mxu0
        %v5594 = vadd.f32 %v5524, %v5593
        %v5595 = vpop.f32.mrb[0].mxu0
        %5596 = vdwg.mxu0
        %5597 = vmatprep.subr.mxu0 %v574
        %5598 = vmatpush1.xpose.msra.mxu0 %v573
        %5599 = vmatprep.subr.mxu0 0.0
        %5600 = vmatpush1.xpose.msra.mxu0 0.0
        %5601 = vmatprep.subr.mxu0 0.0
        %5602 = vmatpush1.xpose.msra.mxu0 0.0
        %5603 = vmatprep.subr.mxu0 0.0
        %5604 = vmatpush1.xpose.msra.mxu0 0.0
        %5605 = vmatprep.subr.mxu0 0.0
        %5606 = vmatpush1.xpose.msra.mxu0 0.0
        %5607 = vmatprep.subr.mxu0 0.0
        %5608 = vmatpush1.xpose.msra.mxu0 0.0
        %5609 = vmatprep.subr.mxu0 0.0
        %5610 = vmatpush1.xpose.msra.mxu0 0.0
        %5611 = vmatprep.subr.mxu0 0.0
        %5612 = vmatpush1.xpose.msra.mxu0 0.0
        %5613 = vmatprep.subr.mxu0 0.0
        %5614 = vmatpush1.xpose.msra.mxu0 0.0
        %5615 = vmatprep.subr.mxu0 0.0
        %5616 = vmatpush1.xpose.msra.mxu0 0.0
        %5617 = vmatprep.subr.mxu0 0.0
        %5618 = vmatpush1.xpose.msra.mxu0 0.0
        %5619 = vmatprep.subr.mxu0 0.0
        %5620 = vmatpush1.xpose.msra.mxu0 0.0
        %5621 = vmatprep.subr.mxu0 0.0
        %5622 = vmatpush1.xpose.msra.mxu0 0.0
        %5623 = vmatprep.subr.mxu0 0.0
        %5624 = vmatpush1.xpose.msra.mxu0 0.0
        %5625 = vmatprep.subr.mxu0 0.0
        %5626 = vmatpush1.xpose.msra.mxu0 0.0
        %5627 = vmatprep.subr.mxu0 0.0
        %5628 = vmatpush1.xpose.msra.mxu0 0.0
        %5629 = vmatprep.subr.mxu0 0.0
        %5630 = vmatpush1.xpose.msra.mxu0 0.0
        %5631 = vmatprep.subr.mxu0 0.0
        %5632 = vmatpush1.xpose.msra.mxu0 0.0
        %5633 = vmatprep.subr.mxu0 0.0
        %5634 = vmatpush1.xpose.msra.mxu0 0.0
        %5635 = vmatprep.subr.mxu0 0.0
        %5636 = vmatpush1.xpose.msra.mxu0 0.0
        %5637 = vmatprep.subr.mxu0 0.0
        %5638 = vmatpush1.xpose.msra.mxu0 0.0
        %5639 = vmatprep.subr.mxu0 0.0
        %5640 = vmatpush1.xpose.msra.mxu0 0.0
        %5641 = vmatprep.subr.mxu0 0.0
        %5642 = vmatpush1.xpose.msra.mxu0 0.0
        %5643 = vmatprep.subr.mxu0 0.0
        %5644 = vmatpush1.xpose.msra.mxu0 0.0
        %5645 = vmatprep.subr.mxu0 0.0
        %5646 = vmatpush1.xpose.msra.mxu0 0.0
        %5647 = vmatprep.subr.mxu0 0.0
        %5648 = vmatpush1.xpose.msra.mxu0 0.0
        %5649 = vmatprep.subr.mxu0 0.0
        %5650 = vmatpush1.xpose.msra.mxu0 0.0
        %5651 = vmatprep.subr.mxu0 0.0
        %5652 = vmatpush1.xpose.msra.mxu0 0.0
        %5653 = vmatprep.subr.mxu0 0.0
        %5654 = vmatpush1.xpose.msra.mxu0 0.0
        %5655 = vmatprep.subr.mxu0 0.0
        %5656 = vmatpush1.xpose.msra.mxu0 0.0
        %5657 = vmatprep.subr.mxu0 0.0
        %5658 = vmatpush1.xpose.msra.mxu0 0.0
        %5659 = vmatprep.subr.mxu0 0.0
        %5660 = vmatpush1.xpose.msra.mxu0 0.0
        %5661 = vmatprep.mubr.f32.mxu0 %v378
        %5662 = vmatmul.mubr.f32.gmra.mrb[0].mxu0 %v377
        %v5663 = vpop.f32.mrb[0].mxu0
        %v5664 = vadd.f32 %v5594, %v5663
        %v5665 = vpop.f32.mrb[0].mxu0
        %5666 = vdwg.mxu0
        %5667 = vmatprep.subr.mxu0 %v576
        %5668 = vmatpush1.xpose.msra.mxu0 %v575
        %5669 = vmatprep.subr.mxu0 0.0
        %5670 = vmatpush1.xpose.msra.mxu0 0.0
        %5671 = vmatprep.subr.mxu0 0.0
        %5672 = vmatpush1.xpose.msra.mxu0 0.0
        %5673 = vmatprep.subr.mxu0 0.0
        %5674 = vmatpush1.xpose.msra.mxu0 0.0
        %5675 = vmatprep.subr.mxu0 0.0
        %5676 = vmatpush1.xpose.msra.mxu0 0.0
        %5677 = vmatprep.subr.mxu0 0.0
        %5678 = vmatpush1.xpose.msra.mxu0 0.0
        %5679 = vmatprep.subr.mxu0 0.0
        %5680 = vmatpush1.xpose.msra.mxu0 0.0
        %5681 = vmatprep.subr.mxu0 0.0
        %5682 = vmatpush1.xpose.msra.mxu0 0.0
        %5683 = vmatprep.subr.mxu0 0.0
        %5684 = vmatpush1.xpose.msra.mxu0 0.0
        %5685 = vmatprep.subr.mxu0 0.0
        %5686 = vmatpush1.xpose.msra.mxu0 0.0
        %5687 = vmatprep.subr.mxu0 0.0
        %5688 = vmatpush1.xpose.msra.mxu0 0.0
        %5689 = vmatprep.subr.mxu0 0.0
        %5690 = vmatpush1.xpose.msra.mxu0 0.0
        %5691 = vmatprep.subr.mxu0 0.0
        %5692 = vmatpush1.xpose.msra.mxu0 0.0
        %5693 = vmatprep.subr.mxu0 0.0
        %5694 = vmatpush1.xpose.msra.mxu0 0.0
        %5695 = vmatprep.subr.mxu0 0.0
        %5696 = vmatpush1.xpose.msra.mxu0 0.0
        %5697 = vmatprep.subr.mxu0 0.0
        %5698 = vmatpush1.xpose.msra.mxu0 0.0
        %5699 = vmatprep.subr.mxu0 0.0
        %5700 = vmatpush1.xpose.msra.mxu0 0.0
        %5701 = vmatprep.subr.mxu0 0.0
        %5702 = vmatpush1.xpose.msra.mxu0 0.0
        %5703 = vmatprep.subr.mxu0 0.0
        %5704 = vmatpush1.xpose.msra.mxu0 0.0
        %5705 = vmatprep.subr.mxu0 0.0
        %5706 = vmatpush1.xpose.msra.mxu0 0.0
        %5707 = vmatprep.subr.mxu0 0.0
        %5708 = vmatpush1.xpose.msra.mxu0 0.0
        %5709 = vmatprep.subr.mxu0 0.0
        %5710 = vmatpush1.xpose.msra.mxu0 0.0
        %5711 = vmatprep.subr.mxu0 0.0
        %5712 = vmatpush1.xpose.msra.mxu0 0.0
        %5713 = vmatprep.subr.mxu0 0.0
        %5714 = vmatpush1.xpose.msra.mxu0 0.0
        %5715 = vmatprep.subr.mxu0 0.0
        %5716 = vmatpush1.xpose.msra.mxu0 0.0
        %5717 = vmatprep.subr.mxu0 0.0
        %5718 = vmatpush1.xpose.msra.mxu0 0.0
        %5719 = vmatprep.subr.mxu0 0.0
        %5720 = vmatpush1.xpose.msra.mxu0 0.0
        %5721 = vmatprep.subr.mxu0 0.0
        %5722 = vmatpush1.xpose.msra.mxu0 0.0
        %5723 = vmatprep.subr.mxu0 0.0
        %5724 = vmatpush1.xpose.msra.mxu0 0.0
        %5725 = vmatprep.subr.mxu0 0.0
        %5726 = vmatpush1.xpose.msra.mxu0 0.0
        %5727 = vmatprep.subr.mxu0 0.0
        %5728 = vmatpush1.xpose.msra.mxu0 0.0
        %5729 = vmatprep.subr.mxu0 0.0
        %5730 = vmatpush1.xpose.msra.mxu0 0.0
        %5731 = vmatprep.mubr.f32.mxu0 %v380
        %5732 = vmatmul.mubr.f32.gmra.mrb[0].mxu0 %v379
        %v5733 = vpop.f32.mrb[0].mxu0
        %v5734 = vadd.f32 %v5664, %v5733
        %v5735 = vpop.f32.mrb[0].mxu0
        %5736 = vdwg.mxu0
        %5737 = vmatprep.subr.mxu0 %v578
        %5738 = vmatpush1.xpose.msra.mxu0 %v577
        %5739 = vmatprep.subr.mxu0 0.0
        %5740 = vmatpush1.xpose.msra.mxu0 0.0
        %5741 = vmatprep.subr.mxu0 0.0
        %5742 = vmatpush1.xpose.msra.mxu0 0.0
        %5743 = vmatprep.subr.mxu0 0.0
        %5744 = vmatpush1.xpose.msra.mxu0 0.0
        %5745 = vmatprep.subr.mxu0 0.0
        %5746 = vmatpush1.xpose.msra.mxu0 0.0
        %5747 = vmatprep.subr.mxu0 0.0
        %5748 = vmatpush1.xpose.msra.mxu0 0.0
        %5749 = vmatprep.subr.mxu0 0.0
        %5750 = vmatpush1.xpose.msra.mxu0 0.0
        %5751 = vmatprep.subr.mxu0 0.0
        %5752 = vmatpush1.xpose.msra.mxu0 0.0
        %5753 = vmatprep.subr.mxu0 0.0
        %5754 = vmatpush1.xpose.msra.mxu0 0.0
        %5755 = vmatprep.subr.mxu0 0.0
        %5756 = vmatpush1.xpose.msra.mxu0 0.0
        %5757 = vmatprep.subr.mxu0 0.0
        %5758 = vmatpush1.xpose.msra.mxu0 0.0
        %5759 = vmatprep.subr.mxu0 0.0
        %5760 = vmatpush1.xpose.msra.mxu0 0.0
        %5761 = vmatprep.subr.mxu0 0.0
        %5762 = vmatpush1.xpose.msra.mxu0 0.0
        %5763 = vmatprep.subr.mxu0 0.0
        %5764 = vmatpush1.xpose.msra.mxu0 0.0
        %5765 = vmatprep.subr.mxu0 0.0
        %5766 = vmatpush1.xpose.msra.mxu0 0.0
        %5767 = vmatprep.subr.mxu0 0.0
        %5768 = vmatpush1.xpose.msra.mxu0 0.0
        %5769 = vmatprep.subr.mxu0 0.0
        %5770 = vmatpush1.xpose.msra.mxu0 0.0
        %5771 = vmatprep.subr.mxu0 0.0
        %5772 = vmatpush1.xpose.msra.mxu0 0.0
        %5773 = vmatprep.subr.mxu0 0.0
        %5774 = vmatpush1.xpose.msra.mxu0 0.0
        %5775 = vmatprep.subr.mxu0 0.0
        %5776 = vmatpush1.xpose.msra.mxu0 0.0
        %5777 = vmatprep.subr.mxu0 0.0
        %5778 = vmatpush1.xpose.msra.mxu0 0.0
        %5779 = vmatprep.subr.mxu0 0.0
        %5780 = vmatpush1.xpose.msra.mxu0 0.0
        %5781 = vmatprep.subr.mxu0 0.0
        %5782 = vmatpush1.xpose.msra.mxu0 0.0
        %5783 = vmatprep.subr.mxu0 0.0
        %5784 = vmatpush1.xpose.msra.mxu0 0.0
        %5785 = vmatprep.subr.mxu0 0.0
        %5786 = vmatpush1.xpose.msra.mxu0 0.0
        %5787 = vmatprep.subr.mxu0 0.0
        %5788 = vmatpush1.xpose.msra.mxu0 0.0
        %5789 = vmatprep.subr.mxu0 0.0
        %5790 = vmatpush1.xpose.msra.mxu0 0.0
        %5791 = vmatprep.subr.mxu0 0.0
        %5792 = vmatpush1.xpose.msra.mxu0 0.0
        %5793 = vmatprep.subr.mxu0 0.0
        %5794 = vmatpush1.xpose.msra.mxu0 0.0
        %5795 = vmatprep.subr.mxu0 0.0
        %5796 = vmatpush1.xpose.msra.mxu0 0.0
        %5797 = vmatprep.subr.mxu0 0.0
        %5798 = vmatpush1.xpose.msra.mxu0 0.0
        %5799 = vmatprep.subr.mxu0 0.0
        %5800 = vmatpush1.xpose.msra.mxu0 0.0
        %5801 = vmatprep.mubr.f32.mxu0 %v382
        %5802 = vmatmul.mubr.f32.gmra.mrb[0].mxu0 %v381
        %v5803 = vpop.f32.mrb[0].mxu0
        %v5804 = vadd.f32 %v5734, %v5803
        %v5805 = vpop.f32.mrb[0].mxu0
        %5806 = vdwg.mxu0
        %5807 = vmatprep.subr.mxu0 %v580
        %5808 = vmatpush1.xpose.msra.mxu0 %v579
        %5809 = vmatprep.subr.mxu0 0.0
        %5810 = vmatpush1.xpose.msra.mxu0 0.0
        %5811 = vmatprep.subr.mxu0 0.0
        %5812 = vmatpush1.xpose.msra.mxu0 0.0
        %5813 = vmatprep.subr.mxu0 0.0
        %5814 = vmatpush1.xpose.msra.mxu0 0.0
        %5815 = vmatprep.subr.mxu0 0.0
        %5816 = vmatpush1.xpose.msra.mxu0 0.0
        %5817 = vmatprep.subr.mxu0 0.0
        %5818 = vmatpush1.xpose.msra.mxu0 0.0
        %5819 = vmatprep.subr.mxu0 0.0
        %5820 = vmatpush1.xpose.msra.mxu0 0.0
        %5821 = vmatprep.subr.mxu0 0.0
        %5822 = vmatpush1.xpose.msra.mxu0 0.0
        %5823 = vmatprep.subr.mxu0 0.0
        %5824 = vmatpush1.xpose.msra.mxu0 0.0
        %5825 = vmatprep.subr.mxu0 0.0
        %5826 = vmatpush1.xpose.msra.mxu0 0.0
        %5827 = vmatprep.subr.mxu0 0.0
        %5828 = vmatpush1.xpose.msra.mxu0 0.0
        %5829 = vmatprep.subr.mxu0 0.0
        %5830 = vmatpush1.xpose.msra.mxu0 0.0
        %5831 = vmatprep.subr.mxu0 0.0
        %5832 = vmatpush1.xpose.msra.mxu0 0.0
        %5833 = vmatprep.subr.mxu0 0.0
        %5834 = vmatpush1.xpose.msra.mxu0 0.0
        %5835 = vmatprep.subr.mxu0 0.0
        %5836 = vmatpush1.xpose.msra.mxu0 0.0
        %5837 = vmatprep.subr.mxu0 0.0
        %5838 = vmatpush1.xpose.msra.mxu0 0.0
        %5839 = vmatprep.subr.mxu0 0.0
        %5840 = vmatpush1.xpose.msra.mxu0 0.0
        %5841 = vmatprep.subr.mxu0 0.0
        %5842 = vmatpush1.xpose.msra.mxu0 0.0
        %5843 = vmatprep.subr.mxu0 0.0
        %5844 = vmatpush1.xpose.msra.mxu0 0.0
        %5845 = vmatprep.subr.mxu0 0.0
        %5846 = vmatpush1.xpose.msra.mxu0 0.0
        %5847 = vmatprep.subr.mxu0 0.0
        %5848 = vmatpush1.xpose.msra.mxu0 0.0
        %5849 = vmatprep.subr.mxu0 0.0
        %5850 = vmatpush1.xpose.msra.mxu0 0.0
        %5851 = vmatprep.subr.mxu0 0.0
        %5852 = vmatpush1.xpose.msra.mxu0 0.0
        %5853 = vmatprep.subr.mxu0 0.0
        %5854 = vmatpush1.xpose.msra.mxu0 0.0
        %5855 = vmatprep.subr.mxu0 0.0
        %5856 = vmatpush1.xpose.msra.mxu0 0.0
        %5857 = vmatprep.subr.mxu0 0.0
        %5858 = vmatpush1.xpose.msra.mxu0 0.0
        %5859 = vmatprep.subr.mxu0 0.0
        %5860 = vmatpush1.xpose.msra.mxu0 0.0
        %5861 = vmatprep.subr.mxu0 0.0
        %5862 = vmatpush1.xpose.msra.mxu0 0.0
        %5863 = vmatprep.subr.mxu0 0.0
        %5864 = vmatpush1.xpose.msra.mxu0 0.0
        %5865 = vmatprep.subr.mxu0 0.0
        %5866 = vmatpush1.xpose.msra.mxu0 0.0
        %5867 = vmatprep.subr.mxu0 0.0
        %5868 = vmatpush1.xpose.msra.mxu0 0.0
        %5869 = vmatprep.subr.mxu0 0.0
        %5870 = vmatpush1.xpose.msra.mxu0 0.0
        %5871 = vmatprep.mubr.f32.mxu0 %v384
        %5872 = vmatmul.mubr.f32.gmra.mrb[0].mxu0 %v383
        %v5873 = vpop.f32.mrb[0].mxu0
        %v5874 = vadd.f32 %v5804, %v5873
        %v5875 = vpop.f32.mrb[0].mxu0
        %5876 = vdwg.mxu0
        %5877 = vmatprep.subr.mxu0 %v582
        %5878 = vmatpush1.xpose.msra.mxu0 %v581
        %5879 = vmatprep.subr.mxu0 0.0
        %5880 = vmatpush1.xpose.msra.mxu0 0.0
        %5881 = vmatprep.subr.mxu0 0.0
        %5882 = vmatpush1.xpose.msra.mxu0 0.0
        %5883 = vmatprep.subr.mxu0 0.0
        %5884 = vmatpush1.xpose.msra.mxu0 0.0
        %5885 = vmatprep.subr.mxu0 0.0
        %5886 = vmatpush1.xpose.msra.mxu0 0.0
        %5887 = vmatprep.subr.mxu0 0.0
        %5888 = vmatpush1.xpose.msra.mxu0 0.0
        %5889 = vmatprep.subr.mxu0 0.0
        %5890 = vmatpush1.xpose.msra.mxu0 0.0
        %5891 = vmatprep.subr.mxu0 0.0
        %5892 = vmatpush1.xpose.msra.mxu0 0.0
        %5893 = vmatprep.subr.mxu0 0.0
        %5894 = vmatpush1.xpose.msra.mxu0 0.0
        %5895 = vmatprep.subr.mxu0 0.0
        %5896 = vmatpush1.xpose.msra.mxu0 0.0
        %5897 = vmatprep.subr.mxu0 0.0
        %5898 = vmatpush1.xpose.msra.mxu0 0.0
        %5899 = vmatprep.subr.mxu0 0.0
        %5900 = vmatpush1.xpose.msra.mxu0 0.0
        %5901 = vmatprep.subr.mxu0 0.0
        %5902 = vmatpush1.xpose.msra.mxu0 0.0
        %5903 = vmatprep.subr.mxu0 0.0
        %5904 = vmatpush1.xpose.msra.mxu0 0.0
        %5905 = vmatprep.subr.mxu0 0.0
        %5906 = vmatpush1.xpose.msra.mxu0 0.0
        %5907 = vmatprep.subr.mxu0 0.0
        %5908 = vmatpush1.xpose.msra.mxu0 0.0
        %5909 = vmatprep.subr.mxu0 0.0
        %5910 = vmatpush1.xpose.msra.mxu0 0.0
        %5911 = vmatprep.subr.mxu0 0.0
        %5912 = vmatpush1.xpose.msra.mxu0 0.0
        %5913 = vmatprep.subr.mxu0 0.0
        %5914 = vmatpush1.xpose.msra.mxu0 0.0
        %5915 = vmatprep.subr.mxu0 0.0
        %5916 = vmatpush1.xpose.msra.mxu0 0.0
        %5917 = vmatprep.subr.mxu0 0.0
        %5918 = vmatpush1.xpose.msra.mxu0 0.0
        %5919 = vmatprep.subr.mxu0 0.0
        %5920 = vmatpush1.xpose.msra.mxu0 0.0
        %5921 = vmatprep.subr.mxu0 0.0
        %5922 = vmatpush1.xpose.msra.mxu0 0.0
        %5923 = vmatprep.subr.mxu0 0.0
        %5924 = vmatpush1.xpose.msra.mxu0 0.0
        %5925 = vmatprep.subr.mxu0 0.0
        %5926 = vmatpush1.xpose.msra.mxu0 0.0
        %5927 = vmatprep.subr.mxu0 0.0
        %5928 = vmatpush1.xpose.msra.mxu0 0.0
        %5929 = vmatprep.subr.mxu0 0.0
        %5930 = vmatpush1.xpose.msra.mxu0 0.0
        %5931 = vmatprep.subr.mxu0 0.0
        %5932 = vmatpush1.xpose.msra.mxu0 0.0
        %5933 = vmatprep.subr.mxu0 0.0
        %5934 = vmatpush1.xpose.msra.mxu0 0.0
        %5935 = vmatprep.subr.mxu0 0.0
        %5936 = vmatpush1.xpose.msra.mxu0 0.0
        %5937 = vmatprep.subr.mxu0 0.0
        %5938 = vmatpush1.xpose.msra.mxu0 0.0
        %5939 = vmatprep.subr.mxu0 0.0
        %5940 = vmatpush1.xpose.msra.mxu0 0.0
        %5941 = vmatprep.mubr.f32.mxu0 %v386
        %5942 = vmatmul.mubr.f32.gmra.mrb[0].mxu0 %v385
        %v5943 = vpop.f32.mrb[0].mxu0
        %v5944 = vadd.f32 %v5874, %v5943
        %v5945 = vpop.f32.mrb[0].mxu0
        %5946 = vdwg.mxu0
        %5947 = vmatprep.subr.mxu0 %v584
        %5948 = vmatpush1.xpose.msra.mxu0 %v583
        %5949 = vmatprep.subr.mxu0 0.0
        %5950 = vmatpush1.xpose.msra.mxu0 0.0
        %5951 = vmatprep.subr.mxu0 0.0
        %5952 = vmatpush1.xpose.msra.mxu0 0.0
        %5953 = vmatprep.subr.mxu0 0.0
        %5954 = vmatpush1.xpose.msra.mxu0 0.0
        %5955 = vmatprep.subr.mxu0 0.0
        %5956 = vmatpush1.xpose.msra.mxu0 0.0
        %5957 = vmatprep.subr.mxu0 0.0
        %5958 = vmatpush1.xpose.msra.mxu0 0.0
        %5959 = vmatprep.subr.mxu0 0.0
        %5960 = vmatpush1.xpose.msra.mxu0 0.0
        %5961 = vmatprep.subr.mxu0 0.0
        %5962 = vmatpush1.xpose.msra.mxu0 0.0
        %5963 = vmatprep.subr.mxu0 0.0
        %5964 = vmatpush1.xpose.msra.mxu0 0.0
        %5965 = vmatprep.subr.mxu0 0.0
        %5966 = vmatpush1.xpose.msra.mxu0 0.0
        %5967 = vmatprep.subr.mxu0 0.0
        %5968 = vmatpush1.xpose.msra.mxu0 0.0
        %5969 = vmatprep.subr.mxu0 0.0
        %5970 = vmatpush1.xpose.msra.mxu0 0.0
        %5971 = vmatprep.subr.mxu0 0.0
        %5972 = vmatpush1.xpose.msra.mxu0 0.0
        %5973 = vmatprep.subr.mxu0 0.0
        %5974 = vmatpush1.xpose.msra.mxu0 0.0
        %5975 = vmatprep.subr.mxu0 0.0
        %5976 = vmatpush1.xpose.msra.mxu0 0.0
        %5977 = vmatprep.subr.mxu0 0.0
        %5978 = vmatpush1.xpose.msra.mxu0 0.0
        %5979 = vmatprep.subr.mxu0 0.0
        %5980 = vmatpush1.xpose.msra.mxu0 0.0
        %5981 = vmatprep.subr.mxu0 0.0
        %5982 = vmatpush1.xpose.msra.mxu0 0.0
        %5983 = vmatprep.subr.mxu0 0.0
        %5984 = vmatpush1.xpose.msra.mxu0 0.0
        %5985 = vmatprep.subr.mxu0 0.0
        %5986 = vmatpush1.xpose.msra.mxu0 0.0
        %5987 = vmatprep.subr.mxu0 0.0
        %5988 = vmatpush1.xpose.msra.mxu0 0.0
        %5989 = vmatprep.subr.mxu0 0.0
        %5990 = vmatpush1.xpose.msra.mxu0 0.0
        %5991 = vmatprep.subr.mxu0 0.0
        %5992 = vmatpush1.xpose.msra.mxu0 0.0
        %5993 = vmatprep.subr.mxu0 0.0
        %5994 = vmatpush1.xpose.msra.mxu0 0.0
        %5995 = vmatprep.subr.mxu0 0.0
        %5996 = vmatpush1.xpose.msra.mxu0 0.0
        %5997 = vmatprep.subr.mxu0 0.0
        %5998 = vmatpush1.xpose.msra.mxu0 0.0
        %5999 = vmatprep.subr.mxu0 0.0
        %6000 = vmatpush1.xpose.msra.mxu0 0.0
        %6001 = vmatprep.subr.mxu0 0.0
        %6002 = vmatpush1.xpose.msra.mxu0 0.0
        %6003 = vmatprep.subr.mxu0 0.0
        %6004 = vmatpush1.xpose.msra.mxu0 0.0
        %6005 = vmatprep.subr.mxu0 0.0
        %6006 = vmatpush1.xpose.msra.mxu0 0.0
        %6007 = vmatprep.subr.mxu0 0.0
        %6008 = vmatpush1.xpose.msra.mxu0 0.0
        %6009 = vmatprep.subr.mxu0 0.0
        %6010 = vmatpush1.xpose.msra.mxu0 0.0
        %6011 = vmatprep.mubr.f32.mxu0 %v388
        %6012 = vmatmul.mubr.f32.gmra.mrb[0].mxu0 %v387
        %v6013 = vpop.f32.mrb[0].mxu0
        %v6014 = vadd.f32 %v5944, %v6013
        %v6015 = vpop.f32.mrb[0].mxu0
        %6016 = vdwg.mxu0
        %6017 = vmatprep.subr.mxu0 %v586
        %6018 = vmatpush1.xpose.msra.mxu0 %v585
        %6019 = vmatprep.subr.mxu0 0.0
        %6020 = vmatpush1.xpose.msra.mxu0 0.0
        %6021 = vmatprep.subr.mxu0 0.0
        %6022 = vmatpush1.xpose.msra.mxu0 0.0
        %6023 = vmatprep.subr.mxu0 0.0
        %6024 = vmatpush1.xpose.msra.mxu0 0.0
        %6025 = vmatprep.subr.mxu0 0.0
        %6026 = vmatpush1.xpose.msra.mxu0 0.0
        %6027 = vmatprep.subr.mxu0 0.0
        %6028 = vmatpush1.xpose.msra.mxu0 0.0
        %6029 = vmatprep.subr.mxu0 0.0
        %6030 = vmatpush1.xpose.msra.mxu0 0.0
        %6031 = vmatprep.subr.mxu0 0.0
        %6032 = vmatpush1.xpose.msra.mxu0 0.0
        %6033 = vmatprep.subr.mxu0 0.0
        %6034 = vmatpush1.xpose.msra.mxu0 0.0
        %6035 = vmatprep.subr.mxu0 0.0
        %6036 = vmatpush1.xpose.msra.mxu0 0.0
        %6037 = vmatprep.subr.mxu0 0.0
        %6038 = vmatpush1.xpose.msra.mxu0 0.0
        %6039 = vmatprep.subr.mxu0 0.0
        %6040 = vmatpush1.xpose.msra.mxu0 0.0
        %6041 = vmatprep.subr.mxu0 0.0
        %6042 = vmatpush1.xpose.msra.mxu0 0.0
        %6043 = vmatprep.subr.mxu0 0.0
        %6044 = vmatpush1.xpose.msra.mxu0 0.0
        %6045 = vmatprep.subr.mxu0 0.0
        %6046 = vmatpush1.xpose.msra.mxu0 0.0
        %6047 = vmatprep.subr.mxu0 0.0
        %6048 = vmatpush1.xpose.msra.mxu0 0.0
        %6049 = vmatprep.subr.mxu0 0.0
        %6050 = vmatpush1.xpose.msra.mxu0 0.0
        %6051 = vmatprep.subr.mxu0 0.0
        %6052 = vmatpush1.xpose.msra.mxu0 0.0
        %6053 = vmatprep.subr.mxu0 0.0
        %6054 = vmatpush1.xpose.msra.mxu0 0.0
        %6055 = vmatprep.subr.mxu0 0.0
        %6056 = vmatpush1.xpose.msra.mxu0 0.0
        %6057 = vmatprep.subr.mxu0 0.0
        %6058 = vmatpush1.xpose.msra.mxu0 0.0
        %6059 = vmatprep.subr.mxu0 0.0
        %6060 = vmatpush1.xpose.msra.mxu0 0.0
        %6061 = vmatprep.subr.mxu0 0.0
        %6062 = vmatpush1.xpose.msra.mxu0 0.0
        %6063 = vmatprep.subr.mxu0 0.0
        %6064 = vmatpush1.xpose.msra.mxu0 0.0
        %6065 = vmatprep.subr.mxu0 0.0
        %6066 = vmatpush1.xpose.msra.mxu0 0.0
        %6067 = vmatprep.subr.mxu0 0.0
        %6068 = vmatpush1.xpose.msra.mxu0 0.0
        %6069 = vmatprep.subr.mxu0 0.0
        %6070 = vmatpush1.xpose.msra.mxu0 0.0
        %6071 = vmatprep.subr.mxu0 0.0
        %6072 = vmatpush1.xpose.msra.mxu0 0.0
        %6073 = vmatprep.subr.mxu0 0.0
        %6074 = vmatpush1.xpose.msra.mxu0 0.0
        %6075 = vmatprep.subr.mxu0 0.0
        %6076 = vmatpush1.xpose.msra.mxu0 0.0
        %6077 = vmatprep.subr.mxu0 0.0
        %6078 = vmatpush1.xpose.msra.mxu0 0.0
        %6079 = vmatprep.subr.mxu0 0.0
        %6080 = vmatpush1.xpose.msra.mxu0 0.0
        %6081 = vmatprep.mubr.f32.mxu0 %v390
        %6082 = vmatmul.mubr.f32.gmra.mrb[0].mxu0 %v389
        %v6083 = vpop.f32.mrb[0].mxu0
        %v6084 = vadd.f32 %v6014, %v6083
        %v6085 = vpop.f32.mrb[0].mxu0
        %6086 = vdwg.mxu0
        %6087 = vmatprep.subr.mxu0 %v588
        %6088 = vmatpush1.xpose.msra.mxu0 %v587
        %6089 = vmatprep.subr.mxu0 0.0
        %6090 = vmatpush1.xpose.msra.mxu0 0.0
        %6091 = vmatprep.subr.mxu0 0.0
        %6092 = vmatpush1.xpose.msra.mxu0 0.0
        %6093 = vmatprep.subr.mxu0 0.0
        %6094 = vmatpush1.xpose.msra.mxu0 0.0
        %6095 = vmatprep.subr.mxu0 0.0
        %6096 = vmatpush1.xpose.msra.mxu0 0.0
        %6097 = vmatprep.subr.mxu0 0.0
        %6098 = vmatpush1.xpose.msra.mxu0 0.0
        %6099 = vmatprep.subr.mxu0 0.0
        %6100 = vmatpush1.xpose.msra.mxu0 0.0
        %6101 = vmatprep.subr.mxu0 0.0
        %6102 = vmatpush1.xpose.msra.mxu0 0.0
        %6103 = vmatprep.subr.mxu0 0.0
        %6104 = vmatpush1.xpose.msra.mxu0 0.0
        %6105 = vmatprep.subr.mxu0 0.0
        %6106 = vmatpush1.xpose.msra.mxu0 0.0
        %6107 = vmatprep.subr.mxu0 0.0
        %6108 = vmatpush1.xpose.msra.mxu0 0.0
        %6109 = vmatprep.subr.mxu0 0.0
        %6110 = vmatpush1.xpose.msra.mxu0 0.0
        %6111 = vmatprep.subr.mxu0 0.0
        %6112 = vmatpush1.xpose.msra.mxu0 0.0
        %6113 = vmatprep.subr.mxu0 0.0
        %6114 = vmatpush1.xpose.msra.mxu0 0.0
        %6115 = vmatprep.subr.mxu0 0.0
        %6116 = vmatpush1.xpose.msra.mxu0 0.0
        %6117 = vmatprep.subr.mxu0 0.0
        %6118 = vmatpush1.xpose.msra.mxu0 0.0
        %6119 = vmatprep.subr.mxu0 0.0
        %6120 = vmatpush1.xpose.msra.mxu0 0.0
        %6121 = vmatprep.subr.mxu0 0.0
        %6122 = vmatpush1.xpose.msra.mxu0 0.0
        %6123 = vmatprep.subr.mxu0 0.0
        %6124 = vmatpush1.xpose.msra.mxu0 0.0
        %6125 = vmatprep.subr.mxu0 0.0
        %6126 = vmatpush1.xpose.msra.mxu0 0.0
        %6127 = vmatprep.subr.mxu0 0.0
        %6128 = vmatpush1.xpose.msra.mxu0 0.0
        %6129 = vmatprep.subr.mxu0 0.0
        %6130 = vmatpush1.xpose.msra.mxu0 0.0
        %6131 = vmatprep.subr.mxu0 0.0
        %6132 = vmatpush1.xpose.msra.mxu0 0.0
        %6133 = vmatprep.subr.mxu0 0.0
        %6134 = vmatpush1.xpose.msra.mxu0 0.0
        %6135 = vmatprep.subr.mxu0 0.0
        %6136 = vmatpush1.xpose.msra.mxu0 0.0
        %6137 = vmatprep.subr.mxu0 0.0
        %6138 = vmatpush1.xpose.msra.mxu0 0.0
        %6139 = vmatprep.subr.mxu0 0.0
        %6140 = vmatpush1.xpose.msra.mxu0 0.0
        %6141 = vmatprep.subr.mxu0 0.0
        %6142 = vmatpush1.xpose.msra.mxu0 0.0
        %6143 = vmatprep.subr.mxu0 0.0
        %6144 = vmatpush1.xpose.msra.mxu0 0.0
        %6145 = vmatprep.subr.mxu0 0.0
        %6146 = vmatpush1.xpose.msra.mxu0 0.0
        %6147 = vmatprep.subr.mxu0 0.0
        %6148 = vmatpush1.xpose.msra.mxu0 0.0
        %6149 = vmatprep.subr.mxu0 0.0
        %6150 = vmatpush1.xpose.msra.mxu0 0.0
        %6151 = vmatprep.mubr.f32.mxu0 %v392
        %6152 = vmatmul.mubr.f32.gmra.mrb[0].mxu0 %v391
        %v6153 = vpop.f32.mrb[0].mxu0
        %v6154 = vadd.f32 %v6084, %v6153
        %v6155 = vpop.f32.mrb[0].mxu0
        %6156 = vdwg.mxu0
        %6157 = vmatprep.subr.mxu0 %v590
        %6158 = vmatpush1.xpose.msra.mxu0 %v589
        %6159 = vmatprep.subr.mxu0 0.0
        %6160 = vmatpush1.xpose.msra.mxu0 0.0
        %6161 = vmatprep.subr.mxu0 0.0
        %6162 = vmatpush1.xpose.msra.mxu0 0.0
        %6163 = vmatprep.subr.mxu0 0.0
        %6164 = vmatpush1.xpose.msra.mxu0 0.0
        %6165 = vmatprep.subr.mxu0 0.0
        %6166 = vmatpush1.xpose.msra.mxu0 0.0
        %6167 = vmatprep.subr.mxu0 0.0
        %6168 = vmatpush1.xpose.msra.mxu0 0.0
        %6169 = vmatprep.subr.mxu0 0.0
        %6170 = vmatpush1.xpose.msra.mxu0 0.0
        %6171 = vmatprep.subr.mxu0 0.0
        %6172 = vmatpush1.xpose.msra.mxu0 0.0
        %6173 = vmatprep.subr.mxu0 0.0
        %6174 = vmatpush1.xpose.msra.mxu0 0.0
        %6175 = vmatprep.subr.mxu0 0.0
        %6176 = vmatpush1.xpose.msra.mxu0 0.0
        %6177 = vmatprep.subr.mxu0 0.0
        %6178 = vmatpush1.xpose.msra.mxu0 0.0
        %6179 = vmatprep.subr.mxu0 0.0
        %6180 = vmatpush1.xpose.msra.mxu0 0.0
        %6181 = vmatprep.subr.mxu0 0.0
        %6182 = vmatpush1.xpose.msra.mxu0 0.0
        %6183 = vmatprep.subr.mxu0 0.0
        %6184 = vmatpush1.xpose.msra.mxu0 0.0
        %6185 = vmatprep.subr.mxu0 0.0
        %6186 = vmatpush1.xpose.msra.mxu0 0.0
        %6187 = vmatprep.subr.mxu0 0.0
        %6188 = vmatpush1.xpose.msra.mxu0 0.0
        %6189 = vmatprep.subr.mxu0 0.0
        %6190 = vmatpush1.xpose.msra.mxu0 0.0
        %6191 = vmatprep.subr.mxu0 0.0
        %6192 = vmatpush1.xpose.msra.mxu0 0.0
        %6193 = vmatprep.subr.mxu0 0.0
        %6194 = vmatpush1.xpose.msra.mxu0 0.0
        %6195 = vmatprep.subr.mxu0 0.0
        %6196 = vmatpush1.xpose.msra.mxu0 0.0
        %6197 = vmatprep.subr.mxu0 0.0
        %6198 = vmatpush1.xpose.msra.mxu0 0.0
        %6199 = vmatprep.subr.mxu0 0.0
        %6200 = vmatpush1.xpose.msra.mxu0 0.0
        %6201 = vmatprep.subr.mxu0 0.0
        %6202 = vmatpush1.xpose.msra.mxu0 0.0
        %6203 = vmatprep.subr.mxu0 0.0
        %6204 = vmatpush1.xpose.msra.mxu0 0.0
        %6205 = vmatprep.subr.mxu0 0.0
        %6206 = vmatpush1.xpose.msra.mxu0 0.0
        %6207 = vmatprep.subr.mxu0 0.0
        %6208 = vmatpush1.xpose.msra.mxu0 0.0
        %6209 = vmatprep.subr.mxu0 0.0
        %6210 = vmatpush1.xpose.msra.mxu0 0.0
        %6211 = vmatprep.subr.mxu0 0.0
        %6212 = vmatpush1.xpose.msra.mxu0 0.0
        %6213 = vmatprep.subr.mxu0 0.0
        %6214 = vmatpush1.xpose.msra.mxu0 0.0
        %6215 = vmatprep.subr.mxu0 0.0
        %6216 = vmatpush1.xpose.msra.mxu0 0.0
        %6217 = vmatprep.subr.mxu0 0.0
        %6218 = vmatpush1.xpose.msra.mxu0 0.0
        %6219 = vmatprep.subr.mxu0 0.0
        %6220 = vmatpush1.xpose.msra.mxu0 0.0
        %6221 = vmatprep.mubr.f32.mxu0 %v394
        %6222 = vmatmul.mubr.f32.gmra.mrb[0].mxu0 %v393
        %v6223 = vpop.f32.mrb[0].mxu0
        %v6224 = vadd.f32 %v6154, %v6223
        %v6225 = vpop.f32.mrb[0].mxu0
        %6226 = vdwg.mxu0
        %6227 = vmatprep.subr.mxu0 %v592
        %6228 = vmatpush1.xpose.msra.mxu0 %v591
        %6229 = vmatprep.subr.mxu0 0.0
        %6230 = vmatpush1.xpose.msra.mxu0 0.0
        %6231 = vmatprep.subr.mxu0 0.0
        %6232 = vmatpush1.xpose.msra.mxu0 0.0
        %6233 = vmatprep.subr.mxu0 0.0
        %6234 = vmatpush1.xpose.msra.mxu0 0.0
        %6235 = vmatprep.subr.mxu0 0.0
        %6236 = vmatpush1.xpose.msra.mxu0 0.0
        %6237 = vmatprep.subr.mxu0 0.0
        %6238 = vmatpush1.xpose.msra.mxu0 0.0
        %6239 = vmatprep.subr.mxu0 0.0
        %6240 = vmatpush1.xpose.msra.mxu0 0.0
        %6241 = vmatprep.subr.mxu0 0.0
        %6242 = vmatpush1.xpose.msra.mxu0 0.0
        %6243 = vmatprep.subr.mxu0 0.0
        %6244 = vmatpush1.xpose.msra.mxu0 0.0
        %6245 = vmatprep.subr.mxu0 0.0
        %6246 = vmatpush1.xpose.msra.mxu0 0.0
        %6247 = vmatprep.subr.mxu0 0.0
        %6248 = vmatpush1.xpose.msra.mxu0 0.0
        %6249 = vmatprep.subr.mxu0 0.0
        %6250 = vmatpush1.xpose.msra.mxu0 0.0
        %6251 = vmatprep.subr.mxu0 0.0
        %6252 = vmatpush1.xpose.msra.mxu0 0.0
        %6253 = vmatprep.subr.mxu0 0.0
        %6254 = vmatpush1.xpose.msra.mxu0 0.0
        %6255 = vmatprep.subr.mxu0 0.0
        %6256 = vmatpush1.xpose.msra.mxu0 0.0
        %6257 = vmatprep.subr.mxu0 0.0
        %6258 = vmatpush1.xpose.msra.mxu0 0.0
        %6259 = vmatprep.subr.mxu0 0.0
        %6260 = vmatpush1.xpose.msra.mxu0 0.0
        %6261 = vmatprep.subr.mxu0 0.0
        %6262 = vmatpush1.xpose.msra.mxu0 0.0
        %6263 = vmatprep.subr.mxu0 0.0
        %6264 = vmatpush1.xpose.msra.mxu0 0.0
        %6265 = vmatprep.subr.mxu0 0.0
        %6266 = vmatpush1.xpose.msra.mxu0 0.0
        %6267 = vmatprep.subr.mxu0 0.0
        %6268 = vmatpush1.xpose.msra.mxu0 0.0
        %6269 = vmatprep.subr.mxu0 0.0
        %6270 = vmatpush1.xpose.msra.mxu0 0.0
        %6271 = vmatprep.subr.mxu0 0.0
        %6272 = vmatpush1.xpose.msra.mxu0 0.0
        %6273 = vmatprep.subr.mxu0 0.0
        %6274 = vmatpush1.xpose.msra.mxu0 0.0
        %6275 = vmatprep.subr.mxu0 0.0
        %6276 = vmatpush1.xpose.msra.mxu0 0.0
        %6277 = vmatprep.subr.mxu0 0.0
        %6278 = vmatpush1.xpose.msra.mxu0 0.0
        %6279 = vmatprep.subr.mxu0 0.0
        %6280 = vmatpush1.xpose.msra.mxu0 0.0
        %6281 = vmatprep.subr.mxu0 0.0
        %6282 = vmatpush1.xpose.msra.mxu0 0.0
        %6283 = vmatprep.subr.mxu0 0.0
        %6284 = vmatpush1.xpose.msra.mxu0 0.0
        %6285 = vmatprep.subr.mxu0 0.0
        %6286 = vmatpush1.xpose.msra.mxu0 0.0
        %6287 = vmatprep.subr.mxu0 0.0
        %6288 = vmatpush1.xpose.msra.mxu0 0.0
        %6289 = vmatprep.subr.mxu0 0.0
        %6290 = vmatpush1.xpose.msra.mxu0 0.0
        %6291 = vmatprep.mubr.f32.mxu0 %v396
        %6292 = vmatmul.mubr.f32.gmra.mrb[0].mxu0 %v395
        %v6293 = vpop.f32.mrb[0].mxu0
        %v6294 = vadd.f32 %v6224, %v6293
        %v6295 = vpop.f32.mrb[0].mxu0
        %6296 = vdwg.mxu0
        %6297 = vmatprep.subr.mxu0 %v594
        %6298 = vmatpush1.xpose.msra.mxu0 %v593
        %6299 = vmatprep.subr.mxu0 0.0
        %6300 = vmatpush1.xpose.msra.mxu0 0.0
        %6301 = vmatprep.subr.mxu0 0.0
        %6302 = vmatpush1.xpose.msra.mxu0 0.0
        %6303 = vmatprep.subr.mxu0 0.0
        %6304 = vmatpush1.xpose.msra.mxu0 0.0
        %6305 = vmatprep.subr.mxu0 0.0
        %6306 = vmatpush1.xpose.msra.mxu0 0.0
        %6307 = vmatprep.subr.mxu0 0.0
        %6308 = vmatpush1.xpose.msra.mxu0 0.0
        %6309 = vmatprep.subr.mxu0 0.0
        %6310 = vmatpush1.xpose.msra.mxu0 0.0
        %6311 = vmatprep.subr.mxu0 0.0
        %6312 = vmatpush1.xpose.msra.mxu0 0.0
        %6313 = vmatprep.subr.mxu0 0.0
        %6314 = vmatpush1.xpose.msra.mxu0 0.0
        %6315 = vmatprep.subr.mxu0 0.0
        %6316 = vmatpush1.xpose.msra.mxu0 0.0
        %6317 = vmatprep.subr.mxu0 0.0
        %6318 = vmatpush1.xpose.msra.mxu0 0.0
        %6319 = vmatprep.subr.mxu0 0.0
        %6320 = vmatpush1.xpose.msra.mxu0 0.0
        %6321 = vmatprep.subr.mxu0 0.0
        %6322 = vmatpush1.xpose.msra.mxu0 0.0
        %6323 = vmatprep.subr.mxu0 0.0
        %6324 = vmatpush1.xpose.msra.mxu0 0.0
        %6325 = vmatprep.subr.mxu0 0.0
        %6326 = vmatpush1.xpose.msra.mxu0 0.0
        %6327 = vmatprep.subr.mxu0 0.0
        %6328 = vmatpush1.xpose.msra.mxu0 0.0
        %6329 = vmatprep.subr.mxu0 0.0
        %6330 = vmatpush1.xpose.msra.mxu0 0.0
        %6331 = vmatprep.subr.mxu0 0.0
        %6332 = vmatpush1.xpose.msra.mxu0 0.0
        %6333 = vmatprep.subr.mxu0 0.0
        %6334 = vmatpush1.xpose.msra.mxu0 0.0
        %6335 = vmatprep.subr.mxu0 0.0
        %6336 = vmatpush1.xpose.msra.mxu0 0.0
        %6337 = vmatprep.subr.mxu0 0.0
        %6338 = vmatpush1.xpose.msra.mxu0 0.0
        %6339 = vmatprep.subr.mxu0 0.0
        %6340 = vmatpush1.xpose.msra.mxu0 0.0
        %6341 = vmatprep.subr.mxu0 0.0
        %6342 = vmatpush1.xpose.msra.mxu0 0.0
        %6343 = vmatprep.subr.mxu0 0.0
        %6344 = vmatpush1.xpose.msra.mxu0 0.0
        %6345 = vmatprep.subr.mxu0 0.0
        %6346 = vmatpush1.xpose.msra.mxu0 0.0
        %6347 = vmatprep.subr.mxu0 0.0
        %6348 = vmatpush1.xpose.msra.mxu0 0.0
        %6349 = vmatprep.subr.mxu0 0.0
        %6350 = vmatpush1.xpose.msra.mxu0 0.0
        %6351 = vmatprep.subr.mxu0 0.0
        %6352 = vmatpush1.xpose.msra.mxu0 0.0
        %6353 = vmatprep.subr.mxu0 0.0
        %6354 = vmatpush1.xpose.msra.mxu0 0.0
        %6355 = vmatprep.subr.mxu0 0.0
        %6356 = vmatpush1.xpose.msra.mxu0 0.0
        %6357 = vmatprep.subr.mxu0 0.0
        %6358 = vmatpush1.xpose.msra.mxu0 0.0
        %6359 = vmatprep.subr.mxu0 0.0
        %6360 = vmatpush1.xpose.msra.mxu0 0.0
        %6361 = vmatprep.mubr.f32.mxu0 %v398
        %6362 = vmatmul.mubr.f32.gmra.mrb[0].mxu0 %v397
        %v6363 = vpop.f32.mrb[0].mxu0
        %v6364 = vadd.f32 %v6294, %v6363
        %v6365 = vpop.f32.mrb[0].mxu0
        %6366 = vdwg.mxu0
        %6367 = vmatprep.subr.mxu0 %v596
        %6368 = vmatpush1.xpose.msra.mxu0 %v595
        %6369 = vmatprep.subr.mxu0 0.0
        %6370 = vmatpush1.xpose.msra.mxu0 0.0
        %6371 = vmatprep.subr.mxu0 0.0
        %6372 = vmatpush1.xpose.msra.mxu0 0.0
        %6373 = vmatprep.subr.mxu0 0.0
        %6374 = vmatpush1.xpose.msra.mxu0 0.0
        %6375 = vmatprep.subr.mxu0 0.0
        %6376 = vmatpush1.xpose.msra.mxu0 0.0
        %6377 = vmatprep.subr.mxu0 0.0
        %6378 = vmatpush1.xpose.msra.mxu0 0.0
        %6379 = vmatprep.subr.mxu0 0.0
        %6380 = vmatpush1.xpose.msra.mxu0 0.0
        %6381 = vmatprep.subr.mxu0 0.0
        %6382 = vmatpush1.xpose.msra.mxu0 0.0
        %6383 = vmatprep.subr.mxu0 0.0
        %6384 = vmatpush1.xpose.msra.mxu0 0.0
        %6385 = vmatprep.subr.mxu0 0.0
        %6386 = vmatpush1.xpose.msra.mxu0 0.0
        %6387 = vmatprep.subr.mxu0 0.0
        %6388 = vmatpush1.xpose.msra.mxu0 0.0
        %6389 = vmatprep.subr.mxu0 0.0
        %6390 = vmatpush1.xpose.msra.mxu0 0.0
        %6391 = vmatprep.subr.mxu0 0.0
        %6392 = vmatpush1.xpose.msra.mxu0 0.0
        %6393 = vmatprep.subr.mxu0 0.0
        %6394 = vmatpush1.xpose.msra.mxu0 0.0
        %6395 = vmatprep.subr.mxu0 0.0
        %6396 = vmatpush1.xpose.msra.mxu0 0.0
        %6397 = vmatprep.subr.mxu0 0.0
        %6398 = vmatpush1.xpose.msra.mxu0 0.0
        %6399 = vmatprep.subr.mxu0 0.0
        %6400 = vmatpush1.xpose.msra.mxu0 0.0
        %6401 = vmatprep.subr.mxu0 0.0
        %6402 = vmatpush1.xpose.msra.mxu0 0.0
        %6403 = vmatprep.subr.mxu0 0.0
        %6404 = vmatpush1.xpose.msra.mxu0 0.0
        %6405 = vmatprep.subr.mxu0 0.0
        %6406 = vmatpush1.xpose.msra.mxu0 0.0
        %6407 = vmatprep.subr.mxu0 0.0
        %6408 = vmatpush1.xpose.msra.mxu0 0.0
        %6409 = vmatprep.subr.mxu0 0.0
        %6410 = vmatpush1.xpose.msra.mxu0 0.0
        %6411 = vmatprep.subr.mxu0 0.0
        %6412 = vmatpush1.xpose.msra.mxu0 0.0
        %6413 = vmatprep.subr.mxu0 0.0
        %6414 = vmatpush1.xpose.msra.mxu0 0.0
        %6415 = vmatprep.subr.mxu0 0.0
        %6416 = vmatpush1.xpose.msra.mxu0 0.0
        %6417 = vmatprep.subr.mxu0 0.0
        %6418 = vmatpush1.xpose.msra.mxu0 0.0
        %6419 = vmatprep.subr.mxu0 0.0
        %6420 = vmatpush1.xpose.msra.mxu0 0.0
        %6421 = vmatprep.subr.mxu0 0.0
        %6422 = vmatpush1.xpose.msra.mxu0 0.0
        %6423 = vmatprep.subr.mxu0 0.0
        %6424 = vmatpush1.xpose.msra.mxu0 0.0
        %6425 = vmatprep.subr.mxu0 0.0
        %6426 = vmatpush1.xpose.msra.mxu0 0.0
        %6427 = vmatprep.subr.mxu0 0.0
        %6428 = vmatpush1.xpose.msra.mxu0 0.0
        %6429 = vmatprep.subr.mxu0 0.0
        %6430 = vmatpush1.xpose.msra.mxu0 0.0
        %6431 = vmatprep.mubr.f32.mxu0 %v400
        %6432 = vmatmul.mubr.f32.gmra.mrb[0].mxu0 %v399
        %v6433 = vpop.f32.mrb[0].mxu0
        %v6434 = vadd.f32 %v6364, %v6433
        %v6435 = vpop.f32.mrb[0].mxu0
        %6436 = vdwg.mxu0
        %6437 = vmatprep.subr.mxu0 %v598
        %6438 = vmatpush1.xpose.msra.mxu0 %v597
        %6439 = vmatprep.subr.mxu0 0.0
        %6440 = vmatpush1.xpose.msra.mxu0 0.0
        %6441 = vmatprep.subr.mxu0 0.0
        %6442 = vmatpush1.xpose.msra.mxu0 0.0
        %6443 = vmatprep.subr.mxu0 0.0
        %6444 = vmatpush1.xpose.msra.mxu0 0.0
        %6445 = vmatprep.subr.mxu0 0.0
        %6446 = vmatpush1.xpose.msra.mxu0 0.0
        %6447 = vmatprep.subr.mxu0 0.0
        %6448 = vmatpush1.xpose.msra.mxu0 0.0
        %6449 = vmatprep.subr.mxu0 0.0
        %6450 = vmatpush1.xpose.msra.mxu0 0.0
        %6451 = vmatprep.subr.mxu0 0.0
        %6452 = vmatpush1.xpose.msra.mxu0 0.0
        %6453 = vmatprep.subr.mxu0 0.0
        %6454 = vmatpush1.xpose.msra.mxu0 0.0
        %6455 = vmatprep.subr.mxu0 0.0
        %6456 = vmatpush1.xpose.msra.mxu0 0.0
        %6457 = vmatprep.subr.mxu0 0.0
        %6458 = vmatpush1.xpose.msra.mxu0 0.0
        %6459 = vmatprep.subr.mxu0 0.0
        %6460 = vmatpush1.xpose.msra.mxu0 0.0
        %6461 = vmatprep.subr.mxu0 0.0
        %6462 = vmatpush1.xpose.msra.mxu0 0.0
        %6463 = vmatprep.subr.mxu0 0.0
        %6464 = vmatpush1.xpose.msra.mxu0 0.0
        %6465 = vmatprep.subr.mxu0 0.0
        %6466 = vmatpush1.xpose.msra.mxu0 0.0
        %6467 = vmatprep.subr.mxu0 0.0
        %6468 = vmatpush1.xpose.msra.mxu0 0.0
        %6469 = vmatprep.subr.mxu0 0.0
        %6470 = vmatpush1.xpose.msra.mxu0 0.0
        %6471 = vmatprep.subr.mxu0 0.0
        %6472 = vmatpush1.xpose.msra.mxu0 0.0
        %6473 = vmatprep.subr.mxu0 0.0
        %6474 = vmatpush1.xpose.msra.mxu0 0.0
        %6475 = vmatprep.subr.mxu0 0.0
        %6476 = vmatpush1.xpose.msra.mxu0 0.0
        %6477 = vmatprep.subr.mxu0 0.0
        %6478 = vmatpush1.xpose.msra.mxu0 0.0
        %6479 = vmatprep.subr.mxu0 0.0
        %6480 = vmatpush1.xpose.msra.mxu0 0.0
        %6481 = vmatprep.subr.mxu0 0.0
        %6482 = vmatpush1.xpose.msra.mxu0 0.0
        %6483 = vmatprep.subr.mxu0 0.0
        %6484 = vmatpush1.xpose.msra.mxu0 0.0
        %6485 = vmatprep.subr.mxu0 0.0
        %6486 = vmatpush1.xpose.msra.mxu0 0.0
        %6487 = vmatprep.subr.mxu0 0.0
        %6488 = vmatpush1.xpose.msra.mxu0 0.0
        %6489 = vmatprep.subr.mxu0 0.0
        %6490 = vmatpush1.xpose.msra.mxu0 0.0
        %6491 = vmatprep.subr.mxu0 0.0
        %6492 = vmatpush1.xpose.msra.mxu0 0.0
        %6493 = vmatprep.subr.mxu0 0.0
        %6494 = vmatpush1.xpose.msra.mxu0 0.0
        %6495 = vmatprep.subr.mxu0 0.0
        %6496 = vmatpush1.xpose.msra.mxu0 0.0
        %6497 = vmatprep.subr.mxu0 0.0
        %6498 = vmatpush1.xpose.msra.mxu0 0.0
        %6499 = vmatprep.subr.mxu0 0.0
        %6500 = vmatpush1.xpose.msra.mxu0 0.0
        %6501 = vmatprep.mubr.f32.mxu0 %v402
        %6502 = vmatmul.mubr.f32.gmra.mrb[0].mxu0 %v401
        %v6503 = vpop.f32.mrb[0].mxu0
        %v6504 = vadd.f32 %v6434, %v6503
        %v6505 = vpop.f32.mrb[0].mxu0
        %6506 = vdwg.mxu0
        %6507 = vmatprep.subr.mxu0 %v600
        %6508 = vmatpush1.xpose.msra.mxu0 %v599
        %6509 = vmatprep.subr.mxu0 0.0
        %6510 = vmatpush1.xpose.msra.mxu0 0.0
        %6511 = vmatprep.subr.mxu0 0.0
        %6512 = vmatpush1.xpose.msra.mxu0 0.0
        %6513 = vmatprep.subr.mxu0 0.0
        %6514 = vmatpush1.xpose.msra.mxu0 0.0
        %6515 = vmatprep.subr.mxu0 0.0
        %6516 = vmatpush1.xpose.msra.mxu0 0.0
        %6517 = vmatprep.subr.mxu0 0.0
        %6518 = vmatpush1.xpose.msra.mxu0 0.0
        %6519 = vmatprep.subr.mxu0 0.0
        %6520 = vmatpush1.xpose.msra.mxu0 0.0
        %6521 = vmatprep.subr.mxu0 0.0
        %6522 = vmatpush1.xpose.msra.mxu0 0.0
        %6523 = vmatprep.subr.mxu0 0.0
        %6524 = vmatpush1.xpose.msra.mxu0 0.0
        %6525 = vmatprep.subr.mxu0 0.0
        %6526 = vmatpush1.xpose.msra.mxu0 0.0
        %6527 = vmatprep.subr.mxu0 0.0
        %6528 = vmatpush1.xpose.msra.mxu0 0.0
        %6529 = vmatprep.subr.mxu0 0.0
        %6530 = vmatpush1.xpose.msra.mxu0 0.0
        %6531 = vmatprep.subr.mxu0 0.0
        %6532 = vmatpush1.xpose.msra.mxu0 0.0
        %6533 = vmatprep.subr.mxu0 0.0
        %6534 = vmatpush1.xpose.msra.mxu0 0.0
        %6535 = vmatprep.subr.mxu0 0.0
        %6536 = vmatpush1.xpose.msra.mxu0 0.0
        %6537 = vmatprep.subr.mxu0 0.0
        %6538 = vmatpush1.xpose.msra.mxu0 0.0
        %6539 = vmatprep.subr.mxu0 0.0
        %6540 = vmatpush1.xpose.msra.mxu0 0.0
        %6541 = vmatprep.subr.mxu0 0.0
        %6542 = vmatpush1.xpose.msra.mxu0 0.0
        %6543 = vmatprep.subr.mxu0 0.0
        %6544 = vmatpush1.xpose.msra.mxu0 0.0
        %6545 = vmatprep.subr.mxu0 0.0
        %6546 = vmatpush1.xpose.msra.mxu0 0.0
        %6547 = vmatprep.subr.mxu0 0.0
        %6548 = vmatpush1.xpose.msra.mxu0 0.0
        %6549 = vmatprep.subr.mxu0 0.0
        %6550 = vmatpush1.xpose.msra.mxu0 0.0
        %6551 = vmatprep.subr.mxu0 0.0
        %6552 = vmatpush1.xpose.msra.mxu0 0.0
        %6553 = vmatprep.subr.mxu0 0.0
        %6554 = vmatpush1.xpose.msra.mxu0 0.0
        %6555 = vmatprep.subr.mxu0 0.0
        %6556 = vmatpush1.xpose.msra.mxu0 0.0
        %6557 = vmatprep.subr.mxu0 0.0
        %6558 = vmatpush1.xpose.msra.mxu0 0.0
        %6559 = vmatprep.subr.mxu0 0.0
        %6560 = vmatpush1.xpose.msra.mxu0 0.0
        %6561 = vmatprep.subr.mxu0 0.0
        %6562 = vmatpush1.xpose.msra.mxu0 0.0
        %6563 = vmatprep.subr.mxu0 0.0
        %6564 = vmatpush1.xpose.msra.mxu0 0.0
        %6565 = vmatprep.subr.mxu0 0.0
        %6566 = vmatpush1.xpose.msra.mxu0 0.0
        %6567 = vmatprep.subr.mxu0 0.0
        %6568 = vmatpush1.xpose.msra.mxu0 0.0
        %6569 = vmatprep.subr.mxu0 0.0
        %6570 = vmatpush1.xpose.msra.mxu0 0.0
        %6571 = vmatprep.mubr.f32.mxu0 %v404
        %6572 = vmatmul.mubr.f32.gmra.mrb[0].mxu0 %v403
        %v6573 = vpop.f32.mrb[0].mxu0
        %v6574 = vadd.f32 %v6504, %v6573
        %v6575 = vpop.f32.mrb[0].mxu0
        %6576 = vdwg.mxu0
        %6577 = vmatprep.subr.mxu0 %v602
        %6578 = vmatpush1.xpose.msra.mxu0 %v601
        %6579 = vmatprep.subr.mxu0 0.0
        %6580 = vmatpush1.xpose.msra.mxu0 0.0
        %6581 = vmatprep.subr.mxu0 0.0
        %6582 = vmatpush1.xpose.msra.mxu0 0.0
        %6583 = vmatprep.subr.mxu0 0.0
        %6584 = vmatpush1.xpose.msra.mxu0 0.0
        %6585 = vmatprep.subr.mxu0 0.0
        %6586 = vmatpush1.xpose.msra.mxu0 0.0
        %6587 = vmatprep.subr.mxu0 0.0
        %6588 = vmatpush1.xpose.msra.mxu0 0.0
        %6589 = vmatprep.subr.mxu0 0.0
        %6590 = vmatpush1.xpose.msra.mxu0 0.0
        %6591 = vmatprep.subr.mxu0 0.0
        %6592 = vmatpush1.xpose.msra.mxu0 0.0
        %6593 = vmatprep.subr.mxu0 0.0
        %6594 = vmatpush1.xpose.msra.mxu0 0.0
        %6595 = vmatprep.subr.mxu0 0.0
        %6596 = vmatpush1.xpose.msra.mxu0 0.0
        %6597 = vmatprep.subr.mxu0 0.0
        %6598 = vmatpush1.xpose.msra.mxu0 0.0
        %6599 = vmatprep.subr.mxu0 0.0
        %6600 = vmatpush1.xpose.msra.mxu0 0.0
        %6601 = vmatprep.subr.mxu0 0.0
        %6602 = vmatpush1.xpose.msra.mxu0 0.0
        %6603 = vmatprep.subr.mxu0 0.0
        %6604 = vmatpush1.xpose.msra.mxu0 0.0
        %6605 = vmatprep.subr.mxu0 0.0
        %6606 = vmatpush1.xpose.msra.mxu0 0.0
        %6607 = vmatprep.subr.mxu0 0.0
        %6608 = vmatpush1.xpose.msra.mxu0 0.0
        %6609 = vmatprep.subr.mxu0 0.0
        %6610 = vmatpush1.xpose.msra.mxu0 0.0
        %6611 = vmatprep.subr.mxu0 0.0
        %6612 = vmatpush1.xpose.msra.mxu0 0.0
        %6613 = vmatprep.subr.mxu0 0.0
        %6614 = vmatpush1.xpose.msra.mxu0 0.0
        %6615 = vmatprep.subr.mxu0 0.0
        %6616 = vmatpush1.xpose.msra.mxu0 0.0
        %6617 = vmatprep.subr.mxu0 0.0
        %6618 = vmatpush1.xpose.msra.mxu0 0.0
        %6619 = vmatprep.subr.mxu0 0.0
        %6620 = vmatpush1.xpose.msra.mxu0 0.0
        %6621 = vmatprep.subr.mxu0 0.0
        %6622 = vmatpush1.xpose.msra.mxu0 0.0
        %6623 = vmatprep.subr.mxu0 0.0
        %6624 = vmatpush1.xpose.msra.mxu0 0.0
        %6625 = vmatprep.subr.mxu0 0.0
        %6626 = vmatpush1.xpose.msra.mxu0 0.0
        %6627 = vmatprep.subr.mxu0 0.0
        %6628 = vmatpush1.xpose.msra.mxu0 0.0
        %6629 = vmatprep.subr.mxu0 0.0
        %6630 = vmatpush1.xpose.msra.mxu0 0.0
        %6631 = vmatprep.subr.mxu0 0.0
        %6632 = vmatpush1.xpose.msra.mxu0 0.0
        %6633 = vmatprep.subr.mxu0 0.0
        %6634 = vmatpush1.xpose.msra.mxu0 0.0
        %6635 = vmatprep.subr.mxu0 0.0
        %6636 = vmatpush1.xpose.msra.mxu0 0.0
        %6637 = vmatprep.subr.mxu0 0.0
        %6638 = vmatpush1.xpose.msra.mxu0 0.0
        %6639 = vmatprep.subr.mxu0 0.0
        %6640 = vmatpush1.xpose.msra.mxu0 0.0
        %6641 = vmatprep.mubr.f32.mxu0 %v406
        %6642 = vmatmul.mubr.f32.gmra.mrb[0].mxu0 %v405
        %v6643 = vpop.f32.mrb[0].mxu0
        %v6644 = vadd.f32 %v6574, %v6643
        %v6645 = vpop.f32.mrb[0].mxu0
        %6646 = vdwg.mxu0
        %6647 = vmatprep.subr.mxu0 %v604
        %6648 = vmatpush1.xpose.msra.mxu0 %v603
        %6649 = vmatprep.subr.mxu0 0.0
        %6650 = vmatpush1.xpose.msra.mxu0 0.0
        %6651 = vmatprep.subr.mxu0 0.0
        %6652 = vmatpush1.xpose.msra.mxu0 0.0
        %6653 = vmatprep.subr.mxu0 0.0
        %6654 = vmatpush1.xpose.msra.mxu0 0.0
        %6655 = vmatprep.subr.mxu0 0.0
        %6656 = vmatpush1.xpose.msra.mxu0 0.0
        %6657 = vmatprep.subr.mxu0 0.0
        %6658 = vmatpush1.xpose.msra.mxu0 0.0
        %6659 = vmatprep.subr.mxu0 0.0
        %6660 = vmatpush1.xpose.msra.mxu0 0.0
        %6661 = vmatprep.subr.mxu0 0.0
        %6662 = vmatpush1.xpose.msra.mxu0 0.0
        %6663 = vmatprep.subr.mxu0 0.0
        %6664 = vmatpush1.xpose.msra.mxu0 0.0
        %6665 = vmatprep.subr.mxu0 0.0
        %6666 = vmatpush1.xpose.msra.mxu0 0.0
        %6667 = vmatprep.subr.mxu0 0.0
        %6668 = vmatpush1.xpose.msra.mxu0 0.0
        %6669 = vmatprep.subr.mxu0 0.0
        %6670 = vmatpush1.xpose.msra.mxu0 0.0
        %6671 = vmatprep.subr.mxu0 0.0
        %6672 = vmatpush1.xpose.msra.mxu0 0.0
        %6673 = vmatprep.subr.mxu0 0.0
        %6674 = vmatpush1.xpose.msra.mxu0 0.0
        %6675 = vmatprep.subr.mxu0 0.0
        %6676 = vmatpush1.xpose.msra.mxu0 0.0
        %6677 = vmatprep.subr.mxu0 0.0
        %6678 = vmatpush1.xpose.msra.mxu0 0.0
        %6679 = vmatprep.subr.mxu0 0.0
        %6680 = vmatpush1.xpose.msra.mxu0 0.0
        %6681 = vmatprep.subr.mxu0 0.0
        %6682 = vmatpush1.xpose.msra.mxu0 0.0
        %6683 = vmatprep.subr.mxu0 0.0
        %6684 = vmatpush1.xpose.msra.mxu0 0.0
        %6685 = vmatprep.subr.mxu0 0.0
        %6686 = vmatpush1.xpose.msra.mxu0 0.0
        %6687 = vmatprep.subr.mxu0 0.0
        %6688 = vmatpush1.xpose.msra.mxu0 0.0
        %6689 = vmatprep.subr.mxu0 0.0
        %6690 = vmatpush1.xpose.msra.mxu0 0.0
        %6691 = vmatprep.subr.mxu0 0.0
        %6692 = vmatpush1.xpose.msra.mxu0 0.0
        %6693 = vmatprep.subr.mxu0 0.0
        %6694 = vmatpush1.xpose.msra.mxu0 0.0
        %6695 = vmatprep.subr.mxu0 0.0
        %6696 = vmatpush1.xpose.msra.mxu0 0.0
        %6697 = vmatprep.subr.mxu0 0.0
        %6698 = vmatpush1.xpose.msra.mxu0 0.0
        %6699 = vmatprep.subr.mxu0 0.0
        %6700 = vmatpush1.xpose.msra.mxu0 0.0
        %6701 = vmatprep.subr.mxu0 0.0
        %6702 = vmatpush1.xpose.msra.mxu0 0.0
        %6703 = vmatprep.subr.mxu0 0.0
        %6704 = vmatpush1.xpose.msra.mxu0 0.0
        %6705 = vmatprep.subr.mxu0 0.0
        %6706 = vmatpush1.xpose.msra.mxu0 0.0
        %6707 = vmatprep.subr.mxu0 0.0
        %6708 = vmatpush1.xpose.msra.mxu0 0.0
        %6709 = vmatprep.subr.mxu0 0.0
        %6710 = vmatpush1.xpose.msra.mxu0 0.0
        %6711 = vmatprep.mubr.f32.mxu0 %v408
        %6712 = vmatmul.mubr.f32.gmra.mrb[0].mxu0 %v407
        %v6713 = vpop.f32.mrb[0].mxu0
        %v6714 = vadd.f32 %v6644, %v6713
        %v6715 = vpop.f32.mrb[0].mxu0
        %6716 = vdwg.mxu0
        %6717 = vmatprep.subr.mxu0 %v606
        %6718 = vmatpush1.xpose.msra.mxu0 %v605
        %6719 = vmatprep.subr.mxu0 0.0
        %6720 = vmatpush1.xpose.msra.mxu0 0.0
        %6721 = vmatprep.subr.mxu0 0.0
        %6722 = vmatpush1.xpose.msra.mxu0 0.0
        %6723 = vmatprep.subr.mxu0 0.0
        %6724 = vmatpush1.xpose.msra.mxu0 0.0
        %6725 = vmatprep.subr.mxu0 0.0
        %6726 = vmatpush1.xpose.msra.mxu0 0.0
        %6727 = vmatprep.subr.mxu0 0.0
        %6728 = vmatpush1.xpose.msra.mxu0 0.0
        %6729 = vmatprep.subr.mxu0 0.0
        %6730 = vmatpush1.xpose.msra.mxu0 0.0
        %6731 = vmatprep.subr.mxu0 0.0
        %6732 = vmatpush1.xpose.msra.mxu0 0.0
        %6733 = vmatprep.subr.mxu0 0.0
        %6734 = vmatpush1.xpose.msra.mxu0 0.0
        %6735 = vmatprep.subr.mxu0 0.0
        %6736 = vmatpush1.xpose.msra.mxu0 0.0
        %6737 = vmatprep.subr.mxu0 0.0
        %6738 = vmatpush1.xpose.msra.mxu0 0.0
        %6739 = vmatprep.subr.mxu0 0.0
        %6740 = vmatpush1.xpose.msra.mxu0 0.0
        %6741 = vmatprep.subr.mxu0 0.0
        %6742 = vmatpush1.xpose.msra.mxu0 0.0
        %6743 = vmatprep.subr.mxu0 0.0
        %6744 = vmatpush1.xpose.msra.mxu0 0.0
        %6745 = vmatprep.subr.mxu0 0.0
        %6746 = vmatpush1.xpose.msra.mxu0 0.0
        %6747 = vmatprep.subr.mxu0 0.0
        %6748 = vmatpush1.xpose.msra.mxu0 0.0
        %6749 = vmatprep.subr.mxu0 0.0
        %6750 = vmatpush1.xpose.msra.mxu0 0.0
        %6751 = vmatprep.subr.mxu0 0.0
        %6752 = vmatpush1.xpose.msra.mxu0 0.0
        %6753 = vmatprep.subr.mxu0 0.0
        %6754 = vmatpush1.xpose.msra.mxu0 0.0
        %6755 = vmatprep.subr.mxu0 0.0
        %6756 = vmatpush1.xpose.msra.mxu0 0.0
        %6757 = vmatprep.subr.mxu0 0.0
        %6758 = vmatpush1.xpose.msra.mxu0 0.0
        %6759 = vmatprep.subr.mxu0 0.0
        %6760 = vmatpush1.xpose.msra.mxu0 0.0
        %6761 = vmatprep.subr.mxu0 0.0
        %6762 = vmatpush1.xpose.msra.mxu0 0.0
        %6763 = vmatprep.subr.mxu0 0.0
        %6764 = vmatpush1.xpose.msra.mxu0 0.0
        %6765 = vmatprep.subr.mxu0 0.0
        %6766 = vmatpush1.xpose.msra.mxu0 0.0
        %6767 = vmatprep.subr.mxu0 0.0
        %6768 = vmatpush1.xpose.msra.mxu0 0.0
        %6769 = vmatprep.subr.mxu0 0.0
        %6770 = vmatpush1.xpose.msra.mxu0 0.0
        %6771 = vmatprep.subr.mxu0 0.0
        %6772 = vmatpush1.xpose.msra.mxu0 0.0
        %6773 = vmatprep.subr.mxu0 0.0
        %6774 = vmatpush1.xpose.msra.mxu0 0.0
        %6775 = vmatprep.subr.mxu0 0.0
        %6776 = vmatpush1.xpose.msra.mxu0 0.0
        %6777 = vmatprep.subr.mxu0 0.0
        %6778 = vmatpush1.xpose.msra.mxu0 0.0
        %6779 = vmatprep.subr.mxu0 0.0
        %6780 = vmatpush1.xpose.msra.mxu0 0.0
        %6781 = vmatprep.mubr.f32.mxu0 %v410
        %6782 = vmatmul.mubr.f32.gmra.mrb[0].mxu0 %v409
        %v6783 = vpop.f32.mrb[0].mxu0
        %v6784 = vadd.f32 %v6714, %v6783
        %v6785 = vpop.f32.mrb[0].mxu0
        %6786 = vdwg.mxu0
        %6787 = vmatprep.subr.mxu0 %v608
        %6788 = vmatpush1.xpose.msra.mxu0 %v607
        %6789 = vmatprep.subr.mxu0 0.0
        %6790 = vmatpush1.xpose.msra.mxu0 0.0
        %6791 = vmatprep.subr.mxu0 0.0
        %6792 = vmatpush1.xpose.msra.mxu0 0.0
        %6793 = vmatprep.subr.mxu0 0.0
        %6794 = vmatpush1.xpose.msra.mxu0 0.0
        %6795 = vmatprep.subr.mxu0 0.0
        %6796 = vmatpush1.xpose.msra.mxu0 0.0
        %6797 = vmatprep.subr.mxu0 0.0
        %6798 = vmatpush1.xpose.msra.mxu0 0.0
        %6799 = vmatprep.subr.mxu0 0.0
        %6800 = vmatpush1.xpose.msra.mxu0 0.0
        %6801 = vmatprep.subr.mxu0 0.0
        %6802 = vmatpush1.xpose.msra.mxu0 0.0
        %6803 = vmatprep.subr.mxu0 0.0
        %6804 = vmatpush1.xpose.msra.mxu0 0.0
        %6805 = vmatprep.subr.mxu0 0.0
        %6806 = vmatpush1.xpose.msra.mxu0 0.0
        %6807 = vmatprep.subr.mxu0 0.0
        %6808 = vmatpush1.xpose.msra.mxu0 0.0
        %6809 = vmatprep.subr.mxu0 0.0
        %6810 = vmatpush1.xpose.msra.mxu0 0.0
        %6811 = vmatprep.subr.mxu0 0.0
        %6812 = vmatpush1.xpose.msra.mxu0 0.0
        %6813 = vmatprep.subr.mxu0 0.0
        %6814 = vmatpush1.xpose.msra.mxu0 0.0
        %6815 = vmatprep.subr.mxu0 0.0
        %6816 = vmatpush1.xpose.msra.mxu0 0.0
        %6817 = vmatprep.subr.mxu0 0.0
        %6818 = vmatpush1.xpose.msra.mxu0 0.0
        %6819 = vmatprep.subr.mxu0 0.0
        %6820 = vmatpush1.xpose.msra.mxu0 0.0
        %6821 = vmatprep.subr.mxu0 0.0
        %6822 = vmatpush1.xpose.msra.mxu0 0.0
        %6823 = vmatprep.subr.mxu0 0.0
        %6824 = vmatpush1.xpose.msra.mxu0 0.0
        %6825 = vmatprep.subr.mxu0 0.0
        %6826 = vmatpush1.xpose.msra.mxu0 0.0
        %6827 = vmatprep.subr.mxu0 0.0
        %6828 = vmatpush1.xpose.msra.mxu0 0.0
        %6829 = vmatprep.subr.mxu0 0.0
        %6830 = vmatpush1.xpose.msra.mxu0 0.0
        %6831 = vmatprep.subr.mxu0 0.0
        %6832 = vmatpush1.xpose.msra.mxu0 0.0
        %6833 = vmatprep.subr.mxu0 0.0
        %6834 = vmatpush1.xpose.msra.mxu0 0.0
        %6835 = vmatprep.subr.mxu0 0.0
        %6836 = vmatpush1.xpose.msra.mxu0 0.0
        %6837 = vmatprep.subr.mxu0 0.0
        %6838 = vmatpush1.xpose.msra.mxu0 0.0
        %6839 = vmatprep.subr.mxu0 0.0
        %6840 = vmatpush1.xpose.msra.mxu0 0.0
        %6841 = vmatprep.subr.mxu0 0.0
        %6842 = vmatpush1.xpose.msra.mxu0 0.0
        %6843 = vmatprep.subr.mxu0 0.0
        %6844 = vmatpush1.xpose.msra.mxu0 0.0
        %6845 = vmatprep.subr.mxu0 0.0
        %6846 = vmatpush1.xpose.msra.mxu0 0.0
        %6847 = vmatprep.subr.mxu0 0.0
        %6848 = vmatpush1.xpose.msra.mxu0 0.0
        %6849 = vmatprep.subr.mxu0 0.0
        %6850 = vmatpush1.xpose.msra.mxu0 0.0
        %6851 = vmatprep.mubr.f32.mxu0 %v412
        %6852 = vmatmul.mubr.f32.gmra.mrb[0].mxu0 %v411
        %v6853 = vpop.f32.mrb[0].mxu0
        %v6854 = vadd.f32 %v6784, %v6853
        %v6855 = vpop.f32.mrb[0].mxu0
        %6856 = vdwg.mxu0
        %6857 = vmatprep.subr.mxu0 %v610
        %6858 = vmatpush1.xpose.msra.mxu0 %v609
        %6859 = vmatprep.subr.mxu0 0.0
        %6860 = vmatpush1.xpose.msra.mxu0 0.0
        %6861 = vmatprep.subr.mxu0 0.0
        %6862 = vmatpush1.xpose.msra.mxu0 0.0
        %6863 = vmatprep.subr.mxu0 0.0
        %6864 = vmatpush1.xpose.msra.mxu0 0.0
        %6865 = vmatprep.subr.mxu0 0.0
        %6866 = vmatpush1.xpose.msra.mxu0 0.0
        %6867 = vmatprep.subr.mxu0 0.0
        %6868 = vmatpush1.xpose.msra.mxu0 0.0
        %6869 = vmatprep.subr.mxu0 0.0
        %6870 = vmatpush1.xpose.msra.mxu0 0.0
        %6871 = vmatprep.subr.mxu0 0.0
        %6872 = vmatpush1.xpose.msra.mxu0 0.0
        %6873 = vmatprep.subr.mxu0 0.0
        %6874 = vmatpush1.xpose.msra.mxu0 0.0
        %6875 = vmatprep.subr.mxu0 0.0
        %6876 = vmatpush1.xpose.msra.mxu0 0.0
        %6877 = vmatprep.subr.mxu0 0.0
        %6878 = vmatpush1.xpose.msra.mxu0 0.0
        %6879 = vmatprep.subr.mxu0 0.0
        %6880 = vmatpush1.xpose.msra.mxu0 0.0
        %6881 = vmatprep.subr.mxu0 0.0
        %6882 = vmatpush1.xpose.msra.mxu0 0.0
        %6883 = vmatprep.subr.mxu0 0.0
        %6884 = vmatpush1.xpose.msra.mxu0 0.0
        %6885 = vmatprep.subr.mxu0 0.0
        %6886 = vmatpush1.xpose.msra.mxu0 0.0
        %6887 = vmatprep.subr.mxu0 0.0
        %6888 = vmatpush1.xpose.msra.mxu0 0.0
        %6889 = vmatprep.subr.mxu0 0.0
        %6890 = vmatpush1.xpose.msra.mxu0 0.0
        %6891 = vmatprep.subr.mxu0 0.0
        %6892 = vmatpush1.xpose.msra.mxu0 0.0
        %6893 = vmatprep.subr.mxu0 0.0
        %6894 = vmatpush1.xpose.msra.mxu0 0.0
        %6895 = vmatprep.subr.mxu0 0.0
        %6896 = vmatpush1.xpose.msra.mxu0 0.0
        %6897 = vmatprep.subr.mxu0 0.0
        %6898 = vmatpush1.xpose.msra.mxu0 0.0
        %6899 = vmatprep.subr.mxu0 0.0
        %6900 = vmatpush1.xpose.msra.mxu0 0.0
        %6901 = vmatprep.subr.mxu0 0.0
        %6902 = vmatpush1.xpose.msra.mxu0 0.0
        %6903 = vmatprep.subr.mxu0 0.0
        %6904 = vmatpush1.xpose.msra.mxu0 0.0
        %6905 = vmatprep.subr.mxu0 0.0
        %6906 = vmatpush1.xpose.msra.mxu0 0.0
        %6907 = vmatprep.subr.mxu0 0.0
        %6908 = vmatpush1.xpose.msra.mxu0 0.0
        %6909 = vmatprep.subr.mxu0 0.0
        %6910 = vmatpush1.xpose.msra.mxu0 0.0
        %6911 = vmatprep.subr.mxu0 0.0
        %6912 = vmatpush1.xpose.msra.mxu0 0.0
        %6913 = vmatprep.subr.mxu0 0.0
        %6914 = vmatpush1.xpose.msra.mxu0 0.0
        %6915 = vmatprep.subr.mxu0 0.0
        %6916 = vmatpush1.xpose.msra.mxu0 0.0
        %6917 = vmatprep.subr.mxu0 0.0
        %6918 = vmatpush1.xpose.msra.mxu0 0.0
        %6919 = vmatprep.subr.mxu0 0.0
        %6920 = vmatpush1.xpose.msra.mxu0 0.0
        %6921 = vmatprep.mubr.f32.mxu0 %v414
        %6922 = vmatmul.mubr.f32.gmra.mrb[0].mxu0 %v413
        %v6923 = vpop.f32.mrb[0].mxu0
        %v6924 = vadd.f32 %v6854, %v6923
        %v6925 = vpop.f32.mrb[0].mxu0
        %6926 = vdwg.mxu0
        %6927 = vmatprep.subr.mxu0 %v612
        %6928 = vmatpush1.xpose.msra.mxu0 %v611
        %6929 = vmatprep.subr.mxu0 0.0
        %6930 = vmatpush1.xpose.msra.mxu0 0.0
        %6931 = vmatprep.subr.mxu0 0.0
        %6932 = vmatpush1.xpose.msra.mxu0 0.0
        %6933 = vmatprep.subr.mxu0 0.0
        %6934 = vmatpush1.xpose.msra.mxu0 0.0
        %6935 = vmatprep.subr.mxu0 0.0
        %6936 = vmatpush1.xpose.msra.mxu0 0.0
        %6937 = vmatprep.subr.mxu0 0.0
        %6938 = vmatpush1.xpose.msra.mxu0 0.0
        %6939 = vmatprep.subr.mxu0 0.0
        %6940 = vmatpush1.xpose.msra.mxu0 0.0
        %6941 = vmatprep.subr.mxu0 0.0
        %6942 = vmatpush1.xpose.msra.mxu0 0.0
        %6943 = vmatprep.subr.mxu0 0.0
        %6944 = vmatpush1.xpose.msra.mxu0 0.0
        %6945 = vmatprep.subr.mxu0 0.0
        %6946 = vmatpush1.xpose.msra.mxu0 0.0
        %6947 = vmatprep.subr.mxu0 0.0
        %6948 = vmatpush1.xpose.msra.mxu0 0.0
        %6949 = vmatprep.subr.mxu0 0.0
        %6950 = vmatpush1.xpose.msra.mxu0 0.0
        %6951 = vmatprep.subr.mxu0 0.0
        %6952 = vmatpush1.xpose.msra.mxu0 0.0
        %6953 = vmatprep.subr.mxu0 0.0
        %6954 = vmatpush1.xpose.msra.mxu0 0.0
        %6955 = vmatprep.subr.mxu0 0.0
        %6956 = vmatpush1.xpose.msra.mxu0 0.0
        %6957 = vmatprep.subr.mxu0 0.0
        %6958 = vmatpush1.xpose.msra.mxu0 0.0
        %6959 = vmatprep.subr.mxu0 0.0
        %6960 = vmatpush1.xpose.msra.mxu0 0.0
        %6961 = vmatprep.subr.mxu0 0.0
        %6962 = vmatpush1.xpose.msra.mxu0 0.0
        %6963 = vmatprep.subr.mxu0 0.0
        %6964 = vmatpush1.xpose.msra.mxu0 0.0
        %6965 = vmatprep.subr.mxu0 0.0
        %6966 = vmatpush1.xpose.msra.mxu0 0.0
        %6967 = vmatprep.subr.mxu0 0.0
        %6968 = vmatpush1.xpose.msra.mxu0 0.0
        %6969 = vmatprep.subr.mxu0 0.0
        %6970 = vmatpush1.xpose.msra.mxu0 0.0
        %6971 = vmatprep.subr.mxu0 0.0
        %6972 = vmatpush1.xpose.msra.mxu0 0.0
        %6973 = vmatprep.subr.mxu0 0.0
        %6974 = vmatpush1.xpose.msra.mxu0 0.0
        %6975 = vmatprep.subr.mxu0 0.0
        %6976 = vmatpush1.xpose.msra.mxu0 0.0
        %6977 = vmatprep.subr.mxu0 0.0
        %6978 = vmatpush1.xpose.msra.mxu0 0.0
        %6979 = vmatprep.subr.mxu0 0.0
        %6980 = vmatpush1.xpose.msra.mxu0 0.0
        %6981 = vmatprep.subr.mxu0 0.0
        %6982 = vmatpush1.xpose.msra.mxu0 0.0
        %6983 = vmatprep.subr.mxu0 0.0
        %6984 = vmatpush1.xpose.msra.mxu0 0.0
        %6985 = vmatprep.subr.mxu0 0.0
        %6986 = vmatpush1.xpose.msra.mxu0 0.0
        %6987 = vmatprep.subr.mxu0 0.0
        %6988 = vmatpush1.xpose.msra.mxu0 0.0
        %6989 = vmatprep.subr.mxu0 0.0
        %6990 = vmatpush1.xpose.msra.mxu0 0.0
        %6991 = vmatprep.mubr.f32.mxu0 %v416
        %6992 = vmatmul.mubr.f32.gmra.mrb[0].mxu0 %v415
        %v6993 = vpop.f32.mrb[0].mxu0
        %v6994 = vadd.f32 %v6924, %v6993
        %v6995 = vpop.f32.mrb[0].mxu0
        %6996 = vdwg.mxu0
        %6997 = vmatprep.subr.mxu0 %v614
        %6998 = vmatpush1.xpose.msra.mxu0 %v613
        %6999 = vmatprep.subr.mxu0 0.0
        %7000 = vmatpush1.xpose.msra.mxu0 0.0
        %7001 = vmatprep.subr.mxu0 0.0
        %7002 = vmatpush1.xpose.msra.mxu0 0.0
        %7003 = vmatprep.subr.mxu0 0.0
        %7004 = vmatpush1.xpose.msra.mxu0 0.0
        %7005 = vmatprep.subr.mxu0 0.0
        %7006 = vmatpush1.xpose.msra.mxu0 0.0
        %7007 = vmatprep.subr.mxu0 0.0
        %7008 = vmatpush1.xpose.msra.mxu0 0.0
        %7009 = vmatprep.subr.mxu0 0.0
        %7010 = vmatpush1.xpose.msra.mxu0 0.0
        %7011 = vmatprep.subr.mxu0 0.0
        %7012 = vmatpush1.xpose.msra.mxu0 0.0
        %7013 = vmatprep.subr.mxu0 0.0
        %7014 = vmatpush1.xpose.msra.mxu0 0.0
        %7015 = vmatprep.subr.mxu0 0.0
        %7016 = vmatpush1.xpose.msra.mxu0 0.0
        %7017 = vmatprep.subr.mxu0 0.0
        %7018 = vmatpush1.xpose.msra.mxu0 0.0
        %7019 = vmatprep.subr.mxu0 0.0
        %7020 = vmatpush1.xpose.msra.mxu0 0.0
        %7021 = vmatprep.subr.mxu0 0.0
        %7022 = vmatpush1.xpose.msra.mxu0 0.0
        %7023 = vmatprep.subr.mxu0 0.0
        %7024 = vmatpush1.xpose.msra.mxu0 0.0
        %7025 = vmatprep.subr.mxu0 0.0
        %7026 = vmatpush1.xpose.msra.mxu0 0.0
        %7027 = vmatprep.subr.mxu0 0.0
        %7028 = vmatpush1.xpose.msra.mxu0 0.0
        %7029 = vmatprep.subr.mxu0 0.0
        %7030 = vmatpush1.xpose.msra.mxu0 0.0
        %7031 = vmatprep.subr.mxu0 0.0
        %7032 = vmatpush1.xpose.msra.mxu0 0.0
        %7033 = vmatprep.subr.mxu0 0.0
        %7034 = vmatpush1.xpose.msra.mxu0 0.0
        %7035 = vmatprep.subr.mxu0 0.0
        %7036 = vmatpush1.xpose.msra.mxu0 0.0
        %7037 = vmatprep.subr.mxu0 0.0
        %7038 = vmatpush1.xpose.msra.mxu0 0.0
        %7039 = vmatprep.subr.mxu0 0.0
        %7040 = vmatpush1.xpose.msra.mxu0 0.0
        %7041 = vmatprep.subr.mxu0 0.0
        %7042 = vmatpush1.xpose.msra.mxu0 0.0
        %7043 = vmatprep.subr.mxu0 0.0
        %7044 = vmatpush1.xpose.msra.mxu0 0.0
        %7045 = vmatprep.subr.mxu0 0.0
        %7046 = vmatpush1.xpose.msra.mxu0 0.0
        %7047 = vmatprep.subr.mxu0 0.0
        %7048 = vmatpush1.xpose.msra.mxu0 0.0
        %7049 = vmatprep.subr.mxu0 0.0
        %7050 = vmatpush1.xpose.msra.mxu0 0.0
        %7051 = vmatprep.subr.mxu0 0.0
        %7052 = vmatpush1.xpose.msra.mxu0 0.0
        %7053 = vmatprep.subr.mxu0 0.0
        %7054 = vmatpush1.xpose.msra.mxu0 0.0
        %7055 = vmatprep.subr.mxu0 0.0
        %7056 = vmatpush1.xpose.msra.mxu0 0.0
        %7057 = vmatprep.subr.mxu0 0.0
        %7058 = vmatpush1.xpose.msra.mxu0 0.0
        %7059 = vmatprep.subr.mxu0 0.0
        %7060 = vmatpush1.xpose.msra.mxu0 0.0
        %7061 = vmatprep.mubr.f32.mxu0 %v418
        %7062 = vmatmul.mubr.f32.gmra.mrb[0].mxu0 %v417
        %v7063 = vpop.f32.mrb[0].mxu0
        %v7064 = vadd.f32 %v6994, %v7063
        %v7065 = vpop.f32.mrb[0].mxu0
        %7066 = vdwg.mxu0
        %7067 = vmatprep.subr.mxu0 %v616
        %7068 = vmatpush1.xpose.msra.mxu0 %v615
        %7069 = vmatprep.subr.mxu0 0.0
        %7070 = vmatpush1.xpose.msra.mxu0 0.0
        %7071 = vmatprep.subr.mxu0 0.0
        %7072 = vmatpush1.xpose.msra.mxu0 0.0
        %7073 = vmatprep.subr.mxu0 0.0
        %7074 = vmatpush1.xpose.msra.mxu0 0.0
        %7075 = vmatprep.subr.mxu0 0.0
        %7076 = vmatpush1.xpose.msra.mxu0 0.0
        %7077 = vmatprep.subr.mxu0 0.0
        %7078 = vmatpush1.xpose.msra.mxu0 0.0
        %7079 = vmatprep.subr.mxu0 0.0
        %7080 = vmatpush1.xpose.msra.mxu0 0.0
        %7081 = vmatprep.subr.mxu0 0.0
        %7082 = vmatpush1.xpose.msra.mxu0 0.0
        %7083 = vmatprep.subr.mxu0 0.0
        %7084 = vmatpush1.xpose.msra.mxu0 0.0
        %7085 = vmatprep.subr.mxu0 0.0
        %7086 = vmatpush1.xpose.msra.mxu0 0.0
        %7087 = vmatprep.subr.mxu0 0.0
        %7088 = vmatpush1.xpose.msra.mxu0 0.0
        %7089 = vmatprep.subr.mxu0 0.0
        %7090 = vmatpush1.xpose.msra.mxu0 0.0
        %7091 = vmatprep.subr.mxu0 0.0
        %7092 = vmatpush1.xpose.msra.mxu0 0.0
        %7093 = vmatprep.subr.mxu0 0.0
        %7094 = vmatpush1.xpose.msra.mxu0 0.0
        %7095 = vmatprep.subr.mxu0 0.0
        %7096 = vmatpush1.xpose.msra.mxu0 0.0
        %7097 = vmatprep.subr.mxu0 0.0
        %7098 = vmatpush1.xpose.msra.mxu0 0.0
        %7099 = vmatprep.subr.mxu0 0.0
        %7100 = vmatpush1.xpose.msra.mxu0 0.0
        %7101 = vmatprep.subr.mxu0 0.0
        %7102 = vmatpush1.xpose.msra.mxu0 0.0
        %7103 = vmatprep.subr.mxu0 0.0
        %7104 = vmatpush1.xpose.msra.mxu0 0.0
        %7105 = vmatprep.subr.mxu0 0.0
        %7106 = vmatpush1.xpose.msra.mxu0 0.0
        %7107 = vmatprep.subr.mxu0 0.0
        %7108 = vmatpush1.xpose.msra.mxu0 0.0
        %7109 = vmatprep.subr.mxu0 0.0
        %7110 = vmatpush1.xpose.msra.mxu0 0.0
        %7111 = vmatprep.subr.mxu0 0.0
        %7112 = vmatpush1.xpose.msra.mxu0 0.0
        %7113 = vmatprep.subr.mxu0 0.0
        %7114 = vmatpush1.xpose.msra.mxu0 0.0
        %7115 = vmatprep.subr.mxu0 0.0
        %7116 = vmatpush1.xpose.msra.mxu0 0.0
        %7117 = vmatprep.subr.mxu0 0.0
        %7118 = vmatpush1.xpose.msra.mxu0 0.0
        %7119 = vmatprep.subr.mxu0 0.0
        %7120 = vmatpush1.xpose.msra.mxu0 0.0
        %7121 = vmatprep.subr.mxu0 0.0
        %7122 = vmatpush1.xpose.msra.mxu0 0.0
        %7123 = vmatprep.subr.mxu0 0.0
        %7124 = vmatpush1.xpose.msra.mxu0 0.0
        %7125 = vmatprep.subr.mxu0 0.0
        %7126 = vmatpush1.xpose.msra.mxu0 0.0
        %7127 = vmatprep.subr.mxu0 0.0
        %7128 = vmatpush1.xpose.msra.mxu0 0.0
        %7129 = vmatprep.subr.mxu0 0.0
        %7130 = vmatpush1.xpose.msra.mxu0 0.0
        %7131 = vmatprep.mubr.f32.mxu0 %v420
        %7132 = vmatmul.mubr.f32.gmra.mrb[0].mxu0 %v419
        %v7133 = vpop.f32.mrb[0].mxu0
        %v7134 = vadd.f32 %v7064, %v7133
        %v7135 = vpop.f32.mrb[0].mxu0
        %7136 = vdwg.mxu0
        %7137 = vmatprep.subr.mxu0 %v618
        %7138 = vmatpush1.xpose.msra.mxu0 %v617
        %7139 = vmatprep.subr.mxu0 0.0
        %7140 = vmatpush1.xpose.msra.mxu0 0.0
        %7141 = vmatprep.subr.mxu0 0.0
        %7142 = vmatpush1.xpose.msra.mxu0 0.0
        %7143 = vmatprep.subr.mxu0 0.0
        %7144 = vmatpush1.xpose.msra.mxu0 0.0
        %7145 = vmatprep.subr.mxu0 0.0
        %7146 = vmatpush1.xpose.msra.mxu0 0.0
        %7147 = vmatprep.subr.mxu0 0.0
        %7148 = vmatpush1.xpose.msra.mxu0 0.0
        %7149 = vmatprep.subr.mxu0 0.0
        %7150 = vmatpush1.xpose.msra.mxu0 0.0
        %7151 = vmatprep.subr.mxu0 0.0
        %7152 = vmatpush1.xpose.msra.mxu0 0.0
        %7153 = vmatprep.subr.mxu0 0.0
        %7154 = vmatpush1.xpose.msra.mxu0 0.0
        %7155 = vmatprep.subr.mxu0 0.0
        %7156 = vmatpush1.xpose.msra.mxu0 0.0
        %7157 = vmatprep.subr.mxu0 0.0
        %7158 = vmatpush1.xpose.msra.mxu0 0.0
        %7159 = vmatprep.subr.mxu0 0.0
        %7160 = vmatpush1.xpose.msra.mxu0 0.0
        %7161 = vmatprep.subr.mxu0 0.0
        %7162 = vmatpush1.xpose.msra.mxu0 0.0
        %7163 = vmatprep.subr.mxu0 0.0
        %7164 = vmatpush1.xpose.msra.mxu0 0.0
        %7165 = vmatprep.subr.mxu0 0.0
        %7166 = vmatpush1.xpose.msra.mxu0 0.0
        %7167 = vmatprep.subr.mxu0 0.0
        %7168 = vmatpush1.xpose.msra.mxu0 0.0
        %7169 = vmatprep.subr.mxu0 0.0
        %7170 = vmatpush1.xpose.msra.mxu0 0.0
        %7171 = vmatprep.subr.mxu0 0.0
        %7172 = vmatpush1.xpose.msra.mxu0 0.0
        %7173 = vmatprep.subr.mxu0 0.0
        %7174 = vmatpush1.xpose.msra.mxu0 0.0
        %7175 = vmatprep.subr.mxu0 0.0
        %7176 = vmatpush1.xpose.msra.mxu0 0.0
        %7177 = vmatprep.subr.mxu0 0.0
        %7178 = vmatpush1.xpose.msra.mxu0 0.0
        %7179 = vmatprep.subr.mxu0 0.0
        %7180 = vmatpush1.xpose.msra.mxu0 0.0
        %7181 = vmatprep.subr.mxu0 0.0
        %7182 = vmatpush1.xpose.msra.mxu0 0.0
        %7183 = vmatprep.subr.mxu0 0.0
        %7184 = vmatpush1.xpose.msra.mxu0 0.0
        %7185 = vmatprep.subr.mxu0 0.0
        %7186 = vmatpush1.xpose.msra.mxu0 0.0
        %7187 = vmatprep.subr.mxu0 0.0
        %7188 = vmatpush1.xpose.msra.mxu0 0.0
        %7189 = vmatprep.subr.mxu0 0.0
        %7190 = vmatpush1.xpose.msra.mxu0 0.0
        %7191 = vmatprep.subr.mxu0 0.0
        %7192 = vmatpush1.xpose.msra.mxu0 0.0
        %7193 = vmatprep.subr.mxu0 0.0
        %7194 = vmatpush1.xpose.msra.mxu0 0.0
        %7195 = vmatprep.subr.mxu0 0.0
        %7196 = vmatpush1.xpose.msra.mxu0 0.0
        %7197 = vmatprep.subr.mxu0 0.0
        %7198 = vmatpush1.xpose.msra.mxu0 0.0
        %7199 = vmatprep.subr.mxu0 0.0
        %7200 = vmatpush1.xpose.msra.mxu0 0.0
        %7201 = vmatprep.mubr.f32.mxu0 %v422
        %7202 = vmatmul.mubr.f32.gmra.mrb[0].mxu0 %v421
        %v7203 = vpop.f32.mrb[0].mxu0
        %v7204 = vadd.f32 %v7134, %v7203
        %v7205 = vpop.f32.mrb[0].mxu0
        %7206 = vdwg.mxu0
        %7207 = vmatprep.subr.mxu0 %v620
        %7208 = vmatpush1.xpose.msra.mxu0 %v619
        %7209 = vmatprep.subr.mxu0 0.0
        %7210 = vmatpush1.xpose.msra.mxu0 0.0
        %7211 = vmatprep.subr.mxu0 0.0
        %7212 = vmatpush1.xpose.msra.mxu0 0.0
        %7213 = vmatprep.subr.mxu0 0.0
        %7214 = vmatpush1.xpose.msra.mxu0 0.0
        %7215 = vmatprep.subr.mxu0 0.0
        %7216 = vmatpush1.xpose.msra.mxu0 0.0
        %7217 = vmatprep.subr.mxu0 0.0
        %7218 = vmatpush1.xpose.msra.mxu0 0.0
        %7219 = vmatprep.subr.mxu0 0.0
        %7220 = vmatpush1.xpose.msra.mxu0 0.0
        %7221 = vmatprep.subr.mxu0 0.0
        %7222 = vmatpush1.xpose.msra.mxu0 0.0
        %7223 = vmatprep.subr.mxu0 0.0
        %7224 = vmatpush1.xpose.msra.mxu0 0.0
        %7225 = vmatprep.subr.mxu0 0.0
        %7226 = vmatpush1.xpose.msra.mxu0 0.0
        %7227 = vmatprep.subr.mxu0 0.0
        %7228 = vmatpush1.xpose.msra.mxu0 0.0
        %7229 = vmatprep.subr.mxu0 0.0
        %7230 = vmatpush1.xpose.msra.mxu0 0.0
        %7231 = vmatprep.subr.mxu0 0.0
        %7232 = vmatpush1.xpose.msra.mxu0 0.0
        %7233 = vmatprep.subr.mxu0 0.0
        %7234 = vmatpush1.xpose.msra.mxu0 0.0
        %7235 = vmatprep.subr.mxu0 0.0
        %7236 = vmatpush1.xpose.msra.mxu0 0.0
        %7237 = vmatprep.subr.mxu0 0.0
        %7238 = vmatpush1.xpose.msra.mxu0 0.0
        %7239 = vmatprep.subr.mxu0 0.0
        %7240 = vmatpush1.xpose.msra.mxu0 0.0
        %7241 = vmatprep.subr.mxu0 0.0
        %7242 = vmatpush1.xpose.msra.mxu0 0.0
        %7243 = vmatprep.subr.mxu0 0.0
        %7244 = vmatpush1.xpose.msra.mxu0 0.0
        %7245 = vmatprep.subr.mxu0 0.0
        %7246 = vmatpush1.xpose.msra.mxu0 0.0
        %7247 = vmatprep.subr.mxu0 0.0
        %7248 = vmatpush1.xpose.msra.mxu0 0.0
        %7249 = vmatprep.subr.mxu0 0.0
        %7250 = vmatpush1.xpose.msra.mxu0 0.0
        %7251 = vmatprep.subr.mxu0 0.0
        %7252 = vmatpush1.xpose.msra.mxu0 0.0
        %7253 = vmatprep.subr.mxu0 0.0
        %7254 = vmatpush1.xpose.msra.mxu0 0.0
        %7255 = vmatprep.subr.mxu0 0.0
        %7256 = vmatpush1.xpose.msra.mxu0 0.0
        %7257 = vmatprep.subr.mxu0 0.0
        %7258 = vmatpush1.xpose.msra.mxu0 0.0
        %7259 = vmatprep.subr.mxu0 0.0
        %7260 = vmatpush1.xpose.msra.mxu0 0.0
        %7261 = vmatprep.subr.mxu0 0.0
        %7262 = vmatpush1.xpose.msra.mxu0 0.0
        %7263 = vmatprep.subr.mxu0 0.0
        %7264 = vmatpush1.xpose.msra.mxu0 0.0
        %7265 = vmatprep.subr.mxu0 0.0
        %7266 = vmatpush1.xpose.msra.mxu0 0.0
        %7267 = vmatprep.subr.mxu0 0.0
        %7268 = vmatpush1.xpose.msra.mxu0 0.0
        %7269 = vmatprep.subr.mxu0 0.0
        %7270 = vmatpush1.xpose.msra.mxu0 0.0
        %7271 = vmatprep.mubr.f32.mxu0 %v424
        %7272 = vmatmul.mubr.f32.gmra.mrb[0].mxu0 %v423
        %v7273 = vpop.f32.mrb[0].mxu0
        %v7274 = vadd.f32 %v7204, %v7273
        %v7275 = vpop.f32.mrb[0].mxu0
        %7276 = vdwg.mxu0
        %7277 = vmatprep.subr.mxu0 %v622
        %7278 = vmatpush1.xpose.msra.mxu0 %v621
        %7279 = vmatprep.subr.mxu0 0.0
        %7280 = vmatpush1.xpose.msra.mxu0 0.0
        %7281 = vmatprep.subr.mxu0 0.0
        %7282 = vmatpush1.xpose.msra.mxu0 0.0
        %7283 = vmatprep.subr.mxu0 0.0
        %7284 = vmatpush1.xpose.msra.mxu0 0.0
        %7285 = vmatprep.subr.mxu0 0.0
        %7286 = vmatpush1.xpose.msra.mxu0 0.0
        %7287 = vmatprep.subr.mxu0 0.0
        %7288 = vmatpush1.xpose.msra.mxu0 0.0
        %7289 = vmatprep.subr.mxu0 0.0
        %7290 = vmatpush1.xpose.msra.mxu0 0.0
        %7291 = vmatprep.subr.mxu0 0.0
        %7292 = vmatpush1.xpose.msra.mxu0 0.0
        %7293 = vmatprep.subr.mxu0 0.0
        %7294 = vmatpush1.xpose.msra.mxu0 0.0
        %7295 = vmatprep.subr.mxu0 0.0
        %7296 = vmatpush1.xpose.msra.mxu0 0.0
        %7297 = vmatprep.subr.mxu0 0.0
        %7298 = vmatpush1.xpose.msra.mxu0 0.0
        %7299 = vmatprep.subr.mxu0 0.0
        %7300 = vmatpush1.xpose.msra.mxu0 0.0
        %7301 = vmatprep.subr.mxu0 0.0
        %7302 = vmatpush1.xpose.msra.mxu0 0.0
        %7303 = vmatprep.subr.mxu0 0.0
        %7304 = vmatpush1.xpose.msra.mxu0 0.0
        %7305 = vmatprep.subr.mxu0 0.0
        %7306 = vmatpush1.xpose.msra.mxu0 0.0
        %7307 = vmatprep.subr.mxu0 0.0
        %7308 = vmatpush1.xpose.msra.mxu0 0.0
        %7309 = vmatprep.subr.mxu0 0.0
        %7310 = vmatpush1.xpose.msra.mxu0 0.0
        %7311 = vmatprep.subr.mxu0 0.0
        %7312 = vmatpush1.xpose.msra.mxu0 0.0
        %7313 = vmatprep.subr.mxu0 0.0
        %7314 = vmatpush1.xpose.msra.mxu0 0.0
        %7315 = vmatprep.subr.mxu0 0.0
        %7316 = vmatpush1.xpose.msra.mxu0 0.0
        %7317 = vmatprep.subr.mxu0 0.0
        %7318 = vmatpush1.xpose.msra.mxu0 0.0
        %7319 = vmatprep.subr.mxu0 0.0
        %7320 = vmatpush1.xpose.msra.mxu0 0.0
        %7321 = vmatprep.subr.mxu0 0.0
        %7322 = vmatpush1.xpose.msra.mxu0 0.0
        %7323 = vmatprep.subr.mxu0 0.0
        %7324 = vmatpush1.xpose.msra.mxu0 0.0
        %7325 = vmatprep.subr.mxu0 0.0
        %7326 = vmatpush1.xpose.msra.mxu0 0.0
        %7327 = vmatprep.subr.mxu0 0.0
        %7328 = vmatpush1.xpose.msra.mxu0 0.0
        %7329 = vmatprep.subr.mxu0 0.0
        %7330 = vmatpush1.xpose.msra.mxu0 0.0
        %7331 = vmatprep.subr.mxu0 0.0
        %7332 = vmatpush1.xpose.msra.mxu0 0.0
        %7333 = vmatprep.subr.mxu0 0.0
        %7334 = vmatpush1.xpose.msra.mxu0 0.0
        %7335 = vmatprep.subr.mxu0 0.0
        %7336 = vmatpush1.xpose.msra.mxu0 0.0
        %7337 = vmatprep.subr.mxu0 0.0
        %7338 = vmatpush1.xpose.msra.mxu0 0.0
        %7339 = vmatprep.subr.mxu0 0.0
        %7340 = vmatpush1.xpose.msra.mxu0 0.0
        %7341 = vmatprep.mubr.f32.mxu0 %v426
        %7342 = vmatmul.mubr.f32.gmra.mrb[0].mxu0 %v425
        %v7343 = vpop.f32.mrb[0].mxu0
        %v7344 = vadd.f32 %v7274, %v7343
        %v7345 = vpop.f32.mrb[0].mxu0
        %7346 = vdwg.mxu0
        %7347 = vmatprep.subr.mxu0 %v624
        %7348 = vmatpush1.xpose.msra.mxu0 %v623
        %7349 = vmatprep.subr.mxu0 0.0
        %7350 = vmatpush1.xpose.msra.mxu0 0.0
        %7351 = vmatprep.subr.mxu0 0.0
        %7352 = vmatpush1.xpose.msra.mxu0 0.0
        %7353 = vmatprep.subr.mxu0 0.0
        %7354 = vmatpush1.xpose.msra.mxu0 0.0
        %7355 = vmatprep.subr.mxu0 0.0
        %7356 = vmatpush1.xpose.msra.mxu0 0.0
        %7357 = vmatprep.subr.mxu0 0.0
        %7358 = vmatpush1.xpose.msra.mxu0 0.0
        %7359 = vmatprep.subr.mxu0 0.0
        %7360 = vmatpush1.xpose.msra.mxu0 0.0
        %7361 = vmatprep.subr.mxu0 0.0
        %7362 = vmatpush1.xpose.msra.mxu0 0.0
        %7363 = vmatprep.subr.mxu0 0.0
        %7364 = vmatpush1.xpose.msra.mxu0 0.0
        %7365 = vmatprep.subr.mxu0 0.0
        %7366 = vmatpush1.xpose.msra.mxu0 0.0
        %7367 = vmatprep.subr.mxu0 0.0
        %7368 = vmatpush1.xpose.msra.mxu0 0.0
        %7369 = vmatprep.subr.mxu0 0.0
        %7370 = vmatpush1.xpose.msra.mxu0 0.0
        %7371 = vmatprep.subr.mxu0 0.0
        %7372 = vmatpush1.xpose.msra.mxu0 0.0
        %7373 = vmatprep.subr.mxu0 0.0
        %7374 = vmatpush1.xpose.msra.mxu0 0.0
        %7375 = vmatprep.subr.mxu0 0.0
        %7376 = vmatpush1.xpose.msra.mxu0 0.0
        %7377 = vmatprep.subr.mxu0 0.0
        %7378 = vmatpush1.xpose.msra.mxu0 0.0
        %7379 = vmatprep.subr.mxu0 0.0
        %7380 = vmatpush1.xpose.msra.mxu0 0.0
        %7381 = vmatprep.subr.mxu0 0.0
        %7382 = vmatpush1.xpose.msra.mxu0 0.0
        %7383 = vmatprep.subr.mxu0 0.0
        %7384 = vmatpush1.xpose.msra.mxu0 0.0
        %7385 = vmatprep.subr.mxu0 0.0
        %7386 = vmatpush1.xpose.msra.mxu0 0.0
        %7387 = vmatprep.subr.mxu0 0.0
        %7388 = vmatpush1.xpose.msra.mxu0 0.0
        %7389 = vmatprep.subr.mxu0 0.0
        %7390 = vmatpush1.xpose.msra.mxu0 0.0
        %7391 = vmatprep.subr.mxu0 0.0
        %7392 = vmatpush1.xpose.msra.mxu0 0.0
        %7393 = vmatprep.subr.mxu0 0.0
        %7394 = vmatpush1.xpose.msra.mxu0 0.0
        %7395 = vmatprep.subr.mxu0 0.0
        %7396 = vmatpush1.xpose.msra.mxu0 0.0
        %7397 = vmatprep.subr.mxu0 0.0
        %7398 = vmatpush1.xpose.msra.mxu0 0.0
        %7399 = vmatprep.subr.mxu0 0.0
        %7400 = vmatpush1.xpose.msra.mxu0 0.0
        %7401 = vmatprep.subr.mxu0 0.0
        %7402 = vmatpush1.xpose.msra.mxu0 0.0
        %7403 = vmatprep.subr.mxu0 0.0
        %7404 = vmatpush1.xpose.msra.mxu0 0.0
        %7405 = vmatprep.subr.mxu0 0.0
        %7406 = vmatpush1.xpose.msra.mxu0 0.0
        %7407 = vmatprep.subr.mxu0 0.0
        %7408 = vmatpush1.xpose.msra.mxu0 0.0
        %7409 = vmatprep.subr.mxu0 0.0
        %7410 = vmatpush1.xpose.msra.mxu0 0.0
        %7411 = vmatprep.mubr.f32.mxu0 %v428
        %7412 = vmatmul.mubr.f32.gmra.mrb[0].mxu0 %v427
        %v7413 = vpop.f32.mrb[0].mxu0
        %v7414 = vadd.f32 %v7344, %v7413
        %v7415 = vpop.f32.mrb[0].mxu0
        %7416 = vdwg.mxu0
        %7417 = vmatprep.subr.mxu0 %v626
        %7418 = vmatpush1.xpose.msra.mxu0 %v625
        %7419 = vmatprep.subr.mxu0 0.0
        %7420 = vmatpush1.xpose.msra.mxu0 0.0
        %7421 = vmatprep.subr.mxu0 0.0
        %7422 = vmatpush1.xpose.msra.mxu0 0.0
        %7423 = vmatprep.subr.mxu0 0.0
        %7424 = vmatpush1.xpose.msra.mxu0 0.0
        %7425 = vmatprep.subr.mxu0 0.0
        %7426 = vmatpush1.xpose.msra.mxu0 0.0
        %7427 = vmatprep.subr.mxu0 0.0
        %7428 = vmatpush1.xpose.msra.mxu0 0.0
        %7429 = vmatprep.subr.mxu0 0.0
        %7430 = vmatpush1.xpose.msra.mxu0 0.0
        %7431 = vmatprep.subr.mxu0 0.0
        %7432 = vmatpush1.xpose.msra.mxu0 0.0
        %7433 = vmatprep.subr.mxu0 0.0
        %7434 = vmatpush1.xpose.msra.mxu0 0.0
        %7435 = vmatprep.subr.mxu0 0.0
        %7436 = vmatpush1.xpose.msra.mxu0 0.0
        %7437 = vmatprep.subr.mxu0 0.0
        %7438 = vmatpush1.xpose.msra.mxu0 0.0
        %7439 = vmatprep.subr.mxu0 0.0
        %7440 = vmatpush1.xpose.msra.mxu0 0.0
        %7441 = vmatprep.subr.mxu0 0.0
        %7442 = vmatpush1.xpose.msra.mxu0 0.0
        %7443 = vmatprep.subr.mxu0 0.0
        %7444 = vmatpush1.xpose.msra.mxu0 0.0
        %7445 = vmatprep.subr.mxu0 0.0
        %7446 = vmatpush1.xpose.msra.mxu0 0.0
        %7447 = vmatprep.subr.mxu0 0.0
        %7448 = vmatpush1.xpose.msra.mxu0 0.0
        %7449 = vmatprep.subr.mxu0 0.0
        %7450 = vmatpush1.xpose.msra.mxu0 0.0
        %7451 = vmatprep.subr.mxu0 0.0
        %7452 = vmatpush1.xpose.msra.mxu0 0.0
        %7453 = vmatprep.subr.mxu0 0.0
        %7454 = vmatpush1.xpose.msra.mxu0 0.0
        %7455 = vmatprep.subr.mxu0 0.0
        %7456 = vmatpush1.xpose.msra.mxu0 0.0
        %7457 = vmatprep.subr.mxu0 0.0
        %7458 = vmatpush1.xpose.msra.mxu0 0.0
        %7459 = vmatprep.subr.mxu0 0.0
        %7460 = vmatpush1.xpose.msra.mxu0 0.0
        %7461 = vmatprep.subr.mxu0 0.0
        %7462 = vmatpush1.xpose.msra.mxu0 0.0
        %7463 = vmatprep.subr.mxu0 0.0
        %7464 = vmatpush1.xpose.msra.mxu0 0.0
        %7465 = vmatprep.subr.mxu0 0.0
        %7466 = vmatpush1.xpose.msra.mxu0 0.0
        %7467 = vmatprep.subr.mxu0 0.0
        %7468 = vmatpush1.xpose.msra.mxu0 0.0
        %7469 = vmatprep.subr.mxu0 0.0
        %7470 = vmatpush1.xpose.msra.mxu0 0.0
        %7471 = vmatprep.subr.mxu0 0.0
        %7472 = vmatpush1.xpose.msra.mxu0 0.0
        %7473 = vmatprep.subr.mxu0 0.0
        %7474 = vmatpush1.xpose.msra.mxu0 0.0
        %7475 = vmatprep.subr.mxu0 0.0
        %7476 = vmatpush1.xpose.msra.mxu0 0.0
        %7477 = vmatprep.subr.mxu0 0.0
        %7478 = vmatpush1.xpose.msra.mxu0 0.0
        %7479 = vmatprep.subr.mxu0 0.0
        %7480 = vmatpush1.xpose.msra.mxu0 0.0
        %7481 = vmatprep.mubr.f32.mxu0 %v430
        %7482 = vmatmul.mubr.f32.gmra.mrb[0].mxu0 %v429
        %v7483 = vpop.f32.mrb[0].mxu0
        %v7484 = vadd.f32 %v7414, %v7483
        %v7485 = vpop.f32.mrb[0].mxu0
        %7486 = vdwg.mxu0
        %v7487 = vadd.f32 %v234, %v7484
        %vm7488 = vcmask 39936
        %7489 = vst.msk [vmem:[%s227] sm:$0xff] %vm7488, %v7487
        %p7490 = scmp.lt.s32.totalorder %s23, 1
        %s7491 = scalar_select %p7490, %s23, 1
        %s7492 = smul.addr %s7491, 8
        %s7493 = scalar_lea.vmem %s2, %s7492
        // Predicated region
        $region41: #{tpu_custom_call.1} parent=27 // pred_check
          %p7494 = pneg %p109
        $region42: #{tpu_custom_call.1} parent=27 // pred_check_branch
          %7496 = sbr.rel (%p7494) target = $region44
        $region43: #{tpu_custom_call.1} parent=27 // pred_region
          _
        $region44: #{tpu_custom_call.1} parent=27 // pred_fallthru
          _
      $region28: #{tpu_custom_call.1} parent=5 // pred_fallthru
        _
      %p7497 = scmp.le.s32.totalorder 2, %s14
      // Predicated region
      $region45: #{tpu_custom_call.1} parent=5 // pred_check
        %p7498 = pneg %p7497
      $region46: #{tpu_custom_call.1} parent=5 // pred_check_branch
        %7500 = sbr.rel (%p7498) target = $region48
      $region47: #{tpu_custom_call.1} parent=5 // pred_region
        %s7501 = ssub.s32 %s14, 2
        // Predicated region
        $region49: #{tpu_custom_call.1} parent=47 // pred_check
          %p7502 = pneg %p115
        $region50: #{tpu_custom_call.1} parent=47 // pred_check_branch
          %7504 = sbr.rel (%p7502) target = $region52
        $region51: #{tpu_custom_call.1} parent=47 // pred_region
          %p7505 = scmp.lt.s32.totalorder %s25, 1
          %s7506 = scalar_select %p7505, %s25, 1
          %s7507 = smul.addr %s7506, 8
          %s7508 = scalar_lea.vmem %s2, %s7507
        $region52: #{tpu_custom_call.1} parent=47 // pred_fallthru
          _
      $region48: #{tpu_custom_call.1} parent=5 // pred_fallthru
        _
    $region6: #{tpu_custom_call.1} parent=1 // loop_footer
      %s18 = sadd.s32 1, %s14
    $region7: #{tpu_custom_call.1} parent=1 // loop_footer_branch
      %13 = sbr.rel target = $region3
    $region8: #{tpu_custom_call.1} parent=1 // loop_exit
      _
    %7509 = vsyncpa [#allocation3], 1
    %s7510 = scalar_lea.sflag [#allocation3], 1
    %7511 = vsyncpa %s7510, 1
    %7512 = vsyncpa [#allocation5], 1
    %s7513 = scalar_lea.sflag [#allocation5], 1
    %7514 = vsyncpa %s7513, 1

</llo_original>
